<compile_context>
chip_gen: v7x
topology: tpu7x:2x2x1
jax: 0.10.0
libtpu: 0.0.40
codegen_flags: <defaults>
</compile_context>

<pallas_src>
import jax
import jax.numpy as jnp
from jax.experimental import pallas as pl
from jax.experimental.pallas import tpu as pltpu

# (Cin, Cout, kernel, stride) for the 6 conv layers.
CONV_CFG = [
    (4, 8, 4, 2),
    (8, 16, 3, 2),
    (16, 32, 3, 2),
    (32, 64, 3, 2),
    (64, 128, 3, 1),
    (128, 256, 3, 1),
]

# MXU operand dtype for the conv matmuls.  bf16 halves HBM/VMEM traffic on the
# memory-bound conv layers (native on v5e/v6e/v7x MXUs); accumulation, bias and
# activation math is always f32.  Set to jnp.float32 for bit-closer numerics.
MATMUL_DTYPE = jnp.bfloat16

TILE_M = 512                       # rows per grid step for tiled conv matmuls
VMEM_LIMIT = 32 * 1024 * 1024      # explicit scoped-VMEM budget (v5e default: 16 MiB)


def _round_up(x, m):
    return ((x + m - 1) // m) * m


def _softplus(z):
    # Numerically stable softplus (f32).
    return jnp.maximum(z, 0.0) + jnp.log(1.0 + jnp.exp(-jnp.abs(z)))


# ---------------------------------------------------------------------------
# Tiled Pallas kernel:  ReLU(X @ W + b)  with an M-grid (conv layers 1-4).
# ---------------------------------------------------------------------------
def _conv_mm_kernel(x_ref, w_ref, b_ref, o_ref):
    acc = jnp.dot(x_ref[...], w_ref[...], preferred_element_type=jnp.float32)
    acc = jnp.maximum(acc + b_ref[...], 0.0)     # bias/ReLU in f32
    o_ref[...] = acc.astype(o_ref.dtype)


def conv_matmul_relu(patches, w2d, b, *, tile_m=TILE_M):
    """patches: (M, K), w2d: (K, N), b: (N,) -> (M, N) with ReLU, dtype of patches."""
    M, K = patches.shape
    N = w2d.shape[1]
    tm = min(tile_m, _round_up(M, 8))            # sublane-aligned tile
    grid = (pl.cdiv(M, tm),)                     # remainder block is masked by Pallas
    return pl.pallas_call(
        _conv_mm_kernel,
        out_shape=jax.ShapeDtypeStruct((M, N), patches.dtype),
        grid=grid,
        in_specs=[
            pl.BlockSpec((tm, K), lambda i: (i, 0)),
            pl.BlockSpec((K, N), lambda i: (0, 0)),
            pl.BlockSpec((1, N), lambda i: (0, 0)),
        ],
        out_specs=pl.BlockSpec((tm, N), lambda i: (i, 0)),
        compiler_params=pltpu.CompilerParams(
            dimension_semantics=("parallel",),
            vmem_limit_bytes=VMEM_LIMIT,
        ),
    )(patches, w2d, b.reshape(1, N).astype(jnp.float32))


# ---------------------------------------------------------------------------
# im2col (plain-JAX layout glue) for the strided conv layers 1-4.
# ---------------------------------------------------------------------------
def _im2col(x, ksize, stride):
    """x: (B, H, W, C) NHWC -> patches (B*Ho*Wo, k*k*C), ordered (kh, kw, c)."""
    B, H, W, C = x.shape
    Ho = (H - ksize) // stride + 1
    Wo = (W - ksize) // stride + 1
    cols = []
    for i in range(ksize):
        for j in range(ksize):
            cols.append(x[:, i:i + stride * Ho:stride, j:j + stride * Wo:stride, :])
    patches = jnp.concatenate(cols, axis=-1)     # (B, Ho, Wo, k*k*C)
    return patches.reshape(B * Ho * Wo, ksize * ksize * C), Ho, Wo


# ---------------------------------------------------------------------------
# Fused tail kernel: conv5 + ReLU + conv6 + ReLU + v/fc/alpha/beta heads.
# All weights stay resident in VMEM; one launch instead of seven.
# ---------------------------------------------------------------------------
def _tail_kernel(x5_ref, w5_ref, b5_ref, w6_ref, b6_ref,
                 wv1_ref, bv1_ref, wv2_ref, bv2_ref,
                 wfc_ref, bfc_ref, wa_ref, ba_ref, wb_ref, bb_ref,
                 v_ref, alpha_ref, beta_ref):
    x5 = x5_ref[...]              # (5, 5, B, 64)  spatial-major, MATMUL_DTYPE
    w5 = w5_ref[...]              # (3, 3, 64, 128)
    w6 = w6_ref[...]              # (3, 3, 128, 256)
    b5 = b5_ref[...]              # (1, 128) f32
    b6 = b6_ref[...]              # (1, 256) f32
    B = x5.shape[2]

    # conv5 (3x3, s1) + ReLU and conv6 (3x3 -> 1x1) + ReLU, fully unrolled.
    # Slicing only major dims keeps the (B, 64) / (64, 128) trailing layout
    # untouched, so every step is a tiny MXU dot on VMEM-resident operands.
    acc6 = jnp.zeros((B, 256), jnp.float32)
    for oi in range(3):
        for oj in range(3):
            acc5 = jnp.zeros((B, 128), jnp.float32)
            for kh in range(3):
                for kw in range(3):
                    a = x5[oi + kh, oj + kw]                       # (B, 64)
                    acc5 = acc5 + jnp.dot(a, w5[kh, kw],
                                          preferred_element_type=jnp.float32)
            y5 = jnp.maximum(acc5 + b5, 0.0).astype(w6.dtype)      # (B, 128)
            acc6 = acc6 + jnp.dot(y5, w6[oi, oj],
                                  preferred_element_type=jnp.float32)
    feat = jnp.maximum(acc6 + b6, 0.0)            # (B, 256)  ==  x.view(-1, 256)

    # value head: Linear(256,100) + ReLU + Linear(100,1)
    vh = jnp.maximum(
        jnp.dot(feat, wv1_ref[...], preferred_element_type=jnp.float32) + bv1_ref[...],
        0.0)
    v_ref[...] = (jnp.dot(vh, wv2_ref[...], preferred_element_type=jnp.float32)
                  + bv2_ref[...])

    # policy trunk + Beta-parameter heads: softplus(.) + 1
    h = jnp.maximum(
        jnp.dot(feat, wfc_ref[...], preferred_element_type=jnp.float32) + bfc_ref[...],
        0.0)
    za = jnp.dot(h, wa_ref[...], preferred_element_type=jnp.float32) + ba_ref[...]
    zb = jnp.dot(h, wb_ref[...], preferred_element_type=jnp.float32) + bb_ref[...]
    alpha_ref[...] = _softplus(za) + 1.0
    beta_ref[...] = _softplus(zb) + 1.0


def _full_spec(shape):
    return pl.BlockSpec(shape, lambda: (0,) * len(shape))


def tail_fused(x5t, params):
    """x5t: (5, 5, B, 64) conv4 activations (spatial-major).  Returns (v, alpha, beta)."""
    B = x5t.shape[2]
    w5, b5 = params["conv"][4]
    w6, b6 = params["conv"][5]
    wv1, bv1 = params["v1"]
    wv2, bv2 = params["v2"]
    wfc, bfc = params["fc"]
    wa, ba = params["alpha"]
    wb, bb = params["beta"]

    def row(v):
        return v.reshape(1, -1).astype(jnp.float32)

    args = (
        x5t.astype(MATMUL_DTYPE),
        w5.astype(MATMUL_DTYPE), row(b5),
        w6.astype(MATMUL_DTYPE), row(b6),
        wv1, row(bv1), wv2, row(bv2),
        wfc, row(bfc), wa, row(ba), wb, row(bb),
    )
    v, alpha, beta = pl.pallas_call(
        _tail_kernel,
        out_shape=(
            jax.ShapeDtypeStruct((B, 1), jnp.float32),
            jax.ShapeDtypeStruct((B, 2), jnp.float32),
            jax.ShapeDtypeStruct((B, 2), jnp.float32),
        ),
        in_specs=[_full_spec(a.shape) for a in args],
        out_specs=(_full_spec((B, 1)), _full_spec((B, 2)), _full_spec((B, 2))),
        compiler_params=pltpu.CompilerParams(vmem_limit_bytes=VMEM_LIMIT),
    )(*args)
    return v, alpha, beta


# ---------------------------------------------------------------------------
# Deterministic parameter initialization (mirrors the PyTorch init scheme:
# conv = xavier_uniform(gain=relu) + bias 0.1, linear = default PyTorch init).
# Conv weight layout is (kh, kw, Cin, Cout).
# TODO(synk): loading real PyTorch (Cout, Cin, kh, kw) weights needs a transpose.
# ---------------------------------------------------------------------------
def init_params(key):
    params = {"conv": []}
    gain = float(jnp.sqrt(2.0))  # calculate_gain('relu')
    for (cin, cout, k, _s) in CONV_CFG:
        key, wk = jax.random.split(key)
        fan_in = cin * k * k
        fan_out = cout * k * k
        limit = gain * (6.0 / (fan_in + fan_out)) ** 0.5
        w = jax.random.uniform(wk, (k, k, cin, cout), jnp.float32, -limit, limit)
        b = jnp.full((cout,), 0.1, jnp.float32)
        params["conv"].append((w, b))

    def linear_init(k, fan_in, fan_out):
        k1, k2 = jax.random.split(k)
        bound = 1.0 / (fan_in ** 0.5)
        w = jax.random.uniform(k1, (fan_in, fan_out), jnp.float32, -bound, bound)
        b = jax.random.uniform(k2, (fan_out,), jnp.float32, -bound, bound)
        return w, b

    key, k1, k2, k3, k4, k5 = jax.random.split(key, 6)
    params["v1"] = linear_init(k1, 256, 100)
    params["v2"] = linear_init(k2, 100, 1)
    params["fc"] = linear_init(k3, 256, 100)
    params["alpha"] = linear_init(k4, 100, 2)
    params["beta"] = linear_init(k5, 100, 2)
    return params


# ---------------------------------------------------------------------------
# Forward pass: ((alpha, beta), v)  exactly like the PyTorch module.
# ---------------------------------------------------------------------------
def net_forward(params, x_nchw):
    B = x_nchw.shape[0]
    x = jnp.transpose(x_nchw, (0, 2, 3, 1)).astype(MATMUL_DTYPE)   # NCHW -> NHWC
    # conv1..conv4: im2col (XLA layout glue) + tiled Pallas matmul+bias+ReLU.
    # TODO(synk): fold the strided im2col for these layers into the kernel
    # (grid over batch / output rows) to remove the k^2 HBM read amplification
    # at large batch sizes, and make the Cout<128 stores lane-dense.
    for li in range(4):
        w, b = params["conv"][li]
        _cin, cout, k, s = CONV_CFG[li]
        patches, Ho, Wo = _im2col(x, k, s)
        y = conv_matmul_relu(patches, w.reshape(-1, cout).astype(MATMUL_DTYPE), b)
        x = y.reshape(B, Ho, Wo, cout)
    # x is (B, 5, 5, 64) for 96x96 inputs.  Put spatial dims first so the fused
    # tail kernel slices (B, 64) tiles with free major-dim indexing.
    x5t = jnp.transpose(x, (1, 2, 0, 3))
    v, alpha, beta = tail_fused(x5t, params)
    return (alpha, beta), v


if __name__ == "__main__":
    key = jax.random.PRNGKey(0)
    pkey, xkey = jax.random.split(key)
    params = init_params(pkey)

    B = 2
    # NCHW like PyTorch: (batch, img_stack=4, 96, 96).  96x96 is required by the
    # conv stack so that the final feature map is 1x1x256 (x.view(-1, 256)).
    x = jax.random.normal(xkey, (B, 4, 96, 96), dtype=jnp.float32)

    (alpha, beta), v = jax.jit(net_forward)(params, x)
    jax.block_until_ready((alpha, beta, v))

    assert alpha.shape == (B, 2) and beta.shape == (B, 2) and v.shape == (B, 1)
    # Beta-distribution parameters must be >= 1 by construction (softplus + 1).
    assert bool(jnp.all(alpha >= 1.0)) and bool(jnp.all(beta >= 1.0))
    assert bool(jnp.all(jnp.isfinite(v)))
    print("KERNEL_OK")
</pallas_src>

<mosaic_0001>
module attributes {stable_mosaic.version = 11 : i64} {
  func.func @_conv_mm_kernel(%arg0: i32, %arg1: memref<512x64xbf16, #tpu.memory_space<vmem>>, %arg2: memref<64x8xbf16, #tpu.memory_space<vmem>>, %arg3: memref<1x8xf32, #tpu.memory_space<vmem>>, %arg4: memref<512x8xbf16, #tpu.memory_space<vmem>>) attributes {dimension_semantics = [#tpu.dimension_semantics<parallel>], iteration_bounds = array<i64: 9>, scalar_prefetch = 0 : i64, scratch_operands = 0 : i64, tpu.core_type = #tpu.core_type<tc>, window_params = [{transform_indices = @transform_0, window_bounds = array<i64: 512, 64>}, {pipeline_mode = #tpu.pipeline_mode<synchronous>, transform_indices = @transform_1, window_bounds = array<i64: 64, 8>}, {pipeline_mode = #tpu.pipeline_mode<synchronous>, transform_indices = @transform_2, window_bounds = array<i64: 1, 8>}, {transform_indices = @transform_3, window_bounds = array<i64: 512, 8>}]} {
    %c0 = arith.constant 0 : index
    %c0_0 = arith.constant 0 : index
    %0 = vector.load %arg1[%c0, %c0_0] : memref<512x64xbf16, #tpu.memory_space<vmem>>, vector<512x64xbf16>
    %c0_1 = arith.constant 0 : index
    %c0_2 = arith.constant 0 : index
    %1 = vector.load %arg2[%c0_1, %c0_2] : memref<64x8xbf16, #tpu.memory_space<vmem>>, vector<64x8xbf16>
    %cst = arith.constant dense<0.000000e+00> : vector<512x8xf32>
    %2 = tpu.matmul %0, %1, %cst {dimension_numbers = #tpu.dot_dimension_numbers<[1], [0], [0], [1], [0, 0, 1, 1], [], []>} : vector<512x64xbf16>, vector<64x8xbf16>, vector<512x8xf32> -> vector<512x8xf32>
    %c0_3 = arith.constant 0 : index
    %c0_4 = arith.constant 0 : index
    %3 = vector.load %arg3[%c0_3, %c0_4] : memref<1x8xf32, #tpu.memory_space<vmem>>, vector<1x8xf32>
    %4 = vector.broadcast %3 : vector<1x8xf32> to vector<512x8xf32>
    %5 = arith.addf %2, %4 : vector<512x8xf32>
    %cst_5 = arith.constant 0.000000e+00 : f32
    %6 = vector.broadcast %cst_5 : f32 to vector<512x8xf32>
    %7 = arith.maximumf %5, %6 : vector<512x8xf32>
    %8 = arith.truncf %7 : vector<512x8xf32> to vector<512x8xbf16>
    %c0_6 = arith.constant 0 : index
    %c0_7 = arith.constant 0 : index
    %9 = vector.load %arg4[%c0_6, %c0_7] : memref<512x8xbf16, #tpu.memory_space<vmem>>, vector<512x8xbf16>
    tpu.vector_store %arg4[%c0_6, %c0_7], %8 {strides = array<i32>} : memref<512x8xbf16, #tpu.memory_space<vmem>>, vector<512x8xbf16>,
    return
  }
  func.func @transform_0(%arg0: i32) -> (i32, i32) {
    %c0_i32 = arith.constant 0 : i32
    %c0_i32_0 = arith.constant 0 : i32
    return %arg0, %c0_i32 : i32, i32
  }
  func.func @transform_1(%arg0: i32) -> (i32, i32) {
    %c0_i32 = arith.constant 0 : i32
    %c0_i32_0 = arith.constant 0 : i32
    %c0_i32_1 = arith.constant 0 : i32
    return %c0_i32, %c0_i32_0 : i32, i32
  }
  func.func @transform_2(%arg0: i32) -> (i32, i32) {
    %c0_i32 = arith.constant 0 : i32
    %c0_i32_0 = arith.constant 0 : i32
    %c0_i32_1 = arith.constant 0 : i32
    return %c0_i32, %c0_i32_0 : i32, i32
  }
  func.func @transform_3(%arg0: i32) -> (i32, i32) {
    %c0_i32 = arith.constant 0 : i32
    %c0_i32_0 = arith.constant 0 : i32
    return %arg0, %c0_i32 : i32, i32
  }
}

module attributes {stable_mosaic.version = 11 : i64} {
  func.func @_conv_mm_kernel(%arg0: i32, %arg1: memref<512x72xbf16, #tpu.memory_space<vmem>>, %arg2: memref<72x16xbf16, #tpu.memory_space<vmem>>, %arg3: memref<1x16xf32, #tpu.memory_space<vmem>>, %arg4: memref<512x16xbf16, #tpu.memory_space<vmem>>) attributes {dimension_semantics = [#tpu.dimension_semantics<parallel>], iteration_bounds = array<i64: 3>, scalar_prefetch = 0 : i64, scratch_operands = 0 : i64, tpu.core_type = #tpu.core_type<tc>, window_params = [{transform_indices = @transform_0, window_bounds = array<i64: 512, 72>}, {pipeline_mode = #tpu.pipeline_mode<synchronous>, transform_indices = @transform_1, window_bounds = array<i64: 72, 16>}, {pipeline_mode = #tpu.pipeline_mode<synchronous>, transform_indices = @transform_2, window_bounds = array<i64: 1, 16>}, {transform_indices = @transform_3, window_bounds = array<i64: 512, 16>}]} {
    %c0 = arith.constant 0 : index
    %c0_0 = arith.constant 0 : index
    %0 = vector.load %arg1[%c0, %c0_0] : memref<512x72xbf16, #tpu.memory_space<vmem>>, vector<512x72xbf16>
    %c0_1 = arith.constant 0 : index
    %c0_2 = arith.constant 0 : index
    %1 = vector.load %arg2[%c0_1, %c0_2] : memref<72x16xbf16, #tpu.memory_space<vmem>>, vector<72x16xbf16>
    %cst = arith.constant dense<0.000000e+00> : vector<512x16xf32>
    %2 = tpu.matmul %0, %1, %cst {dimension_numbers = #tpu.dot_dimension_numbers<[1], [0], [0], [1], [0, 0, 1, 1], [], []>} : vector<512x72xbf16>, vector<72x16xbf16>, vector<512x16xf32> -> vector<512x16xf32>
    %c0_3 = arith.constant 0 : index
    %c0_4 = arith.constant 0 : index
    %3 = vector.load %arg3[%c0_3, %c0_4] : memref<1x16xf32, #tpu.memory_space<vmem>>, vector<1x16xf32>
    %4 = vector.broadcast %3 : vector<1x16xf32> to vector<512x16xf32>
    %5 = arith.addf %2, %4 : vector<512x16xf32>
    %cst_5 = arith.constant 0.000000e+00 : f32
    %6 = vector.broadcast %cst_5 : f32 to vector<512x16xf32>
    %7 = arith.maximumf %5, %6 : vector<512x16xf32>
    %8 = arith.truncf %7 : vector<512x16xf32> to vector<512x16xbf16>
    %c0_6 = arith.constant 0 : index
    %c0_7 = arith.constant 0 : index
    %9 = vector.load %arg4[%c0_6, %c0_7] : memref<512x16xbf16, #tpu.memory_space<vmem>>, vector<512x16xbf16>
    tpu.vector_store %arg4[%c0_6, %c0_7], %8 {strides = array<i32>} : memref<512x16xbf16, #tpu.memory_space<vmem>>, vector<512x16xbf16>,
    return
  }
  func.func @transform_0(%arg0: i32) -> (i32, i32) {
    %c0_i32 = arith.constant 0 : i32
    %c0_i32_0 = arith.constant 0 : i32
    return %arg0, %c0_i32 : i32, i32
  }
  func.func @transform_1(%arg0: i32) -> (i32, i32) {
    %c0_i32 = arith.constant 0 : i32
    %c0_i32_0 = arith.constant 0 : i32
    %c0_i32_1 = arith.constant 0 : i32
    return %c0_i32, %c0_i32_0 : i32, i32
  }
  func.func @transform_2(%arg0: i32) -> (i32, i32) {
    %c0_i32 = arith.constant 0 : i32
    %c0_i32_0 = arith.constant 0 : i32
    %c0_i32_1 = arith.constant 0 : i32
    return %c0_i32, %c0_i32_0 : i32, i32
  }
  func.func @transform_3(%arg0: i32) -> (i32, i32) {
    %c0_i32 = arith.constant 0 : i32
    %c0_i32_0 = arith.constant 0 : i32
    return %arg0, %c0_i32 : i32, i32
  }
}

module attributes {stable_mosaic.version = 11 : i64} {
  func.func @_conv_mm_kernel(%arg0: i32, %arg1: memref<248x144xbf16, #tpu.memory_space<vmem>>, %arg2: memref<144x32xbf16, #tpu.memory_space<vmem>>, %arg3: memref<1x32xf32, #tpu.memory_space<vmem>>, %arg4: memref<248x32xbf16, #tpu.memory_space<vmem>>) attributes {dimension_semantics = [#tpu.dimension_semantics<parallel>], iteration_bounds = array<i64: 1>, scalar_prefetch = 0 : i64, scratch_operands = 0 : i64, tpu.core_type = #tpu.core_type<tc>, window_params = [{transform_indices = @transform_0, window_bounds = array<i64: 248, 144>}, {pipeline_mode = #tpu.pipeline_mode<synchronous>, transform_indices = @transform_1, window_bounds = array<i64: 144, 32>}, {pipeline_mode = #tpu.pipeline_mode<synchronous>, transform_indices = @transform_2, window_bounds = array<i64: 1, 32>}, {transform_indices = @transform_3, window_bounds = array<i64: 248, 32>}]} {
    %c0 = arith.constant 0 : index
    %c0_0 = arith.constant 0 : index
    %0 = vector.load %arg1[%c0, %c0_0] : memref<248x144xbf16, #tpu.memory_space<vmem>>, vector<248x144xbf16>
    %c0_1 = arith.constant 0 : index
    %c0_2 = arith.constant 0 : index
    %1 = vector.load %arg2[%c0_1, %c0_2] : memref<144x32xbf16, #tpu.memory_space<vmem>>, vector<144x32xbf16>
    %cst = arith.constant dense<0.000000e+00> : vector<248x32xf32>
    %2 = tpu.matmul %0, %1, %cst {dimension_numbers = #tpu.dot_dimension_numbers<[1], [0], [0], [1], [0, 0, 1, 1], [], []>} : vector<248x144xbf16>, vector<144x32xbf16>, vector<248x32xf32> -> vector<248x32xf32>
    %c0_3 = arith.constant 0 : index
    %c0_4 = arith.constant 0 : index
    %3 = vector.load %arg3[%c0_3, %c0_4] : memref<1x32xf32, #tpu.memory_space<vmem>>, vector<1x32xf32>
    %4 = vector.broadcast %3 : vector<1x32xf32> to vector<248x32xf32>
    %5 = arith.addf %2, %4 : vector<248x32xf32>
    %cst_5 = arith.constant 0.000000e+00 : f32
    %6 = vector.broadcast %cst_5 : f32 to vector<248x32xf32>
    %7 = arith.maximumf %5, %6 : vector<248x32xf32>
    %8 = arith.truncf %7 : vector<248x32xf32> to vector<248x32xbf16>
    %c0_6 = arith.constant 0 : index
    %c0_7 = arith.constant 0 : index
    %9 = vector.load %arg4[%c0_6, %c0_7] : memref<248x32xbf16, #tpu.memory_space<vmem>>, vector<248x32xbf16>
    tpu.vector_store %arg4[%c0_6, %c0_7], %8 {strides = array<i32>} : memref<248x32xbf16, #tpu.memory_space<vmem>>, vector<248x32xbf16>,
    return
  }
  func.func @transform_0(%arg0: i32) -> (i32, i32) {
    %c0_i32 = arith.constant 0 : i32
    %c0_i32_0 = arith.constant 0 : i32
    return %arg0, %c0_i32 : i32, i32
  }
  func.func @transform_1(%arg0: i32) -> (i32, i32) {
    %c0_i32 = arith.constant 0 : i32
    %c0_i32_0 = arith.constant 0 : i32
    %c0_i32_1 = arith.constant 0 : i32
    return %c0_i32, %c0_i32_0 : i32, i32
  }
  func.func @transform_2(%arg0: i32) -> (i32, i32) {
    %c0_i32 = arith.constant 0 : i32
    %c0_i32_0 = arith.constant 0 : i32
    %c0_i32_1 = arith.constant 0 : i32
    return %c0_i32, %c0_i32_0 : i32, i32
  }
  func.func @transform_3(%arg0: i32) -> (i32, i32) {
    %c0_i32 = arith.constant 0 : i32
    %c0_i32_0 = arith.constant 0 : i32
    return %arg0, %c0_i32 : i32, i32
  }
}

module attributes {stable_mosaic.version = 11 : i64} {
  func.func @_conv_mm_kernel(%arg0: i32, %arg1: memref<56x288xbf16, #tpu.memory_space<vmem>>, %arg2: memref<288x64xbf16, #tpu.memory_space<vmem>>, %arg3: memref<1x64xf32, #tpu.memory_space<vmem>>, %arg4: memref<56x64xbf16, #tpu.memory_space<vmem>>) attributes {dimension_semantics = [#tpu.dimension_semantics<parallel>], iteration_bounds = array<i64: 1>, scalar_prefetch = 0 : i64, scratch_operands = 0 : i64, tpu.core_type = #tpu.core_type<tc>, window_params = [{transform_indices = @transform_0, window_bounds = array<i64: 56, 288>}, {pipeline_mode = #tpu.pipeline_mode<synchronous>, transform_indices = @transform_1, window_bounds = array<i64: 288, 64>}, {pipeline_mode = #tpu.pipeline_mode<synchronous>, transform_indices = @transform_2, window_bounds = array<i64: 1, 64>}, {transform_indices = @transform_3, window_bounds = array<i64: 56, 64>}]} {
    %c0 = arith.constant 0 : index
    %c0_0 = arith.constant 0 : index
    %0 = vector.load %arg1[%c0, %c0_0] : memref<56x288xbf16, #tpu.memory_space<vmem>>, vector<56x288xbf16>
    %c0_1 = arith.constant 0 : index
    %c0_2 = arith.constant 0 : index
    %1 = vector.load %arg2[%c0_1, %c0_2] : memref<288x64xbf16, #tpu.memory_space<vmem>>, vector<288x64xbf16>
    %cst = arith.constant dense<0.000000e+00> : vector<56x64xf32>
    %2 = tpu.matmul %0, %1, %cst {dimension_numbers = #tpu.dot_dimension_numbers<[1], [0], [0], [1], [0, 0, 1, 1], [], []>} : vector<56x288xbf16>, vector<288x64xbf16>, vector<56x64xf32> -> vector<56x64xf32>
    %c0_3 = arith.constant 0 : index
    %c0_4 = arith.constant 0 : index
    %3 = vector.load %arg3[%c0_3, %c0_4] : memref<1x64xf32, #tpu.memory_space<vmem>>, vector<1x64xf32>
    %4 = vector.broadcast %3 : vector<1x64xf32> to vector<56x64xf32>
    %5 = arith.addf %2, %4 : vector<56x64xf32>
    %cst_5 = arith.constant 0.000000e+00 : f32
    %6 = vector.broadcast %cst_5 : f32 to vector<56x64xf32>
    %7 = arith.maximumf %5, %6 : vector<56x64xf32>
    %8 = arith.truncf %7 : vector<56x64xf32> to vector<56x64xbf16>
    %c0_6 = arith.constant 0 : index
    %c0_7 = arith.constant 0 : index
    %9 = vector.load %arg4[%c0_6, %c0_7] : memref<56x64xbf16, #tpu.memory_space<vmem>>, vector<56x64xbf16>
    tpu.vector_store %arg4[%c0_6, %c0_7], %8 {strides = array<i32>} : memref<56x64xbf16, #tpu.memory_space<vmem>>, vector<56x64xbf16>,
    return
  }
  func.func @transform_0(%arg0: i32) -> (i32, i32) {
    %c0_i32 = arith.constant 0 : i32
    %c0_i32_0 = arith.constant 0 : i32
    return %arg0, %c0_i32 : i32, i32
  }
  func.func @transform_1(%arg0: i32) -> (i32, i32) {
    %c0_i32 = arith.constant 0 : i32
    %c0_i32_0 = arith.constant 0 : i32
    %c0_i32_1 = arith.constant 0 : i32
    return %c0_i32, %c0_i32_0 : i32, i32
  }
  func.func @transform_2(%arg0: i32) -> (i32, i32) {
    %c0_i32 = arith.constant 0 : i32
    %c0_i32_0 = arith.constant 0 : i32
    %c0_i32_1 = arith.constant 0 : i32
    return %c0_i32, %c0_i32_0 : i32, i32
  }
  func.func @transform_3(%arg0: i32) -> (i32, i32) {
    %c0_i32 = arith.constant 0 : i32
    %c0_i32_0 = arith.constant 0 : i32
    return %arg0, %c0_i32 : i32, i32
  }
}

module attributes {stable_mosaic.version = 11 : i64} {
  func.func @_tail_kernel(%arg0: memref<5x5x2x64xbf16, #tpu.memory_space<vmem>>, %arg1: memref<3x3x64x128xbf16, #tpu.memory_space<vmem>>, %arg2: memref<1x128xf32, #tpu.memory_space<vmem>>, %arg3: memref<3x3x128x256xbf16, #tpu.memory_space<vmem>>, %arg4: memref<1x256xf32, #tpu.memory_space<vmem>>, %arg5: memref<256x100xf32, #tpu.memory_space<vmem>>, %arg6: memref<1x100xf32, #tpu.memory_space<vmem>>, %arg7: memref<100x1xf32, #tpu.memory_space<vmem>>, %arg8: memref<1x1xf32, #tpu.memory_space<vmem>>, %arg9: memref<256x100xf32, #tpu.memory_space<vmem>>, %arg10: memref<1x100xf32, #tpu.memory_space<vmem>>, %arg11: memref<100x2xf32, #tpu.memory_space<vmem>>, %arg12: memref<1x2xf32, #tpu.memory_space<vmem>>, %arg13: memref<100x2xf32, #tpu.memory_space<vmem>>, %arg14: memref<1x2xf32, #tpu.memory_space<vmem>>, %arg15: memref<2x1xf32, #tpu.memory_space<vmem>>, %arg16: memref<2x2xf32, #tpu.memory_space<vmem>>, %arg17: memref<2x2xf32, #tpu.memory_space<vmem>>) attributes {dimension_semantics = [], scalar_prefetch = 0 : i64, scratch_operands = 0 : i64, tpu.core_type = #tpu.core_type<tc>} {
    %c0 = arith.constant 0 : index
    %c0_0 = arith.constant 0 : index
    %c0_1 = arith.constant 0 : index
    %c0_2 = arith.constant 0 : index
    %0 = vector.load %arg0[%c0, %c0_0, %c0_1, %c0_2] : memref<5x5x2x64xbf16, #tpu.memory_space<vmem>>, vector<5x5x2x64xbf16>
    %c0_3 = arith.constant 0 : index
    %c0_4 = arith.constant 0 : index
    %c0_5 = arith.constant 0 : index
    %c0_6 = arith.constant 0 : index
    %1 = vector.load %arg1[%c0_3, %c0_4, %c0_5, %c0_6] : memref<3x3x64x128xbf16, #tpu.memory_space<vmem>>, vector<3x3x64x128xbf16>
    %c0_7 = arith.constant 0 : index
    %c0_8 = arith.constant 0 : index
    %c0_9 = arith.constant 0 : index
    %c0_10 = arith.constant 0 : index
    %2 = vector.load %arg3[%c0_7, %c0_8, %c0_9, %c0_10] : memref<3x3x128x256xbf16, #tpu.memory_space<vmem>>, vector<3x3x128x256xbf16>
    %c0_11 = arith.constant 0 : index
    %c0_12 = arith.constant 0 : index
    %3 = vector.load %arg2[%c0_11, %c0_12] : memref<1x128xf32, #tpu.memory_space<vmem>>, vector<1x128xf32>
    %c0_13 = arith.constant 0 : index
    %c0_14 = arith.constant 0 : index
    %4 = vector.load %arg4[%c0_13, %c0_14] : memref<1x256xf32, #tpu.memory_space<vmem>>, vector<1x256xf32>
    %cst = arith.constant 0.000000e+00 : f32
    %5 = vector.broadcast %cst : f32 to vector<2x256xf32>
    %cst_15 = arith.constant 0.000000e+00 : f32
    %6 = vector.broadcast %cst_15 : f32 to vector<2x128xf32>
    %7 = vector.extract_strided_slice %0 {offsets = [0, 0, 0, 0], sizes = [1, 1, 2, 64], strides = [1, 1, 1, 1]} : vector<5x5x2x64xbf16> to vector<1x1x2x64xbf16>
    %8 = vector.shape_cast %7 : vector<1x1x2x64xbf16> to vector<2x64xbf16>
    %9 = vector.extract_strided_slice %1 {offsets = [0, 0, 0, 0], sizes = [1, 1, 64, 128], strides = [1, 1, 1, 1]} : vector<3x3x64x128xbf16> to vector<1x1x64x128xbf16>
    %10 = vector.shape_cast %9 : vector<1x1x64x128xbf16> to vector<64x128xbf16>
    %cst_16 = arith.constant dense<0.000000e+00> : vector<2x128xf32>
    %11 = tpu.matmul %8, %10, %cst_16 {dimension_numbers = #tpu.dot_dimension_numbers<[1], [0], [0], [1], [0, 0, 1, 1], [], []>} : vector<2x64xbf16>, vector<64x128xbf16>, vector<2x128xf32> -> vector<2x128xf32>
    %12 = arith.addf %6, %11 : vector<2x128xf32>
    %13 = vector.extract_strided_slice %0 {offsets = [0, 1, 0, 0], sizes = [1, 1, 2, 64], strides = [1, 1, 1, 1]} : vector<5x5x2x64xbf16> to vector<1x1x2x64xbf16>
    %14 = vector.shape_cast %13 : vector<1x1x2x64xbf16> to vector<2x64xbf16>
    %15 = vector.extract_strided_slice %1 {offsets = [0, 1, 0, 0], sizes = [1, 1, 64, 128], strides = [1, 1, 1, 1]} : vector<3x3x64x128xbf16> to vector<1x1x64x128xbf16>
    %16 = vector.shape_cast %15 : vector<1x1x64x128xbf16> to vector<64x128xbf16>
    %cst_17 = arith.constant dense<0.000000e+00> : vector<2x128xf32>
    %17 = tpu.matmul %14, %16, %cst_17 {dimension_numbers = #tpu.dot_dimension_numbers<[1], [0], [0], [1], [0, 0, 1, 1], [], []>} : vector<2x64xbf16>, vector<64x128xbf16>, vector<2x128xf32> -> vector<2x128xf32>
    %18 = arith.addf %12, %17 : vector<2x128xf32>
    %19 = vector.extract_strided_slice %0 {offsets = [0, 2, 0, 0], sizes = [1, 1, 2, 64], strides = [1, 1, 1, 1]} : vector<5x5x2x64xbf16> to vector<1x1x2x64xbf16>
    %20 = vector.shape_cast %19 : vector<1x1x2x64xbf16> to vector<2x64xbf16>
    %21 = vector.extract_strided_slice %1 {offsets = [0, 2, 0, 0], sizes = [1, 1, 64, 128], strides = [1, 1, 1, 1]} : vector<3x3x64x128xbf16> to vector<1x1x64x128xbf16>
    %22 = vector.shape_cast %21 : vector<1x1x64x128xbf16> to vector<64x128xbf16>
    %cst_18 = arith.constant dense<0.000000e+00> : vector<2x128xf32>
    %23 = tpu.matmul %20, %22, %cst_18 {dimension_numbers = #tpu.dot_dimension_numbers<[1], [0], [0], [1], [0, 0, 1, 1], [], []>} : vector<2x64xbf16>, vector<64x128xbf16>, vector<2x128xf32> -> vector<2x128xf32>
    %24 = arith.addf %18, %23 : vector<2x128xf32>
    %25 = vector.extract_strided_slice %0 {offsets = [1, 0, 0, 0], sizes = [1, 1, 2, 64], strides = [1, 1, 1, 1]} : vector<5x5x2x64xbf16> to vector<1x1x2x64xbf16>
    %26 = vector.shape_cast %25 : vector<1x1x2x64xbf16> to vector<2x64xbf16>
    %27 = vector.extract_strided_slice %1 {offsets = [1, 0, 0, 0], sizes = [1, 1, 64, 128], strides = [1, 1, 1, 1]} : vector<3x3x64x128xbf16> to vector<1x1x64x128xbf16>
    %28 = vector.shape_cast %27 : vector<1x1x64x128xbf16> to vector<64x128xbf16>
    %cst_19 = arith.constant dense<0.000000e+00> : vector<2x128xf32>
    %29 = tpu.matmul %26, %28, %cst_19 {dimension_numbers = #tpu.dot_dimension_numbers<[1], [0], [0], [1], [0, 0, 1, 1], [], []>} : vector<2x64xbf16>, vector<64x128xbf16>, vector<2x128xf32> -> vector<2x128xf32>
    %30 = arith.addf %24, %29 : vector<2x128xf32>
    %31 = vector.extract_strided_slice %0 {offsets = [1, 1, 0, 0], sizes = [1, 1, 2, 64], strides = [1, 1, 1, 1]} : vector<5x5x2x64xbf16> to vector<1x1x2x64xbf16>
    %32 = vector.shape_cast %31 : vector<1x1x2x64xbf16> to vector<2x64xbf16>
    %33 = vector.extract_strided_slice %1 {offsets = [1, 1, 0, 0], sizes = [1, 1, 64, 128], strides = [1, 1, 1, 1]} : vector<3x3x64x128xbf16> to vector<1x1x64x128xbf16>
    %34 = vector.shape_cast %33 : vector<1x1x64x128xbf16> to vector<64x128xbf16>
    %cst_20 = arith.constant dense<0.000000e+00> : vector<2x128xf32>
    %35 = tpu.matmul %32, %34, %cst_20 {dimension_numbers = #tpu.dot_dimension_numbers<[1], [0], [0], [1], [0, 0, 1, 1], [], []>} : vector<2x64xbf16>, vector<64x128xbf16>, vector<2x128xf32> -> vector<2x128xf32>
    %36 = arith.addf %30, %35 : vector<2x128xf32>
    %37 = vector.extract_strided_slice %0 {offsets = [1, 2, 0, 0], sizes = [1, 1, 2, 64], strides = [1, 1, 1, 1]} : vector<5x5x2x64xbf16> to vector<1x1x2x64xbf16>
    %38 = vector.shape_cast %37 : vector<1x1x2x64xbf16> to vector<2x64xbf16>
    %39 = vector.extract_strided_slice %1 {offsets = [1, 2, 0, 0], sizes = [1, 1, 64, 128], strides = [1, 1, 1, 1]} : vector<3x3x64x128xbf16> to vector<1x1x64x128xbf16>
    %40 = vector.shape_cast %39 : vector<1x1x64x128xbf16> to vector<64x128xbf16>
    %cst_21 = arith.constant dense<0.000000e+00> : vector<2x128xf32>
    %41 = tpu.matmul %38, %40, %cst_21 {dimension_numbers = #tpu.dot_dimension_numbers<[1], [0], [0], [1], [0, 0, 1, 1], [], []>} : vector<2x64xbf16>, vector<64x128xbf16>, vector<2x128xf32> -> vector<2x128xf32>
    %42 = arith.addf %36, %41 : vector<2x128xf32>
    %43 = vector.extract_strided_slice %0 {offsets = [2, 0, 0, 0], sizes = [1, 1, 2, 64], strides = [1, 1, 1, 1]} : vector<5x5x2x64xbf16> to vector<1x1x2x64xbf16>
    %44 = vector.shape_cast %43 : vector<1x1x2x64xbf16> to vector<2x64xbf16>
    %45 = vector.extract_strided_slice %1 {offsets = [2, 0, 0, 0], sizes = [1, 1, 64, 128], strides = [1, 1, 1, 1]} : vector<3x3x64x128xbf16> to vector<1x1x64x128xbf16>
    %46 = vector.shape_cast %45 : vector<1x1x64x128xbf16> to vector<64x128xbf16>
    %cst_22 = arith.constant dense<0.000000e+00> : vector<2x128xf32>
    %47 = tpu.matmul %44, %46, %cst_22 {dimension_numbers = #tpu.dot_dimension_numbers<[1], [0], [0], [1], [0, 0, 1, 1], [], []>} : vector<2x64xbf16>, vector<64x128xbf16>, vector<2x128xf32> -> vector<2x128xf32>
    %48 = arith.addf %42, %47 : vector<2x128xf32>
    %49 = vector.extract_strided_slice %0 {offsets = [2, 1, 0, 0], sizes = [1, 1, 2, 64], strides = [1, 1, 1, 1]} : vector<5x5x2x64xbf16> to vector<1x1x2x64xbf16>
    %50 = vector.shape_cast %49 : vector<1x1x2x64xbf16> to vector<2x64xbf16>
    %51 = vector.extract_strided_slice %1 {offsets = [2, 1, 0, 0], sizes = [1, 1, 64, 128], strides = [1, 1, 1, 1]} : vector<3x3x64x128xbf16> to vector<1x1x64x128xbf16>
    %52 = vector.shape_cast %51 : vector<1x1x64x128xbf16> to vector<64x128xbf16>
    %cst_23 = arith.constant dense<0.000000e+00> : vector<2x128xf32>
    %53 = tpu.matmul %50, %52, %cst_23 {dimension_numbers = #tpu.dot_dimension_numbers<[1], [0], [0], [1], [0, 0, 1, 1], [], []>} : vector<2x64xbf16>, vector<64x128xbf16>, vector<2x128xf32> -> vector<2x128xf32>
    %54 = arith.addf %48, %53 : vector<2x128xf32>
    %55 = vector.extract_strided_slice %0 {offsets = [2, 2, 0, 0], sizes = [1, 1, 2, 64], strides = [1, 1, 1, 1]} : vector<5x5x2x64xbf16> to vector<1x1x2x64xbf16>
    %56 = vector.shape_cast %55 : vector<1x1x2x64xbf16> to vector<2x64xbf16>
    %57 = vector.extract_strided_slice %1 {offsets = [2, 2, 0, 0], sizes = [1, 1, 64, 128], strides = [1, 1, 1, 1]} : vector<3x3x64x128xbf16> to vector<1x1x64x128xbf16>
    %58 = vector.shape_cast %57 : vector<1x1x64x128xbf16> to vector<64x128xbf16>
    %cst_24 = arith.constant dense<0.000000e+00> : vector<2x128xf32>
    %59 = tpu.matmul %56, %58, %cst_24 {dimension_numbers = #tpu.dot_dimension_numbers<[1], [0], [0], [1], [0, 0, 1, 1], [], []>} : vector<2x64xbf16>, vector<64x128xbf16>, vector<2x128xf32> -> vector<2x128xf32>
    %60 = arith.addf %54, %59 : vector<2x128xf32>
    %61 = vector.broadcast %3 : vector<1x128xf32> to vector<2x128xf32>
    %62 = arith.addf %60, %61 : vector<2x128xf32>
    %cst_25 = arith.constant 0.000000e+00 : f32
    %63 = vector.broadcast %cst_25 : f32 to vector<2x128xf32>
    %64 = arith.maximumf %62, %63 : vector<2x128xf32>
    %65 = arith.truncf %64 : vector<2x128xf32> to vector<2x128xbf16>
    %66 = vector.extract_strided_slice %2 {offsets = [0, 0, 0, 0], sizes = [1, 1, 128, 256], strides = [1, 1, 1, 1]} : vector<3x3x128x256xbf16> to vector<1x1x128x256xbf16>
    %67 = vector.shape_cast %66 : vector<1x1x128x256xbf16> to vector<128x256xbf16>
    %cst_26 = arith.constant dense<0.000000e+00> : vector<2x256xf32>
    %68 = tpu.matmul %65, %67, %cst_26 {dimension_numbers = #tpu.dot_dimension_numbers<[1], [0], [0], [1], [0, 0, 1, 1], [], []>} : vector<2x128xbf16>, vector<128x256xbf16>, vector<2x256xf32> -> vector<2x256xf32>
    %69 = arith.addf %5, %68 : vector<2x256xf32>
    %cst_27 = arith.constant 0.000000e+00 : f32
    %70 = vector.broadcast %cst_27 : f32 to vector<2x128xf32>
    %71 = vector.extract_strided_slice %0 {offsets = [0, 1, 0, 0], sizes = [1, 1, 2, 64], strides = [1, 1, 1, 1]} : vector<5x5x2x64xbf16> to vector<1x1x2x64xbf16>
    %72 = vector.shape_cast %71 : vector<1x1x2x64xbf16> to vector<2x64xbf16>
    %73 = vector.extract_strided_slice %1 {offsets = [0, 0, 0, 0], sizes = [1, 1, 64, 128], strides = [1, 1, 1, 1]} : vector<3x3x64x128xbf16> to vector<1x1x64x128xbf16>
    %74 = vector.shape_cast %73 : vector<1x1x64x128xbf16> to vector<64x128xbf16>
    %cst_28 = arith.constant dense<0.000000e+00> : vector<2x128xf32>
    %75 = tpu.matmul %72, %74, %cst_28 {dimension_numbers = #tpu.dot_dimension_numbers<[1], [0], [0], [1], [0, 0, 1, 1], [], []>} : vector<2x64xbf16>, vector<64x128xbf16>, vector<2x128xf32> -> vector<2x128xf32>
    %76 = arith.addf %70, %75 : vector<2x128xf32>
    %77 = vector.extract_strided_slice %0 {offsets = [0, 2, 0, 0], sizes = [1, 1, 2, 64], strides = [1, 1, 1, 1]} : vector<5x5x2x64xbf16> to vector<1x1x2x64xbf16>
    %78 = vector.shape_cast %77 : vector<1x1x2x64xbf16> to vector<2x64xbf16>
    %79 = vector.extract_strided_slice %1 {offsets = [0, 1, 0, 0], sizes = [1, 1, 64, 128], strides = [1, 1, 1, 1]} : vector<3x3x64x128xbf16> to vector<1x1x64x128xbf16>
    %80 = vector.shape_cast %79 : vector<1x1x64x128xbf16> to vector<64x128xbf16>
    %cst_29 = arith.constant dense<0.000000e+00> : vector<2x128xf32>
    %81 = tpu.matmul %78, %80, %cst_29 {dimension_numbers = #tpu.dot_dimension_numbers<[1], [0], [0], [1], [0, 0, 1, 1], [], []>} : vector<2x64xbf16>, vector<64x128xbf16>, vector<2x128xf32> -> vector<2x128xf32>
    %82 = arith.addf %76, %81 : vector<2x128xf32>
    %83 = vector.extract_strided_slice %0 {offsets = [0, 3, 0, 0], sizes = [1, 1, 2, 64], strides = [1, 1, 1, 1]} : vector<5x5x2x64xbf16> to vector<1x1x2x64xbf16>
    %84 = vector.shape_cast %83 : vector<1x1x2x64xbf16> to vector<2x64xbf16>
    %85 = vector.extract_strided_slice %1 {offsets = [0, 2, 0, 0], sizes = [1, 1, 64, 128], strides = [1, 1, 1, 1]} : vector<3x3x64x128xbf16> to vector<1x1x64x128xbf16>
    %86 = vector.shape_cast %85 : vector<1x1x64x128xbf16> to vector<64x128xbf16>
    %cst_30 = arith.constant dense<0.000000e+00> : vector<2x128xf32>
    %87 = tpu.matmul %84, %86, %cst_30 {dimension_numbers = #tpu.dot_dimension_numbers<[1], [0], [0], [1], [0, 0, 1, 1], [], []>} : vector<2x64xbf16>, vector<64x128xbf16>, vector<2x128xf32> -> vector<2x128xf32>
    %88 = arith.addf %82, %87 : vector<2x128xf32>
    %89 = vector.extract_strided_slice %0 {offsets = [1, 1, 0, 0], sizes = [1, 1, 2, 64], strides = [1, 1, 1, 1]} : vector<5x5x2x64xbf16> to vector<1x1x2x64xbf16>
    %90 = vector.shape_cast %89 : vector<1x1x2x64xbf16> to vector<2x64xbf16>
    %91 = vector.extract_strided_slice %1 {offsets = [1, 0, 0, 0], sizes = [1, 1, 64, 128], strides = [1, 1, 1, 1]} : vector<3x3x64x128xbf16> to vector<1x1x64x128xbf16>
    %92 = vector.shape_cast %91 : vector<1x1x64x128xbf16> to vector<64x128xbf16>
    %cst_31 = arith.constant dense<0.000000e+00> : vector<2x128xf32>
    %93 = tpu.matmul %90, %92, %cst_31 {dimension_numbers = #tpu.dot_dimension_numbers<[1], [0], [0], [1], [0, 0, 1, 1], [], []>} : vector<2x64xbf16>, vector<64x128xbf16>, vector<2x128xf32> -> vector<2x128xf32>
    %94 = arith.addf %88, %93 : vector<2x128xf32>
    %95 = vector.extract_strided_slice %0 {offsets = [1, 2, 0, 0], sizes = [1, 1, 2, 64], strides = [1, 1, 1, 1]} : vector<5x5x2x64xbf16> to vector<1x1x2x64xbf16>
    %96 = vector.shape_cast %95 : vector<1x1x2x64xbf16> to vector<2x64xbf16>
    %97 = vector.extract_strided_slice %1 {offsets = [1, 1, 0, 0], sizes = [1, 1, 64, 128], strides = [1, 1, 1, 1]} : vector<3x3x64x128xbf16> to vector<1x1x64x128xbf16>
    %98 = vector.shape_cast %97 : vector<1x1x64x128xbf16> to vector<64x128xbf16>
    %cst_32 = arith.constant dense<0.000000e+00> : vector<2x128xf32>
    %99 = tpu.matmul %96, %98, %cst_32 {dimension_numbers = #tpu.dot_dimension_numbers<[1], [0], [0], [1], [0, 0, 1, 1], [], []>} : vector<2x64xbf16>, vector<64x128xbf16>, vector<2x128xf32> -> vector<2x128xf32>
    %100 = arith.addf %94, %99 : vector<2x128xf32>
    %101 = vector.extract_strided_slice %0 {offsets = [1, 3, 0, 0], sizes = [1, 1, 2, 64], strides = [1, 1, 1, 1]} : vector<5x5x2x64xbf16> to vector<1x1x2x64xbf16>
    %102 = vector.shape_cast %101 : vector<1x1x2x64xbf16> to vector<2x64xbf16>
    %103 = vector.extract_strided_slice %1 {offsets = [1, 2, 0, 0], sizes = [1, 1, 64, 128], strides = [1, 1, 1, 1]} : vector<3x3x64x128xbf16> to vector<1x1x64x128xbf16>
    %104 = vector.shape_cast %103 : vector<1x1x64x128xbf16> to vector<64x128xbf16>
    %cst_33 = arith.constant dense<0.000000e+00> : vector<2x128xf32>
    %105 = tpu.matmul %102, %104, %cst_33 {dimension_numbers = #tpu.dot_dimension_numbers<[1], [0], [0], [1], [0, 0, 1, 1], [], []>} : vector<2x64xbf16>, vector<64x128xbf16>, vector<2x128xf32> -> vector<2x128xf32>
    %106 = arith.addf %100, %105 : vector<2x128xf32>
    %107 = vector.extract_strided_slice %0 {offsets = [2, 1, 0, 0], sizes = [1, 1, 2, 64], strides = [1, 1, 1, 1]} : vector<5x5x2x64xbf16> to vector<1x1x2x64xbf16>
    %108 = vector.shape_cast %107 : vector<1x1x2x64xbf16> to vector<2x64xbf16>
    %109 = vector.extract_strided_slice %1 {offsets = [2, 0, 0, 0], sizes = [1, 1, 64, 128], strides = [1, 1, 1, 1]} : vector<3x3x64x128xbf16> to vector<1x1x64x128xbf16>
    %110 = vector.shape_cast %109 : vector<1x1x64x128xbf16> to vector<64x128xbf16>
    %cst_34 = arith.constant dense<0.000000e+00> : vector<2x128xf32>
    %111 = tpu.matmul %108, %110, %cst_34 {dimension_numbers = #tpu.dot_dimension_numbers<[1], [0], [0], [1], [0, 0, 1, 1], [], []>} : vector<2x64xbf16>, vector<64x128xbf16>, vector<2x128xf32> -> vector<2x128xf32>
    %112 = arith.addf %106, %111 : vector<2x128xf32>
    %113 = vector.extract_strided_slice %0 {offsets = [2, 2, 0, 0], sizes = [1, 1, 2, 64], strides = [1, 1, 1, 1]} : vector<5x5x2x64xbf16> to vector<1x1x2x64xbf16>
    %114 = vector.shape_cast %113 : vector<1x1x2x64xbf16> to vector<2x64xbf16>
    %115 = vector.extract_strided_slice %1 {offsets = [2, 1, 0, 0], sizes = [1, 1, 64, 128], strides = [1, 1, 1, 1]} : vector<3x3x64x128xbf16> to vector<1x1x64x128xbf16>
    %116 = vector.shape_cast %115 : vector<1x1x64x128xbf16> to vector<64x128xbf16>
    %cst_35 = arith.constant dense<0.000000e+00> : vector<2x128xf32>
    %117 = tpu.matmul %114, %116, %cst_35 {dimension_numbers = #tpu.dot_dimension_numbers<[1], [0], [0], [1], [0, 0, 1, 1], [], []>} : vector<2x64xbf16>, vector<64x128xbf16>, vector<2x128xf32> -> vector<2x128xf32>
    %118 = arith.addf %112, %117 : vector<2x128xf32>
    %119 = vector.extract_strided_slice %0 {offsets = [2, 3, 0, 0], sizes = [1, 1, 2, 64], strides = [1, 1, 1, 1]} : vector<5x5x2x64xbf16> to vector<1x1x2x64xbf16>
    %120 = vector.shape_cast %119 : vector<1x1x2x64xbf16> to vector<2x64xbf16>
    %121 = vector.extract_strided_slice %1 {offsets = [2, 2, 0, 0], sizes = [1, 1, 64, 128], strides = [1, 1, 1, 1]} : vector<3x3x64x128xbf16> to vector<1x1x64x128xbf16>
    %122 = vector.shape_cast %121 : vector<1x1x64x128xbf16> to vector<64x128xbf16>
    %cst_36 = arith.constant dense<0.000000e+00> : vector<2x128xf32>
    %123 = tpu.matmul %120, %122, %cst_36 {dimension_numbers = #tpu.dot_dimension_numbers<[1], [0], [0], [1], [0, 0, 1, 1], [], []>} : vector<2x64xbf16>, vector<64x128xbf16>, vector<2x128xf32> -> vector<2x128xf32>
    %124 = arith.addf %118, %123 : vector<2x128xf32>
    %125 = vector.broadcast %3 : vector<1x128xf32> to vector<2x128xf32>
    %126 = arith.addf %124, %125 : vector<2x128xf32>
    %cst_37 = arith.constant 0.000000e+00 : f32
    %127 = vector.broadcast %cst_37 : f32 to vector<2x128xf32>
    %128 = arith.maximumf %126, %127 : vector<2x128xf32>
    %129 = arith.truncf %128 : vector<2x128xf32> to vector<2x128xbf16>
    %130 = vector.extract_strided_slice %2 {offsets = [0, 1, 0, 0], sizes = [1, 1, 128, 256], strides = [1, 1, 1, 1]} : vector<3x3x128x256xbf16> to vector<1x1x128x256xbf16>
    %131 = vector.shape_cast %130 : vector<1x1x128x256xbf16> to vector<128x256xbf16>
    %cst_38 = arith.constant dense<0.000000e+00> : vector<2x256xf32>
    %132 = tpu.matmul %129, %131, %cst_38 {dimension_numbers = #tpu.dot_dimension_numbers<[1], [0], [0], [1], [0, 0, 1, 1], [], []>} : vector<2x128xbf16>, vector<128x256xbf16>, vector<2x256xf32> -> vector<2x256xf32>
    %133 = arith.addf %69, %132 : vector<2x256xf32>
    %cst_39 = arith.constant 0.000000e+00 : f32
    %134 = vector.broadcast %cst_39 : f32 to vector<2x128xf32>
    %135 = vector.extract_strided_slice %0 {offsets = [0, 2, 0, 0], sizes = [1, 1, 2, 64], strides = [1, 1, 1, 1]} : vector<5x5x2x64xbf16> to vector<1x1x2x64xbf16>
    %136 = vector.shape_cast %135 : vector<1x1x2x64xbf16> to vector<2x64xbf16>
    %137 = vector.extract_strided_slice %1 {offsets = [0, 0, 0, 0], sizes = [1, 1, 64, 128], strides = [1, 1, 1, 1]} : vector<3x3x64x128xbf16> to vector<1x1x64x128xbf16>
    %138 = vector.shape_cast %137 : vector<1x1x64x128xbf16> to vector<64x128xbf16>
    %cst_40 = arith.constant dense<0.000000e+00> : vector<2x128xf32>
    %139 = tpu.matmul %136, %138, %cst_40 {dimension_numbers = #tpu.dot_dimension_numbers<[1], [0], [0], [1], [0, 0, 1, 1], [], []>} : vector<2x64xbf16>, vector<64x128xbf16>, vector<2x128xf32> -> vector<2x128xf32>
    %140 = arith.addf %134, %139 : vector<2x128xf32>
    %141 = vector.extract_strided_slice %0 {offsets = [0, 3, 0, 0], sizes = [1, 1, 2, 64], strides = [1, 1, 1, 1]} : vector<5x5x2x64xbf16> to vector<1x1x2x64xbf16>
    %142 = vector.shape_cast %141 : vector<1x1x2x64xbf16> to vector<2x64xbf16>
    %143 = vector.extract_strided_slice %1 {offsets = [0, 1, 0, 0], sizes = [1, 1, 64, 128], strides = [1, 1, 1, 1]} : vector<3x3x64x128xbf16> to vector<1x1x64x128xbf16>
    %144 = vector.shape_cast %143 : vector<1x1x64x128xbf16> to vector<64x128xbf16>
    %cst_41 = arith.constant dense<0.000000e+00> : vector<2x128xf32>
    %145 = tpu.matmul %142, %144, %cst_41 {dimension_numbers = #tpu.dot_dimension_numbers<[1], [0], [0], [1], [0, 0, 1, 1], [], []>} : vector<2x64xbf16>, vector<64x128xbf16>, vector<2x128xf32> -> vector<2x128xf32>
    %146 = arith.addf %140, %145 : vector<2x128xf32>
    %147 = vector.extract_strided_slice %0 {offsets = [0, 4, 0, 0], sizes = [1, 1, 2, 64], strides = [1, 1, 1, 1]} : vector<5x5x2x64xbf16> to vector<1x1x2x64xbf16>
    %148 = vector.shape_cast %147 : vector<1x1x2x64xbf16> to vector<2x64xbf16>
    %149 = vector.extract_strided_slice %1 {offsets = [0, 2, 0, 0], sizes = [1, 1, 64, 128], strides = [1, 1, 1, 1]} : vector<3x3x64x128xbf16> to vector<1x1x64x128xbf16>
    %150 = vector.shape_cast %149 : vector<1x1x64x128xbf16> to vector<64x128xbf16>
    %cst_42 = arith.constant dense<0.000000e+00> : vector<2x128xf32>
    %151 = tpu.matmul %148, %150, %cst_42 {dimension_numbers = #tpu.dot_dimension_numbers<[1], [0], [0], [1], [0, 0, 1, 1], [], []>} : vector<2x64xbf16>, vector<64x128xbf16>, vector<2x128xf32> -> vector<2x128xf32>
    %152 = arith.addf %146, %151 : vector<2x128xf32>
    %153 = vector.extract_strided_slice %0 {offsets = [1, 2, 0, 0], sizes = [1, 1, 2, 64], strides = [1, 1, 1, 1]} : vector<5x5x2x64xbf16> to vector<1x1x2x64xbf16>
    %154 = vector.shape_cast %153 : vector<1x1x2x64xbf16> to vector<2x64xbf16>
    %155 = vector.extract_strided_slice %1 {offsets = [1, 0, 0, 0], sizes = [1, 1, 64, 128], strides = [1, 1, 1, 1]} : vector<3x3x64x128xbf16> to vector<1x1x64x128xbf16>
    %156 = vector.shape_cast %155 : vector<1x1x64x128xbf16> to vector<64x128xbf16>
    %cst_43 = arith.constant dense<0.000000e+00> : vector<2x128xf32>
    %157 = tpu.matmul %154, %156, %cst_43 {dimension_numbers = #tpu.dot_dimension_numbers<[1], [0], [0], [1], [0, 0, 1, 1], [], []>} : vector<2x64xbf16>, vector<64x128xbf16>, vector<2x128xf32> -> vector<2x128xf32>
    %158 = arith.addf %152, %157 : vector<2x128xf32>
    %159 = vector.extract_strided_slice %0 {offsets = [1, 3, 0, 0], sizes = [1, 1, 2, 64], strides = [1, 1, 1, 1]} : vector<5x5x2x64xbf16> to vector<1x1x2x64xbf16>
    %160 = vector.shape_cast %159 : vector<1x1x2x64xbf16> to vector<2x64xbf16>
    %161 = vector.extract_strided_slice %1 {offsets = [1, 1, 0, 0], sizes = [1, 1, 64, 128], strides = [1, 1, 1, 1]} : vector<3x3x64x128xbf16> to vector<1x1x64x128xbf16>
    %162 = vector.shape_cast %161 : vector<1x1x64x128xbf16> to vector<64x128xbf16>
    %cst_44 = arith.constant dense<0.000000e+00> : vector<2x128xf32>
    %163 = tpu.matmul %160, %162, %cst_44 {dimension_numbers = #tpu.dot_dimension_numbers<[1], [0], [0], [1], [0, 0, 1, 1], [], []>} : vector<2x64xbf16>, vector<64x128xbf16>, vector<2x128xf32> -> vector<2x128xf32>
    %164 = arith.addf %158, %163 : vector<2x128xf32>
    %165 = vector.extract_strided_slice %0 {offsets = [1, 4, 0, 0], sizes = [1, 1, 2, 64], strides = [1, 1, 1, 1]} : vector<5x5x2x64xbf16> to vector<1x1x2x64xbf16>
    %166 = vector.shape_cast %165 : vector<1x1x2x64xbf16> to vector<2x64xbf16>
    %167 = vector.extract_strided_slice %1 {offsets = [1, 2, 0, 0], sizes = [1, 1, 64, 128], strides = [1, 1, 1, 1]} : vector<3x3x64x128xbf16> to vector<1x1x64x128xbf16>
    %168 = vector.shape_cast %167 : vector<1x1x64x128xbf16> to vector<64x128xbf16>
    %cst_45 = arith.constant dense<0.000000e+00> : vector<2x128xf32>
    %169 = tpu.matmul %166, %168, %cst_45 {dimension_numbers = #tpu.dot_dimension_numbers<[1], [0], [0], [1], [0, 0, 1, 1], [], []>} : vector<2x64xbf16>, vector<64x128xbf16>, vector<2x128xf32> -> vector<2x128xf32>
    %170 = arith.addf %164, %169 : vector<2x128xf32>
    %171 = vector.extract_strided_slice %0 {offsets = [2, 2, 0, 0], sizes = [1, 1, 2, 64], strides = [1, 1, 1, 1]} : vector<5x5x2x64xbf16> to vector<1x1x2x64xbf16>
    %172 = vector.shape_cast %171 : vector<1x1x2x64xbf16> to vector<2x64xbf16>
    %173 = vector.extract_strided_slice %1 {offsets = [2, 0, 0, 0], sizes = [1, 1, 64, 128], strides = [1, 1, 1, 1]} : vector<3x3x64x128xbf16> to vector<1x1x64x128xbf16>
    %174 = vector.shape_cast %173 : vector<1x1x64x128xbf16> to vector<64x128xbf16>
    %cst_46 = arith.constant dense<0.000000e+00> : vector<2x128xf32>
    %175 = tpu.matmul %172, %174, %cst_46 {dimension_numbers = #tpu.dot_dimension_numbers<[1], [0], [0], [1], [0, 0, 1, 1], [], []>} : vector<2x64xbf16>, vector<64x128xbf16>, vector<2x128xf32> -> vector<2x128xf32>
    %176 = arith.addf %170, %175 : vector<2x128xf32>
    %177 = vector.extract_strided_slice %0 {offsets = [2, 3, 0, 0], sizes = [1, 1, 2, 64], strides = [1, 1, 1, 1]} : vector<5x5x2x64xbf16> to vector<1x1x2x64xbf16>
    %178 = vector.shape_cast %177 : vector<1x1x2x64xbf16> to vector<2x64xbf16>
    %179 = vector.extract_strided_slice %1 {offsets = [2, 1, 0, 0], sizes = [1, 1, 64, 128], strides = [1, 1, 1, 1]} : vector<3x3x64x128xbf16> to vector<1x1x64x128xbf16>
    %180 = vector.shape_cast %179 : vector<1x1x64x128xbf16> to vector<64x128xbf16>
    %cst_47 = arith.constant dense<0.000000e+00> : vector<2x128xf32>
    %181 = tpu.matmul %178, %180, %cst_47 {dimension_numbers = #tpu.dot_dimension_numbers<[1], [0], [0], [1], [0, 0, 1, 1], [], []>} : vector<2x64xbf16>, vector<64x128xbf16>, vector<2x128xf32> -> vector<2x128xf32>
    %182 = arith.addf %176, %181 : vector<2x128xf32>
    %183 = vector.extract_strided_slice %0 {offsets = [2, 4, 0, 0], sizes = [1, 1, 2, 64], strides = [1, 1, 1, 1]} : vector<5x5x2x64xbf16> to vector<1x1x2x64xbf16>
    %184 = vector.shape_cast %183 : vector<1x1x2x64xbf16> to vector<2x64xbf16>
    %185 = vector.extract_strided_slice %1 {offsets = [2, 2, 0, 0], sizes = [1, 1, 64, 128], strides = [1, 1, 1, 1]} : vector<3x3x64x128xbf16> to vector<1x1x64x128xbf16>
    %186 = vector.shape_cast %185 : vector<1x1x64x128xbf16> to vector<64x128xbf16>
    %cst_48 = arith.constant dense<0.000000e+00> : vector<2x128xf32>
    %187 = tpu.matmul %184, %186, %cst_48 {dimension_numbers = #tpu.dot_dimension_numbers<[1], [0], [0], [1], [0, 0, 1, 1], [], []>} : vector<2x64xbf16>, vector<64x128xbf16>, vector<2x128xf32> -> vector<2x128xf32>
    %188 = arith.addf %182, %187 : vector<2x128xf32>
    %189 = vector.broadcast %3 : vector<1x128xf32> to vector<2x128xf32>
    %190 = arith.addf %188, %189 : vector<2x128xf32>
    %cst_49 = arith.constant 0.000000e+00 : f32
    %191 = vector.broadcast %cst_49 : f32 to vector<2x128xf32>
    %192 = arith.maximumf %190, %191 : vector<2x128xf32>
    %193 = arith.truncf %192 : vector<2x128xf32> to vector<2x128xbf16>
    %194 = vector.extract_strided_slice %2 {offsets = [0, 2, 0, 0], sizes = [1, 1, 128, 256], strides = [1, 1, 1, 1]} : vector<3x3x128x256xbf16> to vector<1x1x128x256xbf16>
    %195 = vector.shape_cast %194 : vector<1x1x128x256xbf16> to vector<128x256xbf16>
    %cst_50 = arith.constant dense<0.000000e+00> : vector<2x256xf32>
    %196 = tpu.matmul %193, %195, %cst_50 {dimension_numbers = #tpu.dot_dimension_numbers<[1], [0], [0], [1], [0, 0, 1, 1], [], []>} : vector<2x128xbf16>, vector<128x256xbf16>, vector<2x256xf32> -> vector<2x256xf32>
    %197 = arith.addf %133, %196 : vector<2x256xf32>
    %cst_51 = arith.constant 0.000000e+00 : f32
    %198 = vector.broadcast %cst_51 : f32 to vector<2x128xf32>
    %199 = vector.extract_strided_slice %0 {offsets = [1, 0, 0, 0], sizes = [1, 1, 2, 64], strides = [1, 1, 1, 1]} : vector<5x5x2x64xbf16> to vector<1x1x2x64xbf16>
    %200 = vector.shape_cast %199 : vector<1x1x2x64xbf16> to vector<2x64xbf16>
    %201 = vector.extract_strided_slice %1 {offsets = [0, 0, 0, 0], sizes = [1, 1, 64, 128], strides = [1, 1, 1, 1]} : vector<3x3x64x128xbf16> to vector<1x1x64x128xbf16>
    %202 = vector.shape_cast %201 : vector<1x1x64x128xbf16> to vector<64x128xbf16>
    %cst_52 = arith.constant dense<0.000000e+00> : vector<2x128xf32>
    %203 = tpu.matmul %200, %202, %cst_52 {dimension_numbers = #tpu.dot_dimension_numbers<[1], [0], [0], [1], [0, 0, 1, 1], [], []>} : vector<2x64xbf16>, vector<64x128xbf16>, vector<2x128xf32> -> vector<2x128xf32>
    %204 = arith.addf %198, %203 : vector<2x128xf32>
    %205 = vector.extract_strided_slice %0 {offsets = [1, 1, 0, 0], sizes = [1, 1, 2, 64], strides = [1, 1, 1, 1]} : vector<5x5x2x64xbf16> to vector<1x1x2x64xbf16>
    %206 = vector.shape_cast %205 : vector<1x1x2x64xbf16> to vector<2x64xbf16>
    %207 = vector.extract_strided_slice %1 {offsets = [0, 1, 0, 0], sizes = [1, 1, 64, 128], strides = [1, 1, 1, 1]} : vector<3x3x64x128xbf16> to vector<1x1x64x128xbf16>
    %208 = vector.shape_cast %207 : vector<1x1x64x128xbf16> to vector<64x128xbf16>
    %cst_53 = arith.constant dense<0.000000e+00> : vector<2x128xf32>
    %209 = tpu.matmul %206, %208, %cst_53 {dimension_numbers = #tpu.dot_dimension_numbers<[1], [0], [0], [1], [0, 0, 1, 1], [], []>} : vector<2x64xbf16>, vector<64x128xbf16>, vector<2x128xf32> -> vector<2x128xf32>
    %210 = arith.addf %204, %209 : vector<2x128xf32>
    %211 = vector.extract_strided_slice %0 {offsets = [1, 2, 0, 0], sizes = [1, 1, 2, 64], strides = [1, 1, 1, 1]} : vector<5x5x2x64xbf16> to vector<1x1x2x64xbf16>
    %212 = vector.shape_cast %211 : vector<1x1x2x64xbf16> to vector<2x64xbf16>
    %213 = vector.extract_strided_slice %1 {offsets = [0, 2, 0, 0], sizes = [1, 1, 64, 128], strides = [1, 1, 1, 1]} : vector<3x3x64x128xbf16> to vector<1x1x64x128xbf16>
    %214 = vector.shape_cast %213 : vector<1x1x64x128xbf16> to vector<64x128xbf16>
    %cst_54 = arith.constant dense<0.000000e+00> : vector<2x128xf32>
    %215 = tpu.matmul %212, %214, %cst_54 {dimension_numbers = #tpu.dot_dimension_numbers<[1], [0], [0], [1], [0, 0, 1, 1], [], []>} : vector<2x64xbf16>, vector<64x128xbf16>, vector<2x128xf32> -> vector<2x128xf32>
    %216 = arith.addf %210, %215 : vector<2x128xf32>
    %217 = vector.extract_strided_slice %0 {offsets = [2, 0, 0, 0], sizes = [1, 1, 2, 64], strides = [1, 1, 1, 1]} : vector<5x5x2x64xbf16> to vector<1x1x2x64xbf16>
    %218 = vector.shape_cast %217 : vector<1x1x2x64xbf16> to vector<2x64xbf16>
    %219 = vector.extract_strided_slice %1 {offsets = [1, 0, 0, 0], sizes = [1, 1, 64, 128], strides = [1, 1, 1, 1]} : vector<3x3x64x128xbf16> to vector<1x1x64x128xbf16>
    %220 = vector.shape_cast %219 : vector<1x1x64x128xbf16> to vector<64x128xbf16>
    %cst_55 = arith.constant dense<0.000000e+00> : vector<2x128xf32>
    %221 = tpu.matmul %218, %220, %cst_55 {dimension_numbers = #tpu.dot_dimension_numbers<[1], [0], [0], [1], [0, 0, 1, 1], [], []>} : vector<2x64xbf16>, vector<64x128xbf16>, vector<2x128xf32> -> vector<2x128xf32>
    %222 = arith.addf %216, %221 : vector<2x128xf32>
    %223 = vector.extract_strided_slice %0 {offsets = [2, 1, 0, 0], sizes = [1, 1, 2, 64], strides = [1, 1, 1, 1]} : vector<5x5x2x64xbf16> to vector<1x1x2x64xbf16>
    %224 = vector.shape_cast %223 : vector<1x1x2x64xbf16> to vector<2x64xbf16>
    %225 = vector.extract_strided_slice %1 {offsets = [1, 1, 0, 0], sizes = [1, 1, 64, 128], strides = [1, 1, 1, 1]} : vector<3x3x64x128xbf16> to vector<1x1x64x128xbf16>
    %226 = vector.shape_cast %225 : vector<1x1x64x128xbf16> to vector<64x128xbf16>
    %cst_56 = arith.constant dense<0.000000e+00> : vector<2x128xf32>
    %227 = tpu.matmul %224, %226, %cst_56 {dimension_numbers = #tpu.dot_dimension_numbers<[1], [0], [0], [1], [0, 0, 1, 1], [], []>} : vector<2x64xbf16>, vector<64x128xbf16>, vector<2x128xf32> -> vector<2x128xf32>
    %228 = arith.addf %222, %227 : vector<2x128xf32>
    %229 = vector.extract_strided_slice %0 {offsets = [2, 2, 0, 0], sizes = [1, 1, 2, 64], strides = [1, 1, 1, 1]} : vector<5x5x2x64xbf16> to vector<1x1x2x64xbf16>
    %230 = vector.shape_cast %229 : vector<1x1x2x64xbf16> to vector<2x64xbf16>
    %231 = vector.extract_strided_slice %1 {offsets = [1, 2, 0, 0], sizes = [1, 1, 64, 128], strides = [1, 1, 1, 1]} : vector<3x3x64x128xbf16> to vector<1x1x64x128xbf16>
    %232 = vector.shape_cast %231 : vector<1x1x64x128xbf16> to vector<64x128xbf16>
    %cst_57 = arith.constant dense<0.000000e+00> : vector<2x128xf32>
    %233 = tpu.matmul %230, %232, %cst_57 {dimension_numbers = #tpu.dot_dimension_numbers<[1], [0], [0], [1], [0, 0, 1, 1], [], []>} : vector<2x64xbf16>, vector<64x128xbf16>, vector<2x128xf32> -> vector<2x128xf32>
    %234 = arith.addf %228, %233 : vector<2x128xf32>
    %235 = vector.extract_strided_slice %0 {offsets = [3, 0, 0, 0], sizes = [1, 1, 2, 64], strides = [1, 1, 1, 1]} : vector<5x5x2x64xbf16> to vector<1x1x2x64xbf16>
    %236 = vector.shape_cast %235 : vector<1x1x2x64xbf16> to vector<2x64xbf16>
    %237 = vector.extract_strided_slice %1 {offsets = [2, 0, 0, 0], sizes = [1, 1, 64, 128], strides = [1, 1, 1, 1]} : vector<3x3x64x128xbf16> to vector<1x1x64x128xbf16>
    %238 = vector.shape_cast %237 : vector<1x1x64x128xbf16> to vector<64x128xbf16>
    %cst_58 = arith.constant dense<0.000000e+00> : vector<2x128xf32>
    %239 = tpu.matmul %236, %238, %cst_58 {dimension_numbers = #tpu.dot_dimension_numbers<[1], [0], [0], [1], [0, 0, 1, 1], [], []>} : vector<2x64xbf16>, vector<64x128xbf16>, vector<2x128xf32> -> vector<2x128xf32>
    %240 = arith.addf %234, %239 : vector<2x128xf32>
    %241 = vector.extract_strided_slice %0 {offsets = [3, 1, 0, 0], sizes = [1, 1, 2, 64], strides = [1, 1, 1, 1]} : vector<5x5x2x64xbf16> to vector<1x1x2x64xbf16>
    %242 = vector.shape_cast %241 : vector<1x1x2x64xbf16> to vector<2x64xbf16>
    %243 = vector.extract_strided_slice %1 {offsets = [2, 1, 0, 0], sizes = [1, 1, 64, 128], strides = [1, 1, 1, 1]} : vector<3x3x64x128xbf16> to vector<1x1x64x128xbf16>
    %244 = vector.shape_cast %243 : vector<1x1x64x128xbf16> to vector<64x128xbf16>
    %cst_59 = arith.constant dense<0.000000e+00> : vector<2x128xf32>
    %245 = tpu.matmul %242, %244, %cst_59 {dimension_numbers = #tpu.dot_dimension_numbers<[1], [0], [0], [1], [0, 0, 1, 1], [], []>} : vector<2x64xbf16>, vector<64x128xbf16>, vector<2x128xf32> -> vector<2x128xf32>
    %246 = arith.addf %240, %245 : vector<2x128xf32>
    %247 = vector.extract_strided_slice %0 {offsets = [3, 2, 0, 0], sizes = [1, 1, 2, 64], strides = [1, 1, 1, 1]} : vector<5x5x2x64xbf16> to vector<1x1x2x64xbf16>
    %248 = vector.shape_cast %247 : vector<1x1x2x64xbf16> to vector<2x64xbf16>
    %249 = vector.extract_strided_slice %1 {offsets = [2, 2, 0, 0], sizes = [1, 1, 64, 128], strides = [1, 1, 1, 1]} : vector<3x3x64x128xbf16> to vector<1x1x64x128xbf16>
    %250 = vector.shape_cast %249 : vector<1x1x64x128xbf16> to vector<64x128xbf16>
    %cst_60 = arith.constant dense<0.000000e+00> : vector<2x128xf32>
    %251 = tpu.matmul %248, %250, %cst_60 {dimension_numbers = #tpu.dot_dimension_numbers<[1], [0], [0], [1], [0, 0, 1, 1], [], []>} : vector<2x64xbf16>, vector<64x128xbf16>, vector<2x128xf32> -> vector<2x128xf32>
    %252 = arith.addf %246, %251 : vector<2x128xf32>
    %253 = vector.broadcast %3 : vector<1x128xf32> to vector<2x128xf32>
    %254 = arith.addf %252, %253 : vector<2x128xf32>
    %cst_61 = arith.constant 0.000000e+00 : f32
    %255 = vector.broadcast %cst_61 : f32 to vector<2x128xf32>
    %256 = arith.maximumf %254, %255 : vector<2x128xf32>
    %257 = arith.truncf %256 : vector<2x128xf32> to vector<2x128xbf16>
    %258 = vector.extract_strided_slice %2 {offsets = [1, 0, 0, 0], sizes = [1, 1, 128, 256], strides = [1, 1, 1, 1]} : vector<3x3x128x256xbf16> to vector<1x1x128x256xbf16>
    %259 = vector.shape_cast %258 : vector<1x1x128x256xbf16> to vector<128x256xbf16>
    %cst_62 = arith.constant dense<0.000000e+00> : vector<2x256xf32>
    %260 = tpu.matmul %257, %259, %cst_62 {dimension_numbers = #tpu.dot_dimension_numbers<[1], [0], [0], [1], [0, 0, 1, 1], [], []>} : vector<2x128xbf16>, vector<128x256xbf16>, vector<2x256xf32> -> vector<2x256xf32>
    %261 = arith.addf %197, %260 : vector<2x256xf32>
    %cst_63 = arith.constant 0.000000e+00 : f32
    %262 = vector.broadcast %cst_63 : f32 to vector<2x128xf32>
    %263 = vector.extract_strided_slice %0 {offsets = [1, 1, 0, 0], sizes = [1, 1, 2, 64], strides = [1, 1, 1, 1]} : vector<5x5x2x64xbf16> to vector<1x1x2x64xbf16>
    %264 = vector.shape_cast %263 : vector<1x1x2x64xbf16> to vector<2x64xbf16>
    %265 = vector.extract_strided_slice %1 {offsets = [0, 0, 0, 0], sizes = [1, 1, 64, 128], strides = [1, 1, 1, 1]} : vector<3x3x64x128xbf16> to vector<1x1x64x128xbf16>
    %266 = vector.shape_cast %265 : vector<1x1x64x128xbf16> to vector<64x128xbf16>
    %cst_64 = arith.constant dense<0.000000e+00> : vector<2x128xf32>
    %267 = tpu.matmul %264, %266, %cst_64 {dimension_numbers = #tpu.dot_dimension_numbers<[1], [0], [0], [1], [0, 0, 1, 1], [], []>} : vector<2x64xbf16>, vector<64x128xbf16>, vector<2x128xf32> -> vector<2x128xf32>
    %268 = arith.addf %262, %267 : vector<2x128xf32>
    %269 = vector.extract_strided_slice %0 {offsets = [1, 2, 0, 0], sizes = [1, 1, 2, 64], strides = [1, 1, 1, 1]} : vector<5x5x2x64xbf16> to vector<1x1x2x64xbf16>
    %270 = vector.shape_cast %269 : vector<1x1x2x64xbf16> to vector<2x64xbf16>
    %271 = vector.extract_strided_slice %1 {offsets = [0, 1, 0, 0], sizes = [1, 1, 64, 128], strides = [1, 1, 1, 1]} : vector<3x3x64x128xbf16> to vector<1x1x64x128xbf16>
    %272 = vector.shape_cast %271 : vector<1x1x64x128xbf16> to vector<64x128xbf16>
    %cst_65 = arith.constant dense<0.000000e+00> : vector<2x128xf32>
    %273 = tpu.matmul %270, %272, %cst_65 {dimension_numbers = #tpu.dot_dimension_numbers<[1], [0], [0], [1], [0, 0, 1, 1], [], []>} : vector<2x64xbf16>, vector<64x128xbf16>, vector<2x128xf32> -> vector<2x128xf32>
    %274 = arith.addf %268, %273 : vector<2x128xf32>
    %275 = vector.extract_strided_slice %0 {offsets = [1, 3, 0, 0], sizes = [1, 1, 2, 64], strides = [1, 1, 1, 1]} : vector<5x5x2x64xbf16> to vector<1x1x2x64xbf16>
    %276 = vector.shape_cast %275 : vector<1x1x2x64xbf16> to vector<2x64xbf16>
    %277 = vector.extract_strided_slice %1 {offsets = [0, 2, 0, 0], sizes = [1, 1, 64, 128], strides = [1, 1, 1, 1]} : vector<3x3x64x128xbf16> to vector<1x1x64x128xbf16>
    %278 = vector.shape_cast %277 : vector<1x1x64x128xbf16> to vector<64x128xbf16>
    %cst_66 = arith.constant dense<0.000000e+00> : vector<2x128xf32>
    %279 = tpu.matmul %276, %278, %cst_66 {dimension_numbers = #tpu.dot_dimension_numbers<[1], [0], [0], [1], [0, 0, 1, 1], [], []>} : vector<2x64xbf16>, vector<64x128xbf16>, vector<2x128xf32> -> vector<2x128xf32>
    %280 = arith.addf %274, %279 : vector<2x128xf32>
    %281 = vector.extract_strided_slice %0 {offsets = [2, 1, 0, 0], sizes = [1, 1, 2, 64], strides = [1, 1, 1, 1]} : vector<5x5x2x64xbf16> to vector<1x1x2x64xbf16>
    %282 = vector.shape_cast %281 : vector<1x1x2x64xbf16> to vector<2x64xbf16>
    %283 = vector.extract_strided_slice %1 {offsets = [1, 0, 0, 0], sizes = [1, 1, 64, 128], strides = [1, 1, 1, 1]} : vector<3x3x64x128xbf16> to vector<1x1x64x128xbf16>
    %284 = vector.shape_cast %283 : vector<1x1x64x128xbf16> to vector<64x128xbf16>
    %cst_67 = arith.constant dense<0.000000e+00> : vector<2x128xf32>
    %285 = tpu.matmul %282, %284, %cst_67 {dimension_numbers = #tpu.dot_dimension_numbers<[1], [0], [0], [1], [0, 0, 1, 1], [], []>} : vector<2x64xbf16>, vector<64x128xbf16>, vector<2x128xf32> -> vector<2x128xf32>
    %286 = arith.addf %280, %285 : vector<2x128xf32>
    %287 = vector.extract_strided_slice %0 {offsets = [2, 2, 0, 0], sizes = [1, 1, 2, 64], strides = [1, 1, 1, 1]} : vector<5x5x2x64xbf16> to vector<1x1x2x64xbf16>
    %288 = vector.shape_cast %287 : vector<1x1x2x64xbf16> to vector<2x64xbf16>
    %289 = vector.extract_strided_slice %1 {offsets = [1, 1, 0, 0], sizes = [1, 1, 64, 128], strides = [1, 1, 1, 1]} : vector<3x3x64x128xbf16> to vector<1x1x64x128xbf16>
    %290 = vector.shape_cast %289 : vector<1x1x64x128xbf16> to vector<64x128xbf16>
    %cst_68 = arith.constant dense<0.000000e+00> : vector<2x128xf32>
    %291 = tpu.matmul %288, %290, %cst_68 {dimension_numbers = #tpu.dot_dimension_numbers<[1], [0], [0], [1], [0, 0, 1, 1], [], []>} : vector<2x64xbf16>, vector<64x128xbf16>, vector<2x128xf32> -> vector<2x128xf32>
    %292 = arith.addf %286, %291 : vector<2x128xf32>
    %293 = vector.extract_strided_slice %0 {offsets = [2, 3, 0, 0], sizes = [1, 1, 2, 64], strides = [1, 1, 1, 1]} : vector<5x5x2x64xbf16> to vector<1x1x2x64xbf16>
    %294 = vector.shape_cast %293 : vector<1x1x2x64xbf16> to vector<2x64xbf16>
    %295 = vector.extract_strided_slice %1 {offsets = [1, 2, 0, 0], sizes = [1, 1, 64, 128], strides = [1, 1, 1, 1]} : vector<3x3x64x128xbf16> to vector<1x1x64x128xbf16>
    %296 = vector.shape_cast %295 : vector<1x1x64x128xbf16> to vector<64x128xbf16>
    %cst_69 = arith.constant dense<0.000000e+00> : vector<2x128xf32>
    %297 = tpu.matmul %294, %296, %cst_69 {dimension_numbers = #tpu.dot_dimension_numbers<[1], [0], [0], [1], [0, 0, 1, 1], [], []>} : vector<2x64xbf16>, vector<64x128xbf16>, vector<2x128xf32> -> vector<2x128xf32>
    %298 = arith.addf %292, %297 : vector<2x128xf32>
    %299 = vector.extract_strided_slice %0 {offsets = [3, 1, 0, 0], sizes = [1, 1, 2, 64], strides = [1, 1, 1, 1]} : vector<5x5x2x64xbf16> to vector<1x1x2x64xbf16>
    %300 = vector.shape_cast %299 : vector<1x1x2x64xbf16> to vector<2x64xbf16>
    %301 = vector.extract_strided_slice %1 {offsets = [2, 0, 0, 0], sizes = [1, 1, 64, 128], strides = [1, 1, 1, 1]} : vector<3x3x64x128xbf16> to vector<1x1x64x128xbf16>
    %302 = vector.shape_cast %301 : vector<1x1x64x128xbf16> to vector<64x128xbf16>
    %cst_70 = arith.constant dense<0.000000e+00> : vector<2x128xf32>
    %303 = tpu.matmul %300, %302, %cst_70 {dimension_numbers = #tpu.dot_dimension_numbers<[1], [0], [0], [1], [0, 0, 1, 1], [], []>} : vector<2x64xbf16>, vector<64x128xbf16>, vector<2x128xf32> -> vector<2x128xf32>
    %304 = arith.addf %298, %303 : vector<2x128xf32>
    %305 = vector.extract_strided_slice %0 {offsets = [3, 2, 0, 0], sizes = [1, 1, 2, 64], strides = [1, 1, 1, 1]} : vector<5x5x2x64xbf16> to vector<1x1x2x64xbf16>
    %306 = vector.shape_cast %305 : vector<1x1x2x64xbf16> to vector<2x64xbf16>
    %307 = vector.extract_strided_slice %1 {offsets = [2, 1, 0, 0], sizes = [1, 1, 64, 128], strides = [1, 1, 1, 1]} : vector<3x3x64x128xbf16> to vector<1x1x64x128xbf16>
    %308 = vector.shape_cast %307 : vector<1x1x64x128xbf16> to vector<64x128xbf16>
    %cst_71 = arith.constant dense<0.000000e+00> : vector<2x128xf32>
    %309 = tpu.matmul %306, %308, %cst_71 {dimension_numbers = #tpu.dot_dimension_numbers<[1], [0], [0], [1], [0, 0, 1, 1], [], []>} : vector<2x64xbf16>, vector<64x128xbf16>, vector<2x128xf32> -> vector<2x128xf32>
    %310 = arith.addf %304, %309 : vector<2x128xf32>
    %311 = vector.extract_strided_slice %0 {offsets = [3, 3, 0, 0], sizes = [1, 1, 2, 64], strides = [1, 1, 1, 1]} : vector<5x5x2x64xbf16> to vector<1x1x2x64xbf16>
    %312 = vector.shape_cast %311 : vector<1x1x2x64xbf16> to vector<2x64xbf16>
    %313 = vector.extract_strided_slice %1 {offsets = [2, 2, 0, 0], sizes = [1, 1, 64, 128], strides = [1, 1, 1, 1]} : vector<3x3x64x128xbf16> to vector<1x1x64x128xbf16>
    %314 = vector.shape_cast %313 : vector<1x1x64x128xbf16> to vector<64x128xbf16>
    %cst_72 = arith.constant dense<0.000000e+00> : vector<2x128xf32>
    %315 = tpu.matmul %312, %314, %cst_72 {dimension_numbers = #tpu.dot_dimension_numbers<[1], [0], [0], [1], [0, 0, 1, 1], [], []>} : vector<2x64xbf16>, vector<64x128xbf16>, vector<2x128xf32> -> vector<2x128xf32>
    %316 = arith.addf %310, %315 : vector<2x128xf32>
    %317 = vector.broadcast %3 : vector<1x128xf32> to vector<2x128xf32>
    %318 = arith.addf %316, %317 : vector<2x128xf32>
    %cst_73 = arith.constant 0.000000e+00 : f32
    %319 = vector.broadcast %cst_73 : f32 to vector<2x128xf32>
    %320 = arith.maximumf %318, %319 : vector<2x128xf32>
    %321 = arith.truncf %320 : vector<2x128xf32> to vector<2x128xbf16>
    %322 = vector.extract_strided_slice %2 {offsets = [1, 1, 0, 0], sizes = [1, 1, 128, 256], strides = [1, 1, 1, 1]} : vector<3x3x128x256xbf16> to vector<1x1x128x256xbf16>
    %323 = vector.shape_cast %322 : vector<1x1x128x256xbf16> to vector<128x256xbf16>
    %cst_74 = arith.constant dense<0.000000e+00> : vector<2x256xf32>
    %324 = tpu.matmul %321, %323, %cst_74 {dimension_numbers = #tpu.dot_dimension_numbers<[1], [0], [0], [1], [0, 0, 1, 1], [], []>} : vector<2x128xbf16>, vector<128x256xbf16>, vector<2x256xf32> -> vector<2x256xf32>
    %325 = arith.addf %261, %324 : vector<2x256xf32>
    %cst_75 = arith.constant 0.000000e+00 : f32
    %326 = vector.broadcast %cst_75 : f32 to vector<2x128xf32>
    %327 = vector.extract_strided_slice %0 {offsets = [1, 2, 0, 0], sizes = [1, 1, 2, 64], strides = [1, 1, 1, 1]} : vector<5x5x2x64xbf16> to vector<1x1x2x64xbf16>
    %328 = vector.shape_cast %327 : vector<1x1x2x64xbf16> to vector<2x64xbf16>
    %329 = vector.extract_strided_slice %1 {offsets = [0, 0, 0, 0], sizes = [1, 1, 64, 128], strides = [1, 1, 1, 1]} : vector<3x3x64x128xbf16> to vector<1x1x64x128xbf16>
    %330 = vector.shape_cast %329 : vector<1x1x64x128xbf16> to vector<64x128xbf16>
    %cst_76 = arith.constant dense<0.000000e+00> : vector<2x128xf32>
    %331 = tpu.matmul %328, %330, %cst_76 {dimension_numbers = #tpu.dot_dimension_numbers<[1], [0], [0], [1], [0, 0, 1, 1], [], []>} : vector<2x64xbf16>, vector<64x128xbf16>, vector<2x128xf32> -> vector<2x128xf32>
    %332 = arith.addf %326, %331 : vector<2x128xf32>
    %333 = vector.extract_strided_slice %0 {offsets = [1, 3, 0, 0], sizes = [1, 1, 2, 64], strides = [1, 1, 1, 1]} : vector<5x5x2x64xbf16> to vector<1x1x2x64xbf16>
    %334 = vector.shape_cast %333 : vector<1x1x2x64xbf16> to vector<2x64xbf16>
    %335 = vector.extract_strided_slice %1 {offsets = [0, 1, 0, 0], sizes = [1, 1, 64, 128], strides = [1, 1, 1, 1]} : vector<3x3x64x128xbf16> to vector<1x1x64x128xbf16>
    %336 = vector.shape_cast %335 : vector<1x1x64x128xbf16> to vector<64x128xbf16>
    %cst_77 = arith.constant dense<0.000000e+00> : vector<2x128xf32>
    %337 = tpu.matmul %334, %336, %cst_77 {dimension_numbers = #tpu.dot_dimension_numbers<[1], [0], [0], [1], [0, 0, 1, 1], [], []>} : vector<2x64xbf16>, vector<64x128xbf16>, vector<2x128xf32> -> vector<2x128xf32>
    %338 = arith.addf %332, %337 : vector<2x128xf32>
    %339 = vector.extract_strided_slice %0 {offsets = [1, 4, 0, 0], sizes = [1, 1, 2, 64], strides = [1, 1, 1, 1]} : vector<5x5x2x64xbf16> to vector<1x1x2x64xbf16>
    %340 = vector.shape_cast %339 : vector<1x1x2x64xbf16> to vector<2x64xbf16>
    %341 = vector.extract_strided_slice %1 {offsets = [0, 2, 0, 0], sizes = [1, 1, 64, 128], strides = [1, 1, 1, 1]} : vector<3x3x64x128xbf16> to vector<1x1x64x128xbf16>
    %342 = vector.shape_cast %341 : vector<1x1x64x128xbf16> to vector<64x128xbf16>
    %cst_78 = arith.constant dense<0.000000e+00> : vector<2x128xf32>
    %343 = tpu.matmul %340, %342, %cst_78 {dimension_numbers = #tpu.dot_dimension_numbers<[1], [0], [0], [1], [0, 0, 1, 1], [], []>} : vector<2x64xbf16>, vector<64x128xbf16>, vector<2x128xf32> -> vector<2x128xf32>
    %344 = arith.addf %338, %343 : vector<2x128xf32>
    %345 = vector.extract_strided_slice %0 {offsets = [2, 2, 0, 0], sizes = [1, 1, 2, 64], strides = [1, 1, 1, 1]} : vector<5x5x2x64xbf16> to vector<1x1x2x64xbf16>
    %346 = vector.shape_cast %345 : vector<1x1x2x64xbf16> to vector<2x64xbf16>
    %347 = vector.extract_strided_slice %1 {offsets = [1, 0, 0, 0], sizes = [1, 1, 64, 128], strides = [1, 1, 1, 1]} : vector<3x3x64x128xbf16> to vector<1x1x64x128xbf16>
    %348 = vector.shape_cast %347 : vector<1x1x64x128xbf16> to vector<64x128xbf16>
    %cst_79 = arith.constant dense<0.000000e+00> : vector<2x128xf32>
    %349 = tpu.matmul %346, %348, %cst_79 {dimension_numbers = #tpu.dot_dimension_numbers<[1], [0], [0], [1], [0, 0, 1, 1], [], []>} : vector<2x64xbf16>, vector<64x128xbf16>, vector<2x128xf32> -> vector<2x128xf32>
    %350 = arith.addf %344, %349 : vector<2x128xf32>
    %351 = vector.extract_strided_slice %0 {offsets = [2, 3, 0, 0], sizes = [1, 1, 2, 64], strides = [1, 1, 1, 1]} : vector<5x5x2x64xbf16> to vector<1x1x2x64xbf16>
    %352 = vector.shape_cast %351 : vector<1x1x2x64xbf16> to vector<2x64xbf16>
    %353 = vector.extract_strided_slice %1 {offsets = [1, 1, 0, 0], sizes = [1, 1, 64, 128], strides = [1, 1, 1, 1]} : vector<3x3x64x128xbf16> to vector<1x1x64x128xbf16>
    %354 = vector.shape_cast %353 : vector<1x1x64x128xbf16> to vector<64x128xbf16>
    %cst_80 = arith.constant dense<0.000000e+00> : vector<2x128xf32>
    %355 = tpu.matmul %352, %354, %cst_80 {dimension_numbers = #tpu.dot_dimension_numbers<[1], [0], [0], [1], [0, 0, 1, 1], [], []>} : vector<2x64xbf16>, vector<64x128xbf16>, vector<2x128xf32> -> vector<2x128xf32>
    %356 = arith.addf %350, %355 : vector<2x128xf32>
    %357 = vector.extract_strided_slice %0 {offsets = [2, 4, 0, 0], sizes = [1, 1, 2, 64], strides = [1, 1, 1, 1]} : vector<5x5x2x64xbf16> to vector<1x1x2x64xbf16>
    %358 = vector.shape_cast %357 : vector<1x1x2x64xbf16> to vector<2x64xbf16>
    %359 = vector.extract_strided_slice %1 {offsets = [1, 2, 0, 0], sizes = [1, 1, 64, 128], strides = [1, 1, 1, 1]} : vector<3x3x64x128xbf16> to vector<1x1x64x128xbf16>
    %360 = vector.shape_cast %359 : vector<1x1x64x128xbf16> to vector<64x128xbf16>
    %cst_81 = arith.constant dense<0.000000e+00> : vector<2x128xf32>
    %361 = tpu.matmul %358, %360, %cst_81 {dimension_numbers = #tpu.dot_dimension_numbers<[1], [0], [0], [1], [0, 0, 1, 1], [], []>} : vector<2x64xbf16>, vector<64x128xbf16>, vector<2x128xf32> -> vector<2x128xf32>
    %362 = arith.addf %356, %361 : vector<2x128xf32>
    %363 = vector.extract_strided_slice %0 {offsets = [3, 2, 0, 0], sizes = [1, 1, 2, 64], strides = [1, 1, 1, 1]} : vector<5x5x2x64xbf16> to vector<1x1x2x64xbf16>
    %364 = vector.shape_cast %363 : vector<1x1x2x64xbf16> to vector<2x64xbf16>
    %365 = vector.extract_strided_slice %1 {offsets = [2, 0, 0, 0], sizes = [1, 1, 64, 128], strides = [1, 1, 1, 1]} : vector<3x3x64x128xbf16> to vector<1x1x64x128xbf16>
    %366 = vector.shape_cast %365 : vector<1x1x64x128xbf16> to vector<64x128xbf16>
    %cst_82 = arith.constant dense<0.000000e+00> : vector<2x128xf32>
    %367 = tpu.matmul %364, %366, %cst_82 {dimension_numbers = #tpu.dot_dimension_numbers<[1], [0], [0], [1], [0, 0, 1, 1], [], []>} : vector<2x64xbf16>, vector<64x128xbf16>, vector<2x128xf32> -> vector<2x128xf32>
    %368 = arith.addf %362, %367 : vector<2x128xf32>
    %369 = vector.extract_strided_slice %0 {offsets = [3, 3, 0, 0], sizes = [1, 1, 2, 64], strides = [1, 1, 1, 1]} : vector<5x5x2x64xbf16> to vector<1x1x2x64xbf16>
    %370 = vector.shape_cast %369 : vector<1x1x2x64xbf16> to vector<2x64xbf16>
    %371 = vector.extract_strided_slice %1 {offsets = [2, 1, 0, 0], sizes = [1, 1, 64, 128], strides = [1, 1, 1, 1]} : vector<3x3x64x128xbf16> to vector<1x1x64x128xbf16>
    %372 = vector.shape_cast %371 : vector<1x1x64x128xbf16> to vector<64x128xbf16>
    %cst_83 = arith.constant dense<0.000000e+00> : vector<2x128xf32>
    %373 = tpu.matmul %370, %372, %cst_83 {dimension_numbers = #tpu.dot_dimension_numbers<[1], [0], [0], [1], [0, 0, 1, 1], [], []>} : vector<2x64xbf16>, vector<64x128xbf16>, vector<2x128xf32> -> vector<2x128xf32>
    %374 = arith.addf %368, %373 : vector<2x128xf32>
    %375 = vector.extract_strided_slice %0 {offsets = [3, 4, 0, 0], sizes = [1, 1, 2, 64], strides = [1, 1, 1, 1]} : vector<5x5x2x64xbf16> to vector<1x1x2x64xbf16>
    %376 = vector.shape_cast %375 : vector<1x1x2x64xbf16> to vector<2x64xbf16>
    %377 = vector.extract_strided_slice %1 {offsets = [2, 2, 0, 0], sizes = [1, 1, 64, 128], strides = [1, 1, 1, 1]} : vector<3x3x64x128xbf16> to vector<1x1x64x128xbf16>
    %378 = vector.shape_cast %377 : vector<1x1x64x128xbf16> to vector<64x128xbf16>
    %cst_84 = arith.constant dense<0.000000e+00> : vector<2x128xf32>
    %379 = tpu.matmul %376, %378, %cst_84 {dimension_numbers = #tpu.dot_dimension_numbers<[1], [0], [0], [1], [0, 0, 1, 1], [], []>} : vector<2x64xbf16>, vector<64x128xbf16>, vector<2x128xf32> -> vector<2x128xf32>
    %380 = arith.addf %374, %379 : vector<2x128xf32>
    %381 = vector.broadcast %3 : vector<1x128xf32> to vector<2x128xf32>
    %382 = arith.addf %380, %381 : vector<2x128xf32>
    %cst_85 = arith.constant 0.000000e+00 : f32
    %383 = vector.broadcast %cst_85 : f32 to vector<2x128xf32>
    %384 = arith.maximumf %382, %383 : vector<2x128xf32>
    %385 = arith.truncf %384 : vector<2x128xf32> to vector<2x128xbf16>
    %386 = vector.extract_strided_slice %2 {offsets = [1, 2, 0, 0], sizes = [1, 1, 128, 256], strides = [1, 1, 1, 1]} : vector<3x3x128x256xbf16> to vector<1x1x128x256xbf16>
    %387 = vector.shape_cast %386 : vector<1x1x128x256xbf16> to vector<128x256xbf16>
    %cst_86 = arith.constant dense<0.000000e+00> : vector<2x256xf32>
    %388 = tpu.matmul %385, %387, %cst_86 {dimension_numbers = #tpu.dot_dimension_numbers<[1], [0], [0], [1], [0, 0, 1, 1], [], []>} : vector<2x128xbf16>, vector<128x256xbf16>, vector<2x256xf32> -> vector<2x256xf32>
    %389 = arith.addf %325, %388 : vector<2x256xf32>
    %cst_87 = arith.constant 0.000000e+00 : f32
    %390 = vector.broadcast %cst_87 : f32 to vector<2x128xf32>
    %391 = vector.extract_strided_slice %0 {offsets = [2, 0, 0, 0], sizes = [1, 1, 2, 64], strides = [1, 1, 1, 1]} : vector<5x5x2x64xbf16> to vector<1x1x2x64xbf16>
    %392 = vector.shape_cast %391 : vector<1x1x2x64xbf16> to vector<2x64xbf16>
    %393 = vector.extract_strided_slice %1 {offsets = [0, 0, 0, 0], sizes = [1, 1, 64, 128], strides = [1, 1, 1, 1]} : vector<3x3x64x128xbf16> to vector<1x1x64x128xbf16>
    %394 = vector.shape_cast %393 : vector<1x1x64x128xbf16> to vector<64x128xbf16>
    %cst_88 = arith.constant dense<0.000000e+00> : vector<2x128xf32>
    %395 = tpu.matmul %392, %394, %cst_88 {dimension_numbers = #tpu.dot_dimension_numbers<[1], [0], [0], [1], [0, 0, 1, 1], [], []>} : vector<2x64xbf16>, vector<64x128xbf16>, vector<2x128xf32> -> vector<2x128xf32>
    %396 = arith.addf %390, %395 : vector<2x128xf32>
    %397 = vector.extract_strided_slice %0 {offsets = [2, 1, 0, 0], sizes = [1, 1, 2, 64], strides = [1, 1, 1, 1]} : vector<5x5x2x64xbf16> to vector<1x1x2x64xbf16>
    %398 = vector.shape_cast %397 : vector<1x1x2x64xbf16> to vector<2x64xbf16>
    %399 = vector.extract_strided_slice %1 {offsets = [0, 1, 0, 0], sizes = [1, 1, 64, 128], strides = [1, 1, 1, 1]} : vector<3x3x64x128xbf16> to vector<1x1x64x128xbf16>
    %400 = vector.shape_cast %399 : vector<1x1x64x128xbf16> to vector<64x128xbf16>
    %cst_89 = arith.constant dense<0.000000e+00> : vector<2x128xf32>
    %401 = tpu.matmul %398, %400, %cst_89 {dimension_numbers = #tpu.dot_dimension_numbers<[1], [0], [0], [1], [0, 0, 1, 1], [], []>} : vector<2x64xbf16>, vector<64x128xbf16>, vector<2x128xf32> -> vector<2x128xf32>
    %402 = arith.addf %396, %401 : vector<2x128xf32>
    %403 = vector.extract_strided_slice %0 {offsets = [2, 2, 0, 0], sizes = [1, 1, 2, 64], strides = [1, 1, 1, 1]} : vector<5x5x2x64xbf16> to vector<1x1x2x64xbf16>
    %404 = vector.shape_cast %403 : vector<1x1x2x64xbf16> to vector<2x64xbf16>
    %405 = vector.extract_strided_slice %1 {offsets = [0, 2, 0, 0], sizes = [1, 1, 64, 128], strides = [1, 1, 1, 1]} : vector<3x3x64x128xbf16> to vector<1x1x64x128xbf16>
    %406 = vector.shape_cast %405 : vector<1x1x64x128xbf16> to vector<64x128xbf16>
    %cst_90 = arith.constant dense<0.000000e+00> : vector<2x128xf32>
    %407 = tpu.matmul %404, %406, %cst_90 {dimension_numbers = #tpu.dot_dimension_numbers<[1], [0], [0], [1], [0, 0, 1, 1], [], []>} : vector<2x64xbf16>, vector<64x128xbf16>, vector<2x128xf32> -> vector<2x128xf32>
    %408 = arith.addf %402, %407 : vector<2x128xf32>
    %409 = vector.extract_strided_slice %0 {offsets = [3, 0, 0, 0], sizes = [1, 1, 2, 64], strides = [1, 1, 1, 1]} : vector<5x5x2x64xbf16> to vector<1x1x2x64xbf16>
    %410 = vector.shape_cast %409 : vector<1x1x2x64xbf16> to vector<2x64xbf16>
    %411 = vector.extract_strided_slice %1 {offsets = [1, 0, 0, 0], sizes = [1, 1, 64, 128], strides = [1, 1, 1, 1]} : vector<3x3x64x128xbf16> to vector<1x1x64x128xbf16>
    %412 = vector.shape_cast %411 : vector<1x1x64x128xbf16> to vector<64x128xbf16>
    %cst_91 = arith.constant dense<0.000000e+00> : vector<2x128xf32>
    %413 = tpu.matmul %410, %412, %cst_91 {dimension_numbers = #tpu.dot_dimension_numbers<[1], [0], [0], [1], [0, 0, 1, 1], [], []>} : vector<2x64xbf16>, vector<64x128xbf16>, vector<2x128xf32> -> vector<2x128xf32>
    %414 = arith.addf %408, %413 : vector<2x128xf32>
    %415 = vector.extract_strided_slice %0 {offsets = [3, 1, 0, 0], sizes = [1, 1, 2, 64], strides = [1, 1, 1, 1]} : vector<5x5x2x64xbf16> to vector<1x1x2x64xbf16>
    %416 = vector.shape_cast %415 : vector<1x1x2x64xbf16> to vector<2x64xbf16>
    %417 = vector.extract_strided_slice %1 {offsets = [1, 1, 0, 0], sizes = [1, 1, 64, 128], strides = [1, 1, 1, 1]} : vector<3x3x64x128xbf16> to vector<1x1x64x128xbf16>
    %418 = vector.shape_cast %417 : vector<1x1x64x128xbf16> to vector<64x128xbf16>
    %cst_92 = arith.constant dense<0.000000e+00> : vector<2x128xf32>
    %419 = tpu.matmul %416, %418, %cst_92 {dimension_numbers = #tpu.dot_dimension_numbers<[1], [0], [0], [1], [0, 0, 1, 1], [], []>} : vector<2x64xbf16>, vector<64x128xbf16>, vector<2x128xf32> -> vector<2x128xf32>
    %420 = arith.addf %414, %419 : vector<2x128xf32>
    %421 = vector.extract_strided_slice %0 {offsets = [3, 2, 0, 0], sizes = [1, 1, 2, 64], strides = [1, 1, 1, 1]} : vector<5x5x2x64xbf16> to vector<1x1x2x64xbf16>
    %422 = vector.shape_cast %421 : vector<1x1x2x64xbf16> to vector<2x64xbf16>
    %423 = vector.extract_strided_slice %1 {offsets = [1, 2, 0, 0], sizes = [1, 1, 64, 128], strides = [1, 1, 1, 1]} : vector<3x3x64x128xbf16> to vector<1x1x64x128xbf16>
    %424 = vector.shape_cast %423 : vector<1x1x64x128xbf16> to vector<64x128xbf16>
    %cst_93 = arith.constant dense<0.000000e+00> : vector<2x128xf32>
    %425 = tpu.matmul %422, %424, %cst_93 {dimension_numbers = #tpu.dot_dimension_numbers<[1], [0], [0], [1], [0, 0, 1, 1], [], []>} : vector<2x64xbf16>, vector<64x128xbf16>, vector<2x128xf32> -> vector<2x128xf32>
    %426 = arith.addf %420, %425 : vector<2x128xf32>
    %427 = vector.extract_strided_slice %0 {offsets = [4, 0, 0, 0], sizes = [1, 1, 2, 64], strides = [1, 1, 1, 1]} : vector<5x5x2x64xbf16> to vector<1x1x2x64xbf16>
    %428 = vector.shape_cast %427 : vector<1x1x2x64xbf16> to vector<2x64xbf16>
    %429 = vector.extract_strided_slice %1 {offsets = [2, 0, 0, 0], sizes = [1, 1, 64, 128], strides = [1, 1, 1, 1]} : vector<3x3x64x128xbf16> to vector<1x1x64x128xbf16>
    %430 = vector.shape_cast %429 : vector<1x1x64x128xbf16> to vector<64x128xbf16>
    %cst_94 = arith.constant dense<0.000000e+00> : vector<2x128xf32>
    %431 = tpu.matmul %428, %430, %cst_94 {dimension_numbers = #tpu.dot_dimension_numbers<[1], [0], [0], [1], [0, 0, 1, 1], [], []>} : vector<2x64xbf16>, vector<64x128xbf16>, vector<2x128xf32> -> vector<2x128xf32>
    %432 = arith.addf %426, %431 : vector<2x128xf32>
    %433 = vector.extract_strided_slice %0 {offsets = [4, 1, 0, 0], sizes = [1, 1, 2, 64], strides = [1, 1, 1, 1]} : vector<5x5x2x64xbf16> to vector<1x1x2x64xbf16>
    %434 = vector.shape_cast %433 : vector<1x1x2x64xbf16> to vector<2x64xbf16>
    %435 = vector.extract_strided_slice %1 {offsets = [2, 1, 0, 0], sizes = [1, 1, 64, 128], strides = [1, 1, 1, 1]} : vector<3x3x64x128xbf16> to vector<1x1x64x128xbf16>
    %436 = vector.shape_cast %435 : vector<1x1x64x128xbf16> to vector<64x128xbf16>
    %cst_95 = arith.constant dense<0.000000e+00> : vector<2x128xf32>
    %437 = tpu.matmul %434, %436, %cst_95 {dimension_numbers = #tpu.dot_dimension_numbers<[1], [0], [0], [1], [0, 0, 1, 1], [], []>} : vector<2x64xbf16>, vector<64x128xbf16>, vector<2x128xf32> -> vector<2x128xf32>
    %438 = arith.addf %432, %437 : vector<2x128xf32>
    %439 = vector.extract_strided_slice %0 {offsets = [4, 2, 0, 0], sizes = [1, 1, 2, 64], strides = [1, 1, 1, 1]} : vector<5x5x2x64xbf16> to vector<1x1x2x64xbf16>
    %440 = vector.shape_cast %439 : vector<1x1x2x64xbf16> to vector<2x64xbf16>
    %441 = vector.extract_strided_slice %1 {offsets = [2, 2, 0, 0], sizes = [1, 1, 64, 128], strides = [1, 1, 1, 1]} : vector<3x3x64x128xbf16> to vector<1x1x64x128xbf16>
    %442 = vector.shape_cast %441 : vector<1x1x64x128xbf16> to vector<64x128xbf16>
    %cst_96 = arith.constant dense<0.000000e+00> : vector<2x128xf32>
    %443 = tpu.matmul %440, %442, %cst_96 {dimension_numbers = #tpu.dot_dimension_numbers<[1], [0], [0], [1], [0, 0, 1, 1], [], []>} : vector<2x64xbf16>, vector<64x128xbf16>, vector<2x128xf32> -> vector<2x128xf32>
    %444 = arith.addf %438, %443 : vector<2x128xf32>
    %445 = vector.broadcast %3 : vector<1x128xf32> to vector<2x128xf32>
    %446 = arith.addf %444, %445 : vector<2x128xf32>
    %cst_97 = arith.constant 0.000000e+00 : f32
    %447 = vector.broadcast %cst_97 : f32 to vector<2x128xf32>
    %448 = arith.maximumf %446, %447 : vector<2x128xf32>
    %449 = arith.truncf %448 : vector<2x128xf32> to vector<2x128xbf16>
    %450 = vector.extract_strided_slice %2 {offsets = [2, 0, 0, 0], sizes = [1, 1, 128, 256], strides = [1, 1, 1, 1]} : vector<3x3x128x256xbf16> to vector<1x1x128x256xbf16>
    %451 = vector.shape_cast %450 : vector<1x1x128x256xbf16> to vector<128x256xbf16>
    %cst_98 = arith.constant dense<0.000000e+00> : vector<2x256xf32>
    %452 = tpu.matmul %449, %451, %cst_98 {dimension_numbers = #tpu.dot_dimension_numbers<[1], [0], [0], [1], [0, 0, 1, 1], [], []>} : vector<2x128xbf16>, vector<128x256xbf16>, vector<2x256xf32> -> vector<2x256xf32>
    %453 = arith.addf %389, %452 : vector<2x256xf32>
    %cst_99 = arith.constant 0.000000e+00 : f32
    %454 = vector.broadcast %cst_99 : f32 to vector<2x128xf32>
    %455 = vector.extract_strided_slice %0 {offsets = [2, 1, 0, 0], sizes = [1, 1, 2, 64], strides = [1, 1, 1, 1]} : vector<5x5x2x64xbf16> to vector<1x1x2x64xbf16>
    %456 = vector.shape_cast %455 : vector<1x1x2x64xbf16> to vector<2x64xbf16>
    %457 = vector.extract_strided_slice %1 {offsets = [0, 0, 0, 0], sizes = [1, 1, 64, 128], strides = [1, 1, 1, 1]} : vector<3x3x64x128xbf16> to vector<1x1x64x128xbf16>
    %458 = vector.shape_cast %457 : vector<1x1x64x128xbf16> to vector<64x128xbf16>
    %cst_100 = arith.constant dense<0.000000e+00> : vector<2x128xf32>
    %459 = tpu.matmul %456, %458, %cst_100 {dimension_numbers = #tpu.dot_dimension_numbers<[1], [0], [0], [1], [0, 0, 1, 1], [], []>} : vector<2x64xbf16>, vector<64x128xbf16>, vector<2x128xf32> -> vector<2x128xf32>
    %460 = arith.addf %454, %459 : vector<2x128xf32>
    %461 = vector.extract_strided_slice %0 {offsets = [2, 2, 0, 0], sizes = [1, 1, 2, 64], strides = [1, 1, 1, 1]} : vector<5x5x2x64xbf16> to vector<1x1x2x64xbf16>
    %462 = vector.shape_cast %461 : vector<1x1x2x64xbf16> to vector<2x64xbf16>
    %463 = vector.extract_strided_slice %1 {offsets = [0, 1, 0, 0], sizes = [1, 1, 64, 128], strides = [1, 1, 1, 1]} : vector<3x3x64x128xbf16> to vector<1x1x64x128xbf16>
    %464 = vector.shape_cast %463 : vector<1x1x64x128xbf16> to vector<64x128xbf16>
    %cst_101 = arith.constant dense<0.000000e+00> : vector<2x128xf32>
    %465 = tpu.matmul %462, %464, %cst_101 {dimension_numbers = #tpu.dot_dimension_numbers<[1], [0], [0], [1], [0, 0, 1, 1], [], []>} : vector<2x64xbf16>, vector<64x128xbf16>, vector<2x128xf32> -> vector<2x128xf32>
    %466 = arith.addf %460, %465 : vector<2x128xf32>
    %467 = vector.extract_strided_slice %0 {offsets = [2, 3, 0, 0], sizes = [1, 1, 2, 64], strides = [1, 1, 1, 1]} : vector<5x5x2x64xbf16> to vector<1x1x2x64xbf16>
    %468 = vector.shape_cast %467 : vector<1x1x2x64xbf16> to vector<2x64xbf16>
    %469 = vector.extract_strided_slice %1 {offsets = [0, 2, 0, 0], sizes = [1, 1, 64, 128], strides = [1, 1, 1, 1]} : vector<3x3x64x128xbf16> to vector<1x1x64x128xbf16>
    %470 = vector.shape_cast %469 : vector<1x1x64x128xbf16> to vector<64x128xbf16>
    %cst_102 = arith.constant dense<0.000000e+00> : vector<2x128xf32>
    %471 = tpu.matmul %468, %470, %cst_102 {dimension_numbers = #tpu.dot_dimension_numbers<[1], [0], [0], [1], [0, 0, 1, 1], [], []>} : vector<2x64xbf16>, vector<64x128xbf16>, vector<2x128xf32> -> vector<2x128xf32>
    %472 = arith.addf %466, %471 : vector<2x128xf32>
    %473 = vector.extract_strided_slice %0 {offsets = [3, 1, 0, 0], sizes = [1, 1, 2, 64], strides = [1, 1, 1, 1]} : vector<5x5x2x64xbf16> to vector<1x1x2x64xbf16>
    %474 = vector.shape_cast %473 : vector<1x1x2x64xbf16> to vector<2x64xbf16>
    %475 = vector.extract_strided_slice %1 {offsets = [1, 0, 0, 0], sizes = [1, 1, 64, 128], strides = [1, 1, 1, 1]} : vector<3x3x64x128xbf16> to vector<1x1x64x128xbf16>
    %476 = vector.shape_cast %475 : vector<1x1x64x128xbf16> to vector<64x128xbf16>
    %cst_103 = arith.constant dense<0.000000e+00> : vector<2x128xf32>
    %477 = tpu.matmul %474, %476, %cst_103 {dimension_numbers = #tpu.dot_dimension_numbers<[1], [0], [0], [1], [0, 0, 1, 1], [], []>} : vector<2x64xbf16>, vector<64x128xbf16>, vector<2x128xf32> -> vector<2x128xf32>
    %478 = arith.addf %472, %477 : vector<2x128xf32>
    %479 = vector.extract_strided_slice %0 {offsets = [3, 2, 0, 0], sizes = [1, 1, 2, 64], strides = [1, 1, 1, 1]} : vector<5x5x2x64xbf16> to vector<1x1x2x64xbf16>
    %480 = vector.shape_cast %479 : vector<1x1x2x64xbf16> to vector<2x64xbf16>
    %481 = vector.extract_strided_slice %1 {offsets = [1, 1, 0, 0], sizes = [1, 1, 64, 128], strides = [1, 1, 1, 1]} : vector<3x3x64x128xbf16> to vector<1x1x64x128xbf16>
    %482 = vector.shape_cast %481 : vector<1x1x64x128xbf16> to vector<64x128xbf16>
    %cst_104 = arith.constant dense<0.000000e+00> : vector<2x128xf32>
    %483 = tpu.matmul %480, %482, %cst_104 {dimension_numbers = #tpu.dot_dimension_numbers<[1], [0], [0], [1], [0, 0, 1, 1], [], []>} : vector<2x64xbf16>, vector<64x128xbf16>, vector<2x128xf32> -> vector<2x128xf32>
    %484 = arith.addf %478, %483 : vector<2x128xf32>
    %485 = vector.extract_strided_slice %0 {offsets = [3, 3, 0, 0], sizes = [1, 1, 2, 64], strides = [1, 1, 1, 1]} : vector<5x5x2x64xbf16> to vector<1x1x2x64xbf16>
    %486 = vector.shape_cast %485 : vector<1x1x2x64xbf16> to vector<2x64xbf16>
    %487 = vector.extract_strided_slice %1 {offsets = [1, 2, 0, 0], sizes = [1, 1, 64, 128], strides = [1, 1, 1, 1]} : vector<3x3x64x128xbf16> to vector<1x1x64x128xbf16>
    %488 = vector.shape_cast %487 : vector<1x1x64x128xbf16> to vector<64x128xbf16>
    %cst_105 = arith.constant dense<0.000000e+00> : vector<2x128xf32>
    %489 = tpu.matmul %486, %488, %cst_105 {dimension_numbers = #tpu.dot_dimension_numbers<[1], [0], [0], [1], [0, 0, 1, 1], [], []>} : vector<2x64xbf16>, vector<64x128xbf16>, vector<2x128xf32> -> vector<2x128xf32>
    %490 = arith.addf %484, %489 : vector<2x128xf32>
    %491 = vector.extract_strided_slice %0 {offsets = [4, 1, 0, 0], sizes = [1, 1, 2, 64], strides = [1, 1, 1, 1]} : vector<5x5x2x64xbf16> to vector<1x1x2x64xbf16>
    %492 = vector.shape_cast %491 : vector<1x1x2x64xbf16> to vector<2x64xbf16>
    %493 = vector.extract_strided_slice %1 {offsets = [2, 0, 0, 0], sizes = [1, 1, 64, 128], strides = [1, 1, 1, 1]} : vector<3x3x64x128xbf16> to vector<1x1x64x128xbf16>
    %494 = vector.shape_cast %493 : vector<1x1x64x128xbf16> to vector<64x128xbf16>
    %cst_106 = arith.constant dense<0.000000e+00> : vector<2x128xf32>
    %495 = tpu.matmul %492, %494, %cst_106 {dimension_numbers = #tpu.dot_dimension_numbers<[1], [0], [0], [1], [0, 0, 1, 1], [], []>} : vector<2x64xbf16>, vector<64x128xbf16>, vector<2x128xf32> -> vector<2x128xf32>
    %496 = arith.addf %490, %495 : vector<2x128xf32>
    %497 = vector.extract_strided_slice %0 {offsets = [4, 2, 0, 0], sizes = [1, 1, 2, 64], strides = [1, 1, 1, 1]} : vector<5x5x2x64xbf16> to vector<1x1x2x64xbf16>
    %498 = vector.shape_cast %497 : vector<1x1x2x64xbf16> to vector<2x64xbf16>
    %499 = vector.extract_strided_slice %1 {offsets = [2, 1, 0, 0], sizes = [1, 1, 64, 128], strides = [1, 1, 1, 1]} : vector<3x3x64x128xbf16> to vector<1x1x64x128xbf16>
    %500 = vector.shape_cast %499 : vector<1x1x64x128xbf16> to vector<64x128xbf16>
    %cst_107 = arith.constant dense<0.000000e+00> : vector<2x128xf32>
    %501 = tpu.matmul %498, %500, %cst_107 {dimension_numbers = #tpu.dot_dimension_numbers<[1], [0], [0], [1], [0, 0, 1, 1], [], []>} : vector<2x64xbf16>, vector<64x128xbf16>, vector<2x128xf32> -> vector<2x128xf32>
    %502 = arith.addf %496, %501 : vector<2x128xf32>
    %503 = vector.extract_strided_slice %0 {offsets = [4, 3, 0, 0], sizes = [1, 1, 2, 64], strides = [1, 1, 1, 1]} : vector<5x5x2x64xbf16> to vector<1x1x2x64xbf16>
    %504 = vector.shape_cast %503 : vector<1x1x2x64xbf16> to vector<2x64xbf16>
    %505 = vector.extract_strided_slice %1 {offsets = [2, 2, 0, 0], sizes = [1, 1, 64, 128], strides = [1, 1, 1, 1]} : vector<3x3x64x128xbf16> to vector<1x1x64x128xbf16>
    %506 = vector.shape_cast %505 : vector<1x1x64x128xbf16> to vector<64x128xbf16>
    %cst_108 = arith.constant dense<0.000000e+00> : vector<2x128xf32>
    %507 = tpu.matmul %504, %506, %cst_108 {dimension_numbers = #tpu.dot_dimension_numbers<[1], [0], [0], [1], [0, 0, 1, 1], [], []>} : vector<2x64xbf16>, vector<64x128xbf16>, vector<2x128xf32> -> vector<2x128xf32>
    %508 = arith.addf %502, %507 : vector<2x128xf32>
    %509 = vector.broadcast %3 : vector<1x128xf32> to vector<2x128xf32>
    %510 = arith.addf %508, %509 : vector<2x128xf32>
    %cst_109 = arith.constant 0.000000e+00 : f32
    %511 = vector.broadcast %cst_109 : f32 to vector<2x128xf32>
    %512 = arith.maximumf %510, %511 : vector<2x128xf32>
    %513 = arith.truncf %512 : vector<2x128xf32> to vector<2x128xbf16>
    %514 = vector.extract_strided_slice %2 {offsets = [2, 1, 0, 0], sizes = [1, 1, 128, 256], strides = [1, 1, 1, 1]} : vector<3x3x128x256xbf16> to vector<1x1x128x256xbf16>
    %515 = vector.shape_cast %514 : vector<1x1x128x256xbf16> to vector<128x256xbf16>
    %cst_110 = arith.constant dense<0.000000e+00> : vector<2x256xf32>
    %516 = tpu.matmul %513, %515, %cst_110 {dimension_numbers = #tpu.dot_dimension_numbers<[1], [0], [0], [1], [0, 0, 1, 1], [], []>} : vector<2x128xbf16>, vector<128x256xbf16>, vector<2x256xf32> -> vector<2x256xf32>
    %517 = arith.addf %453, %516 : vector<2x256xf32>
    %cst_111 = arith.constant 0.000000e+00 : f32
    %518 = vector.broadcast %cst_111 : f32 to vector<2x128xf32>
    %519 = vector.extract_strided_slice %0 {offsets = [2, 2, 0, 0], sizes = [1, 1, 2, 64], strides = [1, 1, 1, 1]} : vector<5x5x2x64xbf16> to vector<1x1x2x64xbf16>
    %520 = vector.shape_cast %519 : vector<1x1x2x64xbf16> to vector<2x64xbf16>
    %521 = vector.extract_strided_slice %1 {offsets = [0, 0, 0, 0], sizes = [1, 1, 64, 128], strides = [1, 1, 1, 1]} : vector<3x3x64x128xbf16> to vector<1x1x64x128xbf16>
    %522 = vector.shape_cast %521 : vector<1x1x64x128xbf16> to vector<64x128xbf16>
    %cst_112 = arith.constant dense<0.000000e+00> : vector<2x128xf32>
    %523 = tpu.matmul %520, %522, %cst_112 {dimension_numbers = #tpu.dot_dimension_numbers<[1], [0], [0], [1], [0, 0, 1, 1], [], []>} : vector<2x64xbf16>, vector<64x128xbf16>, vector<2x128xf32> -> vector<2x128xf32>
    %524 = arith.addf %518, %523 : vector<2x128xf32>
    %525 = vector.extract_strided_slice %0 {offsets = [2, 3, 0, 0], sizes = [1, 1, 2, 64], strides = [1, 1, 1, 1]} : vector<5x5x2x64xbf16> to vector<1x1x2x64xbf16>
    %526 = vector.shape_cast %525 : vector<1x1x2x64xbf16> to vector<2x64xbf16>
    %527 = vector.extract_strided_slice %1 {offsets = [0, 1, 0, 0], sizes = [1, 1, 64, 128], strides = [1, 1, 1, 1]} : vector<3x3x64x128xbf16> to vector<1x1x64x128xbf16>
    %528 = vector.shape_cast %527 : vector<1x1x64x128xbf16> to vector<64x128xbf16>
    %cst_113 = arith.constant dense<0.000000e+00> : vector<2x128xf32>
    %529 = tpu.matmul %526, %528, %cst_113 {dimension_numbers = #tpu.dot_dimension_numbers<[1], [0], [0], [1], [0, 0, 1, 1], [], []>} : vector<2x64xbf16>, vector<64x128xbf16>, vector<2x128xf32> -> vector<2x128xf32>
    %530 = arith.addf %524, %529 : vector<2x128xf32>
    %531 = vector.extract_strided_slice %0 {offsets = [2, 4, 0, 0], sizes = [1, 1, 2, 64], strides = [1, 1, 1, 1]} : vector<5x5x2x64xbf16> to vector<1x1x2x64xbf16>
    %532 = vector.shape_cast %531 : vector<1x1x2x64xbf16> to vector<2x64xbf16>
    %533 = vector.extract_strided_slice %1 {offsets = [0, 2, 0, 0], sizes = [1, 1, 64, 128], strides = [1, 1, 1, 1]} : vector<3x3x64x128xbf16> to vector<1x1x64x128xbf16>
    %534 = vector.shape_cast %533 : vector<1x1x64x128xbf16> to vector<64x128xbf16>
    %cst_114 = arith.constant dense<0.000000e+00> : vector<2x128xf32>
    %535 = tpu.matmul %532, %534, %cst_114 {dimension_numbers = #tpu.dot_dimension_numbers<[1], [0], [0], [1], [0, 0, 1, 1], [], []>} : vector<2x64xbf16>, vector<64x128xbf16>, vector<2x128xf32> -> vector<2x128xf32>
    %536 = arith.addf %530, %535 : vector<2x128xf32>
    %537 = vector.extract_strided_slice %0 {offsets = [3, 2, 0, 0], sizes = [1, 1, 2, 64], strides = [1, 1, 1, 1]} : vector<5x5x2x64xbf16> to vector<1x1x2x64xbf16>
    %538 = vector.shape_cast %537 : vector<1x1x2x64xbf16> to vector<2x64xbf16>
    %539 = vector.extract_strided_slice %1 {offsets = [1, 0, 0, 0], sizes = [1, 1, 64, 128], strides = [1, 1, 1, 1]} : vector<3x3x64x128xbf16> to vector<1x1x64x128xbf16>
    %540 = vector.shape_cast %539 : vector<1x1x64x128xbf16> to vector<64x128xbf16>
    %cst_115 = arith.constant dense<0.000000e+00> : vector<2x128xf32>
    %541 = tpu.matmul %538, %540, %cst_115 {dimension_numbers = #tpu.dot_dimension_numbers<[1], [0], [0], [1], [0, 0, 1, 1], [], []>} : vector<2x64xbf16>, vector<64x128xbf16>, vector<2x128xf32> -> vector<2x128xf32>
    %542 = arith.addf %536, %541 : vector<2x128xf32>
    %543 = vector.extract_strided_slice %0 {offsets = [3, 3, 0, 0], sizes = [1, 1, 2, 64], strides = [1, 1, 1, 1]} : vector<5x5x2x64xbf16> to vector<1x1x2x64xbf16>
    %544 = vector.shape_cast %543 : vector<1x1x2x64xbf16> to vector<2x64xbf16>
    %545 = vector.extract_strided_slice %1 {offsets = [1, 1, 0, 0], sizes = [1, 1, 64, 128], strides = [1, 1, 1, 1]} : vector<3x3x64x128xbf16> to vector<1x1x64x128xbf16>
    %546 = vector.shape_cast %545 : vector<1x1x64x128xbf16> to vector<64x128xbf16>
    %cst_116 = arith.constant dense<0.000000e+00> : vector<2x128xf32>
    %547 = tpu.matmul %544, %546, %cst_116 {dimension_numbers = #tpu.dot_dimension_numbers<[1], [0], [0], [1], [0, 0, 1, 1], [], []>} : vector<2x64xbf16>, vector<64x128xbf16>, vector<2x128xf32> -> vector<2x128xf32>
    %548 = arith.addf %542, %547 : vector<2x128xf32>
    %549 = vector.extract_strided_slice %0 {offsets = [3, 4, 0, 0], sizes = [1, 1, 2, 64], strides = [1, 1, 1, 1]} : vector<5x5x2x64xbf16> to vector<1x1x2x64xbf16>
    %550 = vector.shape_cast %549 : vector<1x1x2x64xbf16> to vector<2x64xbf16>
    %551 = vector.extract_strided_slice %1 {offsets = [1, 2, 0, 0], sizes = [1, 1, 64, 128], strides = [1, 1, 1, 1]} : vector<3x3x64x128xbf16> to vector<1x1x64x128xbf16>
    %552 = vector.shape_cast %551 : vector<1x1x64x128xbf16> to vector<64x128xbf16>
    %cst_117 = arith.constant dense<0.000000e+00> : vector<2x128xf32>
    %553 = tpu.matmul %550, %552, %cst_117 {dimension_numbers = #tpu.dot_dimension_numbers<[1], [0], [0], [1], [0, 0, 1, 1], [], []>} : vector<2x64xbf16>, vector<64x128xbf16>, vector<2x128xf32> -> vector<2x128xf32>
    %554 = arith.addf %548, %553 : vector<2x128xf32>
    %555 = vector.extract_strided_slice %0 {offsets = [4, 2, 0, 0], sizes = [1, 1, 2, 64], strides = [1, 1, 1, 1]} : vector<5x5x2x64xbf16> to vector<1x1x2x64xbf16>
    %556 = vector.shape_cast %555 : vector<1x1x2x64xbf16> to vector<2x64xbf16>
    %557 = vector.extract_strided_slice %1 {offsets = [2, 0, 0, 0], sizes = [1, 1, 64, 128], strides = [1, 1, 1, 1]} : vector<3x3x64x128xbf16> to vector<1x1x64x128xbf16>
    %558 = vector.shape_cast %557 : vector<1x1x64x128xbf16> to vector<64x128xbf16>
    %cst_118 = arith.constant dense<0.000000e+00> : vector<2x128xf32>
    %559 = tpu.matmul %556, %558, %cst_118 {dimension_numbers = #tpu.dot_dimension_numbers<[1], [0], [0], [1], [0, 0, 1, 1], [], []>} : vector<2x64xbf16>, vector<64x128xbf16>, vector<2x128xf32> -> vector<2x128xf32>
    %560 = arith.addf %554, %559 : vector<2x128xf32>
    %561 = vector.extract_strided_slice %0 {offsets = [4, 3, 0, 0], sizes = [1, 1, 2, 64], strides = [1, 1, 1, 1]} : vector<5x5x2x64xbf16> to vector<1x1x2x64xbf16>
    %562 = vector.shape_cast %561 : vector<1x1x2x64xbf16> to vector<2x64xbf16>
    %563 = vector.extract_strided_slice %1 {offsets = [2, 1, 0, 0], sizes = [1, 1, 64, 128], strides = [1, 1, 1, 1]} : vector<3x3x64x128xbf16> to vector<1x1x64x128xbf16>
    %564 = vector.shape_cast %563 : vector<1x1x64x128xbf16> to vector<64x128xbf16>
    %cst_119 = arith.constant dense<0.000000e+00> : vector<2x128xf32>
    %565 = tpu.matmul %562, %564, %cst_119 {dimension_numbers = #tpu.dot_dimension_numbers<[1], [0], [0], [1], [0, 0, 1, 1], [], []>} : vector<2x64xbf16>, vector<64x128xbf16>, vector<2x128xf32> -> vector<2x128xf32>
    %566 = arith.addf %560, %565 : vector<2x128xf32>
    %567 = vector.extract_strided_slice %0 {offsets = [4, 4, 0, 0], sizes = [1, 1, 2, 64], strides = [1, 1, 1, 1]} : vector<5x5x2x64xbf16> to vector<1x1x2x64xbf16>
    %568 = vector.shape_cast %567 : vector<1x1x2x64xbf16> to vector<2x64xbf16>
    %569 = vector.extract_strided_slice %1 {offsets = [2, 2, 0, 0], sizes = [1, 1, 64, 128], strides = [1, 1, 1, 1]} : vector<3x3x64x128xbf16> to vector<1x1x64x128xbf16>
    %570 = vector.shape_cast %569 : vector<1x1x64x128xbf16> to vector<64x128xbf16>
    %cst_120 = arith.constant dense<0.000000e+00> : vector<2x128xf32>
    %571 = tpu.matmul %568, %570, %cst_120 {dimension_numbers = #tpu.dot_dimension_numbers<[1], [0], [0], [1], [0, 0, 1, 1], [], []>} : vector<2x64xbf16>, vector<64x128xbf16>, vector<2x128xf32> -> vector<2x128xf32>
    %572 = arith.addf %566, %571 : vector<2x128xf32>
    %573 = vector.broadcast %3 : vector<1x128xf32> to vector<2x128xf32>
    %574 = arith.addf %572, %573 : vector<2x128xf32>
    %cst_121 = arith.constant 0.000000e+00 : f32
    %575 = vector.broadcast %cst_121 : f32 to vector<2x128xf32>
    %576 = arith.maximumf %574, %575 : vector<2x128xf32>
    %577 = arith.truncf %576 : vector<2x128xf32> to vector<2x128xbf16>
    %578 = vector.extract_strided_slice %2 {offsets = [2, 2, 0, 0], sizes = [1, 1, 128, 256], strides = [1, 1, 1, 1]} : vector<3x3x128x256xbf16> to vector<1x1x128x256xbf16>
    %579 = vector.shape_cast %578 : vector<1x1x128x256xbf16> to vector<128x256xbf16>
    %cst_122 = arith.constant dense<0.000000e+00> : vector<2x256xf32>
    %580 = tpu.matmul %577, %579, %cst_122 {dimension_numbers = #tpu.dot_dimension_numbers<[1], [0], [0], [1], [0, 0, 1, 1], [], []>} : vector<2x128xbf16>, vector<128x256xbf16>, vector<2x256xf32> -> vector<2x256xf32>
    %581 = arith.addf %517, %580 : vector<2x256xf32>
    %582 = vector.broadcast %4 : vector<1x256xf32> to vector<2x256xf32>
    %583 = arith.addf %581, %582 : vector<2x256xf32>
    %cst_123 = arith.constant 0.000000e+00 : f32
    %584 = vector.broadcast %cst_123 : f32 to vector<2x256xf32>
    %585 = arith.maximumf %583, %584 : vector<2x256xf32>
    %c0_124 = arith.constant 0 : index
    %c0_125 = arith.constant 0 : index
    %586 = vector.load %arg5[%c0_124, %c0_125] : memref<256x100xf32, #tpu.memory_space<vmem>>, vector<256x100xf32>
    %cst_126 = arith.constant dense<0.000000e+00> : vector<2x100xf32>
    %587 = tpu.matmul %585, %586, %cst_126 {dimension_numbers = #tpu.dot_dimension_numbers<[1], [0], [0], [1], [0, 0, 1, 1], [], []>} : vector<2x256xf32>, vector<256x100xf32>, vector<2x100xf32> -> vector<2x100xf32>
    %c0_127 = arith.constant 0 : index
    %c0_128 = arith.constant 0 : index
    %588 = vector.load %arg6[%c0_127, %c0_128] : memref<1x100xf32, #tpu.memory_space<vmem>>, vector<1x100xf32>
    %589 = vector.broadcast %588 : vector<1x100xf32> to vector<2x100xf32>
    %590 = arith.addf %587, %589 : vector<2x100xf32>
    %cst_129 = arith.constant 0.000000e+00 : f32
    %591 = vector.broadcast %cst_129 : f32 to vector<2x100xf32>
    %592 = arith.maximumf %590, %591 : vector<2x100xf32>
    %c0_130 = arith.constant 0 : index
    %c0_131 = arith.constant 0 : index
    %593 = vector.load %arg7[%c0_130, %c0_131] : memref<100x1xf32, #tpu.memory_space<vmem>>, vector<100x1xf32>
    %cst_132 = arith.constant dense<0.000000e+00> : vector<2x1xf32>
    %594 = tpu.matmul %592, %593, %cst_132 {dimension_numbers = #tpu.dot_dimension_numbers<[1], [0], [0], [1], [0, 0, 1, 1], [], []>} : vector<2x100xf32>, vector<100x1xf32>, vector<2x1xf32> -> vector<2x1xf32>
    %c0_133 = arith.constant 0 : index
    %c0_134 = arith.constant 0 : index
    %595 = vector.load %arg8[%c0_133, %c0_134] : memref<1x1xf32, #tpu.memory_space<vmem>>, vector<1x1xf32>
    %596 = vector.broadcast %595 : vector<1x1xf32> to vector<2x1xf32>
    %597 = arith.addf %594, %596 : vector<2x1xf32>
    %c0_135 = arith.constant 0 : index
    %c0_136 = arith.constant 0 : index
    %598 = vector.load %arg15[%c0_135, %c0_136] : memref<2x1xf32, #tpu.memory_space<vmem>>, vector<2x1xf32>
    tpu.vector_store %arg15[%c0_135, %c0_136], %597 {strides = array<i32>} : memref<2x1xf32, #tpu.memory_space<vmem>>, vector<2x1xf32>,
    %c0_137 = arith.constant 0 : index
    %c0_138 = arith.constant 0 : index
    %599 = vector.load %arg9[%c0_137, %c0_138] : memref<256x100xf32, #tpu.memory_space<vmem>>, vector<256x100xf32>
    %cst_139 = arith.constant dense<0.000000e+00> : vector<2x100xf32>
    %600 = tpu.matmul %585, %599, %cst_139 {dimension_numbers = #tpu.dot_dimension_numbers<[1], [0], [0], [1], [0, 0, 1, 1], [], []>} : vector<2x256xf32>, vector<256x100xf32>, vector<2x100xf32> -> vector<2x100xf32>
    %c0_140 = arith.constant 0 : index
    %c0_141 = arith.constant 0 : index
    %601 = vector.load %arg10[%c0_140, %c0_141] : memref<1x100xf32, #tpu.memory_space<vmem>>, vector<1x100xf32>
    %602 = vector.broadcast %601 : vector<1x100xf32> to vector<2x100xf32>
    %603 = arith.addf %600, %602 : vector<2x100xf32>
    %cst_142 = arith.constant 0.000000e+00 : f32
    %604 = vector.broadcast %cst_142 : f32 to vector<2x100xf32>
    %605 = arith.maximumf %603, %604 : vector<2x100xf32>
    %c0_143 = arith.constant 0 : index
    %c0_144 = arith.constant 0 : index
    %606 = vector.load %arg11[%c0_143, %c0_144] : memref<100x2xf32, #tpu.memory_space<vmem>>, vector<100x2xf32>
    %cst_145 = arith.constant dense<0.000000e+00> : vector<2x2xf32>
    %607 = tpu.matmul %605, %606, %cst_145 {dimension_numbers = #tpu.dot_dimension_numbers<[1], [0], [0], [1], [0, 0, 1, 1], [], []>} : vector<2x100xf32>, vector<100x2xf32>, vector<2x2xf32> -> vector<2x2xf32>
    %c0_146 = arith.constant 0 : index
    %c0_147 = arith.constant 0 : index
    %608 = vector.load %arg12[%c0_146, %c0_147] : memref<1x2xf32, #tpu.memory_space<vmem>>, vector<1x2xf32>
    %609 = vector.broadcast %608 : vector<1x2xf32> to vector<2x2xf32>
    %610 = arith.addf %607, %609 : vector<2x2xf32>
    %c0_148 = arith.constant 0 : index
    %c0_149 = arith.constant 0 : index
    %611 = vector.load %arg13[%c0_148, %c0_149] : memref<100x2xf32, #tpu.memory_space<vmem>>, vector<100x2xf32>
    %cst_150 = arith.constant dense<0.000000e+00> : vector<2x2xf32>
    %612 = tpu.matmul %605, %611, %cst_150 {dimension_numbers = #tpu.dot_dimension_numbers<[1], [0], [0], [1], [0, 0, 1, 1], [], []>} : vector<2x100xf32>, vector<100x2xf32>, vector<2x2xf32> -> vector<2x2xf32>
    %c0_151 = arith.constant 0 : index
    %c0_152 = arith.constant 0 : index
    %613 = vector.load %arg14[%c0_151, %c0_152] : memref<1x2xf32, #tpu.memory_space<vmem>>, vector<1x2xf32>
    %614 = vector.broadcast %613 : vector<1x2xf32> to vector<2x2xf32>
    %615 = arith.addf %612, %614 : vector<2x2xf32>
    %cst_153 = arith.constant 0.000000e+00 : f32
    %616 = vector.broadcast %cst_153 : f32 to vector<2x2xf32>
    %617 = arith.maximumf %610, %616 : vector<2x2xf32>
    %618 = math.absf %610 : vector<2x2xf32>
    %cst_154 = arith.constant 0.000000e+00 : f32
    %619 = vector.broadcast %cst_154 : f32 to vector<2x2xf32>
    %620 = arith.subf %619, %618 : vector<2x2xf32>
    %621 = math.exp %620 : vector<2x2xf32>
    %cst_155 = arith.constant 1.000000e+00 : f32
    %622 = vector.broadcast %cst_155 : f32 to vector<2x2xf32>
    %623 = arith.addf %622, %621 : vector<2x2xf32>
    %624 = math.log %623 : vector<2x2xf32>
    %625 = arith.addf %617, %624 : vector<2x2xf32>
    %cst_156 = arith.constant 1.000000e+00 : f32
    %626 = vector.broadcast %cst_156 : f32 to vector<2x2xf32>
    %627 = arith.addf %625, %626 : vector<2x2xf32>
    %c0_157 = arith.constant 0 : index
    %c0_158 = arith.constant 0 : index
    %628 = vector.load %arg16[%c0_157, %c0_158] : memref<2x2xf32, #tpu.memory_space<vmem>>, vector<2x2xf32>
    tpu.vector_store %arg16[%c0_157, %c0_158], %627 {strides = array<i32>} : memref<2x2xf32, #tpu.memory_space<vmem>>, vector<2x2xf32>,
    %cst_159 = arith.constant 0.000000e+00 : f32
    %629 = vector.broadcast %cst_159 : f32 to vector<2x2xf32>
    %630 = arith.maximumf %615, %629 : vector<2x2xf32>
    %631 = math.absf %615 : vector<2x2xf32>
    %cst_160 = arith.constant 0.000000e+00 : f32
    %632 = vector.broadcast %cst_160 : f32 to vector<2x2xf32>
    %633 = arith.subf %632, %631 : vector<2x2xf32>
    %634 = math.exp %633 : vector<2x2xf32>
    %cst_161 = arith.constant 1.000000e+00 : f32
    %635 = vector.broadcast %cst_161 : f32 to vector<2x2xf32>
    %636 = arith.addf %635, %634 : vector<2x2xf32>
    %637 = math.log %636 : vector<2x2xf32>
    %638 = arith.addf %630, %637 : vector<2x2xf32>
    %cst_162 = arith.constant 1.000000e+00 : f32
    %639 = vector.broadcast %cst_162 : f32 to vector<2x2xf32>
    %640 = arith.addf %638, %639 : vector<2x2xf32>
    %c0_163 = arith.constant 0 : index
    %c0_164 = arith.constant 0 : index
    %641 = vector.load %arg17[%c0_163, %c0_164] : memref<2x2xf32, #tpu.memory_space<vmem>>, vector<2x2xf32>
    tpu.vector_store %arg17[%c0_163, %c0_164], %640 {strides = array<i32>} : memref<2x2xf32, #tpu.memory_space<vmem>>, vector<2x2xf32>,
    return
  }
}

</mosaic_0001>

<llo_original>
// kernel: net_forward.5
$region0: #{net_forward.5}
  #allocation0 [shape = 'u32[]', space=smem, size = 0x4, offset = 0x4, fixed_abs, tag = 'smem constant byte address 0x4 - core index']
  #allocation1 [shape = 'u32[144,128]{1,0:T(1,128)}', space=vmem, size = 0x12000, scoped, tag = 'internal scratch']
  %s0 = inlined_call_operand.vmem [shape: bf16[4418,64], index: 0, kind: input, shape index: {}]
  %s1 = inlined_call_operand.vmem [shape: bf16[64,8], index: 1, kind: input, shape index: {}]
  %s2 = inlined_call_operand.vmem [shape: f32[1,8], index: 2, kind: input, shape index: {}]
  %s3 = inlined_call_operand.vmem [shape: bf16[4418,8], index: 3, kind: output, shape index: {}]
  %s4 = sld [smem:[#allocation0]]
  $region89: #{net_forward.5} parent=0
    _
  %s6 = ssub.s32 1, %s4
  %s7 = scalar_select 0, %s6, %s4
  $region1: #{net_forward.5} parent=0
    #allocation2 [shape = 'u8[262144]{0}', space=vmem, size = 0x40000, scoped, tag = 'output window, operand 0']
    loop: start=0, step=1, limit=11
    $region2: #{net_forward.5} parent=1 // loop_pre_header
      _
    $region3: #{net_forward.5} parent=1 // loop_header
      %s9 = sphi 0, %s13
      %p10 = scmp.ge.s32.totalorder %s9, 11
      %s19 = sphi 0, %s21
      %s22 = sphi 0, %s19
      %s23 = sphi 0, %s22
      %s39 = sphi 0, %s23
      %s43 = sphi 0, %s43
      %s45 = sphi 0, %s43
      %s46 = sphi 0, %s45
      %s60 = sphi 0, %s46
      %s64 = sphi 0, %s64
      %s66 = sphi 0, %s64
      %s67 = sphi 0, %s66
      %s81 = sphi 0, %s67
      %s87 = sphi 0, %s89
      %s90 = sphi 0, %s87
      %s91 = sphi 0, %s90
      %s107 = sphi 0, %s91
    $region4: #{net_forward.5} parent=1 // loop_header_branch
      %12 = sbr.rel (%p10) target = $region8
    $region5: #{net_forward.5} parent=1 // loop_body
      %s14 = ssub.s32 %s9, 1
      %s15 = ssub.s32 %s9, 2
      %s16 = sadd.s32 %s9, 1
      %s17 = ssub.s32 %s9, %s16
      %p18 = scmp.eq.s32.totalorder %s17, 0
      %s20 = sadd.s32 %s19, 1
      %s21 = scalar_select %p18, %s19, %s20
      %p24 = pneg %p18
      %p25 = scmp.eq.s32.totalorder %s9, 8
      %p26 = por %p24, %p25
      %p27 = scmp.ne.s32.totalorder %s19, %s22
      %p28 = scmp.eq.s32.totalorder %s9, 0
      %p29 = por %p27, %p28
      %p30 = scmp.ne.s32.totalorder %s19, %s22
      %p31 = scmp.eq.s32.totalorder %s14, 8
      %p32 = por %p30, %p31
      %p33 = scmp.ne.s32.totalorder %s22, %s23
      %p34 = scmp.eq.s32.totalorder %s14, 0
      %p35 = por %p33, %p34
      %p36 = scmp.ne.s32.totalorder %s22, %s23
      %p37 = scmp.eq.s32.totalorder %s15, 8
      %p38 = por %p36, %p37
      %p40 = scmp.ne.s32.totalorder %s23, %s39
      %p41 = scmp.eq.s32.totalorder %s15, 0
      %p42 = por %p40, %p41
      %s44 = sadd.s32 %s43, 1
      %p47 = scmp.eq.s32.totalorder %s9, 8
      %p48 = scmp.ne.s32.totalorder %s43, %s45
      %p49 = scmp.eq.s32.totalorder %s9, 0
      %p50 = por %p48, %p49
      %p51 = scmp.ne.s32.totalorder %s43, %s45
      %p52 = scmp.eq.s32.totalorder %s14, 8
      %p53 = por %p51, %p52
      %p54 = scmp.ne.s32.totalorder %s45, %s46
      %p55 = scmp.eq.s32.totalorder %s14, 0
      %p56 = por %p54, %p55
      %p57 = scmp.ne.s32.totalorder %s45, %s46
      %p58 = scmp.eq.s32.totalorder %s15, 8
      %p59 = por %p57, %p58
      %p61 = scmp.ne.s32.totalorder %s46, %s60
      %p62 = scmp.eq.s32.totalorder %s15, 0
      %p63 = por %p61, %p62
      %s65 = sadd.s32 %s64, 1
      %p68 = scmp.eq.s32.totalorder %s9, 8
      %p69 = scmp.ne.s32.totalorder %s64, %s66
      %p70 = scmp.eq.s32.totalorder %s9, 0
      %p71 = por %p69, %p70
      %p72 = scmp.ne.s32.totalorder %s64, %s66
      %p73 = scmp.eq.s32.totalorder %s14, 8
      %p74 = por %p72, %p73
      %p75 = scmp.ne.s32.totalorder %s66, %s67
      %p76 = scmp.eq.s32.totalorder %s14, 0
      %p77 = por %p75, %p76
      %p78 = scmp.ne.s32.totalorder %s66, %s67
      %p79 = scmp.eq.s32.totalorder %s15, 8
      %p80 = por %p78, %p79
      %p82 = scmp.ne.s32.totalorder %s67, %s81
      %p83 = scmp.eq.s32.totalorder %s15, 0
      %p84 = por %p82, %p83
      %s85 = ssub.s32 %s9, %s16
      %p86 = scmp.eq.s32.totalorder %s85, 0
      %s88 = sadd.s32 %s87, 1
      %s89 = scalar_select %p86, %s87, %s88
      %p92 = pneg %p86
      %p93 = scmp.eq.s32.totalorder %s9, 8
      %p94 = por %p92, %p93
      %p95 = scmp.ne.s32.totalorder %s87, %s90
      %p96 = scmp.eq.s32.totalorder %s9, 0
      %p97 = por %p95, %p96
      %p98 = scmp.ne.s32.totalorder %s87, %s90
      %p99 = scmp.eq.s32.totalorder %s14, 8
      %p100 = por %p98, %p99
      %p101 = scmp.ne.s32.totalorder %s90, %s91
      %p102 = scmp.eq.s32.totalorder %s14, 0
      %p103 = por %p101, %p102
      %p104 = scmp.ne.s32.totalorder %s90, %s91
      %p105 = scmp.eq.s32.totalorder %s15, 8
      %p106 = por %p104, %p105
      %p108 = scmp.ne.s32.totalorder %s91, %s107
      %p109 = scmp.eq.s32.totalorder %s15, 0
      %p110 = por %p108, %p109
      %p111 = scmp.le.s32.totalorder 1, %s9
      %p112 = scmp.lt.s32.totalorder %s9, 10
      %p113 = pnand %p111, %p112
      %p114 = pneg %p113
      // Predicated region
      $region9: #{net_forward.5} parent=5 // pred_check
        _
      $region10: #{net_forward.5} parent=5 // pred_check_branch
        %116 = sbr.rel (%p113) target = $region12
      $region11: #{net_forward.5} parent=5 // pred_region
        %s117 = ssub.s32 %s9, 1
        // Predicated region
        $region13: #{net_forward.5} parent=11 // pred_check
          %p118 = pneg %p56
        $region14: #{net_forward.5} parent=11 // pred_check_branch
          %120 = sbr.rel (%p118) target = $region16
        $region15: #{net_forward.5} parent=11 // pred_region
          _
        $region16: #{net_forward.5} parent=11 // pred_fallthru
          _
        // Predicated region
        $region17: #{net_forward.5} parent=11 // pred_check
          %p121 = pneg %p77
        $region18: #{net_forward.5} parent=11 // pred_check_branch
          %123 = sbr.rel (%p121) target = $region20
        $region19: #{net_forward.5} parent=11 // pred_region
          _
        $region20: #{net_forward.5} parent=11 // pred_fallthru
          _
      $region12: #{net_forward.5} parent=5 // pred_fallthru
        _
      %p124 = scmp.lt.s32.totalorder %s9, 9
      // Predicated region
      $region21: #{net_forward.5} parent=5 // pred_check
        %p125 = pneg %p124
      $region22: #{net_forward.5} parent=5 // pred_check_branch
        %127 = sbr.rel (%p125) target = $region24
      $region23: #{net_forward.5} parent=5 // pred_region
        // Predicated region
        $region25: #{net_forward.5} parent=23 // pred_check
          %p128 = pneg %p29
        $region26: #{net_forward.5} parent=23 // pred_check_branch
          %130 = sbr.rel (%p128) target = $region28
        $region27: #{net_forward.5} parent=23 // pred_region
          %s131 = smul.u32 64, %s9
          %s132 = ssub.s32 553, %s131
          %p133 = scmp.lt.s32.totalorder %s132, 64
          %s134 = scalar_select %p133, %s132, 64
          %s135 = smul.u32 64, %s134
          %p136 = scmp.lt.s32.totalorder %s131, 552
          %s137 = scalar_select %p136, %s131, 552
          %s138 = smul.addr %s137, 4
          %s139 = scalar_lea.vmem %s0, %s138
          %s140 = smul.u32 64, %s9
          %s141 = ssub.s32 553, %s140
          %p142 = scmp.lt.s32.totalorder %s141, 64
          %s143 = scalar_select %p142, %s141, 64
          %s144 = smul.u32 64, %s143
        $region28: #{net_forward.5} parent=23 // pred_fallthru
          _
      $region24: #{net_forward.5} parent=5 // pred_fallthru
        _
      %p145 = scmp.le.s32.totalorder 1, %s9
      %p146 = scmp.lt.s32.totalorder %s9, 10
      %p147 = pnand %p145, %p146
      %p148 = pneg %p147
      // Predicated region
      $region29: #{net_forward.5} parent=5 // pred_check
        _
      $region30: #{net_forward.5} parent=5 // pred_check_branch
        %150 = sbr.rel (%p147) target = $region32
      $region31: #{net_forward.5} parent=5 // pred_region
        %s151 = ssub.s32 %s9, 1
        %s152 = smul.u32 64, %s14
        %s153 = ssub.s32 553, %s152
        %p154 = scmp.lt.s32.totalorder %s153, 64
        %s155 = scalar_select %p154, %s153, 64
        %s156 = smul.u32 64, %s155
        %p157 = scmp.lt.s32.totalorder %s152, 552
        %s158 = scalar_select %p157, %s152, 552
        %s159 = smul.addr %s158, 4
        %s160 = scalar_lea.vmem %s0, %s159
        %p161 = pneg %p35
        %p162 = pneg %p32
        %p163 = pneg %p56
        %p164 = pneg %p53
        %p165 = pneg %p77
        %p166 = pneg %p74
        %p167 = pneg %p103
        %p168 = pneg %p100
        %s169 = sand.u32 %s90, 1
        %s170 = sand.u32 %s90, 1
        %s171 = smul.addr %s170, 256
        %s172 = scalar_lea.vmem [#allocation2], %s171
        %s173 = smul.u32 64, %s14
        %s174 = ssub.s32 553, %s173
        %p175 = scmp.lt.s32.totalorder %s174, 64
        %s176 = scalar_select %p175, %s174, 64
        %s177 = smul.u32 64, %s176
        %p178 = scmp.lt.s32.totalorder %s173, 552
        %s179 = scalar_select %p178, %s173, 552
        %s180 = smul.addr %s179, 4
        %s181 = scalar_lea.vmem %s0, %s180
        %s182 = smul.u32 64, %s14
        %s183 = ssub.s32 553, %s182
        %p184 = scmp.lt.s32.totalorder %s183, 64
        %s185 = scalar_select %p184, %s183, 64
        %s186 = smul.u32 64, %s185
        %s187 = smul.u32 64, %s14
        %s188 = ssub.s32 553, %s187
        %p189 = scmp.lt.s32.totalorder %s188, 64
        %s190 = scalar_select %p189, %s188, 64
        %s191 = smul.u32 64, %s190
        %v193 = vld [vmem:[%s181] sm:$0xf]
        %v194 = vld [vmem:[%s181 + $0x4] sm:$0xf]
        %v195 = vld [vmem:[%s181 + $0x8] sm:$0xf]
        %v196 = vld [vmem:[%s181 + $0xc] sm:$0xf]
        %v197 = vld [vmem:[%s181 + $0x10] sm:$0xf]
        %v198 = vld [vmem:[%s181 + $0x14] sm:$0xf]
        %v199 = vld [vmem:[%s181 + $0x18] sm:$0xf]
        %v200 = vld [vmem:[%s181 + $0x1c] sm:$0xf]
        %v201 = vld [vmem:[%s181 + $0x20] sm:$0xf]
        %v202 = vld [vmem:[%s181 + $0x24] sm:$0xf]
        %v203 = vld [vmem:[%s181 + $0x28] sm:$0xf]
        %v204 = vld [vmem:[%s181 + $0x2c] sm:$0xf]
        %v205 = vld [vmem:[%s181 + $0x30] sm:$0xf]
        %v206 = vld [vmem:[%s181 + $0x34] sm:$0xf]
        %v207 = vld [vmem:[%s181 + $0x38] sm:$0xf]
        %v208 = vld [vmem:[%s181 + $0x3c] sm:$0xf]
        %v209 = vld [vmem:[%s181 + $0x40] sm:$0xf]
        %v210 = vld [vmem:[%s181 + $0x44] sm:$0xf]
        %v211 = vld [vmem:[%s181 + $0x48] sm:$0xf]
        %v212 = vld [vmem:[%s181 + $0x4c] sm:$0xf]
        %v213 = vld [vmem:[%s181 + $0x50] sm:$0xf]
        %v214 = vld [vmem:[%s181 + $0x54] sm:$0xf]
        %v215 = vld [vmem:[%s181 + $0x58] sm:$0xf]
        %v216 = vld [vmem:[%s181 + $0x5c] sm:$0xf]
        %v217 = vld [vmem:[%s181 + $0x60] sm:$0xf]
        %v218 = vld [vmem:[%s181 + $0x64] sm:$0xf]
        %v219 = vld [vmem:[%s181 + $0x68] sm:$0xf]
        %v220 = vld [vmem:[%s181 + $0x6c] sm:$0xf]
        %v221 = vld [vmem:[%s181 + $0x70] sm:$0xf]
        %v222 = vld [vmem:[%s181 + $0x74] sm:$0xf]
        %v223 = vld [vmem:[%s181 + $0x78] sm:$0xf]
        %v224 = vld [vmem:[%s181 + $0x7c] sm:$0xf]
        %v225 = vld [vmem:[%s181 + $0x80] sm:$0xf]
        %v226 = vld [vmem:[%s181 + $0x84] sm:$0xf]
        %v227 = vld [vmem:[%s181 + $0x88] sm:$0xf]
        %v228 = vld [vmem:[%s181 + $0x8c] sm:$0xf]
        %v229 = vld [vmem:[%s181 + $0x90] sm:$0xf]
        %v230 = vld [vmem:[%s181 + $0x94] sm:$0xf]
        %v231 = vld [vmem:[%s181 + $0x98] sm:$0xf]
        %v232 = vld [vmem:[%s181 + $0x9c] sm:$0xf]
        %v233 = vld [vmem:[%s181 + $0xa0] sm:$0xf]
        %v234 = vld [vmem:[%s181 + $0xa4] sm:$0xf]
        %v235 = vld [vmem:[%s181 + $0xa8] sm:$0xf]
        %v236 = vld [vmem:[%s181 + $0xac] sm:$0xf]
        %v237 = vld [vmem:[%s181 + $0xb0] sm:$0xf]
        %v238 = vld [vmem:[%s181 + $0xb4] sm:$0xf]
        %v239 = vld [vmem:[%s181 + $0xb8] sm:$0xf]
        %v240 = vld [vmem:[%s181 + $0xbc] sm:$0xf]
        %v241 = vld [vmem:[%s181 + $0xc0] sm:$0xf]
        %v242 = vld [vmem:[%s181 + $0xc4] sm:$0xf]
        %v243 = vld [vmem:[%s181 + $0xc8] sm:$0xf]
        %v244 = vld [vmem:[%s181 + $0xcc] sm:$0xf]
        %v245 = vld [vmem:[%s181 + $0xd0] sm:$0xf]
        %v246 = vld [vmem:[%s181 + $0xd4] sm:$0xf]
        %v247 = vld [vmem:[%s181 + $0xd8] sm:$0xf]
        %v248 = vld [vmem:[%s181 + $0xdc] sm:$0xf]
        %v249 = vld [vmem:[%s181 + $0xe0] sm:$0xf]
        %v250 = vld [vmem:[%s181 + $0xe4] sm:$0xf]
        %v251 = vld [vmem:[%s181 + $0xe8] sm:$0xf]
        %v252 = vld [vmem:[%s181 + $0xec] sm:$0xf]
        %v253 = vld [vmem:[%s181 + $0xf0] sm:$0xf]
        %v254 = vld [vmem:[%s181 + $0xf4] sm:$0xf]
        %v255 = vld [vmem:[%s181 + $0xf8] sm:$0xf]
        %v256 = vld [vmem:[%s181 + $0xfc] sm:$0xf]
        %v257 = vld [vmem:[%s1] sm:$0xf]
        %v258 = vld [vmem:[%s1 + $0x4] sm:$0xf]
        %v259 = vld [vmem:[%s1 + $0x8] sm:$0xf]
        %v260 = vld [vmem:[%s1 + $0xc] sm:$0xf]
        %v261 = vld [vmem:[%s1 + $0x10] sm:$0xf]
        %v262 = vld [vmem:[%s1 + $0x14] sm:$0xf]
        %v263 = vld [vmem:[%s1 + $0x18] sm:$0xf]
        %v264 = vld [vmem:[%s1 + $0x1c] sm:$0xf]
        %v265 = vld [vmem:[%s2] sm:$0x1]
        %v267 = vlaneseq
        %v268 = vshrl.u32 %v267, 7
        %v269 = vsub.s32 0, %v268
        %v270 = vrot.slane %v265, %v269
        %v336 = vunpack.c.l.b16 %v193
        %v337 = vunpack.c.l.b16 %v194
        %v338 = vunpack.c.l.b16 %v195
        %v339 = vunpack.c.l.b16 %v196
        %v340 = vunpack.c.l.b16 %v197
        %v341 = vunpack.c.l.b16 %v198
        %v342 = vunpack.c.l.b16 %v199
        %v343 = vunpack.c.l.b16 %v200
        %v344 = vunpack.c.l.b16 %v201
        %v345 = vunpack.c.l.b16 %v202
        %v346 = vunpack.c.l.b16 %v203
        %v347 = vunpack.c.l.b16 %v204
        %v348 = vunpack.c.l.b16 %v205
        %v349 = vunpack.c.l.b16 %v206
        %v350 = vunpack.c.l.b16 %v207
        %v351 = vunpack.c.l.b16 %v208
        %v352 = vunpack.c.l.b16 %v209
        %v353 = vunpack.c.l.b16 %v210
        %v354 = vunpack.c.l.b16 %v211
        %v355 = vunpack.c.l.b16 %v212
        %v356 = vunpack.c.l.b16 %v213
        %v357 = vunpack.c.l.b16 %v214
        %v358 = vunpack.c.l.b16 %v215
        %v359 = vunpack.c.l.b16 %v216
        %v360 = vunpack.c.l.b16 %v217
        %v361 = vunpack.c.l.b16 %v218
        %v362 = vunpack.c.l.b16 %v219
        %v363 = vunpack.c.l.b16 %v220
        %v364 = vunpack.c.l.b16 %v221
        %v365 = vunpack.c.l.b16 %v222
        %v366 = vunpack.c.l.b16 %v223
        %v367 = vunpack.c.l.b16 %v224
        %v368 = vunpack.c.l.b16 %v225
        %v369 = vunpack.c.l.b16 %v226
        %v370 = vunpack.c.l.b16 %v227
        %v371 = vunpack.c.l.b16 %v228
        %v372 = vunpack.c.l.b16 %v229
        %v373 = vunpack.c.l.b16 %v230
        %v374 = vunpack.c.l.b16 %v231
        %v375 = vunpack.c.l.b16 %v232
        %v376 = vunpack.c.l.b16 %v233
        %v377 = vunpack.c.l.b16 %v234
        %v378 = vunpack.c.l.b16 %v235
        %v379 = vunpack.c.l.b16 %v236
        %v380 = vunpack.c.l.b16 %v237
        %v381 = vunpack.c.l.b16 %v238
        %v382 = vunpack.c.l.b16 %v239
        %v383 = vunpack.c.l.b16 %v240
        %v384 = vunpack.c.l.b16 %v241
        %v385 = vunpack.c.l.b16 %v242
        %v386 = vunpack.c.l.b16 %v243
        %v387 = vunpack.c.l.b16 %v244
        %v388 = vunpack.c.l.b16 %v245
        %v389 = vunpack.c.l.b16 %v246
        %v390 = vunpack.c.l.b16 %v247
        %v391 = vunpack.c.l.b16 %v248
        %v392 = vunpack.c.l.b16 %v249
        %v393 = vunpack.c.l.b16 %v250
        %v394 = vunpack.c.l.b16 %v251
        %v395 = vunpack.c.l.b16 %v252
        %v396 = vunpack.c.l.b16 %v253
        %v397 = vunpack.c.l.b16 %v254
        %v398 = vunpack.c.l.b16 %v255
        %v399 = vunpack.c.l.b16 %v256
        %v400 = vpack.c.b16 %v337, %v336
        %v401 = vpack.c.b16 %v339, %v338
        %v402 = vpack.c.b16 %v341, %v340
        %v403 = vpack.c.b16 %v343, %v342
        %v404 = vpack.c.b16 %v345, %v344
        %v405 = vpack.c.b16 %v347, %v346
        %v406 = vpack.c.b16 %v349, %v348
        %v407 = vpack.c.b16 %v351, %v350
        %v408 = vpack.c.b16 %v353, %v352
        %v409 = vpack.c.b16 %v355, %v354
        %v410 = vpack.c.b16 %v357, %v356
        %v411 = vpack.c.b16 %v359, %v358
        %v412 = vpack.c.b16 %v361, %v360
        %v413 = vpack.c.b16 %v363, %v362
        %v414 = vpack.c.b16 %v365, %v364
        %v415 = vpack.c.b16 %v367, %v366
        %v416 = vpack.c.b16 %v369, %v368
        %v417 = vpack.c.b16 %v371, %v370
        %v418 = vpack.c.b16 %v373, %v372
        %v419 = vpack.c.b16 %v375, %v374
        %v420 = vpack.c.b16 %v377, %v376
        %v421 = vpack.c.b16 %v379, %v378
        %v422 = vpack.c.b16 %v381, %v380
        %v423 = vpack.c.b16 %v383, %v382
        %v424 = vpack.c.b16 %v385, %v384
        %v425 = vpack.c.b16 %v387, %v386
        %v426 = vpack.c.b16 %v389, %v388
        %v427 = vpack.c.b16 %v391, %v390
        %v428 = vpack.c.b16 %v393, %v392
        %v429 = vpack.c.b16 %v395, %v394
        %v430 = vpack.c.b16 %v397, %v396
        %v431 = vpack.c.b16 %v399, %v398
        %v440 = vunpack.c.l.b16 %v257
        %v441 = vunpack.c.l.b16 %v258
        %v442 = vunpack.c.l.b16 %v259
        %v443 = vunpack.c.l.b16 %v260
        %v444 = vunpack.c.l.b16 %v261
        %v445 = vunpack.c.l.b16 %v262
        %v446 = vunpack.c.l.b16 %v263
        %v447 = vunpack.c.l.b16 %v264
        %v448 = vpack.c.b16 %v441, %v440
        %v449 = vpack.c.b16 %v443, %v442
        %v450 = vpack.c.b16 %v445, %v444
        %v451 = vpack.c.b16 %v447, %v446
        %vm456 = vcmask 523264
        %v458 = vsel %vm456, %v400, 0
        %v461 = vsel %vm456, %v401, 0
        %v464 = vsel %vm456, %v402, 0
        %v467 = vsel %vm456, %v403, 0
        %v470 = vsel %vm456, %v404, 0
        %v473 = vsel %vm456, %v405, 0
        %v476 = vsel %vm456, %v406, 0
        %v479 = vsel %vm456, %v407, 0
        %v482 = vsel %vm456, %v408, 0
        %v485 = vsel %vm456, %v409, 0
        %v488 = vsel %vm456, %v410, 0
        %v491 = vsel %vm456, %v411, 0
        %v494 = vsel %vm456, %v412, 0
        %v497 = vsel %vm456, %v413, 0
        %v500 = vsel %vm456, %v414, 0
        %v503 = vsel %vm456, %v415, 0
        %v506 = vsel %vm456, %v416, 0
        %v509 = vsel %vm456, %v417, 0
        %v512 = vsel %vm456, %v418, 0
        %v515 = vsel %vm456, %v419, 0
        %v518 = vsel %vm456, %v420, 0
        %v521 = vsel %vm456, %v421, 0
        %v524 = vsel %vm456, %v422, 0
        %v527 = vsel %vm456, %v423, 0
        %v530 = vsel %vm456, %v424, 0
        %v533 = vsel %vm456, %v425, 0
        %v536 = vsel %vm456, %v426, 0
        %v539 = vsel %vm456, %v427, 0
        %v542 = vsel %vm456, %v428, 0
        %v545 = vsel %vm456, %v429, 0
        %v548 = vsel %vm456, %v430, 0
        %v551 = vsel %vm456, %v431, 0
        %553 = vmatprep.subr.bf16.mxu0 0
        %554 = vmatpush1.bf16.msra.mxu0 %v448
        %555 = vmatprep.subr.bf16.mxu0 0
        %556 = vmatpush1.bf16.msra.mxu0 %v449
        %557 = vmatprep.subr.bf16.mxu0 0
        %558 = vmatpush1.bf16.msra.mxu0 %v450
        %559 = vmatprep.subr.bf16.mxu0 0
        %560 = vmatpush1.bf16.msra.mxu0 %v451
        %561 = vmatprep.subr.bf16.mxu0 0
        %562 = vmatpush1.bf16.msra.mxu0 0
        %563 = vmatprep.subr.bf16.mxu0 0
        %564 = vmatpush1.bf16.msra.mxu0 0
        %565 = vmatprep.subr.bf16.mxu0 0
        %566 = vmatpush1.bf16.msra.mxu0 0
        %567 = vmatprep.subr.bf16.mxu0 0
        %568 = vmatpush1.bf16.msra.mxu0 0
        %569 = vmatprep.subr.bf16.mxu0 0
        %570 = vmatpush1.bf16.msra.mxu0 0
        %571 = vmatprep.subr.bf16.mxu0 0
        %572 = vmatpush1.bf16.msra.mxu0 0
        %573 = vmatprep.subr.bf16.mxu0 0
        %574 = vmatpush1.bf16.msra.mxu0 0
        %575 = vmatprep.subr.bf16.mxu0 0
        %576 = vmatpush1.bf16.msra.mxu0 0
        %577 = vmatprep.subr.bf16.mxu0 0
        %578 = vmatpush1.bf16.msra.mxu0 0
        %579 = vmatprep.subr.bf16.mxu0 0
        %580 = vmatpush1.bf16.msra.mxu0 0
        %581 = vmatprep.subr.bf16.mxu0 0
        %582 = vmatpush1.bf16.msra.mxu0 0
        %583 = vmatprep.subr.bf16.mxu0 0
        %584 = vmatpush1.bf16.msra.mxu0 0
        %585 = vmatprep.mubr.bf16.mxu0 0
        %586 = vmatmul.mubr.bf16.gmra.mrb[0].mxu0 %v458
        %v587 = vpop.f32.mrb[0].mxu0
        %v588 = vadd.f32 %v270, %v587
        %v589 = vpop.f32.mrb[0].mxu0
        %v590 = vpop.f32.mrb[0].mxu0
        %v591 = vadd.f32 %v270, %v590
        %v592 = vpop.f32.mrb[0].mxu0
        %593 = vmatprep.mubr.bf16.mxu0 0
        %594 = vmatmul.mubr.bf16.gmra.mrb[0].mxu0 %v461
        %v595 = vpop.f32.mrb[0].mxu0
        %v596 = vadd.f32 %v270, %v595
        %v597 = vpop.f32.mrb[0].mxu0
        %v598 = vpop.f32.mrb[0].mxu0
        %v599 = vadd.f32 %v270, %v598
        %v600 = vpop.f32.mrb[0].mxu0
        %601 = vmatprep.mubr.bf16.mxu0 0
        %602 = vmatmul.mubr.bf16.gmra.mrb[0].mxu0 %v464
        %v603 = vpop.f32.mrb[0].mxu0
        %v604 = vadd.f32 %v270, %v603
        %v605 = vpop.f32.mrb[0].mxu0
        %v606 = vpop.f32.mrb[0].mxu0
        %v607 = vadd.f32 %v270, %v606
        %v608 = vpop.f32.mrb[0].mxu0
        %609 = vmatprep.mubr.bf16.mxu0 0
        %610 = vmatmul.mubr.bf16.gmra.mrb[0].mxu0 %v467
        %v611 = vpop.f32.mrb[0].mxu0
        %v612 = vadd.f32 %v270, %v611
        %v613 = vpop.f32.mrb[0].mxu0
        %v614 = vpop.f32.mrb[0].mxu0
        %v615 = vadd.f32 %v270, %v614
        %v616 = vpop.f32.mrb[0].mxu0
        %617 = vmatprep.mubr.bf16.mxu0 0
        %618 = vmatmul.mubr.bf16.gmra.mrb[0].mxu0 %v470
        %v619 = vpop.f32.mrb[0].mxu0
        %v620 = vadd.f32 %v270, %v619
        %v621 = vpop.f32.mrb[0].mxu0
        %v622 = vpop.f32.mrb[0].mxu0
        %v623 = vadd.f32 %v270, %v622
        %v624 = vpop.f32.mrb[0].mxu0
        %625 = vmatprep.mubr.bf16.mxu0 0
        %626 = vmatmul.mubr.bf16.gmra.mrb[0].mxu0 %v473
        %v627 = vpop.f32.mrb[0].mxu0
        %v628 = vadd.f32 %v270, %v627
        %v629 = vpop.f32.mrb[0].mxu0
        %v630 = vpop.f32.mrb[0].mxu0
        %v631 = vadd.f32 %v270, %v630
        %v632 = vpop.f32.mrb[0].mxu0
        %633 = vmatprep.mubr.bf16.mxu0 0
        %634 = vmatmul.mubr.bf16.gmra.mrb[0].mxu0 %v476
        %v635 = vpop.f32.mrb[0].mxu0
        %v636 = vadd.f32 %v270, %v635
        %v637 = vpop.f32.mrb[0].mxu0
        %v638 = vpop.f32.mrb[0].mxu0
        %v639 = vadd.f32 %v270, %v638
        %v640 = vpop.f32.mrb[0].mxu0
        %641 = vmatprep.mubr.bf16.mxu0 0
        %642 = vmatmul.mubr.bf16.gmra.mrb[0].mxu0 %v479
        %v643 = vpop.f32.mrb[0].mxu0
        %v644 = vadd.f32 %v270, %v643
        %v645 = vpop.f32.mrb[0].mxu0
        %v646 = vpop.f32.mrb[0].mxu0
        %v647 = vadd.f32 %v270, %v646
        %v648 = vpop.f32.mrb[0].mxu0
        %649 = vmatprep.mubr.bf16.mxu0 0
        %650 = vmatmul.mubr.bf16.gmra.mrb[0].mxu0 %v482
        %v651 = vpop.f32.mrb[0].mxu0
        %v652 = vadd.f32 %v270, %v651
        %v653 = vpop.f32.mrb[0].mxu0
        %v654 = vpop.f32.mrb[0].mxu0
        %v655 = vadd.f32 %v270, %v654
        %v656 = vpop.f32.mrb[0].mxu0
        %657 = vmatprep.mubr.bf16.mxu0 0
        %658 = vmatmul.mubr.bf16.gmra.mrb[0].mxu0 %v485
        %v659 = vpop.f32.mrb[0].mxu0
        %v660 = vadd.f32 %v270, %v659
        %v661 = vpop.f32.mrb[0].mxu0
        %v662 = vpop.f32.mrb[0].mxu0
        %v663 = vadd.f32 %v270, %v662
        %v664 = vpop.f32.mrb[0].mxu0
        %665 = vmatprep.mubr.bf16.mxu0 0
        %666 = vmatmul.mubr.bf16.gmra.mrb[0].mxu0 %v488
        %v667 = vpop.f32.mrb[0].mxu0
        %v668 = vadd.f32 %v270, %v667
        %v669 = vpop.f32.mrb[0].mxu0
        %v670 = vpop.f32.mrb[0].mxu0
        %v671 = vadd.f32 %v270, %v670
        %v672 = vpop.f32.mrb[0].mxu0
        %673 = vmatprep.mubr.bf16.mxu0 0
        %674 = vmatmul.mubr.bf16.gmra.mrb[0].mxu0 %v491
        %v675 = vpop.f32.mrb[0].mxu0
        %v676 = vadd.f32 %v270, %v675
        %v677 = vpop.f32.mrb[0].mxu0
        %v678 = vpop.f32.mrb[0].mxu0
        %v679 = vadd.f32 %v270, %v678
        %v680 = vpop.f32.mrb[0].mxu0
        %681 = vmatprep.mubr.bf16.mxu0 0
        %682 = vmatmul.mubr.bf16.gmra.mrb[0].mxu0 %v494
        %v683 = vpop.f32.mrb[0].mxu0
        %v684 = vadd.f32 %v270, %v683
        %v685 = vpop.f32.mrb[0].mxu0
        %v686 = vpop.f32.mrb[0].mxu0
        %v687 = vadd.f32 %v270, %v686
        %v688 = vpop.f32.mrb[0].mxu0
        %689 = vmatprep.mubr.bf16.mxu0 0
        %690 = vmatmul.mubr.bf16.gmra.mrb[0].mxu0 %v497
        %v691 = vpop.f32.mrb[0].mxu0
        %v692 = vadd.f32 %v270, %v691
        %v693 = vpop.f32.mrb[0].mxu0
        %v694 = vpop.f32.mrb[0].mxu0
        %v695 = vadd.f32 %v270, %v694
        %v696 = vpop.f32.mrb[0].mxu0
        %697 = vmatprep.mubr.bf16.mxu0 0
        %698 = vmatmul.mubr.bf16.gmra.mrb[0].mxu0 %v500
        %v699 = vpop.f32.mrb[0].mxu0
        %v700 = vadd.f32 %v270, %v699
        %v701 = vpop.f32.mrb[0].mxu0
        %v702 = vpop.f32.mrb[0].mxu0
        %v703 = vadd.f32 %v270, %v702
        %v704 = vpop.f32.mrb[0].mxu0
        %705 = vmatprep.mubr.bf16.mxu0 0
        %706 = vmatmul.mubr.bf16.gmra.mrb[0].mxu0 %v503
        %v707 = vpop.f32.mrb[0].mxu0
        %v708 = vadd.f32 %v270, %v707
        %v709 = vpop.f32.mrb[0].mxu0
        %v710 = vpop.f32.mrb[0].mxu0
        %v711 = vadd.f32 %v270, %v710
        %v712 = vpop.f32.mrb[0].mxu0
        %713 = vmatprep.mubr.bf16.mxu0 0
        %714 = vmatmul.mubr.bf16.gmra.mrb[0].mxu0 %v506
        %v715 = vpop.f32.mrb[0].mxu0
        %v716 = vadd.f32 %v270, %v715
        %v717 = vpop.f32.mrb[0].mxu0
        %v718 = vpop.f32.mrb[0].mxu0
        %v719 = vadd.f32 %v270, %v718
        %v720 = vpop.f32.mrb[0].mxu0
        %721 = vmatprep.mubr.bf16.mxu0 0
        %722 = vmatmul.mubr.bf16.gmra.mrb[0].mxu0 %v509
        %v723 = vpop.f32.mrb[0].mxu0
        %v724 = vadd.f32 %v270, %v723
        %v725 = vpop.f32.mrb[0].mxu0
        %v726 = vpop.f32.mrb[0].mxu0
        %v727 = vadd.f32 %v270, %v726
        %v728 = vpop.f32.mrb[0].mxu0
        %729 = vmatprep.mubr.bf16.mxu0 0
        %730 = vmatmul.mubr.bf16.gmra.mrb[0].mxu0 %v512
        %v731 = vpop.f32.mrb[0].mxu0
        %v732 = vadd.f32 %v270, %v731
        %v733 = vpop.f32.mrb[0].mxu0
        %v734 = vpop.f32.mrb[0].mxu0
        %v735 = vadd.f32 %v270, %v734
        %v736 = vpop.f32.mrb[0].mxu0
        %737 = vmatprep.mubr.bf16.mxu0 0
        %738 = vmatmul.mubr.bf16.gmra.mrb[0].mxu0 %v515
        %v739 = vpop.f32.mrb[0].mxu0
        %v740 = vadd.f32 %v270, %v739
        %v741 = vpop.f32.mrb[0].mxu0
        %v742 = vpop.f32.mrb[0].mxu0
        %v743 = vadd.f32 %v270, %v742
        %v744 = vpop.f32.mrb[0].mxu0
        %745 = vmatprep.mubr.bf16.mxu0 0
        %746 = vmatmul.mubr.bf16.gmra.mrb[0].mxu0 %v518
        %v747 = vpop.f32.mrb[0].mxu0
        %v748 = vadd.f32 %v270, %v747
        %v749 = vpop.f32.mrb[0].mxu0
        %v750 = vpop.f32.mrb[0].mxu0
        %v751 = vadd.f32 %v270, %v750
        %v752 = vpop.f32.mrb[0].mxu0
        %753 = vmatprep.mubr.bf16.mxu0 0
        %754 = vmatmul.mubr.bf16.gmra.mrb[0].mxu0 %v521
        %v755 = vpop.f32.mrb[0].mxu0
        %v756 = vadd.f32 %v270, %v755
        %v757 = vpop.f32.mrb[0].mxu0
        %v758 = vpop.f32.mrb[0].mxu0
        %v759 = vadd.f32 %v270, %v758
        %v760 = vpop.f32.mrb[0].mxu0
        %761 = vmatprep.mubr.bf16.mxu0 0
        %762 = vmatmul.mubr.bf16.gmra.mrb[0].mxu0 %v524
        %v763 = vpop.f32.mrb[0].mxu0
        %v764 = vadd.f32 %v270, %v763
        %v765 = vpop.f32.mrb[0].mxu0
        %v766 = vpop.f32.mrb[0].mxu0
        %v767 = vadd.f32 %v270, %v766
        %v768 = vpop.f32.mrb[0].mxu0
        %769 = vmatprep.mubr.bf16.mxu0 0
        %770 = vmatmul.mubr.bf16.gmra.mrb[0].mxu0 %v527
        %v771 = vpop.f32.mrb[0].mxu0
        %v772 = vadd.f32 %v270, %v771
        %v773 = vpop.f32.mrb[0].mxu0
        %v774 = vpop.f32.mrb[0].mxu0
        %v775 = vadd.f32 %v270, %v774
        %v776 = vpop.f32.mrb[0].mxu0
        %777 = vmatprep.mubr.bf16.mxu0 0
        %778 = vmatmul.mubr.bf16.gmra.mrb[0].mxu0 %v530
        %v779 = vpop.f32.mrb[0].mxu0
        %v780 = vadd.f32 %v270, %v779
        %v781 = vpop.f32.mrb[0].mxu0
        %v782 = vpop.f32.mrb[0].mxu0
        %v783 = vadd.f32 %v270, %v782
        %v784 = vpop.f32.mrb[0].mxu0
        %785 = vmatprep.mubr.bf16.mxu0 0
        %786 = vmatmul.mubr.bf16.gmra.mrb[0].mxu0 %v533
        %v787 = vpop.f32.mrb[0].mxu0
        %v788 = vadd.f32 %v270, %v787
        %v789 = vpop.f32.mrb[0].mxu0
        %v790 = vpop.f32.mrb[0].mxu0
        %v791 = vadd.f32 %v270, %v790
        %v792 = vpop.f32.mrb[0].mxu0
        %793 = vmatprep.mubr.bf16.mxu0 0
        %794 = vmatmul.mubr.bf16.gmra.mrb[0].mxu0 %v536
        %v795 = vpop.f32.mrb[0].mxu0
        %v796 = vadd.f32 %v270, %v795
        %v797 = vpop.f32.mrb[0].mxu0
        %v798 = vpop.f32.mrb[0].mxu0
        %v799 = vadd.f32 %v270, %v798
        %v800 = vpop.f32.mrb[0].mxu0
        %801 = vmatprep.mubr.bf16.mxu0 0
        %802 = vmatmul.mubr.bf16.gmra.mrb[0].mxu0 %v539
        %v803 = vpop.f32.mrb[0].mxu0
        %v804 = vadd.f32 %v270, %v803
        %v805 = vpop.f32.mrb[0].mxu0
        %v806 = vpop.f32.mrb[0].mxu0
        %v807 = vadd.f32 %v270, %v806
        %v808 = vpop.f32.mrb[0].mxu0
        %809 = vmatprep.mubr.bf16.mxu0 0
        %810 = vmatmul.mubr.bf16.gmra.mrb[0].mxu0 %v542
        %v811 = vpop.f32.mrb[0].mxu0
        %v812 = vadd.f32 %v270, %v811
        %v813 = vpop.f32.mrb[0].mxu0
        %v814 = vpop.f32.mrb[0].mxu0
        %v815 = vadd.f32 %v270, %v814
        %v816 = vpop.f32.mrb[0].mxu0
        %817 = vmatprep.mubr.bf16.mxu0 0
        %818 = vmatmul.mubr.bf16.gmra.mrb[0].mxu0 %v545
        %v819 = vpop.f32.mrb[0].mxu0
        %v820 = vadd.f32 %v270, %v819
        %v821 = vpop.f32.mrb[0].mxu0
        %v822 = vpop.f32.mrb[0].mxu0
        %v823 = vadd.f32 %v270, %v822
        %v824 = vpop.f32.mrb[0].mxu0
        %825 = vmatprep.mubr.bf16.mxu0 0
        %826 = vmatmul.mubr.bf16.gmra.mrb[0].mxu0 %v548
        %v827 = vpop.f32.mrb[0].mxu0
        %v828 = vadd.f32 %v270, %v827
        %v829 = vpop.f32.mrb[0].mxu0
        %v830 = vpop.f32.mrb[0].mxu0
        %v831 = vadd.f32 %v270, %v830
        %v832 = vpop.f32.mrb[0].mxu0
        %833 = vmatprep.mubr.bf16.mxu0 0
        %834 = vmatmul.mubr.bf16.gmra.mrb[0].mxu0 %v551
        %v835 = vpop.f32.mrb[0].mxu0
        %v836 = vadd.f32 %v270, %v835
        %v837 = vpop.f32.mrb[0].mxu0
        %v838 = vpop.f32.mrb[0].mxu0
        %v839 = vadd.f32 %v270, %v838
        %v840 = vpop.f32.mrb[0].mxu0
        %841 = vdwg.mxu0
        %v842 = vmax.f32 %v588, 0.0
        %v843 = vmax.f32 %v591, 0.0
        %v844 = vmax.f32 %v596, 0.0
        %v845 = vmax.f32 %v599, 0.0
        %v846 = vmax.f32 %v604, 0.0
        %v847 = vmax.f32 %v607, 0.0
        %v848 = vmax.f32 %v612, 0.0
        %v849 = vmax.f32 %v615, 0.0
        %v850 = vmax.f32 %v620, 0.0
        %v851 = vmax.f32 %v623, 0.0
        %v852 = vmax.f32 %v628, 0.0
        %v853 = vmax.f32 %v631, 0.0
        %v854 = vmax.f32 %v636, 0.0
        %v855 = vmax.f32 %v639, 0.0
        %v856 = vmax.f32 %v644, 0.0
        %v857 = vmax.f32 %v647, 0.0
        %v858 = vmax.f32 %v652, 0.0
        %v859 = vmax.f32 %v655, 0.0
        %v860 = vmax.f32 %v660, 0.0
        %v861 = vmax.f32 %v663, 0.0
        %v862 = vmax.f32 %v668, 0.0
        %v863 = vmax.f32 %v671, 0.0
        %v864 = vmax.f32 %v676, 0.0
        %v865 = vmax.f32 %v679, 0.0
        %v866 = vmax.f32 %v684, 0.0
        %v867 = vmax.f32 %v687, 0.0
        %v868 = vmax.f32 %v692, 0.0
        %v869 = vmax.f32 %v695, 0.0
        %v870 = vmax.f32 %v700, 0.0
        %v871 = vmax.f32 %v703, 0.0
        %v872 = vmax.f32 %v708, 0.0
        %v873 = vmax.f32 %v711, 0.0
        %v874 = vmax.f32 %v716, 0.0
        %v875 = vmax.f32 %v719, 0.0
        %v876 = vmax.f32 %v724, 0.0
        %v877 = vmax.f32 %v727, 0.0
        %v878 = vmax.f32 %v732, 0.0
        %v879 = vmax.f32 %v735, 0.0
        %v880 = vmax.f32 %v740, 0.0
        %v881 = vmax.f32 %v743, 0.0
        %v882 = vmax.f32 %v748, 0.0
        %v883 = vmax.f32 %v751, 0.0
        %v884 = vmax.f32 %v756, 0.0
        %v885 = vmax.f32 %v759, 0.0
        %v886 = vmax.f32 %v764, 0.0
        %v887 = vmax.f32 %v767, 0.0
        %v888 = vmax.f32 %v772, 0.0
        %v889 = vmax.f32 %v775, 0.0
        %v890 = vmax.f32 %v780, 0.0
        %v891 = vmax.f32 %v783, 0.0
        %v892 = vmax.f32 %v788, 0.0
        %v893 = vmax.f32 %v791, 0.0
        %v894 = vmax.f32 %v796, 0.0
        %v895 = vmax.f32 %v799, 0.0
        %v896 = vmax.f32 %v804, 0.0
        %v897 = vmax.f32 %v807, 0.0
        %v898 = vmax.f32 %v812, 0.0
        %v899 = vmax.f32 %v815, 0.0
        %v900 = vmax.f32 %v820, 0.0
        %v901 = vmax.f32 %v823, 0.0
        %v902 = vmax.f32 %v828, 0.0
        %v903 = vmax.f32 %v831, 0.0
        %v904 = vmax.f32 %v836, 0.0
        %v905 = vmax.f32 %v839, 0.0
        %v906 = vpack.c.bf16 %v843, %v842
        %v907 = vpack.c.bf16 %v845, %v844
        %v908 = vpack.c.bf16 %v847, %v846
        %v909 = vpack.c.bf16 %v849, %v848
        %v910 = vpack.c.bf16 %v851, %v850
        %v911 = vpack.c.bf16 %v853, %v852
        %v912 = vpack.c.bf16 %v855, %v854
        %v913 = vpack.c.bf16 %v857, %v856
        %v914 = vpack.c.bf16 %v859, %v858
        %v915 = vpack.c.bf16 %v861, %v860
        %v916 = vpack.c.bf16 %v863, %v862
        %v917 = vpack.c.bf16 %v865, %v864
        %v918 = vpack.c.bf16 %v867, %v866
        %v919 = vpack.c.bf16 %v869, %v868
        %v920 = vpack.c.bf16 %v871, %v870
        %v921 = vpack.c.bf16 %v873, %v872
        %v922 = vpack.c.bf16 %v875, %v874
        %v923 = vpack.c.bf16 %v877, %v876
        %v924 = vpack.c.bf16 %v879, %v878
        %v925 = vpack.c.bf16 %v881, %v880
        %v926 = vpack.c.bf16 %v883, %v882
        %v927 = vpack.c.bf16 %v885, %v884
        %v928 = vpack.c.bf16 %v887, %v886
        %v929 = vpack.c.bf16 %v889, %v888
        %v930 = vpack.c.bf16 %v891, %v890
        %v931 = vpack.c.bf16 %v893, %v892
        %v932 = vpack.c.bf16 %v895, %v894
        %v933 = vpack.c.bf16 %v897, %v896
        %v934 = vpack.c.bf16 %v899, %v898
        %v935 = vpack.c.bf16 %v901, %v900
        %v936 = vpack.c.bf16 %v903, %v902
        %v937 = vpack.c.bf16 %v905, %v904
        %v970 = vunpack.c.l.b16 %v906
        %v971 = vunpack.c.h.b16 %v906
        %v972 = vunpack.c.l.b16 %v907
        %v973 = vunpack.c.h.b16 %v907
        %v974 = vunpack.c.l.b16 %v908
        %v975 = vunpack.c.h.b16 %v908
        %v976 = vunpack.c.l.b16 %v909
        %v977 = vunpack.c.h.b16 %v909
        %v978 = vunpack.c.l.b16 %v910
        %v979 = vunpack.c.h.b16 %v910
        %v980 = vunpack.c.l.b16 %v911
        %v981 = vunpack.c.h.b16 %v911
        %v982 = vunpack.c.l.b16 %v912
        %v983 = vunpack.c.h.b16 %v912
        %v984 = vunpack.c.l.b16 %v913
        %v985 = vunpack.c.h.b16 %v913
        %v986 = vunpack.c.l.b16 %v914
        %v987 = vunpack.c.h.b16 %v914
        %v988 = vunpack.c.l.b16 %v915
        %v989 = vunpack.c.h.b16 %v915
        %v990 = vunpack.c.l.b16 %v916
        %v991 = vunpack.c.h.b16 %v916
        %v992 = vunpack.c.l.b16 %v917
        %v993 = vunpack.c.h.b16 %v917
        %v994 = vunpack.c.l.b16 %v918
        %v995 = vunpack.c.h.b16 %v918
        %v996 = vunpack.c.l.b16 %v919
        %v997 = vunpack.c.h.b16 %v919
        %v998 = vunpack.c.l.b16 %v920
        %v999 = vunpack.c.h.b16 %v920
        %v1000 = vunpack.c.l.b16 %v921
        %v1001 = vunpack.c.h.b16 %v921
        %v1002 = vunpack.c.l.b16 %v922
        %v1003 = vunpack.c.h.b16 %v922
        %v1004 = vunpack.c.l.b16 %v923
        %v1005 = vunpack.c.h.b16 %v923
        %v1006 = vunpack.c.l.b16 %v924
        %v1007 = vunpack.c.h.b16 %v924
        %v1008 = vunpack.c.l.b16 %v925
        %v1009 = vunpack.c.h.b16 %v925
        %v1010 = vunpack.c.l.b16 %v926
        %v1011 = vunpack.c.h.b16 %v926
        %v1012 = vunpack.c.l.b16 %v927
        %v1013 = vunpack.c.h.b16 %v927
        %v1014 = vunpack.c.l.b16 %v928
        %v1015 = vunpack.c.h.b16 %v928
        %v1016 = vunpack.c.l.b16 %v929
        %v1017 = vunpack.c.h.b16 %v929
        %v1018 = vunpack.c.l.b16 %v930
        %v1019 = vunpack.c.h.b16 %v930
        %v1020 = vunpack.c.l.b16 %v931
        %v1021 = vunpack.c.h.b16 %v931
        %v1022 = vunpack.c.l.b16 %v932
        %v1023 = vunpack.c.h.b16 %v932
        %v1024 = vunpack.c.l.b16 %v933
        %v1025 = vunpack.c.h.b16 %v933
        %v1026 = vunpack.c.l.b16 %v934
        %v1027 = vunpack.c.h.b16 %v934
        %v1028 = vunpack.c.l.b16 %v935
        %v1029 = vunpack.c.h.b16 %v935
        %v1030 = vunpack.c.l.b16 %v936
        %v1031 = vunpack.c.h.b16 %v936
        %v1032 = vunpack.c.l.b16 %v937
        %v1033 = vunpack.c.h.b16 %v937
        %v1034 = vpack.c.b16 %v970, %v970
        %v1035 = vpack.c.b16 %v971, %v971
        %v1036 = vpack.c.b16 %v972, %v972
        %v1037 = vpack.c.b16 %v973, %v973
        %v1038 = vpack.c.b16 %v974, %v974
        %v1039 = vpack.c.b16 %v975, %v975
        %v1040 = vpack.c.b16 %v976, %v976
        %v1041 = vpack.c.b16 %v977, %v977
        %v1042 = vpack.c.b16 %v978, %v978
        %v1043 = vpack.c.b16 %v979, %v979
        %v1044 = vpack.c.b16 %v980, %v980
        %v1045 = vpack.c.b16 %v981, %v981
        %v1046 = vpack.c.b16 %v982, %v982
        %v1047 = vpack.c.b16 %v983, %v983
        %v1048 = vpack.c.b16 %v984, %v984
        %v1049 = vpack.c.b16 %v985, %v985
        %v1050 = vpack.c.b16 %v986, %v986
        %v1051 = vpack.c.b16 %v987, %v987
        %v1052 = vpack.c.b16 %v988, %v988
        %v1053 = vpack.c.b16 %v989, %v989
        %v1054 = vpack.c.b16 %v990, %v990
        %v1055 = vpack.c.b16 %v991, %v991
        %v1056 = vpack.c.b16 %v992, %v992
        %v1057 = vpack.c.b16 %v993, %v993
        %v1058 = vpack.c.b16 %v994, %v994
        %v1059 = vpack.c.b16 %v995, %v995
        %v1060 = vpack.c.b16 %v996, %v996
        %v1061 = vpack.c.b16 %v997, %v997
        %v1062 = vpack.c.b16 %v998, %v998
        %v1063 = vpack.c.b16 %v999, %v999
        %v1064 = vpack.c.b16 %v1000, %v1000
        %v1065 = vpack.c.b16 %v1001, %v1001
        %v1066 = vpack.c.b16 %v1002, %v1002
        %v1067 = vpack.c.b16 %v1003, %v1003
        %v1068 = vpack.c.b16 %v1004, %v1004
        %v1069 = vpack.c.b16 %v1005, %v1005
        %v1070 = vpack.c.b16 %v1006, %v1006
        %v1071 = vpack.c.b16 %v1007, %v1007
        %v1072 = vpack.c.b16 %v1008, %v1008
        %v1073 = vpack.c.b16 %v1009, %v1009
        %v1074 = vpack.c.b16 %v1010, %v1010
        %v1075 = vpack.c.b16 %v1011, %v1011
        %v1076 = vpack.c.b16 %v1012, %v1012
        %v1077 = vpack.c.b16 %v1013, %v1013
        %v1078 = vpack.c.b16 %v1014, %v1014
        %v1079 = vpack.c.b16 %v1015, %v1015
        %v1080 = vpack.c.b16 %v1016, %v1016
        %v1081 = vpack.c.b16 %v1017, %v1017
        %v1082 = vpack.c.b16 %v1018, %v1018
        %v1083 = vpack.c.b16 %v1019, %v1019
        %v1084 = vpack.c.b16 %v1020, %v1020
        %v1085 = vpack.c.b16 %v1021, %v1021
        %v1086 = vpack.c.b16 %v1022, %v1022
        %v1087 = vpack.c.b16 %v1023, %v1023
        %v1088 = vpack.c.b16 %v1024, %v1024
        %v1089 = vpack.c.b16 %v1025, %v1025
        %v1090 = vpack.c.b16 %v1026, %v1026
        %v1091 = vpack.c.b16 %v1027, %v1027
        %v1092 = vpack.c.b16 %v1028, %v1028
        %v1093 = vpack.c.b16 %v1029, %v1029
        %v1094 = vpack.c.b16 %v1030, %v1030
        %v1095 = vpack.c.b16 %v1031, %v1031
        %v1096 = vpack.c.b16 %v1032, %v1032
        %v1097 = vpack.c.b16 %v1033, %v1033
        %vm1162 = vcmask 60416
        %1163 = vst.msk [vmem:[%s172] sm:$0xf] %vm1162, %v1034
        %1164 = vst.msk [vmem:[%s172 + $0x4] sm:$0xf] %vm1162, %v1035
        %1165 = vst.msk [vmem:[%s172 + $0x8] sm:$0xf] %vm1162, %v1036
        %1166 = vst.msk [vmem:[%s172 + $0xc] sm:$0xf] %vm1162, %v1037
        %1167 = vst.msk [vmem:[%s172 + $0x10] sm:$0xf] %vm1162, %v1038
        %1168 = vst.msk [vmem:[%s172 + $0x14] sm:$0xf] %vm1162, %v1039
        %1169 = vst.msk [vmem:[%s172 + $0x18] sm:$0xf] %vm1162, %v1040
        %1170 = vst.msk [vmem:[%s172 + $0x1c] sm:$0xf] %vm1162, %v1041
        %1171 = vst.msk [vmem:[%s172 + $0x20] sm:$0xf] %vm1162, %v1042
        %1172 = vst.msk [vmem:[%s172 + $0x24] sm:$0xf] %vm1162, %v1043
        %1173 = vst.msk [vmem:[%s172 + $0x28] sm:$0xf] %vm1162, %v1044
        %1174 = vst.msk [vmem:[%s172 + $0x2c] sm:$0xf] %vm1162, %v1045
        %1175 = vst.msk [vmem:[%s172 + $0x30] sm:$0xf] %vm1162, %v1046
        %1176 = vst.msk [vmem:[%s172 + $0x34] sm:$0xf] %vm1162, %v1047
        %1177 = vst.msk [vmem:[%s172 + $0x38] sm:$0xf] %vm1162, %v1048
        %1178 = vst.msk [vmem:[%s172 + $0x3c] sm:$0xf] %vm1162, %v1049
        %1179 = vst.msk [vmem:[%s172 + $0x40] sm:$0xf] %vm1162, %v1050
        %1180 = vst.msk [vmem:[%s172 + $0x44] sm:$0xf] %vm1162, %v1051
        %1181 = vst.msk [vmem:[%s172 + $0x48] sm:$0xf] %vm1162, %v1052
        %1182 = vst.msk [vmem:[%s172 + $0x4c] sm:$0xf] %vm1162, %v1053
        %1183 = vst.msk [vmem:[%s172 + $0x50] sm:$0xf] %vm1162, %v1054
        %1184 = vst.msk [vmem:[%s172 + $0x54] sm:$0xf] %vm1162, %v1055
        %1185 = vst.msk [vmem:[%s172 + $0x58] sm:$0xf] %vm1162, %v1056
        %1186 = vst.msk [vmem:[%s172 + $0x5c] sm:$0xf] %vm1162, %v1057
        %1187 = vst.msk [vmem:[%s172 + $0x60] sm:$0xf] %vm1162, %v1058
        %1188 = vst.msk [vmem:[%s172 + $0x64] sm:$0xf] %vm1162, %v1059
        %1189 = vst.msk [vmem:[%s172 + $0x68] sm:$0xf] %vm1162, %v1060
        %1190 = vst.msk [vmem:[%s172 + $0x6c] sm:$0xf] %vm1162, %v1061
        %1191 = vst.msk [vmem:[%s172 + $0x70] sm:$0xf] %vm1162, %v1062
        %1192 = vst.msk [vmem:[%s172 + $0x74] sm:$0xf] %vm1162, %v1063
        %1193 = vst.msk [vmem:[%s172 + $0x78] sm:$0xf] %vm1162, %v1064
        %1194 = vst.msk [vmem:[%s172 + $0x7c] sm:$0xf] %vm1162, %v1065
        %1195 = vst.msk [vmem:[%s172 + $0x80] sm:$0xf] %vm1162, %v1066
        %1196 = vst.msk [vmem:[%s172 + $0x84] sm:$0xf] %vm1162, %v1067
        %1197 = vst.msk [vmem:[%s172 + $0x88] sm:$0xf] %vm1162, %v1068
        %1198 = vst.msk [vmem:[%s172 + $0x8c] sm:$0xf] %vm1162, %v1069
        %1199 = vst.msk [vmem:[%s172 + $0x90] sm:$0xf] %vm1162, %v1070
        %1200 = vst.msk [vmem:[%s172 + $0x94] sm:$0xf] %vm1162, %v1071
        %1201 = vst.msk [vmem:[%s172 + $0x98] sm:$0xf] %vm1162, %v1072
        %1202 = vst.msk [vmem:[%s172 + $0x9c] sm:$0xf] %vm1162, %v1073
        %1203 = vst.msk [vmem:[%s172 + $0xa0] sm:$0xf] %vm1162, %v1074
        %1204 = vst.msk [vmem:[%s172 + $0xa4] sm:$0xf] %vm1162, %v1075
        %1205 = vst.msk [vmem:[%s172 + $0xa8] sm:$0xf] %vm1162, %v1076
        %1206 = vst.msk [vmem:[%s172 + $0xac] sm:$0xf] %vm1162, %v1077
        %1207 = vst.msk [vmem:[%s172 + $0xb0] sm:$0xf] %vm1162, %v1078
        %1208 = vst.msk [vmem:[%s172 + $0xb4] sm:$0xf] %vm1162, %v1079
        %1209 = vst.msk [vmem:[%s172 + $0xb8] sm:$0xf] %vm1162, %v1080
        %1210 = vst.msk [vmem:[%s172 + $0xbc] sm:$0xf] %vm1162, %v1081
        %1211 = vst.msk [vmem:[%s172 + $0xc0] sm:$0xf] %vm1162, %v1082
        %1212 = vst.msk [vmem:[%s172 + $0xc4] sm:$0xf] %vm1162, %v1083
        %1213 = vst.msk [vmem:[%s172 + $0xc8] sm:$0xf] %vm1162, %v1084
        %1214 = vst.msk [vmem:[%s172 + $0xcc] sm:$0xf] %vm1162, %v1085
        %1215 = vst.msk [vmem:[%s172 + $0xd0] sm:$0xf] %vm1162, %v1086
        %1216 = vst.msk [vmem:[%s172 + $0xd4] sm:$0xf] %vm1162, %v1087
        %1217 = vst.msk [vmem:[%s172 + $0xd8] sm:$0xf] %vm1162, %v1088
        %1218 = vst.msk [vmem:[%s172 + $0xdc] sm:$0xf] %vm1162, %v1089
        %1219 = vst.msk [vmem:[%s172 + $0xe0] sm:$0xf] %vm1162, %v1090
        %1220 = vst.msk [vmem:[%s172 + $0xe4] sm:$0xf] %vm1162, %v1091
        %1221 = vst.msk [vmem:[%s172 + $0xe8] sm:$0xf] %vm1162, %v1092
        %1222 = vst.msk [vmem:[%s172 + $0xec] sm:$0xf] %vm1162, %v1093
        %1223 = vst.msk [vmem:[%s172 + $0xf0] sm:$0xf] %vm1162, %v1094
        %1224 = vst.msk [vmem:[%s172 + $0xf4] sm:$0xf] %vm1162, %v1095
        %1225 = vst.msk [vmem:[%s172 + $0xf8] sm:$0xf] %vm1162, %v1096
        %1226 = vst.msk [vmem:[%s172 + $0xfc] sm:$0xf] %vm1162, %v1097
        %s1227 = sand.u32 %s90, 1
        %s1228 = sand.u32 %s90, 1
        %s1229 = smul.addr %s1228, 256
        %s1230 = scalar_lea.vmem [#allocation2], %s1229
        // Predicated region
        $region33: #{net_forward.5} parent=31 // pred_check
          %p1231 = pneg %p100
        $region34: #{net_forward.5} parent=31 // pred_check_branch
          %1233 = sbr.rel (%p1231) target = $region36
        $region35: #{net_forward.5} parent=31 // pred_region
          %s1234 = smul.u32 64, %s14
          %s1235 = ssub.s32 553, %s1234
          %p1236 = scmp.lt.s32.totalorder %s1235, 64
          %s1237 = scalar_select %p1236, %s1235, 64
          %s1238 = smul.u32 64, %s1237
          %p1239 = scmp.ne.s32.totalorder 0, %s1238
          %s1240 = smul.addr %s1234, 4
          %s1241 = scalar_lea.vmem %s3, %s1240
          // Predicated region
          $region37: #{net_forward.5} parent=35 // pred_check
            %p1242 = pneg %p1239
          $region38: #{net_forward.5} parent=35 // pred_check_branch
            %1244 = sbr.rel (%p1242) target = $region40
          $region39: #{net_forward.5} parent=35 // pred_region
            // Predicated region
            $region41: #{net_forward.5} parent=39 // pred_check
              _
            $region42: #{net_forward.5} parent=39 // pred_check_branch
              %1246 = sbr.rel target = $region44
            $region43: #{net_forward.5} parent=39 // pred_region
              // Predicated region
              $region63: #{net_forward.5} parent=43 // pred_check
                _
              $region64: #{net_forward.5} parent=43 // pred_check_branch
                %1421 = sbr.rel (0) target = $region66
              $region65: #{net_forward.5} parent=43 // pred_region
                %s1423 = sshrl.u32 %s1237, 6
                // While loop
                $region67: #{net_forward.5} parent=65 // loop_pre_header
                  _
                $region68: #{net_forward.5} parent=65 // loop_header
                  %s1425 = sphi 0, %s1427
                  %p1426 = scmp.ge.s32.totalorder %s1425, %s1423
                  %s1430 = sphi 0, %s1563
                  %s1431 = sphi %s1230, %s1566
                  %s1432 = sphi %s1241, %s1567
                $region69: #{net_forward.5} parent=65 // loop_header_branch
                  %1429 = sbr.rel (%p1426) target = $region73
                $region70: #{net_forward.5} parent=65 // loop_body
                  %v1433 = vld [vmem:[%s1431] sm:$0xf]
                  %1434 = vst [vmem:[%s1432] sm:$0xf] %v1433
                  %v1435 = vld [vmem:[%s1431 + $0x4] sm:$0xf]
                  %1436 = vst [vmem:[%s1432 + $0x4] sm:$0xf] %v1435
                  %v1437 = vld [vmem:[%s1431 + $0x8] sm:$0xf]
                  %1438 = vst [vmem:[%s1432 + $0x8] sm:$0xf] %v1437
                  %v1439 = vld [vmem:[%s1431 + $0xc] sm:$0xf]
                  %1440 = vst [vmem:[%s1432 + $0xc] sm:$0xf] %v1439
                  %v1441 = vld [vmem:[%s1431 + $0x10] sm:$0xf]
                  %1442 = vst [vmem:[%s1432 + $0x10] sm:$0xf] %v1441
                  %v1443 = vld [vmem:[%s1431 + $0x14] sm:$0xf]
                  %1444 = vst [vmem:[%s1432 + $0x14] sm:$0xf] %v1443
                  %v1445 = vld [vmem:[%s1431 + $0x18] sm:$0xf]
                  %1446 = vst [vmem:[%s1432 + $0x18] sm:$0xf] %v1445
                  %v1447 = vld [vmem:[%s1431 + $0x1c] sm:$0xf]
                  %1448 = vst [vmem:[%s1432 + $0x1c] sm:$0xf] %v1447
                  %v1449 = vld [vmem:[%s1431 + $0x20] sm:$0xf]
                  %1450 = vst [vmem:[%s1432 + $0x20] sm:$0xf] %v1449
                  %v1451 = vld [vmem:[%s1431 + $0x24] sm:$0xf]
                  %1452 = vst [vmem:[%s1432 + $0x24] sm:$0xf] %v1451
                  %v1453 = vld [vmem:[%s1431 + $0x28] sm:$0xf]
                  %1454 = vst [vmem:[%s1432 + $0x28] sm:$0xf] %v1453
                  %v1455 = vld [vmem:[%s1431 + $0x2c] sm:$0xf]
                  %1456 = vst [vmem:[%s1432 + $0x2c] sm:$0xf] %v1455
                  %v1457 = vld [vmem:[%s1431 + $0x30] sm:$0xf]
                  %1458 = vst [vmem:[%s1432 + $0x30] sm:$0xf] %v1457
                  %v1459 = vld [vmem:[%s1431 + $0x34] sm:$0xf]
                  %1460 = vst [vmem:[%s1432 + $0x34] sm:$0xf] %v1459
                  %v1461 = vld [vmem:[%s1431 + $0x38] sm:$0xf]
                  %1462 = vst [vmem:[%s1432 + $0x38] sm:$0xf] %v1461
                  %v1463 = vld [vmem:[%s1431 + $0x3c] sm:$0xf]
                  %1464 = vst [vmem:[%s1432 + $0x3c] sm:$0xf] %v1463
                  %v1465 = vld [vmem:[%s1431 + $0x40] sm:$0xf]
                  %1466 = vst [vmem:[%s1432 + $0x40] sm:$0xf] %v1465
                  %v1467 = vld [vmem:[%s1431 + $0x44] sm:$0xf]
                  %1468 = vst [vmem:[%s1432 + $0x44] sm:$0xf] %v1467
                  %v1469 = vld [vmem:[%s1431 + $0x48] sm:$0xf]
                  %1470 = vst [vmem:[%s1432 + $0x48] sm:$0xf] %v1469
                  %v1471 = vld [vmem:[%s1431 + $0x4c] sm:$0xf]
                  %1472 = vst [vmem:[%s1432 + $0x4c] sm:$0xf] %v1471
                  %v1473 = vld [vmem:[%s1431 + $0x50] sm:$0xf]
                  %1474 = vst [vmem:[%s1432 + $0x50] sm:$0xf] %v1473
                  %v1475 = vld [vmem:[%s1431 + $0x54] sm:$0xf]
                  %1476 = vst [vmem:[%s1432 + $0x54] sm:$0xf] %v1475
                  %v1477 = vld [vmem:[%s1431 + $0x58] sm:$0xf]
                  %1478 = vst [vmem:[%s1432 + $0x58] sm:$0xf] %v1477
                  %v1479 = vld [vmem:[%s1431 + $0x5c] sm:$0xf]
                  %1480 = vst [vmem:[%s1432 + $0x5c] sm:$0xf] %v1479
                  %v1481 = vld [vmem:[%s1431 + $0x60] sm:$0xf]
                  %1482 = vst [vmem:[%s1432 + $0x60] sm:$0xf] %v1481
                  %v1483 = vld [vmem:[%s1431 + $0x64] sm:$0xf]
                  %1484 = vst [vmem:[%s1432 + $0x64] sm:$0xf] %v1483
                  %v1485 = vld [vmem:[%s1431 + $0x68] sm:$0xf]
                  %1486 = vst [vmem:[%s1432 + $0x68] sm:$0xf] %v1485
                  %v1487 = vld [vmem:[%s1431 + $0x6c] sm:$0xf]
                  %1488 = vst [vmem:[%s1432 + $0x6c] sm:$0xf] %v1487
                  %v1489 = vld [vmem:[%s1431 + $0x70] sm:$0xf]
                  %1490 = vst [vmem:[%s1432 + $0x70] sm:$0xf] %v1489
                  %v1491 = vld [vmem:[%s1431 + $0x74] sm:$0xf]
                  %1492 = vst [vmem:[%s1432 + $0x74] sm:$0xf] %v1491
                  %v1493 = vld [vmem:[%s1431 + $0x78] sm:$0xf]
                  %1494 = vst [vmem:[%s1432 + $0x78] sm:$0xf] %v1493
                  %v1495 = vld [vmem:[%s1431 + $0x7c] sm:$0xf]
                  %1496 = vst [vmem:[%s1432 + $0x7c] sm:$0xf] %v1495
                  %v1497 = vld [vmem:[%s1431 + $0x80] sm:$0xf]
                  %1498 = vst [vmem:[%s1432 + $0x80] sm:$0xf] %v1497
                  %v1499 = vld [vmem:[%s1431 + $0x84] sm:$0xf]
                  %1500 = vst [vmem:[%s1432 + $0x84] sm:$0xf] %v1499
                  %v1501 = vld [vmem:[%s1431 + $0x88] sm:$0xf]
                  %1502 = vst [vmem:[%s1432 + $0x88] sm:$0xf] %v1501
                  %v1503 = vld [vmem:[%s1431 + $0x8c] sm:$0xf]
                  %1504 = vst [vmem:[%s1432 + $0x8c] sm:$0xf] %v1503
                  %v1505 = vld [vmem:[%s1431 + $0x90] sm:$0xf]
                  %1506 = vst [vmem:[%s1432 + $0x90] sm:$0xf] %v1505
                  %v1507 = vld [vmem:[%s1431 + $0x94] sm:$0xf]
                  %1508 = vst [vmem:[%s1432 + $0x94] sm:$0xf] %v1507
                  %v1509 = vld [vmem:[%s1431 + $0x98] sm:$0xf]
                  %1510 = vst [vmem:[%s1432 + $0x98] sm:$0xf] %v1509
                  %v1511 = vld [vmem:[%s1431 + $0x9c] sm:$0xf]
                  %1512 = vst [vmem:[%s1432 + $0x9c] sm:$0xf] %v1511
                  %v1513 = vld [vmem:[%s1431 + $0xa0] sm:$0xf]
                  %1514 = vst [vmem:[%s1432 + $0xa0] sm:$0xf] %v1513
                  %v1515 = vld [vmem:[%s1431 + $0xa4] sm:$0xf]
                  %1516 = vst [vmem:[%s1432 + $0xa4] sm:$0xf] %v1515
                  %v1517 = vld [vmem:[%s1431 + $0xa8] sm:$0xf]
                  %1518 = vst [vmem:[%s1432 + $0xa8] sm:$0xf] %v1517
                  %v1519 = vld [vmem:[%s1431 + $0xac] sm:$0xf]
                  %1520 = vst [vmem:[%s1432 + $0xac] sm:$0xf] %v1519
                  %v1521 = vld [vmem:[%s1431 + $0xb0] sm:$0xf]
                  %1522 = vst [vmem:[%s1432 + $0xb0] sm:$0xf] %v1521
                  %v1523 = vld [vmem:[%s1431 + $0xb4] sm:$0xf]
                  %1524 = vst [vmem:[%s1432 + $0xb4] sm:$0xf] %v1523
                  %v1525 = vld [vmem:[%s1431 + $0xb8] sm:$0xf]
                  %1526 = vst [vmem:[%s1432 + $0xb8] sm:$0xf] %v1525
                  %v1527 = vld [vmem:[%s1431 + $0xbc] sm:$0xf]
                  %1528 = vst [vmem:[%s1432 + $0xbc] sm:$0xf] %v1527
                  %v1529 = vld [vmem:[%s1431 + $0xc0] sm:$0xf]
                  %1530 = vst [vmem:[%s1432 + $0xc0] sm:$0xf] %v1529
                  %v1531 = vld [vmem:[%s1431 + $0xc4] sm:$0xf]
                  %1532 = vst [vmem:[%s1432 + $0xc4] sm:$0xf] %v1531
                  %v1533 = vld [vmem:[%s1431 + $0xc8] sm:$0xf]
                  %1534 = vst [vmem:[%s1432 + $0xc8] sm:$0xf] %v1533
                  %v1535 = vld [vmem:[%s1431 + $0xcc] sm:$0xf]
                  %1536 = vst [vmem:[%s1432 + $0xcc] sm:$0xf] %v1535
                  %v1537 = vld [vmem:[%s1431 + $0xd0] sm:$0xf]
                  %1538 = vst [vmem:[%s1432 + $0xd0] sm:$0xf] %v1537
                  %v1539 = vld [vmem:[%s1431 + $0xd4] sm:$0xf]
                  %1540 = vst [vmem:[%s1432 + $0xd4] sm:$0xf] %v1539
                  %v1541 = vld [vmem:[%s1431 + $0xd8] sm:$0xf]
                  %1542 = vst [vmem:[%s1432 + $0xd8] sm:$0xf] %v1541
                  %v1543 = vld [vmem:[%s1431 + $0xdc] sm:$0xf]
                  %1544 = vst [vmem:[%s1432 + $0xdc] sm:$0xf] %v1543
                  %v1545 = vld [vmem:[%s1431 + $0xe0] sm:$0xf]
                  %1546 = vst [vmem:[%s1432 + $0xe0] sm:$0xf] %v1545
                  %v1547 = vld [vmem:[%s1431 + $0xe4] sm:$0xf]
                  %1548 = vst [vmem:[%s1432 + $0xe4] sm:$0xf] %v1547
                  %v1549 = vld [vmem:[%s1431 + $0xe8] sm:$0xf]
                  %1550 = vst [vmem:[%s1432 + $0xe8] sm:$0xf] %v1549
                  %v1551 = vld [vmem:[%s1431 + $0xec] sm:$0xf]
                  %1552 = vst [vmem:[%s1432 + $0xec] sm:$0xf] %v1551
                  %v1553 = vld [vmem:[%s1431 + $0xf0] sm:$0xf]
                  %1554 = vst [vmem:[%s1432 + $0xf0] sm:$0xf] %v1553
                  %v1555 = vld [vmem:[%s1431 + $0xf4] sm:$0xf]
                  %1556 = vst [vmem:[%s1432 + $0xf4] sm:$0xf] %v1555
                  %v1557 = vld [vmem:[%s1431 + $0xf8] sm:$0xf]
                  %1558 = vst [vmem:[%s1432 + $0xf8] sm:$0xf] %v1557
                  %v1559 = vld [vmem:[%s1431 + $0xfc] sm:$0xf]
                  %1560 = vst [vmem:[%s1432 + $0xfc] sm:$0xf] %v1559
                  %s1561 = sadd.s32 1, %s1430
                  %p1562 = scmp.ge.s32.totalorder %s1561, %s1423
                  %s1563 = scalar_select %p1562, 0, %s1561
                  %s1564 = smul.u32 %s1563, 256
                  %s1565 = smul.u32 %s1563, 256
                  %s1566 = scalar_lea.vmem %s1230, %s1564 [#allocation2]
                  %s1567 = scalar_lea.vmem %s1241, %s1565
                $region71: #{net_forward.5} parent=65 // loop_footer
                  %s1427 = sadd.s32 %s1425, 1
                $region72: #{net_forward.5} parent=65 // loop_footer_branch
                  %1424 = sbr.rel target = $region68
                $region73: #{net_forward.5} parent=65 // loop_exit
                  _
                %s1568 = sshrl.u32 %s1237, 6
                %s1569 = sand.u32 %s1237, 63
                %s1570 = smul.u32 %s1568, 64
                %s1571 = smul.u32 4, %s1570
                %s1572 = scalar_lea.vmem %s1230, %s1571 [#allocation2]
                %s1573 = smul.u32 4, %s1570
                %s1574 = scalar_lea.vmem %s1241, %s1573
                // While loop
                $region74: #{net_forward.5} parent=65 // loop_pre_header
                  _
                $region75: #{net_forward.5} parent=65 // loop_header
                  %s1576 = sphi 0, %s1578
                  %p1577 = scmp.ge.s32.totalorder %s1576, %s1569
                  %s1581 = sphi 0, %s1588
                  %s1582 = sphi %s1572, %s1591
                  %s1583 = sphi %s1574, %s1592
                $region76: #{net_forward.5} parent=65 // loop_header_branch
                  %1580 = sbr.rel (%p1577) target = $region80
                $region77: #{net_forward.5} parent=65 // loop_body
                  %v1584 = vld [vmem:[%s1582] sm:$0xf]
                  %1585 = vst [vmem:[%s1583] sm:$0xf] %v1584
                  %s1586 = sadd.s32 1, %s1581
                  %p1587 = scmp.ge.s32.totalorder %s1586, %s1569
                  %s1588 = scalar_select %p1587, 0, %s1586
                  %s1589 = smul.u32 %s1588, 4
                  %s1590 = smul.u32 %s1588, 4
                  %s1591 = scalar_lea.vmem %s1572, %s1589 [#allocation2]
                  %s1592 = scalar_lea.vmem %s1574, %s1590
                $region78: #{net_forward.5} parent=65 // loop_footer
                  %s1578 = sadd.s32 %s1576, 1
                $region79: #{net_forward.5} parent=65 // loop_footer_branch
                  %1575 = sbr.rel target = $region75
                $region80: #{net_forward.5} parent=65 // loop_exit
                  _
              $region66: #{net_forward.5} parent=43 // pred_fallthru
                _
            $region44: #{net_forward.5} parent=39 // pred_fallthru
              _
            // Predicated region
            $region45: #{net_forward.5} parent=39 // pred_check
              _
            $region46: #{net_forward.5} parent=39 // pred_check_branch
              %1248 = sbr.rel (0) target = $region48
            $region47: #{net_forward.5} parent=39 // pred_region
              %s1250 = sshrl.u32 %s1237, 6
              // While loop
              $region49: #{net_forward.5} parent=47 // loop_pre_header
                _
              $region50: #{net_forward.5} parent=47 // loop_header
                %s1252 = sphi 0, %s1254
                %p1253 = scmp.ge.s32.totalorder %s1252, %s1250
                %s1257 = sphi 0, %s1390
                %s1258 = sphi %s1230, %s1393
                %s1259 = sphi %s1241, %s1394
              $region51: #{net_forward.5} parent=47 // loop_header_branch
                %1256 = sbr.rel (%p1253) target = $region55
              $region52: #{net_forward.5} parent=47 // loop_body
                %v1260 = vld [vmem:[%s1258] sm:$0xf]
                %1261 = vst [vmem:[%s1259] sm:$0xf] %v1260
                %v1262 = vld [vmem:[%s1258 + $0x4] sm:$0xf]
                %1263 = vst [vmem:[%s1259 + $0x4] sm:$0xf] %v1262
                %v1264 = vld [vmem:[%s1258 + $0x8] sm:$0xf]
                %1265 = vst [vmem:[%s1259 + $0x8] sm:$0xf] %v1264
                %v1266 = vld [vmem:[%s1258 + $0xc] sm:$0xf]
                %1267 = vst [vmem:[%s1259 + $0xc] sm:$0xf] %v1266
                %v1268 = vld [vmem:[%s1258 + $0x10] sm:$0xf]
                %1269 = vst [vmem:[%s1259 + $0x10] sm:$0xf] %v1268
                %v1270 = vld [vmem:[%s1258 + $0x14] sm:$0xf]
                %1271 = vst [vmem:[%s1259 + $0x14] sm:$0xf] %v1270
                %v1272 = vld [vmem:[%s1258 + $0x18] sm:$0xf]
                %1273 = vst [vmem:[%s1259 + $0x18] sm:$0xf] %v1272
                %v1274 = vld [vmem:[%s1258 + $0x1c] sm:$0xf]
                %1275 = vst [vmem:[%s1259 + $0x1c] sm:$0xf] %v1274
                %v1276 = vld [vmem:[%s1258 + $0x20] sm:$0xf]
                %1277 = vst [vmem:[%s1259 + $0x20] sm:$0xf] %v1276
                %v1278 = vld [vmem:[%s1258 + $0x24] sm:$0xf]
                %1279 = vst [vmem:[%s1259 + $0x24] sm:$0xf] %v1278
                %v1280 = vld [vmem:[%s1258 + $0x28] sm:$0xf]
                %1281 = vst [vmem:[%s1259 + $0x28] sm:$0xf] %v1280
                %v1282 = vld [vmem:[%s1258 + $0x2c] sm:$0xf]
                %1283 = vst [vmem:[%s1259 + $0x2c] sm:$0xf] %v1282
                %v1284 = vld [vmem:[%s1258 + $0x30] sm:$0xf]
                %1285 = vst [vmem:[%s1259 + $0x30] sm:$0xf] %v1284
                %v1286 = vld [vmem:[%s1258 + $0x34] sm:$0xf]
                %1287 = vst [vmem:[%s1259 + $0x34] sm:$0xf] %v1286
                %v1288 = vld [vmem:[%s1258 + $0x38] sm:$0xf]
                %1289 = vst [vmem:[%s1259 + $0x38] sm:$0xf] %v1288
                %v1290 = vld [vmem:[%s1258 + $0x3c] sm:$0xf]
                %1291 = vst [vmem:[%s1259 + $0x3c] sm:$0xf] %v1290
                %v1292 = vld [vmem:[%s1258 + $0x40] sm:$0xf]
                %1293 = vst [vmem:[%s1259 + $0x40] sm:$0xf] %v1292
                %v1294 = vld [vmem:[%s1258 + $0x44] sm:$0xf]
                %1295 = vst [vmem:[%s1259 + $0x44] sm:$0xf] %v1294
                %v1296 = vld [vmem:[%s1258 + $0x48] sm:$0xf]
                %1297 = vst [vmem:[%s1259 + $0x48] sm:$0xf] %v1296
                %v1298 = vld [vmem:[%s1258 + $0x4c] sm:$0xf]
                %1299 = vst [vmem:[%s1259 + $0x4c] sm:$0xf] %v1298
                %v1300 = vld [vmem:[%s1258 + $0x50] sm:$0xf]
                %1301 = vst [vmem:[%s1259 + $0x50] sm:$0xf] %v1300
                %v1302 = vld [vmem:[%s1258 + $0x54] sm:$0xf]
                %1303 = vst [vmem:[%s1259 + $0x54] sm:$0xf] %v1302
                %v1304 = vld [vmem:[%s1258 + $0x58] sm:$0xf]
                %1305 = vst [vmem:[%s1259 + $0x58] sm:$0xf] %v1304
                %v1306 = vld [vmem:[%s1258 + $0x5c] sm:$0xf]
                %1307 = vst [vmem:[%s1259 + $0x5c] sm:$0xf] %v1306
                %v1308 = vld [vmem:[%s1258 + $0x60] sm:$0xf]
                %1309 = vst [vmem:[%s1259 + $0x60] sm:$0xf] %v1308
                %v1310 = vld [vmem:[%s1258 + $0x64] sm:$0xf]
                %1311 = vst [vmem:[%s1259 + $0x64] sm:$0xf] %v1310
                %v1312 = vld [vmem:[%s1258 + $0x68] sm:$0xf]
                %1313 = vst [vmem:[%s1259 + $0x68] sm:$0xf] %v1312
                %v1314 = vld [vmem:[%s1258 + $0x6c] sm:$0xf]
                %1315 = vst [vmem:[%s1259 + $0x6c] sm:$0xf] %v1314
                %v1316 = vld [vmem:[%s1258 + $0x70] sm:$0xf]
                %1317 = vst [vmem:[%s1259 + $0x70] sm:$0xf] %v1316
                %v1318 = vld [vmem:[%s1258 + $0x74] sm:$0xf]
                %1319 = vst [vmem:[%s1259 + $0x74] sm:$0xf] %v1318
                %v1320 = vld [vmem:[%s1258 + $0x78] sm:$0xf]
                %1321 = vst [vmem:[%s1259 + $0x78] sm:$0xf] %v1320
                %v1322 = vld [vmem:[%s1258 + $0x7c] sm:$0xf]
                %1323 = vst [vmem:[%s1259 + $0x7c] sm:$0xf] %v1322
                %v1324 = vld [vmem:[%s1258 + $0x80] sm:$0xf]
                %1325 = vst [vmem:[%s1259 + $0x80] sm:$0xf] %v1324
                %v1326 = vld [vmem:[%s1258 + $0x84] sm:$0xf]
                %1327 = vst [vmem:[%s1259 + $0x84] sm:$0xf] %v1326
                %v1328 = vld [vmem:[%s1258 + $0x88] sm:$0xf]
                %1329 = vst [vmem:[%s1259 + $0x88] sm:$0xf] %v1328
                %v1330 = vld [vmem:[%s1258 + $0x8c] sm:$0xf]
                %1331 = vst [vmem:[%s1259 + $0x8c] sm:$0xf] %v1330
                %v1332 = vld [vmem:[%s1258 + $0x90] sm:$0xf]
                %1333 = vst [vmem:[%s1259 + $0x90] sm:$0xf] %v1332
                %v1334 = vld [vmem:[%s1258 + $0x94] sm:$0xf]
                %1335 = vst [vmem:[%s1259 + $0x94] sm:$0xf] %v1334
                %v1336 = vld [vmem:[%s1258 + $0x98] sm:$0xf]
                %1337 = vst [vmem:[%s1259 + $0x98] sm:$0xf] %v1336
                %v1338 = vld [vmem:[%s1258 + $0x9c] sm:$0xf]
                %1339 = vst [vmem:[%s1259 + $0x9c] sm:$0xf] %v1338
                %v1340 = vld [vmem:[%s1258 + $0xa0] sm:$0xf]
                %1341 = vst [vmem:[%s1259 + $0xa0] sm:$0xf] %v1340
                %v1342 = vld [vmem:[%s1258 + $0xa4] sm:$0xf]
                %1343 = vst [vmem:[%s1259 + $0xa4] sm:$0xf] %v1342
                %v1344 = vld [vmem:[%s1258 + $0xa8] sm:$0xf]
                %1345 = vst [vmem:[%s1259 + $0xa8] sm:$0xf] %v1344
                %v1346 = vld [vmem:[%s1258 + $0xac] sm:$0xf]
                %1347 = vst [vmem:[%s1259 + $0xac] sm:$0xf] %v1346
                %v1348 = vld [vmem:[%s1258 + $0xb0] sm:$0xf]
                %1349 = vst [vmem:[%s1259 + $0xb0] sm:$0xf] %v1348
                %v1350 = vld [vmem:[%s1258 + $0xb4] sm:$0xf]
                %1351 = vst [vmem:[%s1259 + $0xb4] sm:$0xf] %v1350
                %v1352 = vld [vmem:[%s1258 + $0xb8] sm:$0xf]
                %1353 = vst [vmem:[%s1259 + $0xb8] sm:$0xf] %v1352
                %v1354 = vld [vmem:[%s1258 + $0xbc] sm:$0xf]
                %1355 = vst [vmem:[%s1259 + $0xbc] sm:$0xf] %v1354
                %v1356 = vld [vmem:[%s1258 + $0xc0] sm:$0xf]
                %1357 = vst [vmem:[%s1259 + $0xc0] sm:$0xf] %v1356
                %v1358 = vld [vmem:[%s1258 + $0xc4] sm:$0xf]
                %1359 = vst [vmem:[%s1259 + $0xc4] sm:$0xf] %v1358
                %v1360 = vld [vmem:[%s1258 + $0xc8] sm:$0xf]
                %1361 = vst [vmem:[%s1259 + $0xc8] sm:$0xf] %v1360
                %v1362 = vld [vmem:[%s1258 + $0xcc] sm:$0xf]
                %1363 = vst [vmem:[%s1259 + $0xcc] sm:$0xf] %v1362
                %v1364 = vld [vmem:[%s1258 + $0xd0] sm:$0xf]
                %1365 = vst [vmem:[%s1259 + $0xd0] sm:$0xf] %v1364
                %v1366 = vld [vmem:[%s1258 + $0xd4] sm:$0xf]
                %1367 = vst [vmem:[%s1259 + $0xd4] sm:$0xf] %v1366
                %v1368 = vld [vmem:[%s1258 + $0xd8] sm:$0xf]
                %1369 = vst [vmem:[%s1259 + $0xd8] sm:$0xf] %v1368
                %v1370 = vld [vmem:[%s1258 + $0xdc] sm:$0xf]
                %1371 = vst [vmem:[%s1259 + $0xdc] sm:$0xf] %v1370
                %v1372 = vld [vmem:[%s1258 + $0xe0] sm:$0xf]
                %1373 = vst [vmem:[%s1259 + $0xe0] sm:$0xf] %v1372
                %v1374 = vld [vmem:[%s1258 + $0xe4] sm:$0xf]
                %1375 = vst [vmem:[%s1259 + $0xe4] sm:$0xf] %v1374
                %v1376 = vld [vmem:[%s1258 + $0xe8] sm:$0xf]
                %1377 = vst [vmem:[%s1259 + $0xe8] sm:$0xf] %v1376
                %v1378 = vld [vmem:[%s1258 + $0xec] sm:$0xf]
                %1379 = vst [vmem:[%s1259 + $0xec] sm:$0xf] %v1378
                %v1380 = vld [vmem:[%s1258 + $0xf0] sm:$0xf]
                %1381 = vst [vmem:[%s1259 + $0xf0] sm:$0xf] %v1380
                %v1382 = vld [vmem:[%s1258 + $0xf4] sm:$0xf]
                %1383 = vst [vmem:[%s1259 + $0xf4] sm:$0xf] %v1382
                %v1384 = vld [vmem:[%s1258 + $0xf8] sm:$0xf]
                %1385 = vst [vmem:[%s1259 + $0xf8] sm:$0xf] %v1384
                %v1386 = vld [vmem:[%s1258 + $0xfc] sm:$0xf]
                %1387 = vst [vmem:[%s1259 + $0xfc] sm:$0xf] %v1386
                %s1388 = sadd.s32 1, %s1257
                %p1389 = scmp.ge.s32.totalorder %s1388, %s1250
                %s1390 = scalar_select %p1389, 0, %s1388
                %s1391 = smul.u32 %s1390, 256
                %s1392 = smul.u32 %s1390, 256
                %s1393 = scalar_lea.vmem %s1230, %s1391 [#allocation2]
                %s1394 = scalar_lea.vmem %s1241, %s1392
              $region53: #{net_forward.5} parent=47 // loop_footer
                %s1254 = sadd.s32 %s1252, 1
              $region54: #{net_forward.5} parent=47 // loop_footer_branch
                %1251 = sbr.rel target = $region50
              $region55: #{net_forward.5} parent=47 // loop_exit
                _
              %s1395 = sshrl.u32 %s1237, 6
              %s1396 = sand.u32 %s1237, 63
              %s1397 = smul.u32 %s1395, 64
              %s1398 = smul.u32 4, %s1397
              %s1399 = scalar_lea.vmem %s1230, %s1398 [#allocation2]
              %s1400 = smul.u32 4, %s1397
              %s1401 = scalar_lea.vmem %s1241, %s1400
              // While loop
              $region56: #{net_forward.5} parent=47 // loop_pre_header
                _
              $region57: #{net_forward.5} parent=47 // loop_header
                %s1403 = sphi 0, %s1405
                %p1404 = scmp.ge.s32.totalorder %s1403, %s1396
                %s1408 = sphi 0, %s1415
                %s1409 = sphi %s1399, %s1418
                %s1410 = sphi %s1401, %s1419
              $region58: #{net_forward.5} parent=47 // loop_header_branch
                %1407 = sbr.rel (%p1404) target = $region62
              $region59: #{net_forward.5} parent=47 // loop_body
                %v1411 = vld [vmem:[%s1409] sm:$0xf]
                %1412 = vst [vmem:[%s1410] sm:$0xf] %v1411
                %s1413 = sadd.s32 1, %s1408
                %p1414 = scmp.ge.s32.totalorder %s1413, %s1396
                %s1415 = scalar_select %p1414, 0, %s1413
                %s1416 = smul.u32 %s1415, 4
                %s1417 = smul.u32 %s1415, 4
                %s1418 = scalar_lea.vmem %s1399, %s1416 [#allocation2]
                %s1419 = scalar_lea.vmem %s1401, %s1417
              $region60: #{net_forward.5} parent=47 // loop_footer
                %s1405 = sadd.s32 %s1403, 1
              $region61: #{net_forward.5} parent=47 // loop_footer_branch
                %1402 = sbr.rel target = $region57
              $region62: #{net_forward.5} parent=47 // loop_exit
                _
            $region48: #{net_forward.5} parent=39 // pred_fallthru
              _
          $region40: #{net_forward.5} parent=35 // pred_fallthru
            _
          %1593 = vnop
        $region36: #{net_forward.5} parent=31 // pred_fallthru
          _
      $region32: #{net_forward.5} parent=5 // pred_fallthru
        _
      %p1594 = scmp.le.s32.totalorder 2, %s9
      // Predicated region
      $region81: #{net_forward.5} parent=5 // pred_check
        %p1595 = pneg %p1594
      $region82: #{net_forward.5} parent=5 // pred_check_branch
        %1597 = sbr.rel (%p1595) target = $region84
      $region83: #{net_forward.5} parent=5 // pred_region
        %s1598 = ssub.s32 %s9, 2
        // Predicated region
        $region85: #{net_forward.5} parent=83 // pred_check
          %p1599 = pneg %p106
        $region86: #{net_forward.5} parent=83 // pred_check_branch
          %1601 = sbr.rel (%p1599) target = $region88
        $region87: #{net_forward.5} parent=83 // pred_region
          %s1602 = sand.u32 %s91, 1
          %s1603 = sand.u32 %s91, 1
          %s1604 = smul.addr %s1603, 256
          %s1605 = scalar_lea.vmem [#allocation2], %s1604
        $region88: #{net_forward.5} parent=83 // pred_fallthru
          _
      $region84: #{net_forward.5} parent=5 // pred_fallthru
        _
    $region6: #{net_forward.5} parent=1 // loop_footer
      %s13 = sadd.s32 1, %s9
    $region7: #{net_forward.5} parent=1 // loop_footer_branch
      %8 = sbr.rel target = $region3
    $region8: #{net_forward.5} parent=1 // loop_exit
      _

// kernel: net_forward.6
$region0: #{net_forward.6}
  #allocation0 [shape = 'u32[]', space=smem, size = 0x4, offset = 0x4, fixed_abs, tag = 'smem constant byte address 0x4 - core index']
  #allocation1 [shape = 'u32[144,128]{1,0:T(1,128)}', space=vmem, size = 0x12000, scoped, tag = 'internal scratch']
  %s0 = inlined_call_operand.vmem [shape: bf16[1058,72], index: 0, kind: input, shape index: {}]
  %s1 = inlined_call_operand.vmem [shape: bf16[72,16], index: 1, kind: input, shape index: {}]
  %s2 = inlined_call_operand.vmem [shape: f32[1,16], index: 2, kind: input, shape index: {}]
  %s3 = inlined_call_operand.vmem [shape: bf16[1058,16], index: 3, kind: output, shape index: {}]
  %s4 = sld [smem:[#allocation0]]
  $region89: #{net_forward.6} parent=0
    _
  %s6 = ssub.s32 1, %s4
  %s7 = scalar_select 0, %s6, %s4
  $region1: #{net_forward.6} parent=0
    #allocation2 [shape = 'u8[262144]{0}', space=vmem, size = 0x40000, scoped, tag = 'output window, operand 0']
    loop: start=0, step=1, limit=5
    $region2: #{net_forward.6} parent=1 // loop_pre_header
      _
    $region3: #{net_forward.6} parent=1 // loop_header
      %s9 = sphi 0, %s13
      %p10 = scmp.ge.s32.totalorder %s9, 5
      %s19 = sphi 0, %s21
      %s22 = sphi 0, %s19
      %s23 = sphi 0, %s22
      %s39 = sphi 0, %s23
      %s43 = sphi 0, %s43
      %s45 = sphi 0, %s43
      %s46 = sphi 0, %s45
      %s60 = sphi 0, %s46
      %s64 = sphi 0, %s64
      %s66 = sphi 0, %s64
      %s67 = sphi 0, %s66
      %s81 = sphi 0, %s67
      %s87 = sphi 0, %s89
      %s90 = sphi 0, %s87
      %s91 = sphi 0, %s90
      %s107 = sphi 0, %s91
    $region4: #{net_forward.6} parent=1 // loop_header_branch
      %12 = sbr.rel (%p10) target = $region8
    $region5: #{net_forward.6} parent=1 // loop_body
      %s14 = ssub.s32 %s9, 1
      %s15 = ssub.s32 %s9, 2
      %s16 = sadd.s32 %s9, 1
      %s17 = ssub.s32 %s9, %s16
      %p18 = scmp.eq.s32.totalorder %s17, 0
      %s20 = sadd.s32 %s19, 1
      %s21 = scalar_select %p18, %s19, %s20
      %p24 = pneg %p18
      %p25 = scmp.eq.s32.totalorder %s9, 2
      %p26 = por %p24, %p25
      %p27 = scmp.ne.s32.totalorder %s19, %s22
      %p28 = scmp.eq.s32.totalorder %s9, 0
      %p29 = por %p27, %p28
      %p30 = scmp.ne.s32.totalorder %s19, %s22
      %p31 = scmp.eq.s32.totalorder %s14, 2
      %p32 = por %p30, %p31
      %p33 = scmp.ne.s32.totalorder %s22, %s23
      %p34 = scmp.eq.s32.totalorder %s14, 0
      %p35 = por %p33, %p34
      %p36 = scmp.ne.s32.totalorder %s22, %s23
      %p37 = scmp.eq.s32.totalorder %s15, 2
      %p38 = por %p36, %p37
      %p40 = scmp.ne.s32.totalorder %s23, %s39
      %p41 = scmp.eq.s32.totalorder %s15, 0
      %p42 = por %p40, %p41
      %s44 = sadd.s32 %s43, 1
      %p47 = scmp.eq.s32.totalorder %s9, 2
      %p48 = scmp.ne.s32.totalorder %s43, %s45
      %p49 = scmp.eq.s32.totalorder %s9, 0
      %p50 = por %p48, %p49
      %p51 = scmp.ne.s32.totalorder %s43, %s45
      %p52 = scmp.eq.s32.totalorder %s14, 2
      %p53 = por %p51, %p52
      %p54 = scmp.ne.s32.totalorder %s45, %s46
      %p55 = scmp.eq.s32.totalorder %s14, 0
      %p56 = por %p54, %p55
      %p57 = scmp.ne.s32.totalorder %s45, %s46
      %p58 = scmp.eq.s32.totalorder %s15, 2
      %p59 = por %p57, %p58
      %p61 = scmp.ne.s32.totalorder %s46, %s60
      %p62 = scmp.eq.s32.totalorder %s15, 0
      %p63 = por %p61, %p62
      %s65 = sadd.s32 %s64, 1
      %p68 = scmp.eq.s32.totalorder %s9, 2
      %p69 = scmp.ne.s32.totalorder %s64, %s66
      %p70 = scmp.eq.s32.totalorder %s9, 0
      %p71 = por %p69, %p70
      %p72 = scmp.ne.s32.totalorder %s64, %s66
      %p73 = scmp.eq.s32.totalorder %s14, 2
      %p74 = por %p72, %p73
      %p75 = scmp.ne.s32.totalorder %s66, %s67
      %p76 = scmp.eq.s32.totalorder %s14, 0
      %p77 = por %p75, %p76
      %p78 = scmp.ne.s32.totalorder %s66, %s67
      %p79 = scmp.eq.s32.totalorder %s15, 2
      %p80 = por %p78, %p79
      %p82 = scmp.ne.s32.totalorder %s67, %s81
      %p83 = scmp.eq.s32.totalorder %s15, 0
      %p84 = por %p82, %p83
      %s85 = ssub.s32 %s9, %s16
      %p86 = scmp.eq.s32.totalorder %s85, 0
      %s88 = sadd.s32 %s87, 1
      %s89 = scalar_select %p86, %s87, %s88
      %p92 = pneg %p86
      %p93 = scmp.eq.s32.totalorder %s9, 2
      %p94 = por %p92, %p93
      %p95 = scmp.ne.s32.totalorder %s87, %s90
      %p96 = scmp.eq.s32.totalorder %s9, 0
      %p97 = por %p95, %p96
      %p98 = scmp.ne.s32.totalorder %s87, %s90
      %p99 = scmp.eq.s32.totalorder %s14, 2
      %p100 = por %p98, %p99
      %p101 = scmp.ne.s32.totalorder %s90, %s91
      %p102 = scmp.eq.s32.totalorder %s14, 0
      %p103 = por %p101, %p102
      %p104 = scmp.ne.s32.totalorder %s90, %s91
      %p105 = scmp.eq.s32.totalorder %s15, 2
      %p106 = por %p104, %p105
      %p108 = scmp.ne.s32.totalorder %s91, %s107
      %p109 = scmp.eq.s32.totalorder %s15, 0
      %p110 = por %p108, %p109
      %p111 = scmp.le.s32.totalorder 1, %s9
      %p112 = scmp.lt.s32.totalorder %s9, 4
      %p113 = pnand %p111, %p112
      %p114 = pneg %p113
      // Predicated region
      $region9: #{net_forward.6} parent=5 // pred_check
        _
      $region10: #{net_forward.6} parent=5 // pred_check_branch
        %116 = sbr.rel (%p113) target = $region12
      $region11: #{net_forward.6} parent=5 // pred_region
        %s117 = ssub.s32 %s9, 1
        // Predicated region
        $region13: #{net_forward.6} parent=11 // pred_check
          %p118 = pneg %p56
        $region14: #{net_forward.6} parent=11 // pred_check_branch
          %120 = sbr.rel (%p118) target = $region16
        $region15: #{net_forward.6} parent=11 // pred_region
          _
        $region16: #{net_forward.6} parent=11 // pred_fallthru
          _
        // Predicated region
        $region17: #{net_forward.6} parent=11 // pred_check
          %p121 = pneg %p77
        $region18: #{net_forward.6} parent=11 // pred_check_branch
          %123 = sbr.rel (%p121) target = $region20
        $region19: #{net_forward.6} parent=11 // pred_region
          _
        $region20: #{net_forward.6} parent=11 // pred_fallthru
          _
      $region12: #{net_forward.6} parent=5 // pred_fallthru
        _
      %p124 = scmp.lt.s32.totalorder %s9, 3
      // Predicated region
      $region21: #{net_forward.6} parent=5 // pred_check
        %p125 = pneg %p124
      $region22: #{net_forward.6} parent=5 // pred_check_branch
        %127 = sbr.rel (%p125) target = $region24
      $region23: #{net_forward.6} parent=5 // pred_region
        // Predicated region
        $region25: #{net_forward.6} parent=23 // pred_check
          %p128 = pneg %p29
        $region26: #{net_forward.6} parent=23 // pred_check_branch
          %130 = sbr.rel (%p128) target = $region28
        $region27: #{net_forward.6} parent=23 // pred_region
          %s131 = smul.u32 64, %s9
          %s132 = ssub.s32 133, %s131
          %p133 = scmp.lt.s32.totalorder %s132, 64
          %s134 = scalar_select %p133, %s132, 64
          %s135 = smul.u32 64, %s134
          %p136 = scmp.lt.s32.totalorder %s131, 132
          %s137 = scalar_select %p136, %s131, 132
          %s138 = smul.addr %s137, 4
          %s139 = scalar_lea.vmem %s0, %s138
          %s140 = smul.u32 64, %s9
          %s141 = ssub.s32 133, %s140
          %p142 = scmp.lt.s32.totalorder %s141, 64
          %s143 = scalar_select %p142, %s141, 64
          %s144 = smul.u32 64, %s143
        $region28: #{net_forward.6} parent=23 // pred_fallthru
          _
      $region24: #{net_forward.6} parent=5 // pred_fallthru
        _
      %p145 = scmp.le.s32.totalorder 1, %s9
      %p146 = scmp.lt.s32.totalorder %s9, 4
      %p147 = pnand %p145, %p146
      %p148 = pneg %p147
      // Predicated region
      $region29: #{net_forward.6} parent=5 // pred_check
        _
      $region30: #{net_forward.6} parent=5 // pred_check_branch
        %150 = sbr.rel (%p147) target = $region32
      $region31: #{net_forward.6} parent=5 // pred_region
        %s151 = ssub.s32 %s9, 1
        %s152 = smul.u32 64, %s14
        %s153 = ssub.s32 133, %s152
        %p154 = scmp.lt.s32.totalorder %s153, 64
        %s155 = scalar_select %p154, %s153, 64
        %s156 = smul.u32 64, %s155
        %p157 = scmp.lt.s32.totalorder %s152, 132
        %s158 = scalar_select %p157, %s152, 132
        %s159 = smul.addr %s158, 4
        %s160 = scalar_lea.vmem %s0, %s159
        %p161 = pneg %p35
        %p162 = pneg %p32
        %p163 = pneg %p56
        %p164 = pneg %p53
        %p165 = pneg %p77
        %p166 = pneg %p74
        %p167 = pneg %p103
        %p168 = pneg %p100
        %s169 = sand.u32 %s90, 1
        %s170 = sand.u32 %s90, 1
        %s171 = smul.addr %s170, 256
        %s172 = scalar_lea.vmem [#allocation2], %s171
        %s173 = smul.u32 64, %s14
        %s174 = ssub.s32 133, %s173
        %p175 = scmp.lt.s32.totalorder %s174, 64
        %s176 = scalar_select %p175, %s174, 64
        %s177 = smul.u32 64, %s176
        %p178 = scmp.lt.s32.totalorder %s173, 132
        %s179 = scalar_select %p178, %s173, 132
        %s180 = smul.addr %s179, 4
        %s181 = scalar_lea.vmem %s0, %s180
        %s182 = smul.u32 64, %s14
        %s183 = ssub.s32 133, %s182
        %p184 = scmp.lt.s32.totalorder %s183, 64
        %s185 = scalar_select %p184, %s183, 64
        %s186 = smul.u32 64, %s185
        %s187 = smul.u32 64, %s14
        %s188 = ssub.s32 133, %s187
        %p189 = scmp.lt.s32.totalorder %s188, 64
        %s190 = scalar_select %p189, %s188, 64
        %s191 = smul.u32 64, %s190
        %v193 = vld [vmem:[%s181] sm:$0xf]
        %v194 = vld [vmem:[%s181 + $0x4] sm:$0xf]
        %v195 = vld [vmem:[%s181 + $0x8] sm:$0xf]
        %v196 = vld [vmem:[%s181 + $0xc] sm:$0xf]
        %v197 = vld [vmem:[%s181 + $0x10] sm:$0xf]
        %v198 = vld [vmem:[%s181 + $0x14] sm:$0xf]
        %v199 = vld [vmem:[%s181 + $0x18] sm:$0xf]
        %v200 = vld [vmem:[%s181 + $0x1c] sm:$0xf]
        %v201 = vld [vmem:[%s181 + $0x20] sm:$0xf]
        %v202 = vld [vmem:[%s181 + $0x24] sm:$0xf]
        %v203 = vld [vmem:[%s181 + $0x28] sm:$0xf]
        %v204 = vld [vmem:[%s181 + $0x2c] sm:$0xf]
        %v205 = vld [vmem:[%s181 + $0x30] sm:$0xf]
        %v206 = vld [vmem:[%s181 + $0x34] sm:$0xf]
        %v207 = vld [vmem:[%s181 + $0x38] sm:$0xf]
        %v208 = vld [vmem:[%s181 + $0x3c] sm:$0xf]
        %v209 = vld [vmem:[%s181 + $0x40] sm:$0xf]
        %v210 = vld [vmem:[%s181 + $0x44] sm:$0xf]
        %v211 = vld [vmem:[%s181 + $0x48] sm:$0xf]
        %v212 = vld [vmem:[%s181 + $0x4c] sm:$0xf]
        %v213 = vld [vmem:[%s181 + $0x50] sm:$0xf]
        %v214 = vld [vmem:[%s181 + $0x54] sm:$0xf]
        %v215 = vld [vmem:[%s181 + $0x58] sm:$0xf]
        %v216 = vld [vmem:[%s181 + $0x5c] sm:$0xf]
        %v217 = vld [vmem:[%s181 + $0x60] sm:$0xf]
        %v218 = vld [vmem:[%s181 + $0x64] sm:$0xf]
        %v219 = vld [vmem:[%s181 + $0x68] sm:$0xf]
        %v220 = vld [vmem:[%s181 + $0x6c] sm:$0xf]
        %v221 = vld [vmem:[%s181 + $0x70] sm:$0xf]
        %v222 = vld [vmem:[%s181 + $0x74] sm:$0xf]
        %v223 = vld [vmem:[%s181 + $0x78] sm:$0xf]
        %v224 = vld [vmem:[%s181 + $0x7c] sm:$0xf]
        %v225 = vld [vmem:[%s181 + $0x80] sm:$0xf]
        %v226 = vld [vmem:[%s181 + $0x84] sm:$0xf]
        %v227 = vld [vmem:[%s181 + $0x88] sm:$0xf]
        %v228 = vld [vmem:[%s181 + $0x8c] sm:$0xf]
        %v229 = vld [vmem:[%s181 + $0x90] sm:$0xf]
        %v230 = vld [vmem:[%s181 + $0x94] sm:$0xf]
        %v231 = vld [vmem:[%s181 + $0x98] sm:$0xf]
        %v232 = vld [vmem:[%s181 + $0x9c] sm:$0xf]
        %v233 = vld [vmem:[%s181 + $0xa0] sm:$0xf]
        %v234 = vld [vmem:[%s181 + $0xa4] sm:$0xf]
        %v235 = vld [vmem:[%s181 + $0xa8] sm:$0xf]
        %v236 = vld [vmem:[%s181 + $0xac] sm:$0xf]
        %v237 = vld [vmem:[%s181 + $0xb0] sm:$0xf]
        %v238 = vld [vmem:[%s181 + $0xb4] sm:$0xf]
        %v239 = vld [vmem:[%s181 + $0xb8] sm:$0xf]
        %v240 = vld [vmem:[%s181 + $0xbc] sm:$0xf]
        %v241 = vld [vmem:[%s181 + $0xc0] sm:$0xf]
        %v242 = vld [vmem:[%s181 + $0xc4] sm:$0xf]
        %v243 = vld [vmem:[%s181 + $0xc8] sm:$0xf]
        %v244 = vld [vmem:[%s181 + $0xcc] sm:$0xf]
        %v245 = vld [vmem:[%s181 + $0xd0] sm:$0xf]
        %v246 = vld [vmem:[%s181 + $0xd4] sm:$0xf]
        %v247 = vld [vmem:[%s181 + $0xd8] sm:$0xf]
        %v248 = vld [vmem:[%s181 + $0xdc] sm:$0xf]
        %v249 = vld [vmem:[%s181 + $0xe0] sm:$0xf]
        %v250 = vld [vmem:[%s181 + $0xe4] sm:$0xf]
        %v251 = vld [vmem:[%s181 + $0xe8] sm:$0xf]
        %v252 = vld [vmem:[%s181 + $0xec] sm:$0xf]
        %v253 = vld [vmem:[%s181 + $0xf0] sm:$0xf]
        %v254 = vld [vmem:[%s181 + $0xf4] sm:$0xf]
        %v255 = vld [vmem:[%s181 + $0xf8] sm:$0xf]
        %v256 = vld [vmem:[%s181 + $0xfc] sm:$0xf]
        %v257 = vld [vmem:[%s1] sm:$0xf]
        %v258 = vld [vmem:[%s1 + $0x4] sm:$0xf]
        %v259 = vld [vmem:[%s1 + $0x8] sm:$0xf]
        %v260 = vld [vmem:[%s1 + $0xc] sm:$0xf]
        %v261 = vld [vmem:[%s1 + $0x10] sm:$0xf]
        %v262 = vld [vmem:[%s1 + $0x14] sm:$0xf]
        %v263 = vld [vmem:[%s1 + $0x18] sm:$0xf]
        %v264 = vld [vmem:[%s1 + $0x1c] sm:$0xf]
        %v265 = vld [vmem:[%s1 + $0x20] sm:$0xf]
        %v266 = vld [vmem:[%s2] sm:$0x1]
        %v268 = vlaneseq
        %v269 = vshrl.u32 %v268, 7
        %v270 = vsub.s32 0, %v269
        %v271 = vrot.slane %v266, %v270
        %v337 = vunpack.c.l.b16 %v193
        %v338 = vunpack.c.l.b16 %v194
        %v339 = vunpack.c.l.b16 %v195
        %v340 = vunpack.c.l.b16 %v196
        %v341 = vunpack.c.l.b16 %v197
        %v342 = vunpack.c.l.b16 %v198
        %v343 = vunpack.c.l.b16 %v199
        %v344 = vunpack.c.l.b16 %v200
        %v345 = vunpack.c.l.b16 %v201
        %v346 = vunpack.c.l.b16 %v202
        %v347 = vunpack.c.l.b16 %v203
        %v348 = vunpack.c.l.b16 %v204
        %v349 = vunpack.c.l.b16 %v205
        %v350 = vunpack.c.l.b16 %v206
        %v351 = vunpack.c.l.b16 %v207
        %v352 = vunpack.c.l.b16 %v208
        %v353 = vunpack.c.l.b16 %v209
        %v354 = vunpack.c.l.b16 %v210
        %v355 = vunpack.c.l.b16 %v211
        %v356 = vunpack.c.l.b16 %v212
        %v357 = vunpack.c.l.b16 %v213
        %v358 = vunpack.c.l.b16 %v214
        %v359 = vunpack.c.l.b16 %v215
        %v360 = vunpack.c.l.b16 %v216
        %v361 = vunpack.c.l.b16 %v217
        %v362 = vunpack.c.l.b16 %v218
        %v363 = vunpack.c.l.b16 %v219
        %v364 = vunpack.c.l.b16 %v220
        %v365 = vunpack.c.l.b16 %v221
        %v366 = vunpack.c.l.b16 %v222
        %v367 = vunpack.c.l.b16 %v223
        %v368 = vunpack.c.l.b16 %v224
        %v369 = vunpack.c.l.b16 %v225
        %v370 = vunpack.c.l.b16 %v226
        %v371 = vunpack.c.l.b16 %v227
        %v372 = vunpack.c.l.b16 %v228
        %v373 = vunpack.c.l.b16 %v229
        %v374 = vunpack.c.l.b16 %v230
        %v375 = vunpack.c.l.b16 %v231
        %v376 = vunpack.c.l.b16 %v232
        %v377 = vunpack.c.l.b16 %v233
        %v378 = vunpack.c.l.b16 %v234
        %v379 = vunpack.c.l.b16 %v235
        %v380 = vunpack.c.l.b16 %v236
        %v381 = vunpack.c.l.b16 %v237
        %v382 = vunpack.c.l.b16 %v238
        %v383 = vunpack.c.l.b16 %v239
        %v384 = vunpack.c.l.b16 %v240
        %v385 = vunpack.c.l.b16 %v241
        %v386 = vunpack.c.l.b16 %v242
        %v387 = vunpack.c.l.b16 %v243
        %v388 = vunpack.c.l.b16 %v244
        %v389 = vunpack.c.l.b16 %v245
        %v390 = vunpack.c.l.b16 %v246
        %v391 = vunpack.c.l.b16 %v247
        %v392 = vunpack.c.l.b16 %v248
        %v393 = vunpack.c.l.b16 %v249
        %v394 = vunpack.c.l.b16 %v250
        %v395 = vunpack.c.l.b16 %v251
        %v396 = vunpack.c.l.b16 %v252
        %v397 = vunpack.c.l.b16 %v253
        %v398 = vunpack.c.l.b16 %v254
        %v399 = vunpack.c.l.b16 %v255
        %v400 = vunpack.c.l.b16 %v256
        %v401 = vpack.c.b16 %v338, %v337
        %v402 = vpack.c.b16 %v340, %v339
        %v403 = vpack.c.b16 %v342, %v341
        %v404 = vpack.c.b16 %v344, %v343
        %v405 = vpack.c.b16 %v346, %v345
        %v406 = vpack.c.b16 %v348, %v347
        %v407 = vpack.c.b16 %v350, %v349
        %v408 = vpack.c.b16 %v352, %v351
        %v409 = vpack.c.b16 %v354, %v353
        %v410 = vpack.c.b16 %v356, %v355
        %v411 = vpack.c.b16 %v358, %v357
        %v412 = vpack.c.b16 %v360, %v359
        %v413 = vpack.c.b16 %v362, %v361
        %v414 = vpack.c.b16 %v364, %v363
        %v415 = vpack.c.b16 %v366, %v365
        %v416 = vpack.c.b16 %v368, %v367
        %v417 = vpack.c.b16 %v370, %v369
        %v418 = vpack.c.b16 %v372, %v371
        %v419 = vpack.c.b16 %v374, %v373
        %v420 = vpack.c.b16 %v376, %v375
        %v421 = vpack.c.b16 %v378, %v377
        %v422 = vpack.c.b16 %v380, %v379
        %v423 = vpack.c.b16 %v382, %v381
        %v424 = vpack.c.b16 %v384, %v383
        %v425 = vpack.c.b16 %v386, %v385
        %v426 = vpack.c.b16 %v388, %v387
        %v427 = vpack.c.b16 %v390, %v389
        %v428 = vpack.c.b16 %v392, %v391
        %v429 = vpack.c.b16 %v394, %v393
        %v430 = vpack.c.b16 %v396, %v395
        %v431 = vpack.c.b16 %v398, %v397
        %v432 = vpack.c.b16 %v400, %v399
        %v442 = vunpack.c.l.b16 %v257
        %v443 = vunpack.c.l.b16 %v258
        %v444 = vunpack.c.l.b16 %v259
        %v445 = vunpack.c.l.b16 %v260
        %v446 = vunpack.c.l.b16 %v261
        %v447 = vunpack.c.l.b16 %v262
        %v448 = vunpack.c.l.b16 %v263
        %v449 = vunpack.c.l.b16 %v264
        %v450 = vunpack.c.l.b16 %v265
        %v451 = vpack.c.b16 %v443, %v442
        %v452 = vpack.c.b16 %v445, %v444
        %v453 = vpack.c.b16 %v447, %v446
        %v454 = vpack.c.b16 %v449, %v448
        %v455 = vpack.c.b16 %v450, %v450
        %vm460 = vcmask 588800
        %v462 = vsel %vm460, %v401, 0
        %v465 = vsel %vm460, %v402, 0
        %v468 = vsel %vm460, %v403, 0
        %v471 = vsel %vm460, %v404, 0
        %v474 = vsel %vm460, %v405, 0
        %v477 = vsel %vm460, %v406, 0
        %v480 = vsel %vm460, %v407, 0
        %v483 = vsel %vm460, %v408, 0
        %v486 = vsel %vm460, %v409, 0
        %v489 = vsel %vm460, %v410, 0
        %v492 = vsel %vm460, %v411, 0
        %v495 = vsel %vm460, %v412, 0
        %v498 = vsel %vm460, %v413, 0
        %v501 = vsel %vm460, %v414, 0
        %v504 = vsel %vm460, %v415, 0
        %v507 = vsel %vm460, %v416, 0
        %v510 = vsel %vm460, %v417, 0
        %v513 = vsel %vm460, %v418, 0
        %v516 = vsel %vm460, %v419, 0
        %v519 = vsel %vm460, %v420, 0
        %v522 = vsel %vm460, %v421, 0
        %v525 = vsel %vm460, %v422, 0
        %v528 = vsel %vm460, %v423, 0
        %v531 = vsel %vm460, %v424, 0
        %v534 = vsel %vm460, %v425, 0
        %v537 = vsel %vm460, %v426, 0
        %v540 = vsel %vm460, %v427, 0
        %v543 = vsel %vm460, %v428, 0
        %v546 = vsel %vm460, %v429, 0
        %v549 = vsel %vm460, %v430, 0
        %v552 = vsel %vm460, %v431, 0
        %v555 = vsel %vm460, %v432, 0
        %vm557 = vcmask 1043456
        %v559 = vsel %vm557, %v455, 0
        %561 = vmatprep.subr.bf16.mxu0 0
        %562 = vmatpush1.bf16.msra.mxu0 %v451
        %563 = vmatprep.subr.bf16.mxu0 0
        %564 = vmatpush1.bf16.msra.mxu0 %v452
        %565 = vmatprep.subr.bf16.mxu0 0
        %566 = vmatpush1.bf16.msra.mxu0 %v453
        %567 = vmatprep.subr.bf16.mxu0 0
        %568 = vmatpush1.bf16.msra.mxu0 %v454
        %569 = vmatprep.subr.bf16.mxu0 0
        %570 = vmatpush1.bf16.msra.mxu0 %v559
        %571 = vmatprep.subr.bf16.mxu0 0
        %572 = vmatpush1.bf16.msra.mxu0 0
        %573 = vmatprep.subr.bf16.mxu0 0
        %574 = vmatpush1.bf16.msra.mxu0 0
        %575 = vmatprep.subr.bf16.mxu0 0
        %576 = vmatpush1.bf16.msra.mxu0 0
        %577 = vmatprep.subr.bf16.mxu0 0
        %578 = vmatpush1.bf16.msra.mxu0 0
        %579 = vmatprep.subr.bf16.mxu0 0
        %580 = vmatpush1.bf16.msra.mxu0 0
        %581 = vmatprep.subr.bf16.mxu0 0
        %582 = vmatpush1.bf16.msra.mxu0 0
        %583 = vmatprep.subr.bf16.mxu0 0
        %584 = vmatpush1.bf16.msra.mxu0 0
        %585 = vmatprep.subr.bf16.mxu0 0
        %586 = vmatpush1.bf16.msra.mxu0 0
        %587 = vmatprep.subr.bf16.mxu0 0
        %588 = vmatpush1.bf16.msra.mxu0 0
        %589 = vmatprep.subr.bf16.mxu0 0
        %590 = vmatpush1.bf16.msra.mxu0 0
        %591 = vmatprep.subr.bf16.mxu0 0
        %592 = vmatpush1.bf16.msra.mxu0 0
        %593 = vmatprep.mubr.bf16.mxu0 0
        %594 = vmatmul.mubr.bf16.gmra.mrb[0].mxu0 %v462
        %v595 = vpop.f32.mrb[0].mxu0
        %v596 = vadd.f32 %v271, %v595
        %v597 = vpop.f32.mrb[0].mxu0
        %v598 = vpop.f32.mrb[0].mxu0
        %v599 = vadd.f32 %v271, %v598
        %v600 = vpop.f32.mrb[0].mxu0
        %601 = vmatprep.mubr.bf16.mxu0 0
        %602 = vmatmul.mubr.bf16.gmra.mrb[0].mxu0 %v465
        %v603 = vpop.f32.mrb[0].mxu0
        %v604 = vadd.f32 %v271, %v603
        %v605 = vpop.f32.mrb[0].mxu0
        %v606 = vpop.f32.mrb[0].mxu0
        %v607 = vadd.f32 %v271, %v606
        %v608 = vpop.f32.mrb[0].mxu0
        %609 = vmatprep.mubr.bf16.mxu0 0
        %610 = vmatmul.mubr.bf16.gmra.mrb[0].mxu0 %v468
        %v611 = vpop.f32.mrb[0].mxu0
        %v612 = vadd.f32 %v271, %v611
        %v613 = vpop.f32.mrb[0].mxu0
        %v614 = vpop.f32.mrb[0].mxu0
        %v615 = vadd.f32 %v271, %v614
        %v616 = vpop.f32.mrb[0].mxu0
        %617 = vmatprep.mubr.bf16.mxu0 0
        %618 = vmatmul.mubr.bf16.gmra.mrb[0].mxu0 %v471
        %v619 = vpop.f32.mrb[0].mxu0
        %v620 = vadd.f32 %v271, %v619
        %v621 = vpop.f32.mrb[0].mxu0
        %v622 = vpop.f32.mrb[0].mxu0
        %v623 = vadd.f32 %v271, %v622
        %v624 = vpop.f32.mrb[0].mxu0
        %625 = vmatprep.mubr.bf16.mxu0 0
        %626 = vmatmul.mubr.bf16.gmra.mrb[0].mxu0 %v474
        %v627 = vpop.f32.mrb[0].mxu0
        %v628 = vadd.f32 %v271, %v627
        %v629 = vpop.f32.mrb[0].mxu0
        %v630 = vpop.f32.mrb[0].mxu0
        %v631 = vadd.f32 %v271, %v630
        %v632 = vpop.f32.mrb[0].mxu0
        %633 = vmatprep.mubr.bf16.mxu0 0
        %634 = vmatmul.mubr.bf16.gmra.mrb[0].mxu0 %v477
        %v635 = vpop.f32.mrb[0].mxu0
        %v636 = vadd.f32 %v271, %v635
        %v637 = vpop.f32.mrb[0].mxu0
        %v638 = vpop.f32.mrb[0].mxu0
        %v639 = vadd.f32 %v271, %v638
        %v640 = vpop.f32.mrb[0].mxu0
        %641 = vmatprep.mubr.bf16.mxu0 0
        %642 = vmatmul.mubr.bf16.gmra.mrb[0].mxu0 %v480
        %v643 = vpop.f32.mrb[0].mxu0
        %v644 = vadd.f32 %v271, %v643
        %v645 = vpop.f32.mrb[0].mxu0
        %v646 = vpop.f32.mrb[0].mxu0
        %v647 = vadd.f32 %v271, %v646
        %v648 = vpop.f32.mrb[0].mxu0
        %649 = vmatprep.mubr.bf16.mxu0 0
        %650 = vmatmul.mubr.bf16.gmra.mrb[0].mxu0 %v483
        %v651 = vpop.f32.mrb[0].mxu0
        %v652 = vadd.f32 %v271, %v651
        %v653 = vpop.f32.mrb[0].mxu0
        %v654 = vpop.f32.mrb[0].mxu0
        %v655 = vadd.f32 %v271, %v654
        %v656 = vpop.f32.mrb[0].mxu0
        %657 = vmatprep.mubr.bf16.mxu0 0
        %658 = vmatmul.mubr.bf16.gmra.mrb[0].mxu0 %v486
        %v659 = vpop.f32.mrb[0].mxu0
        %v660 = vadd.f32 %v271, %v659
        %v661 = vpop.f32.mrb[0].mxu0
        %v662 = vpop.f32.mrb[0].mxu0
        %v663 = vadd.f32 %v271, %v662
        %v664 = vpop.f32.mrb[0].mxu0
        %665 = vmatprep.mubr.bf16.mxu0 0
        %666 = vmatmul.mubr.bf16.gmra.mrb[0].mxu0 %v489
        %v667 = vpop.f32.mrb[0].mxu0
        %v668 = vadd.f32 %v271, %v667
        %v669 = vpop.f32.mrb[0].mxu0
        %v670 = vpop.f32.mrb[0].mxu0
        %v671 = vadd.f32 %v271, %v670
        %v672 = vpop.f32.mrb[0].mxu0
        %673 = vmatprep.mubr.bf16.mxu0 0
        %674 = vmatmul.mubr.bf16.gmra.mrb[0].mxu0 %v492
        %v675 = vpop.f32.mrb[0].mxu0
        %v676 = vadd.f32 %v271, %v675
        %v677 = vpop.f32.mrb[0].mxu0
        %v678 = vpop.f32.mrb[0].mxu0
        %v679 = vadd.f32 %v271, %v678
        %v680 = vpop.f32.mrb[0].mxu0
        %681 = vmatprep.mubr.bf16.mxu0 0
        %682 = vmatmul.mubr.bf16.gmra.mrb[0].mxu0 %v495
        %v683 = vpop.f32.mrb[0].mxu0
        %v684 = vadd.f32 %v271, %v683
        %v685 = vpop.f32.mrb[0].mxu0
        %v686 = vpop.f32.mrb[0].mxu0
        %v687 = vadd.f32 %v271, %v686
        %v688 = vpop.f32.mrb[0].mxu0
        %689 = vmatprep.mubr.bf16.mxu0 0
        %690 = vmatmul.mubr.bf16.gmra.mrb[0].mxu0 %v498
        %v691 = vpop.f32.mrb[0].mxu0
        %v692 = vadd.f32 %v271, %v691
        %v693 = vpop.f32.mrb[0].mxu0
        %v694 = vpop.f32.mrb[0].mxu0
        %v695 = vadd.f32 %v271, %v694
        %v696 = vpop.f32.mrb[0].mxu0
        %697 = vmatprep.mubr.bf16.mxu0 0
        %698 = vmatmul.mubr.bf16.gmra.mrb[0].mxu0 %v501
        %v699 = vpop.f32.mrb[0].mxu0
        %v700 = vadd.f32 %v271, %v699
        %v701 = vpop.f32.mrb[0].mxu0
        %v702 = vpop.f32.mrb[0].mxu0
        %v703 = vadd.f32 %v271, %v702
        %v704 = vpop.f32.mrb[0].mxu0
        %705 = vmatprep.mubr.bf16.mxu0 0
        %706 = vmatmul.mubr.bf16.gmra.mrb[0].mxu0 %v504
        %v707 = vpop.f32.mrb[0].mxu0
        %v708 = vadd.f32 %v271, %v707
        %v709 = vpop.f32.mrb[0].mxu0
        %v710 = vpop.f32.mrb[0].mxu0
        %v711 = vadd.f32 %v271, %v710
        %v712 = vpop.f32.mrb[0].mxu0
        %713 = vmatprep.mubr.bf16.mxu0 0
        %714 = vmatmul.mubr.bf16.gmra.mrb[0].mxu0 %v507
        %v715 = vpop.f32.mrb[0].mxu0
        %v716 = vadd.f32 %v271, %v715
        %v717 = vpop.f32.mrb[0].mxu0
        %v718 = vpop.f32.mrb[0].mxu0
        %v719 = vadd.f32 %v271, %v718
        %v720 = vpop.f32.mrb[0].mxu0
        %721 = vmatprep.mubr.bf16.mxu0 0
        %722 = vmatmul.mubr.bf16.gmra.mrb[0].mxu0 %v510
        %v723 = vpop.f32.mrb[0].mxu0
        %v724 = vadd.f32 %v271, %v723
        %v725 = vpop.f32.mrb[0].mxu0
        %v726 = vpop.f32.mrb[0].mxu0
        %v727 = vadd.f32 %v271, %v726
        %v728 = vpop.f32.mrb[0].mxu0
        %729 = vmatprep.mubr.bf16.mxu0 0
        %730 = vmatmul.mubr.bf16.gmra.mrb[0].mxu0 %v513
        %v731 = vpop.f32.mrb[0].mxu0
        %v732 = vadd.f32 %v271, %v731
        %v733 = vpop.f32.mrb[0].mxu0
        %v734 = vpop.f32.mrb[0].mxu0
        %v735 = vadd.f32 %v271, %v734
        %v736 = vpop.f32.mrb[0].mxu0
        %737 = vmatprep.mubr.bf16.mxu0 0
        %738 = vmatmul.mubr.bf16.gmra.mrb[0].mxu0 %v516
        %v739 = vpop.f32.mrb[0].mxu0
        %v740 = vadd.f32 %v271, %v739
        %v741 = vpop.f32.mrb[0].mxu0
        %v742 = vpop.f32.mrb[0].mxu0
        %v743 = vadd.f32 %v271, %v742
        %v744 = vpop.f32.mrb[0].mxu0
        %745 = vmatprep.mubr.bf16.mxu0 0
        %746 = vmatmul.mubr.bf16.gmra.mrb[0].mxu0 %v519
        %v747 = vpop.f32.mrb[0].mxu0
        %v748 = vadd.f32 %v271, %v747
        %v749 = vpop.f32.mrb[0].mxu0
        %v750 = vpop.f32.mrb[0].mxu0
        %v751 = vadd.f32 %v271, %v750
        %v752 = vpop.f32.mrb[0].mxu0
        %753 = vmatprep.mubr.bf16.mxu0 0
        %754 = vmatmul.mubr.bf16.gmra.mrb[0].mxu0 %v522
        %v755 = vpop.f32.mrb[0].mxu0
        %v756 = vadd.f32 %v271, %v755
        %v757 = vpop.f32.mrb[0].mxu0
        %v758 = vpop.f32.mrb[0].mxu0
        %v759 = vadd.f32 %v271, %v758
        %v760 = vpop.f32.mrb[0].mxu0
        %761 = vmatprep.mubr.bf16.mxu0 0
        %762 = vmatmul.mubr.bf16.gmra.mrb[0].mxu0 %v525
        %v763 = vpop.f32.mrb[0].mxu0
        %v764 = vadd.f32 %v271, %v763
        %v765 = vpop.f32.mrb[0].mxu0
        %v766 = vpop.f32.mrb[0].mxu0
        %v767 = vadd.f32 %v271, %v766
        %v768 = vpop.f32.mrb[0].mxu0
        %769 = vmatprep.mubr.bf16.mxu0 0
        %770 = vmatmul.mubr.bf16.gmra.mrb[0].mxu0 %v528
        %v771 = vpop.f32.mrb[0].mxu0
        %v772 = vadd.f32 %v271, %v771
        %v773 = vpop.f32.mrb[0].mxu0
        %v774 = vpop.f32.mrb[0].mxu0
        %v775 = vadd.f32 %v271, %v774
        %v776 = vpop.f32.mrb[0].mxu0
        %777 = vmatprep.mubr.bf16.mxu0 0
        %778 = vmatmul.mubr.bf16.gmra.mrb[0].mxu0 %v531
        %v779 = vpop.f32.mrb[0].mxu0
        %v780 = vadd.f32 %v271, %v779
        %v781 = vpop.f32.mrb[0].mxu0
        %v782 = vpop.f32.mrb[0].mxu0
        %v783 = vadd.f32 %v271, %v782
        %v784 = vpop.f32.mrb[0].mxu0
        %785 = vmatprep.mubr.bf16.mxu0 0
        %786 = vmatmul.mubr.bf16.gmra.mrb[0].mxu0 %v534
        %v787 = vpop.f32.mrb[0].mxu0
        %v788 = vadd.f32 %v271, %v787
        %v789 = vpop.f32.mrb[0].mxu0
        %v790 = vpop.f32.mrb[0].mxu0
        %v791 = vadd.f32 %v271, %v790
        %v792 = vpop.f32.mrb[0].mxu0
        %793 = vmatprep.mubr.bf16.mxu0 0
        %794 = vmatmul.mubr.bf16.gmra.mrb[0].mxu0 %v537
        %v795 = vpop.f32.mrb[0].mxu0
        %v796 = vadd.f32 %v271, %v795
        %v797 = vpop.f32.mrb[0].mxu0
        %v798 = vpop.f32.mrb[0].mxu0
        %v799 = vadd.f32 %v271, %v798
        %v800 = vpop.f32.mrb[0].mxu0
        %801 = vmatprep.mubr.bf16.mxu0 0
        %802 = vmatmul.mubr.bf16.gmra.mrb[0].mxu0 %v540
        %v803 = vpop.f32.mrb[0].mxu0
        %v804 = vadd.f32 %v271, %v803
        %v805 = vpop.f32.mrb[0].mxu0
        %v806 = vpop.f32.mrb[0].mxu0
        %v807 = vadd.f32 %v271, %v806
        %v808 = vpop.f32.mrb[0].mxu0
        %809 = vmatprep.mubr.bf16.mxu0 0
        %810 = vmatmul.mubr.bf16.gmra.mrb[0].mxu0 %v543
        %v811 = vpop.f32.mrb[0].mxu0
        %v812 = vadd.f32 %v271, %v811
        %v813 = vpop.f32.mrb[0].mxu0
        %v814 = vpop.f32.mrb[0].mxu0
        %v815 = vadd.f32 %v271, %v814
        %v816 = vpop.f32.mrb[0].mxu0
        %817 = vmatprep.mubr.bf16.mxu0 0
        %818 = vmatmul.mubr.bf16.gmra.mrb[0].mxu0 %v546
        %v819 = vpop.f32.mrb[0].mxu0
        %v820 = vadd.f32 %v271, %v819
        %v821 = vpop.f32.mrb[0].mxu0
        %v822 = vpop.f32.mrb[0].mxu0
        %v823 = vadd.f32 %v271, %v822
        %v824 = vpop.f32.mrb[0].mxu0
        %825 = vmatprep.mubr.bf16.mxu0 0
        %826 = vmatmul.mubr.bf16.gmra.mrb[0].mxu0 %v549
        %v827 = vpop.f32.mrb[0].mxu0
        %v828 = vadd.f32 %v271, %v827
        %v829 = vpop.f32.mrb[0].mxu0
        %v830 = vpop.f32.mrb[0].mxu0
        %v831 = vadd.f32 %v271, %v830
        %v832 = vpop.f32.mrb[0].mxu0
        %833 = vmatprep.mubr.bf16.mxu0 0
        %834 = vmatmul.mubr.bf16.gmra.mrb[0].mxu0 %v552
        %v835 = vpop.f32.mrb[0].mxu0
        %v836 = vadd.f32 %v271, %v835
        %v837 = vpop.f32.mrb[0].mxu0
        %v838 = vpop.f32.mrb[0].mxu0
        %v839 = vadd.f32 %v271, %v838
        %v840 = vpop.f32.mrb[0].mxu0
        %841 = vmatprep.mubr.bf16.mxu0 0
        %842 = vmatmul.mubr.bf16.gmra.mrb[0].mxu0 %v555
        %v843 = vpop.f32.mrb[0].mxu0
        %v844 = vadd.f32 %v271, %v843
        %v845 = vpop.f32.mrb[0].mxu0
        %v846 = vpop.f32.mrb[0].mxu0
        %v847 = vadd.f32 %v271, %v846
        %v848 = vpop.f32.mrb[0].mxu0
        %849 = vdwg.mxu0
        %v850 = vmax.f32 %v596, 0.0
        %v851 = vmax.f32 %v599, 0.0
        %v852 = vmax.f32 %v604, 0.0
        %v853 = vmax.f32 %v607, 0.0
        %v854 = vmax.f32 %v612, 0.0
        %v855 = vmax.f32 %v615, 0.0
        %v856 = vmax.f32 %v620, 0.0
        %v857 = vmax.f32 %v623, 0.0
        %v858 = vmax.f32 %v628, 0.0
        %v859 = vmax.f32 %v631, 0.0
        %v860 = vmax.f32 %v636, 0.0
        %v861 = vmax.f32 %v639, 0.0
        %v862 = vmax.f32 %v644, 0.0
        %v863 = vmax.f32 %v647, 0.0
        %v864 = vmax.f32 %v652, 0.0
        %v865 = vmax.f32 %v655, 0.0
        %v866 = vmax.f32 %v660, 0.0
        %v867 = vmax.f32 %v663, 0.0
        %v868 = vmax.f32 %v668, 0.0
        %v869 = vmax.f32 %v671, 0.0
        %v870 = vmax.f32 %v676, 0.0
        %v871 = vmax.f32 %v679, 0.0
        %v872 = vmax.f32 %v684, 0.0
        %v873 = vmax.f32 %v687, 0.0
        %v874 = vmax.f32 %v692, 0.0
        %v875 = vmax.f32 %v695, 0.0
        %v876 = vmax.f32 %v700, 0.0
        %v877 = vmax.f32 %v703, 0.0
        %v878 = vmax.f32 %v708, 0.0
        %v879 = vmax.f32 %v711, 0.0
        %v880 = vmax.f32 %v716, 0.0
        %v881 = vmax.f32 %v719, 0.0
        %v882 = vmax.f32 %v724, 0.0
        %v883 = vmax.f32 %v727, 0.0
        %v884 = vmax.f32 %v732, 0.0
        %v885 = vmax.f32 %v735, 0.0
        %v886 = vmax.f32 %v740, 0.0
        %v887 = vmax.f32 %v743, 0.0
        %v888 = vmax.f32 %v748, 0.0
        %v889 = vmax.f32 %v751, 0.0
        %v890 = vmax.f32 %v756, 0.0
        %v891 = vmax.f32 %v759, 0.0
        %v892 = vmax.f32 %v764, 0.0
        %v893 = vmax.f32 %v767, 0.0
        %v894 = vmax.f32 %v772, 0.0
        %v895 = vmax.f32 %v775, 0.0
        %v896 = vmax.f32 %v780, 0.0
        %v897 = vmax.f32 %v783, 0.0
        %v898 = vmax.f32 %v788, 0.0
        %v899 = vmax.f32 %v791, 0.0
        %v900 = vmax.f32 %v796, 0.0
        %v901 = vmax.f32 %v799, 0.0
        %v902 = vmax.f32 %v804, 0.0
        %v903 = vmax.f32 %v807, 0.0
        %v904 = vmax.f32 %v812, 0.0
        %v905 = vmax.f32 %v815, 0.0
        %v906 = vmax.f32 %v820, 0.0
        %v907 = vmax.f32 %v823, 0.0
        %v908 = vmax.f32 %v828, 0.0
        %v909 = vmax.f32 %v831, 0.0
        %v910 = vmax.f32 %v836, 0.0
        %v911 = vmax.f32 %v839, 0.0
        %v912 = vmax.f32 %v844, 0.0
        %v913 = vmax.f32 %v847, 0.0
        %v914 = vpack.c.bf16 %v851, %v850
        %v915 = vpack.c.bf16 %v853, %v852
        %v916 = vpack.c.bf16 %v855, %v854
        %v917 = vpack.c.bf16 %v857, %v856
        %v918 = vpack.c.bf16 %v859, %v858
        %v919 = vpack.c.bf16 %v861, %v860
        %v920 = vpack.c.bf16 %v863, %v862
        %v921 = vpack.c.bf16 %v865, %v864
        %v922 = vpack.c.bf16 %v867, %v866
        %v923 = vpack.c.bf16 %v869, %v868
        %v924 = vpack.c.bf16 %v871, %v870
        %v925 = vpack.c.bf16 %v873, %v872
        %v926 = vpack.c.bf16 %v875, %v874
        %v927 = vpack.c.bf16 %v877, %v876
        %v928 = vpack.c.bf16 %v879, %v878
        %v929 = vpack.c.bf16 %v881, %v880
        %v930 = vpack.c.bf16 %v883, %v882
        %v931 = vpack.c.bf16 %v885, %v884
        %v932 = vpack.c.bf16 %v887, %v886
        %v933 = vpack.c.bf16 %v889, %v888
        %v934 = vpack.c.bf16 %v891, %v890
        %v935 = vpack.c.bf16 %v893, %v892
        %v936 = vpack.c.bf16 %v895, %v894
        %v937 = vpack.c.bf16 %v897, %v896
        %v938 = vpack.c.bf16 %v899, %v898
        %v939 = vpack.c.bf16 %v901, %v900
        %v940 = vpack.c.bf16 %v903, %v902
        %v941 = vpack.c.bf16 %v905, %v904
        %v942 = vpack.c.bf16 %v907, %v906
        %v943 = vpack.c.bf16 %v909, %v908
        %v944 = vpack.c.bf16 %v911, %v910
        %v945 = vpack.c.bf16 %v913, %v912
        %v978 = vunpack.c.l.b16 %v914
        %v979 = vunpack.c.h.b16 %v914
        %v980 = vunpack.c.l.b16 %v915
        %v981 = vunpack.c.h.b16 %v915
        %v982 = vunpack.c.l.b16 %v916
        %v983 = vunpack.c.h.b16 %v916
        %v984 = vunpack.c.l.b16 %v917
        %v985 = vunpack.c.h.b16 %v917
        %v986 = vunpack.c.l.b16 %v918
        %v987 = vunpack.c.h.b16 %v918
        %v988 = vunpack.c.l.b16 %v919
        %v989 = vunpack.c.h.b16 %v919
        %v990 = vunpack.c.l.b16 %v920
        %v991 = vunpack.c.h.b16 %v920
        %v992 = vunpack.c.l.b16 %v921
        %v993 = vunpack.c.h.b16 %v921
        %v994 = vunpack.c.l.b16 %v922
        %v995 = vunpack.c.h.b16 %v922
        %v996 = vunpack.c.l.b16 %v923
        %v997 = vunpack.c.h.b16 %v923
        %v998 = vunpack.c.l.b16 %v924
        %v999 = vunpack.c.h.b16 %v924
        %v1000 = vunpack.c.l.b16 %v925
        %v1001 = vunpack.c.h.b16 %v925
        %v1002 = vunpack.c.l.b16 %v926
        %v1003 = vunpack.c.h.b16 %v926
        %v1004 = vunpack.c.l.b16 %v927
        %v1005 = vunpack.c.h.b16 %v927
        %v1006 = vunpack.c.l.b16 %v928
        %v1007 = vunpack.c.h.b16 %v928
        %v1008 = vunpack.c.l.b16 %v929
        %v1009 = vunpack.c.h.b16 %v929
        %v1010 = vunpack.c.l.b16 %v930
        %v1011 = vunpack.c.h.b16 %v930
        %v1012 = vunpack.c.l.b16 %v931
        %v1013 = vunpack.c.h.b16 %v931
        %v1014 = vunpack.c.l.b16 %v932
        %v1015 = vunpack.c.h.b16 %v932
        %v1016 = vunpack.c.l.b16 %v933
        %v1017 = vunpack.c.h.b16 %v933
        %v1018 = vunpack.c.l.b16 %v934
        %v1019 = vunpack.c.h.b16 %v934
        %v1020 = vunpack.c.l.b16 %v935
        %v1021 = vunpack.c.h.b16 %v935
        %v1022 = vunpack.c.l.b16 %v936
        %v1023 = vunpack.c.h.b16 %v936
        %v1024 = vunpack.c.l.b16 %v937
        %v1025 = vunpack.c.h.b16 %v937
        %v1026 = vunpack.c.l.b16 %v938
        %v1027 = vunpack.c.h.b16 %v938
        %v1028 = vunpack.c.l.b16 %v939
        %v1029 = vunpack.c.h.b16 %v939
        %v1030 = vunpack.c.l.b16 %v940
        %v1031 = vunpack.c.h.b16 %v940
        %v1032 = vunpack.c.l.b16 %v941
        %v1033 = vunpack.c.h.b16 %v941
        %v1034 = vunpack.c.l.b16 %v942
        %v1035 = vunpack.c.h.b16 %v942
        %v1036 = vunpack.c.l.b16 %v943
        %v1037 = vunpack.c.h.b16 %v943
        %v1038 = vunpack.c.l.b16 %v944
        %v1039 = vunpack.c.h.b16 %v944
        %v1040 = vunpack.c.l.b16 %v945
        %v1041 = vunpack.c.h.b16 %v945
        %v1042 = vpack.c.b16 %v978, %v978
        %v1043 = vpack.c.b16 %v979, %v979
        %v1044 = vpack.c.b16 %v980, %v980
        %v1045 = vpack.c.b16 %v981, %v981
        %v1046 = vpack.c.b16 %v982, %v982
        %v1047 = vpack.c.b16 %v983, %v983
        %v1048 = vpack.c.b16 %v984, %v984
        %v1049 = vpack.c.b16 %v985, %v985
        %v1050 = vpack.c.b16 %v986, %v986
        %v1051 = vpack.c.b16 %v987, %v987
        %v1052 = vpack.c.b16 %v988, %v988
        %v1053 = vpack.c.b16 %v989, %v989
        %v1054 = vpack.c.b16 %v990, %v990
        %v1055 = vpack.c.b16 %v991, %v991
        %v1056 = vpack.c.b16 %v992, %v992
        %v1057 = vpack.c.b16 %v993, %v993
        %v1058 = vpack.c.b16 %v994, %v994
        %v1059 = vpack.c.b16 %v995, %v995
        %v1060 = vpack.c.b16 %v996, %v996
        %v1061 = vpack.c.b16 %v997, %v997
        %v1062 = vpack.c.b16 %v998, %v998
        %v1063 = vpack.c.b16 %v999, %v999
        %v1064 = vpack.c.b16 %v1000, %v1000
        %v1065 = vpack.c.b16 %v1001, %v1001
        %v1066 = vpack.c.b16 %v1002, %v1002
        %v1067 = vpack.c.b16 %v1003, %v1003
        %v1068 = vpack.c.b16 %v1004, %v1004
        %v1069 = vpack.c.b16 %v1005, %v1005
        %v1070 = vpack.c.b16 %v1006, %v1006
        %v1071 = vpack.c.b16 %v1007, %v1007
        %v1072 = vpack.c.b16 %v1008, %v1008
        %v1073 = vpack.c.b16 %v1009, %v1009
        %v1074 = vpack.c.b16 %v1010, %v1010
        %v1075 = vpack.c.b16 %v1011, %v1011
        %v1076 = vpack.c.b16 %v1012, %v1012
        %v1077 = vpack.c.b16 %v1013, %v1013
        %v1078 = vpack.c.b16 %v1014, %v1014
        %v1079 = vpack.c.b16 %v1015, %v1015
        %v1080 = vpack.c.b16 %v1016, %v1016
        %v1081 = vpack.c.b16 %v1017, %v1017
        %v1082 = vpack.c.b16 %v1018, %v1018
        %v1083 = vpack.c.b16 %v1019, %v1019
        %v1084 = vpack.c.b16 %v1020, %v1020
        %v1085 = vpack.c.b16 %v1021, %v1021
        %v1086 = vpack.c.b16 %v1022, %v1022
        %v1087 = vpack.c.b16 %v1023, %v1023
        %v1088 = vpack.c.b16 %v1024, %v1024
        %v1089 = vpack.c.b16 %v1025, %v1025
        %v1090 = vpack.c.b16 %v1026, %v1026
        %v1091 = vpack.c.b16 %v1027, %v1027
        %v1092 = vpack.c.b16 %v1028, %v1028
        %v1093 = vpack.c.b16 %v1029, %v1029
        %v1094 = vpack.c.b16 %v1030, %v1030
        %v1095 = vpack.c.b16 %v1031, %v1031
        %v1096 = vpack.c.b16 %v1032, %v1032
        %v1097 = vpack.c.b16 %v1033, %v1033
        %v1098 = vpack.c.b16 %v1034, %v1034
        %v1099 = vpack.c.b16 %v1035, %v1035
        %v1100 = vpack.c.b16 %v1036, %v1036
        %v1101 = vpack.c.b16 %v1037, %v1037
        %v1102 = vpack.c.b16 %v1038, %v1038
        %v1103 = vpack.c.b16 %v1039, %v1039
        %v1104 = vpack.c.b16 %v1040, %v1040
        %v1105 = vpack.c.b16 %v1041, %v1041
        %vm1170 = vcmask 125952
        %1171 = vst.msk [vmem:[%s172] sm:$0xf] %vm1170, %v1042
        %1172 = vst.msk [vmem:[%s172 + $0x4] sm:$0xf] %vm1170, %v1043
        %1173 = vst.msk [vmem:[%s172 + $0x8] sm:$0xf] %vm1170, %v1044
        %1174 = vst.msk [vmem:[%s172 + $0xc] sm:$0xf] %vm1170, %v1045
        %1175 = vst.msk [vmem:[%s172 + $0x10] sm:$0xf] %vm1170, %v1046
        %1176 = vst.msk [vmem:[%s172 + $0x14] sm:$0xf] %vm1170, %v1047
        %1177 = vst.msk [vmem:[%s172 + $0x18] sm:$0xf] %vm1170, %v1048
        %1178 = vst.msk [vmem:[%s172 + $0x1c] sm:$0xf] %vm1170, %v1049
        %1179 = vst.msk [vmem:[%s172 + $0x20] sm:$0xf] %vm1170, %v1050
        %1180 = vst.msk [vmem:[%s172 + $0x24] sm:$0xf] %vm1170, %v1051
        %1181 = vst.msk [vmem:[%s172 + $0x28] sm:$0xf] %vm1170, %v1052
        %1182 = vst.msk [vmem:[%s172 + $0x2c] sm:$0xf] %vm1170, %v1053
        %1183 = vst.msk [vmem:[%s172 + $0x30] sm:$0xf] %vm1170, %v1054
        %1184 = vst.msk [vmem:[%s172 + $0x34] sm:$0xf] %vm1170, %v1055
        %1185 = vst.msk [vmem:[%s172 + $0x38] sm:$0xf] %vm1170, %v1056
        %1186 = vst.msk [vmem:[%s172 + $0x3c] sm:$0xf] %vm1170, %v1057
        %1187 = vst.msk [vmem:[%s172 + $0x40] sm:$0xf] %vm1170, %v1058
        %1188 = vst.msk [vmem:[%s172 + $0x44] sm:$0xf] %vm1170, %v1059
        %1189 = vst.msk [vmem:[%s172 + $0x48] sm:$0xf] %vm1170, %v1060
        %1190 = vst.msk [vmem:[%s172 + $0x4c] sm:$0xf] %vm1170, %v1061
        %1191 = vst.msk [vmem:[%s172 + $0x50] sm:$0xf] %vm1170, %v1062
        %1192 = vst.msk [vmem:[%s172 + $0x54] sm:$0xf] %vm1170, %v1063
        %1193 = vst.msk [vmem:[%s172 + $0x58] sm:$0xf] %vm1170, %v1064
        %1194 = vst.msk [vmem:[%s172 + $0x5c] sm:$0xf] %vm1170, %v1065
        %1195 = vst.msk [vmem:[%s172 + $0x60] sm:$0xf] %vm1170, %v1066
        %1196 = vst.msk [vmem:[%s172 + $0x64] sm:$0xf] %vm1170, %v1067
        %1197 = vst.msk [vmem:[%s172 + $0x68] sm:$0xf] %vm1170, %v1068
        %1198 = vst.msk [vmem:[%s172 + $0x6c] sm:$0xf] %vm1170, %v1069
        %1199 = vst.msk [vmem:[%s172 + $0x70] sm:$0xf] %vm1170, %v1070
        %1200 = vst.msk [vmem:[%s172 + $0x74] sm:$0xf] %vm1170, %v1071
        %1201 = vst.msk [vmem:[%s172 + $0x78] sm:$0xf] %vm1170, %v1072
        %1202 = vst.msk [vmem:[%s172 + $0x7c] sm:$0xf] %vm1170, %v1073
        %1203 = vst.msk [vmem:[%s172 + $0x80] sm:$0xf] %vm1170, %v1074
        %1204 = vst.msk [vmem:[%s172 + $0x84] sm:$0xf] %vm1170, %v1075
        %1205 = vst.msk [vmem:[%s172 + $0x88] sm:$0xf] %vm1170, %v1076
        %1206 = vst.msk [vmem:[%s172 + $0x8c] sm:$0xf] %vm1170, %v1077
        %1207 = vst.msk [vmem:[%s172 + $0x90] sm:$0xf] %vm1170, %v1078
        %1208 = vst.msk [vmem:[%s172 + $0x94] sm:$0xf] %vm1170, %v1079
        %1209 = vst.msk [vmem:[%s172 + $0x98] sm:$0xf] %vm1170, %v1080
        %1210 = vst.msk [vmem:[%s172 + $0x9c] sm:$0xf] %vm1170, %v1081
        %1211 = vst.msk [vmem:[%s172 + $0xa0] sm:$0xf] %vm1170, %v1082
        %1212 = vst.msk [vmem:[%s172 + $0xa4] sm:$0xf] %vm1170, %v1083
        %1213 = vst.msk [vmem:[%s172 + $0xa8] sm:$0xf] %vm1170, %v1084
        %1214 = vst.msk [vmem:[%s172 + $0xac] sm:$0xf] %vm1170, %v1085
        %1215 = vst.msk [vmem:[%s172 + $0xb0] sm:$0xf] %vm1170, %v1086
        %1216 = vst.msk [vmem:[%s172 + $0xb4] sm:$0xf] %vm1170, %v1087
        %1217 = vst.msk [vmem:[%s172 + $0xb8] sm:$0xf] %vm1170, %v1088
        %1218 = vst.msk [vmem:[%s172 + $0xbc] sm:$0xf] %vm1170, %v1089
        %1219 = vst.msk [vmem:[%s172 + $0xc0] sm:$0xf] %vm1170, %v1090
        %1220 = vst.msk [vmem:[%s172 + $0xc4] sm:$0xf] %vm1170, %v1091
        %1221 = vst.msk [vmem:[%s172 + $0xc8] sm:$0xf] %vm1170, %v1092
        %1222 = vst.msk [vmem:[%s172 + $0xcc] sm:$0xf] %vm1170, %v1093
        %1223 = vst.msk [vmem:[%s172 + $0xd0] sm:$0xf] %vm1170, %v1094
        %1224 = vst.msk [vmem:[%s172 + $0xd4] sm:$0xf] %vm1170, %v1095
        %1225 = vst.msk [vmem:[%s172 + $0xd8] sm:$0xf] %vm1170, %v1096
        %1226 = vst.msk [vmem:[%s172 + $0xdc] sm:$0xf] %vm1170, %v1097
        %1227 = vst.msk [vmem:[%s172 + $0xe0] sm:$0xf] %vm1170, %v1098
        %1228 = vst.msk [vmem:[%s172 + $0xe4] sm:$0xf] %vm1170, %v1099
        %1229 = vst.msk [vmem:[%s172 + $0xe8] sm:$0xf] %vm1170, %v1100
        %1230 = vst.msk [vmem:[%s172 + $0xec] sm:$0xf] %vm1170, %v1101
        %1231 = vst.msk [vmem:[%s172 + $0xf0] sm:$0xf] %vm1170, %v1102
        %1232 = vst.msk [vmem:[%s172 + $0xf4] sm:$0xf] %vm1170, %v1103
        %1233 = vst.msk [vmem:[%s172 + $0xf8] sm:$0xf] %vm1170, %v1104
        %1234 = vst.msk [vmem:[%s172 + $0xfc] sm:$0xf] %vm1170, %v1105
        %s1235 = sand.u32 %s90, 1
        %s1236 = sand.u32 %s90, 1
        %s1237 = smul.addr %s1236, 256
        %s1238 = scalar_lea.vmem [#allocation2], %s1237
        // Predicated region
        $region33: #{net_forward.6} parent=31 // pred_check
          %p1239 = pneg %p100
        $region34: #{net_forward.6} parent=31 // pred_check_branch
          %1241 = sbr.rel (%p1239) target = $region36
        $region35: #{net_forward.6} parent=31 // pred_region
          %s1242 = smul.u32 64, %s14
          %s1243 = ssub.s32 133, %s1242
          %p1244 = scmp.lt.s32.totalorder %s1243, 64
          %s1245 = scalar_select %p1244, %s1243, 64
          %s1246 = smul.u32 64, %s1245
          %p1247 = scmp.ne.s32.totalorder 0, %s1246
          %s1248 = smul.addr %s1242, 4
          %s1249 = scalar_lea.vmem %s3, %s1248
          // Predicated region
          $region37: #{net_forward.6} parent=35 // pred_check
            %p1250 = pneg %p1247
          $region38: #{net_forward.6} parent=35 // pred_check_branch
            %1252 = sbr.rel (%p1250) target = $region40
          $region39: #{net_forward.6} parent=35 // pred_region
            // Predicated region
            $region41: #{net_forward.6} parent=39 // pred_check
              _
            $region42: #{net_forward.6} parent=39 // pred_check_branch
              %1254 = sbr.rel target = $region44
            $region43: #{net_forward.6} parent=39 // pred_region
              // Predicated region
              $region63: #{net_forward.6} parent=43 // pred_check
                _
              $region64: #{net_forward.6} parent=43 // pred_check_branch
                %1429 = sbr.rel (0) target = $region66
              $region65: #{net_forward.6} parent=43 // pred_region
                %s1431 = sshrl.u32 %s1245, 6
                // While loop
                $region67: #{net_forward.6} parent=65 // loop_pre_header
                  _
                $region68: #{net_forward.6} parent=65 // loop_header
                  %s1433 = sphi 0, %s1435
                  %p1434 = scmp.ge.s32.totalorder %s1433, %s1431
                  %s1438 = sphi 0, %s1571
                  %s1439 = sphi %s1238, %s1574
                  %s1440 = sphi %s1249, %s1575
                $region69: #{net_forward.6} parent=65 // loop_header_branch
                  %1437 = sbr.rel (%p1434) target = $region73
                $region70: #{net_forward.6} parent=65 // loop_body
                  %v1441 = vld [vmem:[%s1439] sm:$0xf]
                  %1442 = vst [vmem:[%s1440] sm:$0xf] %v1441
                  %v1443 = vld [vmem:[%s1439 + $0x4] sm:$0xf]
                  %1444 = vst [vmem:[%s1440 + $0x4] sm:$0xf] %v1443
                  %v1445 = vld [vmem:[%s1439 + $0x8] sm:$0xf]
                  %1446 = vst [vmem:[%s1440 + $0x8] sm:$0xf] %v1445
                  %v1447 = vld [vmem:[%s1439 + $0xc] sm:$0xf]
                  %1448 = vst [vmem:[%s1440 + $0xc] sm:$0xf] %v1447
                  %v1449 = vld [vmem:[%s1439 + $0x10] sm:$0xf]
                  %1450 = vst [vmem:[%s1440 + $0x10] sm:$0xf] %v1449
                  %v1451 = vld [vmem:[%s1439 + $0x14] sm:$0xf]
                  %1452 = vst [vmem:[%s1440 + $0x14] sm:$0xf] %v1451
                  %v1453 = vld [vmem:[%s1439 + $0x18] sm:$0xf]
                  %1454 = vst [vmem:[%s1440 + $0x18] sm:$0xf] %v1453
                  %v1455 = vld [vmem:[%s1439 + $0x1c] sm:$0xf]
                  %1456 = vst [vmem:[%s1440 + $0x1c] sm:$0xf] %v1455
                  %v1457 = vld [vmem:[%s1439 + $0x20] sm:$0xf]
                  %1458 = vst [vmem:[%s1440 + $0x20] sm:$0xf] %v1457
                  %v1459 = vld [vmem:[%s1439 + $0x24] sm:$0xf]
                  %1460 = vst [vmem:[%s1440 + $0x24] sm:$0xf] %v1459
                  %v1461 = vld [vmem:[%s1439 + $0x28] sm:$0xf]
                  %1462 = vst [vmem:[%s1440 + $0x28] sm:$0xf] %v1461
                  %v1463 = vld [vmem:[%s1439 + $0x2c] sm:$0xf]
                  %1464 = vst [vmem:[%s1440 + $0x2c] sm:$0xf] %v1463
                  %v1465 = vld [vmem:[%s1439 + $0x30] sm:$0xf]
                  %1466 = vst [vmem:[%s1440 + $0x30] sm:$0xf] %v1465
                  %v1467 = vld [vmem:[%s1439 + $0x34] sm:$0xf]
                  %1468 = vst [vmem:[%s1440 + $0x34] sm:$0xf] %v1467
                  %v1469 = vld [vmem:[%s1439 + $0x38] sm:$0xf]
                  %1470 = vst [vmem:[%s1440 + $0x38] sm:$0xf] %v1469
                  %v1471 = vld [vmem:[%s1439 + $0x3c] sm:$0xf]
                  %1472 = vst [vmem:[%s1440 + $0x3c] sm:$0xf] %v1471
                  %v1473 = vld [vmem:[%s1439 + $0x40] sm:$0xf]
                  %1474 = vst [vmem:[%s1440 + $0x40] sm:$0xf] %v1473
                  %v1475 = vld [vmem:[%s1439 + $0x44] sm:$0xf]
                  %1476 = vst [vmem:[%s1440 + $0x44] sm:$0xf] %v1475
                  %v1477 = vld [vmem:[%s1439 + $0x48] sm:$0xf]
                  %1478 = vst [vmem:[%s1440 + $0x48] sm:$0xf] %v1477
                  %v1479 = vld [vmem:[%s1439 + $0x4c] sm:$0xf]
                  %1480 = vst [vmem:[%s1440 + $0x4c] sm:$0xf] %v1479
                  %v1481 = vld [vmem:[%s1439 + $0x50] sm:$0xf]
                  %1482 = vst [vmem:[%s1440 + $0x50] sm:$0xf] %v1481
                  %v1483 = vld [vmem:[%s1439 + $0x54] sm:$0xf]
                  %1484 = vst [vmem:[%s1440 + $0x54] sm:$0xf] %v1483
                  %v1485 = vld [vmem:[%s1439 + $0x58] sm:$0xf]
                  %1486 = vst [vmem:[%s1440 + $0x58] sm:$0xf] %v1485
                  %v1487 = vld [vmem:[%s1439 + $0x5c] sm:$0xf]
                  %1488 = vst [vmem:[%s1440 + $0x5c] sm:$0xf] %v1487
                  %v1489 = vld [vmem:[%s1439 + $0x60] sm:$0xf]
                  %1490 = vst [vmem:[%s1440 + $0x60] sm:$0xf] %v1489
                  %v1491 = vld [vmem:[%s1439 + $0x64] sm:$0xf]
                  %1492 = vst [vmem:[%s1440 + $0x64] sm:$0xf] %v1491
                  %v1493 = vld [vmem:[%s1439 + $0x68] sm:$0xf]
                  %1494 = vst [vmem:[%s1440 + $0x68] sm:$0xf] %v1493
                  %v1495 = vld [vmem:[%s1439 + $0x6c] sm:$0xf]
                  %1496 = vst [vmem:[%s1440 + $0x6c] sm:$0xf] %v1495
                  %v1497 = vld [vmem:[%s1439 + $0x70] sm:$0xf]
                  %1498 = vst [vmem:[%s1440 + $0x70] sm:$0xf] %v1497
                  %v1499 = vld [vmem:[%s1439 + $0x74] sm:$0xf]
                  %1500 = vst [vmem:[%s1440 + $0x74] sm:$0xf] %v1499
                  %v1501 = vld [vmem:[%s1439 + $0x78] sm:$0xf]
                  %1502 = vst [vmem:[%s1440 + $0x78] sm:$0xf] %v1501
                  %v1503 = vld [vmem:[%s1439 + $0x7c] sm:$0xf]
                  %1504 = vst [vmem:[%s1440 + $0x7c] sm:$0xf] %v1503
                  %v1505 = vld [vmem:[%s1439 + $0x80] sm:$0xf]
                  %1506 = vst [vmem:[%s1440 + $0x80] sm:$0xf] %v1505
                  %v1507 = vld [vmem:[%s1439 + $0x84] sm:$0xf]
                  %1508 = vst [vmem:[%s1440 + $0x84] sm:$0xf] %v1507
                  %v1509 = vld [vmem:[%s1439 + $0x88] sm:$0xf]
                  %1510 = vst [vmem:[%s1440 + $0x88] sm:$0xf] %v1509
                  %v1511 = vld [vmem:[%s1439 + $0x8c] sm:$0xf]
                  %1512 = vst [vmem:[%s1440 + $0x8c] sm:$0xf] %v1511
                  %v1513 = vld [vmem:[%s1439 + $0x90] sm:$0xf]
                  %1514 = vst [vmem:[%s1440 + $0x90] sm:$0xf] %v1513
                  %v1515 = vld [vmem:[%s1439 + $0x94] sm:$0xf]
                  %1516 = vst [vmem:[%s1440 + $0x94] sm:$0xf] %v1515
                  %v1517 = vld [vmem:[%s1439 + $0x98] sm:$0xf]
                  %1518 = vst [vmem:[%s1440 + $0x98] sm:$0xf] %v1517
                  %v1519 = vld [vmem:[%s1439 + $0x9c] sm:$0xf]
                  %1520 = vst [vmem:[%s1440 + $0x9c] sm:$0xf] %v1519
                  %v1521 = vld [vmem:[%s1439 + $0xa0] sm:$0xf]
                  %1522 = vst [vmem:[%s1440 + $0xa0] sm:$0xf] %v1521
                  %v1523 = vld [vmem:[%s1439 + $0xa4] sm:$0xf]
                  %1524 = vst [vmem:[%s1440 + $0xa4] sm:$0xf] %v1523
                  %v1525 = vld [vmem:[%s1439 + $0xa8] sm:$0xf]
                  %1526 = vst [vmem:[%s1440 + $0xa8] sm:$0xf] %v1525
                  %v1527 = vld [vmem:[%s1439 + $0xac] sm:$0xf]
                  %1528 = vst [vmem:[%s1440 + $0xac] sm:$0xf] %v1527
                  %v1529 = vld [vmem:[%s1439 + $0xb0] sm:$0xf]
                  %1530 = vst [vmem:[%s1440 + $0xb0] sm:$0xf] %v1529
                  %v1531 = vld [vmem:[%s1439 + $0xb4] sm:$0xf]
                  %1532 = vst [vmem:[%s1440 + $0xb4] sm:$0xf] %v1531
                  %v1533 = vld [vmem:[%s1439 + $0xb8] sm:$0xf]
                  %1534 = vst [vmem:[%s1440 + $0xb8] sm:$0xf] %v1533
                  %v1535 = vld [vmem:[%s1439 + $0xbc] sm:$0xf]
                  %1536 = vst [vmem:[%s1440 + $0xbc] sm:$0xf] %v1535
                  %v1537 = vld [vmem:[%s1439 + $0xc0] sm:$0xf]
                  %1538 = vst [vmem:[%s1440 + $0xc0] sm:$0xf] %v1537
                  %v1539 = vld [vmem:[%s1439 + $0xc4] sm:$0xf]
                  %1540 = vst [vmem:[%s1440 + $0xc4] sm:$0xf] %v1539
                  %v1541 = vld [vmem:[%s1439 + $0xc8] sm:$0xf]
                  %1542 = vst [vmem:[%s1440 + $0xc8] sm:$0xf] %v1541
                  %v1543 = vld [vmem:[%s1439 + $0xcc] sm:$0xf]
                  %1544 = vst [vmem:[%s1440 + $0xcc] sm:$0xf] %v1543
                  %v1545 = vld [vmem:[%s1439 + $0xd0] sm:$0xf]
                  %1546 = vst [vmem:[%s1440 + $0xd0] sm:$0xf] %v1545
                  %v1547 = vld [vmem:[%s1439 + $0xd4] sm:$0xf]
                  %1548 = vst [vmem:[%s1440 + $0xd4] sm:$0xf] %v1547
                  %v1549 = vld [vmem:[%s1439 + $0xd8] sm:$0xf]
                  %1550 = vst [vmem:[%s1440 + $0xd8] sm:$0xf] %v1549
                  %v1551 = vld [vmem:[%s1439 + $0xdc] sm:$0xf]
                  %1552 = vst [vmem:[%s1440 + $0xdc] sm:$0xf] %v1551
                  %v1553 = vld [vmem:[%s1439 + $0xe0] sm:$0xf]
                  %1554 = vst [vmem:[%s1440 + $0xe0] sm:$0xf] %v1553
                  %v1555 = vld [vmem:[%s1439 + $0xe4] sm:$0xf]
                  %1556 = vst [vmem:[%s1440 + $0xe4] sm:$0xf] %v1555
                  %v1557 = vld [vmem:[%s1439 + $0xe8] sm:$0xf]
                  %1558 = vst [vmem:[%s1440 + $0xe8] sm:$0xf] %v1557
                  %v1559 = vld [vmem:[%s1439 + $0xec] sm:$0xf]
                  %1560 = vst [vmem:[%s1440 + $0xec] sm:$0xf] %v1559
                  %v1561 = vld [vmem:[%s1439 + $0xf0] sm:$0xf]
                  %1562 = vst [vmem:[%s1440 + $0xf0] sm:$0xf] %v1561
                  %v1563 = vld [vmem:[%s1439 + $0xf4] sm:$0xf]
                  %1564 = vst [vmem:[%s1440 + $0xf4] sm:$0xf] %v1563
                  %v1565 = vld [vmem:[%s1439 + $0xf8] sm:$0xf]
                  %1566 = vst [vmem:[%s1440 + $0xf8] sm:$0xf] %v1565
                  %v1567 = vld [vmem:[%s1439 + $0xfc] sm:$0xf]
                  %1568 = vst [vmem:[%s1440 + $0xfc] sm:$0xf] %v1567
                  %s1569 = sadd.s32 1, %s1438
                  %p1570 = scmp.ge.s32.totalorder %s1569, %s1431
                  %s1571 = scalar_select %p1570, 0, %s1569
                  %s1572 = smul.u32 %s1571, 256
                  %s1573 = smul.u32 %s1571, 256
                  %s1574 = scalar_lea.vmem %s1238, %s1572 [#allocation2]
                  %s1575 = scalar_lea.vmem %s1249, %s1573
                $region71: #{net_forward.6} parent=65 // loop_footer
                  %s1435 = sadd.s32 %s1433, 1
                $region72: #{net_forward.6} parent=65 // loop_footer_branch
                  %1432 = sbr.rel target = $region68
                $region73: #{net_forward.6} parent=65 // loop_exit
                  _
                %s1576 = sshrl.u32 %s1245, 6
                %s1577 = sand.u32 %s1245, 63
                %s1578 = smul.u32 %s1576, 64
                %s1579 = smul.u32 4, %s1578
                %s1580 = scalar_lea.vmem %s1238, %s1579 [#allocation2]
                %s1581 = smul.u32 4, %s1578
                %s1582 = scalar_lea.vmem %s1249, %s1581
                // While loop
                $region74: #{net_forward.6} parent=65 // loop_pre_header
                  _
                $region75: #{net_forward.6} parent=65 // loop_header
                  %s1584 = sphi 0, %s1586
                  %p1585 = scmp.ge.s32.totalorder %s1584, %s1577
                  %s1589 = sphi 0, %s1596
                  %s1590 = sphi %s1580, %s1599
                  %s1591 = sphi %s1582, %s1600
                $region76: #{net_forward.6} parent=65 // loop_header_branch
                  %1588 = sbr.rel (%p1585) target = $region80
                $region77: #{net_forward.6} parent=65 // loop_body
                  %v1592 = vld [vmem:[%s1590] sm:$0xf]
                  %1593 = vst [vmem:[%s1591] sm:$0xf] %v1592
                  %s1594 = sadd.s32 1, %s1589
                  %p1595 = scmp.ge.s32.totalorder %s1594, %s1577
                  %s1596 = scalar_select %p1595, 0, %s1594
                  %s1597 = smul.u32 %s1596, 4
                  %s1598 = smul.u32 %s1596, 4
                  %s1599 = scalar_lea.vmem %s1580, %s1597 [#allocation2]
                  %s1600 = scalar_lea.vmem %s1582, %s1598
                $region78: #{net_forward.6} parent=65 // loop_footer
                  %s1586 = sadd.s32 %s1584, 1
                $region79: #{net_forward.6} parent=65 // loop_footer_branch
                  %1583 = sbr.rel target = $region75
                $region80: #{net_forward.6} parent=65 // loop_exit
                  _
              $region66: #{net_forward.6} parent=43 // pred_fallthru
                _
            $region44: #{net_forward.6} parent=39 // pred_fallthru
              _
            // Predicated region
            $region45: #{net_forward.6} parent=39 // pred_check
              _
            $region46: #{net_forward.6} parent=39 // pred_check_branch
              %1256 = sbr.rel (0) target = $region48
            $region47: #{net_forward.6} parent=39 // pred_region
              %s1258 = sshrl.u32 %s1245, 6
              // While loop
              $region49: #{net_forward.6} parent=47 // loop_pre_header
                _
              $region50: #{net_forward.6} parent=47 // loop_header
                %s1260 = sphi 0, %s1262
                %p1261 = scmp.ge.s32.totalorder %s1260, %s1258
                %s1265 = sphi 0, %s1398
                %s1266 = sphi %s1238, %s1401
                %s1267 = sphi %s1249, %s1402
              $region51: #{net_forward.6} parent=47 // loop_header_branch
                %1264 = sbr.rel (%p1261) target = $region55
              $region52: #{net_forward.6} parent=47 // loop_body
                %v1268 = vld [vmem:[%s1266] sm:$0xf]
                %1269 = vst [vmem:[%s1267] sm:$0xf] %v1268
                %v1270 = vld [vmem:[%s1266 + $0x4] sm:$0xf]
                %1271 = vst [vmem:[%s1267 + $0x4] sm:$0xf] %v1270
                %v1272 = vld [vmem:[%s1266 + $0x8] sm:$0xf]
                %1273 = vst [vmem:[%s1267 + $0x8] sm:$0xf] %v1272
                %v1274 = vld [vmem:[%s1266 + $0xc] sm:$0xf]
                %1275 = vst [vmem:[%s1267 + $0xc] sm:$0xf] %v1274
                %v1276 = vld [vmem:[%s1266 + $0x10] sm:$0xf]
                %1277 = vst [vmem:[%s1267 + $0x10] sm:$0xf] %v1276
                %v1278 = vld [vmem:[%s1266 + $0x14] sm:$0xf]
                %1279 = vst [vmem:[%s1267 + $0x14] sm:$0xf] %v1278
                %v1280 = vld [vmem:[%s1266 + $0x18] sm:$0xf]
                %1281 = vst [vmem:[%s1267 + $0x18] sm:$0xf] %v1280
                %v1282 = vld [vmem:[%s1266 + $0x1c] sm:$0xf]
                %1283 = vst [vmem:[%s1267 + $0x1c] sm:$0xf] %v1282
                %v1284 = vld [vmem:[%s1266 + $0x20] sm:$0xf]
                %1285 = vst [vmem:[%s1267 + $0x20] sm:$0xf] %v1284
                %v1286 = vld [vmem:[%s1266 + $0x24] sm:$0xf]
                %1287 = vst [vmem:[%s1267 + $0x24] sm:$0xf] %v1286
                %v1288 = vld [vmem:[%s1266 + $0x28] sm:$0xf]
                %1289 = vst [vmem:[%s1267 + $0x28] sm:$0xf] %v1288
                %v1290 = vld [vmem:[%s1266 + $0x2c] sm:$0xf]
                %1291 = vst [vmem:[%s1267 + $0x2c] sm:$0xf] %v1290
                %v1292 = vld [vmem:[%s1266 + $0x30] sm:$0xf]
                %1293 = vst [vmem:[%s1267 + $0x30] sm:$0xf] %v1292
                %v1294 = vld [vmem:[%s1266 + $0x34] sm:$0xf]
                %1295 = vst [vmem:[%s1267 + $0x34] sm:$0xf] %v1294
                %v1296 = vld [vmem:[%s1266 + $0x38] sm:$0xf]
                %1297 = vst [vmem:[%s1267 + $0x38] sm:$0xf] %v1296
                %v1298 = vld [vmem:[%s1266 + $0x3c] sm:$0xf]
                %1299 = vst [vmem:[%s1267 + $0x3c] sm:$0xf] %v1298
                %v1300 = vld [vmem:[%s1266 + $0x40] sm:$0xf]
                %1301 = vst [vmem:[%s1267 + $0x40] sm:$0xf] %v1300
                %v1302 = vld [vmem:[%s1266 + $0x44] sm:$0xf]
                %1303 = vst [vmem:[%s1267 + $0x44] sm:$0xf] %v1302
                %v1304 = vld [vmem:[%s1266 + $0x48] sm:$0xf]
                %1305 = vst [vmem:[%s1267 + $0x48] sm:$0xf] %v1304
                %v1306 = vld [vmem:[%s1266 + $0x4c] sm:$0xf]
                %1307 = vst [vmem:[%s1267 + $0x4c] sm:$0xf] %v1306
                %v1308 = vld [vmem:[%s1266 + $0x50] sm:$0xf]
                %1309 = vst [vmem:[%s1267 + $0x50] sm:$0xf] %v1308
                %v1310 = vld [vmem:[%s1266 + $0x54] sm:$0xf]
                %1311 = vst [vmem:[%s1267 + $0x54] sm:$0xf] %v1310
                %v1312 = vld [vmem:[%s1266 + $0x58] sm:$0xf]
                %1313 = vst [vmem:[%s1267 + $0x58] sm:$0xf] %v1312
                %v1314 = vld [vmem:[%s1266 + $0x5c] sm:$0xf]
                %1315 = vst [vmem:[%s1267 + $0x5c] sm:$0xf] %v1314
                %v1316 = vld [vmem:[%s1266 + $0x60] sm:$0xf]
                %1317 = vst [vmem:[%s1267 + $0x60] sm:$0xf] %v1316
                %v1318 = vld [vmem:[%s1266 + $0x64] sm:$0xf]
                %1319 = vst [vmem:[%s1267 + $0x64] sm:$0xf] %v1318
                %v1320 = vld [vmem:[%s1266 + $0x68] sm:$0xf]
                %1321 = vst [vmem:[%s1267 + $0x68] sm:$0xf] %v1320
                %v1322 = vld [vmem:[%s1266 + $0x6c] sm:$0xf]
                %1323 = vst [vmem:[%s1267 + $0x6c] sm:$0xf] %v1322
                %v1324 = vld [vmem:[%s1266 + $0x70] sm:$0xf]
                %1325 = vst [vmem:[%s1267 + $0x70] sm:$0xf] %v1324
                %v1326 = vld [vmem:[%s1266 + $0x74] sm:$0xf]
                %1327 = vst [vmem:[%s1267 + $0x74] sm:$0xf] %v1326
                %v1328 = vld [vmem:[%s1266 + $0x78] sm:$0xf]
                %1329 = vst [vmem:[%s1267 + $0x78] sm:$0xf] %v1328
                %v1330 = vld [vmem:[%s1266 + $0x7c] sm:$0xf]
                %1331 = vst [vmem:[%s1267 + $0x7c] sm:$0xf] %v1330
                %v1332 = vld [vmem:[%s1266 + $0x80] sm:$0xf]
                %1333 = vst [vmem:[%s1267 + $0x80] sm:$0xf] %v1332
                %v1334 = vld [vmem:[%s1266 + $0x84] sm:$0xf]
                %1335 = vst [vmem:[%s1267 + $0x84] sm:$0xf] %v1334
                %v1336 = vld [vmem:[%s1266 + $0x88] sm:$0xf]
                %1337 = vst [vmem:[%s1267 + $0x88] sm:$0xf] %v1336
                %v1338 = vld [vmem:[%s1266 + $0x8c] sm:$0xf]
                %1339 = vst [vmem:[%s1267 + $0x8c] sm:$0xf] %v1338
                %v1340 = vld [vmem:[%s1266 + $0x90] sm:$0xf]
                %1341 = vst [vmem:[%s1267 + $0x90] sm:$0xf] %v1340
                %v1342 = vld [vmem:[%s1266 + $0x94] sm:$0xf]
                %1343 = vst [vmem:[%s1267 + $0x94] sm:$0xf] %v1342
                %v1344 = vld [vmem:[%s1266 + $0x98] sm:$0xf]
                %1345 = vst [vmem:[%s1267 + $0x98] sm:$0xf] %v1344
                %v1346 = vld [vmem:[%s1266 + $0x9c] sm:$0xf]
                %1347 = vst [vmem:[%s1267 + $0x9c] sm:$0xf] %v1346
                %v1348 = vld [vmem:[%s1266 + $0xa0] sm:$0xf]
                %1349 = vst [vmem:[%s1267 + $0xa0] sm:$0xf] %v1348
                %v1350 = vld [vmem:[%s1266 + $0xa4] sm:$0xf]
                %1351 = vst [vmem:[%s1267 + $0xa4] sm:$0xf] %v1350
                %v1352 = vld [vmem:[%s1266 + $0xa8] sm:$0xf]
                %1353 = vst [vmem:[%s1267 + $0xa8] sm:$0xf] %v1352
                %v1354 = vld [vmem:[%s1266 + $0xac] sm:$0xf]
                %1355 = vst [vmem:[%s1267 + $0xac] sm:$0xf] %v1354
                %v1356 = vld [vmem:[%s1266 + $0xb0] sm:$0xf]
                %1357 = vst [vmem:[%s1267 + $0xb0] sm:$0xf] %v1356
                %v1358 = vld [vmem:[%s1266 + $0xb4] sm:$0xf]
                %1359 = vst [vmem:[%s1267 + $0xb4] sm:$0xf] %v1358
                %v1360 = vld [vmem:[%s1266 + $0xb8] sm:$0xf]
                %1361 = vst [vmem:[%s1267 + $0xb8] sm:$0xf] %v1360
                %v1362 = vld [vmem:[%s1266 + $0xbc] sm:$0xf]
                %1363 = vst [vmem:[%s1267 + $0xbc] sm:$0xf] %v1362
                %v1364 = vld [vmem:[%s1266 + $0xc0] sm:$0xf]
                %1365 = vst [vmem:[%s1267 + $0xc0] sm:$0xf] %v1364
                %v1366 = vld [vmem:[%s1266 + $0xc4] sm:$0xf]
                %1367 = vst [vmem:[%s1267 + $0xc4] sm:$0xf] %v1366
                %v1368 = vld [vmem:[%s1266 + $0xc8] sm:$0xf]
                %1369 = vst [vmem:[%s1267 + $0xc8] sm:$0xf] %v1368
                %v1370 = vld [vmem:[%s1266 + $0xcc] sm:$0xf]
                %1371 = vst [vmem:[%s1267 + $0xcc] sm:$0xf] %v1370
                %v1372 = vld [vmem:[%s1266 + $0xd0] sm:$0xf]
                %1373 = vst [vmem:[%s1267 + $0xd0] sm:$0xf] %v1372
                %v1374 = vld [vmem:[%s1266 + $0xd4] sm:$0xf]
                %1375 = vst [vmem:[%s1267 + $0xd4] sm:$0xf] %v1374
                %v1376 = vld [vmem:[%s1266 + $0xd8] sm:$0xf]
                %1377 = vst [vmem:[%s1267 + $0xd8] sm:$0xf] %v1376
                %v1378 = vld [vmem:[%s1266 + $0xdc] sm:$0xf]
                %1379 = vst [vmem:[%s1267 + $0xdc] sm:$0xf] %v1378
                %v1380 = vld [vmem:[%s1266 + $0xe0] sm:$0xf]
                %1381 = vst [vmem:[%s1267 + $0xe0] sm:$0xf] %v1380
                %v1382 = vld [vmem:[%s1266 + $0xe4] sm:$0xf]
                %1383 = vst [vmem:[%s1267 + $0xe4] sm:$0xf] %v1382
                %v1384 = vld [vmem:[%s1266 + $0xe8] sm:$0xf]
                %1385 = vst [vmem:[%s1267 + $0xe8] sm:$0xf] %v1384
                %v1386 = vld [vmem:[%s1266 + $0xec] sm:$0xf]
                %1387 = vst [vmem:[%s1267 + $0xec] sm:$0xf] %v1386
                %v1388 = vld [vmem:[%s1266 + $0xf0] sm:$0xf]
                %1389 = vst [vmem:[%s1267 + $0xf0] sm:$0xf] %v1388
                %v1390 = vld [vmem:[%s1266 + $0xf4] sm:$0xf]
                %1391 = vst [vmem:[%s1267 + $0xf4] sm:$0xf] %v1390
                %v1392 = vld [vmem:[%s1266 + $0xf8] sm:$0xf]
                %1393 = vst [vmem:[%s1267 + $0xf8] sm:$0xf] %v1392
                %v1394 = vld [vmem:[%s1266 + $0xfc] sm:$0xf]
                %1395 = vst [vmem:[%s1267 + $0xfc] sm:$0xf] %v1394
                %s1396 = sadd.s32 1, %s1265
                %p1397 = scmp.ge.s32.totalorder %s1396, %s1258
                %s1398 = scalar_select %p1397, 0, %s1396
                %s1399 = smul.u32 %s1398, 256
                %s1400 = smul.u32 %s1398, 256
                %s1401 = scalar_lea.vmem %s1238, %s1399 [#allocation2]
                %s1402 = scalar_lea.vmem %s1249, %s1400
              $region53: #{net_forward.6} parent=47 // loop_footer
                %s1262 = sadd.s32 %s1260, 1
              $region54: #{net_forward.6} parent=47 // loop_footer_branch
                %1259 = sbr.rel target = $region50
              $region55: #{net_forward.6} parent=47 // loop_exit
                _
              %s1403 = sshrl.u32 %s1245, 6
              %s1404 = sand.u32 %s1245, 63
              %s1405 = smul.u32 %s1403, 64
              %s1406 = smul.u32 4, %s1405
              %s1407 = scalar_lea.vmem %s1238, %s1406 [#allocation2]
              %s1408 = smul.u32 4, %s1405
              %s1409 = scalar_lea.vmem %s1249, %s1408
              // While loop
              $region56: #{net_forward.6} parent=47 // loop_pre_header
                _
              $region57: #{net_forward.6} parent=47 // loop_header
                %s1411 = sphi 0, %s1413
                %p1412 = scmp.ge.s32.totalorder %s1411, %s1404
                %s1416 = sphi 0, %s1423
                %s1417 = sphi %s1407, %s1426
                %s1418 = sphi %s1409, %s1427
              $region58: #{net_forward.6} parent=47 // loop_header_branch
                %1415 = sbr.rel (%p1412) target = $region62
              $region59: #{net_forward.6} parent=47 // loop_body
                %v1419 = vld [vmem:[%s1417] sm:$0xf]
                %1420 = vst [vmem:[%s1418] sm:$0xf] %v1419
                %s1421 = sadd.s32 1, %s1416
                %p1422 = scmp.ge.s32.totalorder %s1421, %s1404
                %s1423 = scalar_select %p1422, 0, %s1421
                %s1424 = smul.u32 %s1423, 4
                %s1425 = smul.u32 %s1423, 4
                %s1426 = scalar_lea.vmem %s1407, %s1424 [#allocation2]
                %s1427 = scalar_lea.vmem %s1409, %s1425
              $region60: #{net_forward.6} parent=47 // loop_footer
                %s1413 = sadd.s32 %s1411, 1
              $region61: #{net_forward.6} parent=47 // loop_footer_branch
                %1410 = sbr.rel target = $region57
              $region62: #{net_forward.6} parent=47 // loop_exit
                _
            $region48: #{net_forward.6} parent=39 // pred_fallthru
              _
          $region40: #{net_forward.6} parent=35 // pred_fallthru
            _
          %1601 = vnop
        $region36: #{net_forward.6} parent=31 // pred_fallthru
          _
      $region32: #{net_forward.6} parent=5 // pred_fallthru
        _
      %p1602 = scmp.le.s32.totalorder 2, %s9
      // Predicated region
      $region81: #{net_forward.6} parent=5 // pred_check
        %p1603 = pneg %p1602
      $region82: #{net_forward.6} parent=5 // pred_check_branch
        %1605 = sbr.rel (%p1603) target = $region84
      $region83: #{net_forward.6} parent=5 // pred_region
        %s1606 = ssub.s32 %s9, 2
        // Predicated region
        $region85: #{net_forward.6} parent=83 // pred_check
          %p1607 = pneg %p106
        $region86: #{net_forward.6} parent=83 // pred_check_branch
          %1609 = sbr.rel (%p1607) target = $region88
        $region87: #{net_forward.6} parent=83 // pred_region
          %s1610 = sand.u32 %s91, 1
          %s1611 = sand.u32 %s91, 1
          %s1612 = smul.addr %s1611, 256
          %s1613 = scalar_lea.vmem [#allocation2], %s1612
        $region88: #{net_forward.6} parent=83 // pred_fallthru
          _
      $region84: #{net_forward.6} parent=5 // pred_fallthru
        _
    $region6: #{net_forward.6} parent=1 // loop_footer
      %s13 = sadd.s32 1, %s9
    $region7: #{net_forward.6} parent=1 // loop_footer_branch
      %8 = sbr.rel target = $region3
    $region8: #{net_forward.6} parent=1 // loop_exit
      _

// kernel: net_forward.7
$region0: #{net_forward.7}
  #allocation0 [shape = 'u32[]', space=smem, size = 0x4, offset = 0x4, fixed_abs, tag = 'smem constant byte address 0x4 - core index']
  #allocation1 [shape = 'u32[144,128]{1,0:T(1,128)}', space=vmem, size = 0x12000, scoped, tag = 'internal scratch']
  %s0 = inlined_call_operand.vmem [shape: bf16[242,144], index: 0, kind: input, shape index: {}]
  %s1 = inlined_call_operand.vmem [shape: bf16[144,32], index: 1, kind: input, shape index: {}]
  %s2 = inlined_call_operand.vmem [shape: f32[1,32], index: 2, kind: input, shape index: {}]
  %s3 = inlined_call_operand.vmem [shape: bf16[242,32], index: 3, kind: output, shape index: {}]
  %s4 = sld [smem:[#allocation0]]
  $region22: #{net_forward.7} parent=0
    _
  %s6 = ssub.s32 1, %s4
  %s7 = scalar_select 0, %s6, %s4
  // Predicated region
  $region2: #{net_forward.7} parent=0 // pred_check
    _
  $region3: #{net_forward.7} parent=0 // pred_check_branch
    %9 = sbr.rel (0) target = $region5
  $region4: #{net_forward.7} parent=0 // pred_region
    _
  $region5: #{net_forward.7} parent=0 // pred_fallthru
    _
  // Predicated region
  $region6: #{net_forward.7} parent=0 // pred_check
    _
  $region7: #{net_forward.7} parent=0 // pred_check_branch
    %11 = sbr.rel (0) target = $region9
  $region8: #{net_forward.7} parent=0 // pred_region
    _
  $region9: #{net_forward.7} parent=0 // pred_fallthru
    _
  // Predicated region
  $region10: #{net_forward.7} parent=0 // pred_check
    _
  $region11: #{net_forward.7} parent=0 // pred_check_branch
    %13 = sbr.rel (0) target = $region13
  $region12: #{net_forward.7} parent=0 // pred_region
    _
  $region13: #{net_forward.7} parent=0 // pred_fallthru
    _
  %v15 = vld [vmem:[%s0] sm:$0xff]
  %v16 = vld [vmem:[%s0 + $0x8] sm:$0xff]
  %v17 = vld [vmem:[%s0 + $0x10] sm:$0xff]
  %v18 = vld [vmem:[%s0 + $0x18] sm:$0xff]
  %v19 = vld [vmem:[%s0 + $0x20] sm:$0xff]
  %v20 = vld [vmem:[%s0 + $0x28] sm:$0xff]
  %v21 = vld [vmem:[%s0 + $0x30] sm:$0xff]
  %v22 = vld [vmem:[%s0 + $0x38] sm:$0xff]
  %v23 = vld [vmem:[%s0 + $0x40] sm:$0xff]
  %v24 = vld [vmem:[%s0 + $0x48] sm:$0xff]
  %v25 = vld [vmem:[%s0 + $0x50] sm:$0xff]
  %v26 = vld [vmem:[%s0 + $0x58] sm:$0xff]
  %v27 = vld [vmem:[%s0 + $0x60] sm:$0xff]
  %v28 = vld [vmem:[%s0 + $0x68] sm:$0xff]
  %v29 = vld [vmem:[%s0 + $0x70] sm:$0xff]
  %v30 = vld [vmem:[%s0 + $0x78] sm:$0xff]
  %v31 = vld [vmem:[%s0 + $0x80] sm:$0xff]
  %v32 = vld [vmem:[%s0 + $0x88] sm:$0xff]
  %v33 = vld [vmem:[%s0 + $0x90] sm:$0xff]
  %v34 = vld [vmem:[%s0 + $0x98] sm:$0xff]
  %v35 = vld [vmem:[%s0 + $0xa0] sm:$0xff]
  %v36 = vld [vmem:[%s0 + $0xa8] sm:$0xff]
  %v37 = vld [vmem:[%s0 + $0xb0] sm:$0xff]
  %v38 = vld [vmem:[%s0 + $0xb8] sm:$0xff]
  %v39 = vld [vmem:[%s0 + $0xc0] sm:$0xff]
  %v40 = vld [vmem:[%s0 + $0xc8] sm:$0xff]
  %v41 = vld [vmem:[%s0 + $0xd0] sm:$0xff]
  %v42 = vld [vmem:[%s0 + $0xd8] sm:$0xff]
  %v43 = vld [vmem:[%s0 + $0xe0] sm:$0xff]
  %v44 = vld [vmem:[%s0 + $0xe8] sm:$0xff]
  %v45 = vld [vmem:[%s0 + $0xf0] sm:$0xff]
  %v46 = vld [vmem:[%s1] sm:$0xf]
  %v47 = vld [vmem:[%s1 + $0x4] sm:$0xf]
  %v48 = vld [vmem:[%s1 + $0x8] sm:$0xf]
  %v49 = vld [vmem:[%s1 + $0xc] sm:$0xf]
  %v50 = vld [vmem:[%s1 + $0x10] sm:$0xf]
  %v51 = vld [vmem:[%s1 + $0x14] sm:$0xf]
  %v52 = vld [vmem:[%s1 + $0x18] sm:$0xf]
  %v53 = vld [vmem:[%s1 + $0x1c] sm:$0xf]
  %v54 = vld [vmem:[%s1 + $0x20] sm:$0xf]
  %v55 = vld [vmem:[%s1 + $0x24] sm:$0xf]
  %v56 = vld [vmem:[%s1 + $0x28] sm:$0xf]
  %v57 = vld [vmem:[%s1 + $0x2c] sm:$0xf]
  %v58 = vld [vmem:[%s1 + $0x30] sm:$0xf]
  %v59 = vld [vmem:[%s1 + $0x34] sm:$0xf]
  %v60 = vld [vmem:[%s1 + $0x38] sm:$0xf]
  %v61 = vld [vmem:[%s1 + $0x3c] sm:$0xf]
  %v62 = vld [vmem:[%s1 + $0x40] sm:$0xf]
  %v63 = vld [vmem:[%s1 + $0x44] sm:$0xf]
  %v64 = vld [vmem:[%s2] sm:$0x1]
  %v66 = vlaneseq
  %v67 = vshrl.u32 %v66, 7
  %v68 = vsub.s32 0, %v67
  %v69 = vrot.slane %v64, %v68
  %v102 = vunpack.c.l.b16 %v15
  %v103 = vunpack.c.h.b16 %v15
  %v104 = vunpack.c.l.b16 %v16
  %v105 = vunpack.c.h.b16 %v16
  %v106 = vunpack.c.l.b16 %v17
  %v107 = vunpack.c.h.b16 %v17
  %v108 = vunpack.c.l.b16 %v18
  %v109 = vunpack.c.h.b16 %v18
  %v110 = vunpack.c.l.b16 %v19
  %v111 = vunpack.c.h.b16 %v19
  %v112 = vunpack.c.l.b16 %v20
  %v113 = vunpack.c.h.b16 %v20
  %v114 = vunpack.c.l.b16 %v21
  %v115 = vunpack.c.h.b16 %v21
  %v116 = vunpack.c.l.b16 %v22
  %v117 = vunpack.c.h.b16 %v22
  %v118 = vunpack.c.l.b16 %v23
  %v119 = vunpack.c.h.b16 %v23
  %v120 = vunpack.c.l.b16 %v24
  %v121 = vunpack.c.h.b16 %v24
  %v122 = vunpack.c.l.b16 %v25
  %v123 = vunpack.c.h.b16 %v25
  %v124 = vunpack.c.l.b16 %v26
  %v125 = vunpack.c.h.b16 %v26
  %v126 = vunpack.c.l.b16 %v27
  %v127 = vunpack.c.h.b16 %v27
  %v128 = vunpack.c.l.b16 %v28
  %v129 = vunpack.c.h.b16 %v28
  %v130 = vunpack.c.l.b16 %v29
  %v131 = vunpack.c.h.b16 %v29
  %v132 = vunpack.c.l.b16 %v30
  %v133 = vunpack.c.h.b16 %v30
  %v134 = vunpack.c.l.b16 %v31
  %v135 = vunpack.c.h.b16 %v31
  %v136 = vunpack.c.l.b16 %v32
  %v137 = vunpack.c.h.b16 %v32
  %v138 = vunpack.c.l.b16 %v33
  %v139 = vunpack.c.h.b16 %v33
  %v140 = vunpack.c.l.b16 %v34
  %v141 = vunpack.c.h.b16 %v34
  %v142 = vunpack.c.l.b16 %v35
  %v143 = vunpack.c.h.b16 %v35
  %v144 = vunpack.c.l.b16 %v36
  %v145 = vunpack.c.h.b16 %v36
  %v146 = vunpack.c.l.b16 %v37
  %v147 = vunpack.c.h.b16 %v37
  %v148 = vunpack.c.l.b16 %v38
  %v149 = vunpack.c.h.b16 %v38
  %v150 = vunpack.c.l.b16 %v39
  %v151 = vunpack.c.h.b16 %v39
  %v152 = vunpack.c.l.b16 %v40
  %v153 = vunpack.c.h.b16 %v40
  %v154 = vunpack.c.l.b16 %v41
  %v155 = vunpack.c.h.b16 %v41
  %v156 = vunpack.c.l.b16 %v42
  %v157 = vunpack.c.h.b16 %v42
  %v158 = vunpack.c.l.b16 %v43
  %v159 = vunpack.c.h.b16 %v43
  %v160 = vunpack.c.l.b16 %v44
  %v161 = vunpack.c.h.b16 %v44
  %v162 = vunpack.c.l.b16 %v45
  %v163 = vunpack.c.h.b16 %v45
  %v164 = vpack.c.b16 %v104, %v102
  %v165 = vpack.c.b16 %v105, %v103
  %v166 = vpack.c.b16 %v108, %v106
  %v167 = vpack.c.b16 %v109, %v107
  %v168 = vpack.c.b16 %v112, %v110
  %v169 = vpack.c.b16 %v113, %v111
  %v170 = vpack.c.b16 %v116, %v114
  %v171 = vpack.c.b16 %v117, %v115
  %v172 = vpack.c.b16 %v120, %v118
  %v173 = vpack.c.b16 %v121, %v119
  %v174 = vpack.c.b16 %v124, %v122
  %v175 = vpack.c.b16 %v125, %v123
  %v176 = vpack.c.b16 %v128, %v126
  %v177 = vpack.c.b16 %v129, %v127
  %v178 = vpack.c.b16 %v132, %v130
  %v179 = vpack.c.b16 %v133, %v131
  %v180 = vpack.c.b16 %v136, %v134
  %v181 = vpack.c.b16 %v137, %v135
  %v182 = vpack.c.b16 %v140, %v138
  %v183 = vpack.c.b16 %v141, %v139
  %v184 = vpack.c.b16 %v144, %v142
  %v185 = vpack.c.b16 %v145, %v143
  %v186 = vpack.c.b16 %v148, %v146
  %v187 = vpack.c.b16 %v149, %v147
  %v188 = vpack.c.b16 %v152, %v150
  %v189 = vpack.c.b16 %v153, %v151
  %v190 = vpack.c.b16 %v156, %v154
  %v191 = vpack.c.b16 %v157, %v155
  %v192 = vpack.c.b16 %v160, %v158
  %v193 = vpack.c.b16 %v161, %v159
  %v194 = vpack.c.b16 %v162, %v162
  %v195 = vpack.c.b16 %v163, %v163
  %v230 = vunpack.c.l.b16 %v46
  %v231 = vunpack.c.l.b16 %v47
  %v232 = vunpack.c.l.b16 %v48
  %v233 = vunpack.c.l.b16 %v49
  %v234 = vunpack.c.l.b16 %v50
  %v235 = vunpack.c.l.b16 %v51
  %v236 = vunpack.c.l.b16 %v52
  %v237 = vunpack.c.l.b16 %v53
  %v238 = vunpack.c.l.b16 %v54
  %v239 = vunpack.c.l.b16 %v55
  %v240 = vunpack.c.l.b16 %v56
  %v241 = vunpack.c.l.b16 %v57
  %v242 = vunpack.c.l.b16 %v58
  %v243 = vunpack.c.l.b16 %v59
  %v244 = vunpack.c.l.b16 %v60
  %v245 = vunpack.c.l.b16 %v61
  %v246 = vunpack.c.l.b16 %v62
  %v247 = vunpack.c.l.b16 %v63
  %v248 = vpack.c.b16 %v231, %v230
  %v249 = vpack.c.b16 %v233, %v232
  %v250 = vpack.c.b16 %v235, %v234
  %v251 = vpack.c.b16 %v237, %v236
  %v252 = vpack.c.b16 %v239, %v238
  %v253 = vpack.c.b16 %v241, %v240
  %v254 = vpack.c.b16 %v243, %v242
  %v255 = vpack.c.b16 %v245, %v244
  %v256 = vpack.c.b16 %v247, %v246
  %vm266 = vcmask 130048
  %v268 = vsel %vm266, %v165, 0
  %v271 = vsel %vm266, %v167, 0
  %v274 = vsel %vm266, %v169, 0
  %v277 = vsel %vm266, %v171, 0
  %v280 = vsel %vm266, %v173, 0
  %v283 = vsel %vm266, %v175, 0
  %v286 = vsel %vm266, %v177, 0
  %v289 = vsel %vm266, %v179, 0
  %v292 = vsel %vm266, %v181, 0
  %v295 = vsel %vm266, %v183, 0
  %v298 = vsel %vm266, %v185, 0
  %v301 = vsel %vm266, %v187, 0
  %v304 = vsel %vm266, %v189, 0
  %v307 = vsel %vm266, %v191, 0
  %v310 = vsel %vm266, %v193, 0
  %v313 = vsel %vm266, %v195, 0
  %315 = vmatprep.subr.bf16.mxu0 0
  %316 = vmatpush1.bf16.msra.mxu0 %v248
  %317 = vmatprep.subr.bf16.mxu0 0
  %318 = vmatpush1.bf16.msra.mxu0 %v249
  %319 = vmatprep.subr.bf16.mxu0 0
  %320 = vmatpush1.bf16.msra.mxu0 %v250
  %321 = vmatprep.subr.bf16.mxu0 0
  %322 = vmatpush1.bf16.msra.mxu0 %v251
  %323 = vmatprep.subr.bf16.mxu0 0
  %324 = vmatpush1.bf16.msra.mxu0 %v252
  %325 = vmatprep.subr.bf16.mxu0 0
  %326 = vmatpush1.bf16.msra.mxu0 %v253
  %327 = vmatprep.subr.bf16.mxu0 0
  %328 = vmatpush1.bf16.msra.mxu0 %v254
  %329 = vmatprep.subr.bf16.mxu0 0
  %330 = vmatpush1.bf16.msra.mxu0 %v255
  %331 = vmatprep.subr.bf16.mxu0 0
  %332 = vmatpush1.bf16.msra.mxu0 %v256
  %333 = vmatprep.subr.bf16.mxu0 0
  %334 = vmatpush1.bf16.msra.mxu0 0
  %335 = vmatprep.subr.bf16.mxu0 0
  %336 = vmatpush1.bf16.msra.mxu0 0
  %337 = vmatprep.subr.bf16.mxu0 0
  %338 = vmatpush1.bf16.msra.mxu0 0
  %339 = vmatprep.subr.bf16.mxu0 0
  %340 = vmatpush1.bf16.msra.mxu0 0
  %341 = vmatprep.subr.bf16.mxu0 0
  %342 = vmatpush1.bf16.msra.mxu0 0
  %343 = vmatprep.subr.bf16.mxu0 0
  %344 = vmatpush1.bf16.msra.mxu0 0
  %345 = vmatprep.subr.bf16.mxu0 0
  %346 = vmatpush1.bf16.msra.mxu0 0
  %347 = vmatprep.mubr.bf16.mxu0 %v268
  %348 = vmatmul.mubr.bf16.gmra.mrb[0].mxu0 %v164
  %v349 = vpop.f32.mrb[0].mxu0
  %v350 = vadd.f32 %v69, %v349
  %v351 = vpop.f32.mrb[0].mxu0
  %v352 = vpop.f32.mrb[0].mxu0
  %v353 = vadd.f32 %v69, %v352
  %v354 = vpop.f32.mrb[0].mxu0
  %355 = vmatprep.mubr.bf16.mxu0 %v271
  %356 = vmatmul.mubr.bf16.gmra.mrb[0].mxu0 %v166
  %v357 = vpop.f32.mrb[0].mxu0
  %v358 = vadd.f32 %v69, %v357
  %v359 = vpop.f32.mrb[0].mxu0
  %v360 = vpop.f32.mrb[0].mxu0
  %v361 = vadd.f32 %v69, %v360
  %v362 = vpop.f32.mrb[0].mxu0
  %363 = vmatprep.mubr.bf16.mxu0 %v274
  %364 = vmatmul.mubr.bf16.gmra.mrb[0].mxu0 %v168
  %v365 = vpop.f32.mrb[0].mxu0
  %v366 = vadd.f32 %v69, %v365
  %v367 = vpop.f32.mrb[0].mxu0
  %v368 = vpop.f32.mrb[0].mxu0
  %v369 = vadd.f32 %v69, %v368
  %v370 = vpop.f32.mrb[0].mxu0
  %371 = vmatprep.mubr.bf16.mxu0 %v277
  %372 = vmatmul.mubr.bf16.gmra.mrb[0].mxu0 %v170
  %v373 = vpop.f32.mrb[0].mxu0
  %v374 = vadd.f32 %v69, %v373
  %v375 = vpop.f32.mrb[0].mxu0
  %v376 = vpop.f32.mrb[0].mxu0
  %v377 = vadd.f32 %v69, %v376
  %v378 = vpop.f32.mrb[0].mxu0
  %379 = vmatprep.mubr.bf16.mxu0 %v280
  %380 = vmatmul.mubr.bf16.gmra.mrb[0].mxu0 %v172
  %v381 = vpop.f32.mrb[0].mxu0
  %v382 = vadd.f32 %v69, %v381
  %v383 = vpop.f32.mrb[0].mxu0
  %v384 = vpop.f32.mrb[0].mxu0
  %v385 = vadd.f32 %v69, %v384
  %v386 = vpop.f32.mrb[0].mxu0
  %387 = vmatprep.mubr.bf16.mxu0 %v283
  %388 = vmatmul.mubr.bf16.gmra.mrb[0].mxu0 %v174
  %v389 = vpop.f32.mrb[0].mxu0
  %v390 = vadd.f32 %v69, %v389
  %v391 = vpop.f32.mrb[0].mxu0
  %v392 = vpop.f32.mrb[0].mxu0
  %v393 = vadd.f32 %v69, %v392
  %v394 = vpop.f32.mrb[0].mxu0
  %395 = vmatprep.mubr.bf16.mxu0 %v286
  %396 = vmatmul.mubr.bf16.gmra.mrb[0].mxu0 %v176
  %v397 = vpop.f32.mrb[0].mxu0
  %v398 = vadd.f32 %v69, %v397
  %v399 = vpop.f32.mrb[0].mxu0
  %v400 = vpop.f32.mrb[0].mxu0
  %v401 = vadd.f32 %v69, %v400
  %v402 = vpop.f32.mrb[0].mxu0
  %403 = vmatprep.mubr.bf16.mxu0 %v289
  %404 = vmatmul.mubr.bf16.gmra.mrb[0].mxu0 %v178
  %v405 = vpop.f32.mrb[0].mxu0
  %v406 = vadd.f32 %v69, %v405
  %v407 = vpop.f32.mrb[0].mxu0
  %v408 = vpop.f32.mrb[0].mxu0
  %v409 = vadd.f32 %v69, %v408
  %v410 = vpop.f32.mrb[0].mxu0
  %411 = vmatprep.mubr.bf16.mxu0 %v292
  %412 = vmatmul.mubr.bf16.gmra.mrb[0].mxu0 %v180
  %v413 = vpop.f32.mrb[0].mxu0
  %v414 = vadd.f32 %v69, %v413
  %v415 = vpop.f32.mrb[0].mxu0
  %v416 = vpop.f32.mrb[0].mxu0
  %v417 = vadd.f32 %v69, %v416
  %v418 = vpop.f32.mrb[0].mxu0
  %419 = vmatprep.mubr.bf16.mxu0 %v295
  %420 = vmatmul.mubr.bf16.gmra.mrb[0].mxu0 %v182
  %v421 = vpop.f32.mrb[0].mxu0
  %v422 = vadd.f32 %v69, %v421
  %v423 = vpop.f32.mrb[0].mxu0
  %v424 = vpop.f32.mrb[0].mxu0
  %v425 = vadd.f32 %v69, %v424
  %v426 = vpop.f32.mrb[0].mxu0
  %427 = vmatprep.mubr.bf16.mxu0 %v298
  %428 = vmatmul.mubr.bf16.gmra.mrb[0].mxu0 %v184
  %v429 = vpop.f32.mrb[0].mxu0
  %v430 = vadd.f32 %v69, %v429
  %v431 = vpop.f32.mrb[0].mxu0
  %v432 = vpop.f32.mrb[0].mxu0
  %v433 = vadd.f32 %v69, %v432
  %v434 = vpop.f32.mrb[0].mxu0
  %435 = vmatprep.mubr.bf16.mxu0 %v301
  %436 = vmatmul.mubr.bf16.gmra.mrb[0].mxu0 %v186
  %v437 = vpop.f32.mrb[0].mxu0
  %v438 = vadd.f32 %v69, %v437
  %v439 = vpop.f32.mrb[0].mxu0
  %v440 = vpop.f32.mrb[0].mxu0
  %v441 = vadd.f32 %v69, %v440
  %v442 = vpop.f32.mrb[0].mxu0
  %443 = vmatprep.mubr.bf16.mxu0 %v304
  %444 = vmatmul.mubr.bf16.gmra.mrb[0].mxu0 %v188
  %v445 = vpop.f32.mrb[0].mxu0
  %v446 = vadd.f32 %v69, %v445
  %v447 = vpop.f32.mrb[0].mxu0
  %v448 = vpop.f32.mrb[0].mxu0
  %v449 = vadd.f32 %v69, %v448
  %v450 = vpop.f32.mrb[0].mxu0
  %451 = vmatprep.mubr.bf16.mxu0 %v307
  %452 = vmatmul.mubr.bf16.gmra.mrb[0].mxu0 %v190
  %v453 = vpop.f32.mrb[0].mxu0
  %v454 = vadd.f32 %v69, %v453
  %v455 = vpop.f32.mrb[0].mxu0
  %v456 = vpop.f32.mrb[0].mxu0
  %v457 = vadd.f32 %v69, %v456
  %v458 = vpop.f32.mrb[0].mxu0
  %459 = vmatprep.mubr.bf16.mxu0 %v310
  %460 = vmatmul.mubr.bf16.gmra.mrb[0].mxu0 %v192
  %v461 = vpop.f32.mrb[0].mxu0
  %v462 = vadd.f32 %v69, %v461
  %v463 = vpop.f32.mrb[0].mxu0
  %v464 = vpop.f32.mrb[0].mxu0
  %v465 = vadd.f32 %v69, %v464
  %v466 = vpop.f32.mrb[0].mxu0
  %467 = vmatprep.mubr.bf16.mxu0 %v313
  %468 = vmatmul.mubr.bf16.gmra.mrb[0].mxu0 %v194
  %v469 = vpop.f32.mrb[0].mxu0
  %v470 = vadd.f32 %v69, %v469
  %v471 = vpop.f32.mrb[0].mxu0
  %v472 = vpop.f32.mrb[0].mxu0
  %v473 = vpop.f32.mrb[0].mxu0
  %474 = vdwg.mxu0
  %v475 = vmax.f32 %v350, 0.0
  %v476 = vmax.f32 %v353, 0.0
  %v477 = vmax.f32 %v358, 0.0
  %v478 = vmax.f32 %v361, 0.0
  %v479 = vmax.f32 %v366, 0.0
  %v480 = vmax.f32 %v369, 0.0
  %v481 = vmax.f32 %v374, 0.0
  %v482 = vmax.f32 %v377, 0.0
  %v483 = vmax.f32 %v382, 0.0
  %v484 = vmax.f32 %v385, 0.0
  %v485 = vmax.f32 %v390, 0.0
  %v486 = vmax.f32 %v393, 0.0
  %v487 = vmax.f32 %v398, 0.0
  %v488 = vmax.f32 %v401, 0.0
  %v489 = vmax.f32 %v406, 0.0
  %v490 = vmax.f32 %v409, 0.0
  %v491 = vmax.f32 %v414, 0.0
  %v492 = vmax.f32 %v417, 0.0
  %v493 = vmax.f32 %v422, 0.0
  %v494 = vmax.f32 %v425, 0.0
  %v495 = vmax.f32 %v430, 0.0
  %v496 = vmax.f32 %v433, 0.0
  %v497 = vmax.f32 %v438, 0.0
  %v498 = vmax.f32 %v441, 0.0
  %v499 = vmax.f32 %v446, 0.0
  %v500 = vmax.f32 %v449, 0.0
  %v501 = vmax.f32 %v454, 0.0
  %v502 = vmax.f32 %v457, 0.0
  %v503 = vmax.f32 %v462, 0.0
  %v504 = vmax.f32 %v465, 0.0
  %v505 = vmax.f32 %v470, 0.0
  %v506 = vpack.c.bf16 %v476, %v475
  %v507 = vpack.c.bf16 %v478, %v477
  %v508 = vpack.c.bf16 %v480, %v479
  %v509 = vpack.c.bf16 %v482, %v481
  %v510 = vpack.c.bf16 %v484, %v483
  %v511 = vpack.c.bf16 %v486, %v485
  %v512 = vpack.c.bf16 %v488, %v487
  %v513 = vpack.c.bf16 %v490, %v489
  %v514 = vpack.c.bf16 %v492, %v491
  %v515 = vpack.c.bf16 %v494, %v493
  %v516 = vpack.c.bf16 %v496, %v495
  %v517 = vpack.c.bf16 %v498, %v497
  %v518 = vpack.c.bf16 %v500, %v499
  %v519 = vpack.c.bf16 %v502, %v501
  %v520 = vpack.c.bf16 %v504, %v503
  %v521 = vpack.c.bf16 %v505, %v505
  %v538 = vunpack.c.l.b16 %v506
  %v539 = vunpack.c.h.b16 %v506
  %v540 = vunpack.c.l.b16 %v507
  %v541 = vunpack.c.h.b16 %v507
  %v542 = vunpack.c.l.b16 %v508
  %v543 = vunpack.c.h.b16 %v508
  %v544 = vunpack.c.l.b16 %v509
  %v545 = vunpack.c.h.b16 %v509
  %v546 = vunpack.c.l.b16 %v510
  %v547 = vunpack.c.h.b16 %v510
  %v548 = vunpack.c.l.b16 %v511
  %v549 = vunpack.c.h.b16 %v511
  %v550 = vunpack.c.l.b16 %v512
  %v551 = vunpack.c.h.b16 %v512
  %v552 = vunpack.c.l.b16 %v513
  %v553 = vunpack.c.h.b16 %v513
  %v554 = vunpack.c.l.b16 %v514
  %v555 = vunpack.c.h.b16 %v514
  %v556 = vunpack.c.l.b16 %v515
  %v557 = vunpack.c.h.b16 %v515
  %v558 = vunpack.c.l.b16 %v516
  %v559 = vunpack.c.h.b16 %v516
  %v560 = vunpack.c.l.b16 %v517
  %v561 = vunpack.c.h.b16 %v517
  %v562 = vunpack.c.l.b16 %v518
  %v563 = vunpack.c.h.b16 %v518
  %v564 = vunpack.c.l.b16 %v519
  %v565 = vunpack.c.h.b16 %v519
  %v566 = vunpack.c.l.b16 %v520
  %v567 = vunpack.c.h.b16 %v520
  %v568 = vunpack.c.l.b16 %v521
  %v569 = vpack.c.b16 %v538, %v538
  %v570 = vpack.c.b16 %v539, %v539
  %v571 = vpack.c.b16 %v540, %v540
  %v572 = vpack.c.b16 %v541, %v541
  %v573 = vpack.c.b16 %v542, %v542
  %v574 = vpack.c.b16 %v543, %v543
  %v575 = vpack.c.b16 %v544, %v544
  %v576 = vpack.c.b16 %v545, %v545
  %v577 = vpack.c.b16 %v546, %v546
  %v578 = vpack.c.b16 %v547, %v547
  %v579 = vpack.c.b16 %v548, %v548
  %v580 = vpack.c.b16 %v549, %v549
  %v581 = vpack.c.b16 %v550, %v550
  %v582 = vpack.c.b16 %v551, %v551
  %v583 = vpack.c.b16 %v552, %v552
  %v584 = vpack.c.b16 %v553, %v553
  %v585 = vpack.c.b16 %v554, %v554
  %v586 = vpack.c.b16 %v555, %v555
  %v587 = vpack.c.b16 %v556, %v556
  %v588 = vpack.c.b16 %v557, %v557
  %v589 = vpack.c.b16 %v558, %v558
  %v590 = vpack.c.b16 %v559, %v559
  %v591 = vpack.c.b16 %v560, %v560
  %v592 = vpack.c.b16 %v561, %v561
  %v593 = vpack.c.b16 %v562, %v562
  %v594 = vpack.c.b16 %v563, %v563
  %v595 = vpack.c.b16 %v564, %v564
  %v596 = vpack.c.b16 %v565, %v565
  %v597 = vpack.c.b16 %v566, %v566
  %v598 = vpack.c.b16 %v567, %v567
  %v599 = vpack.c.b16 %v568, %v568
  %vm631 = vcmask 257024
  %632 = vst.msk [vmem:[%s3] sm:$0xf] %vm631, %v569
  %633 = vst.msk [vmem:[%s3 + $0x4] sm:$0xf] %vm631, %v570
  %634 = vst.msk [vmem:[%s3 + $0x8] sm:$0xf] %vm631, %v571
  %635 = vst.msk [vmem:[%s3 + $0xc] sm:$0xf] %vm631, %v572
  %636 = vst.msk [vmem:[%s3 + $0x10] sm:$0xf] %vm631, %v573
  %637 = vst.msk [vmem:[%s3 + $0x14] sm:$0xf] %vm631, %v574
  %638 = vst.msk [vmem:[%s3 + $0x18] sm:$0xf] %vm631, %v575
  %639 = vst.msk [vmem:[%s3 + $0x1c] sm:$0xf] %vm631, %v576
  %640 = vst.msk [vmem:[%s3 + $0x20] sm:$0xf] %vm631, %v577
  %641 = vst.msk [vmem:[%s3 + $0x24] sm:$0xf] %vm631, %v578
  %642 = vst.msk [vmem:[%s3 + $0x28] sm:$0xf] %vm631, %v579
  %643 = vst.msk [vmem:[%s3 + $0x2c] sm:$0xf] %vm631, %v580
  %644 = vst.msk [vmem:[%s3 + $0x30] sm:$0xf] %vm631, %v581
  %645 = vst.msk [vmem:[%s3 + $0x34] sm:$0xf] %vm631, %v582
  %646 = vst.msk [vmem:[%s3 + $0x38] sm:$0xf] %vm631, %v583
  %647 = vst.msk [vmem:[%s3 + $0x3c] sm:$0xf] %vm631, %v584
  %648 = vst.msk [vmem:[%s3 + $0x40] sm:$0xf] %vm631, %v585
  %649 = vst.msk [vmem:[%s3 + $0x44] sm:$0xf] %vm631, %v586
  %650 = vst.msk [vmem:[%s3 + $0x48] sm:$0xf] %vm631, %v587
  %651 = vst.msk [vmem:[%s3 + $0x4c] sm:$0xf] %vm631, %v588
  %652 = vst.msk [vmem:[%s3 + $0x50] sm:$0xf] %vm631, %v589
  %653 = vst.msk [vmem:[%s3 + $0x54] sm:$0xf] %vm631, %v590
  %654 = vst.msk [vmem:[%s3 + $0x58] sm:$0xf] %vm631, %v591
  %655 = vst.msk [vmem:[%s3 + $0x5c] sm:$0xf] %vm631, %v592
  %656 = vst.msk [vmem:[%s3 + $0x60] sm:$0xf] %vm631, %v593
  %657 = vst.msk [vmem:[%s3 + $0x64] sm:$0xf] %vm631, %v594
  %658 = vst.msk [vmem:[%s3 + $0x68] sm:$0xf] %vm631, %v595
  %659 = vst.msk [vmem:[%s3 + $0x6c] sm:$0xf] %vm631, %v596
  %660 = vst.msk [vmem:[%s3 + $0x70] sm:$0xf] %vm631, %v597
  %661 = vst.msk [vmem:[%s3 + $0x74] sm:$0xf] %vm631, %v598
  %662 = vst.msk [vmem:[%s3 + $0x78] sm:$0xf] %vm631, %v599
  // Predicated region
  $region14: #{net_forward.7} parent=0 // pred_check
    _
  $region15: #{net_forward.7} parent=0 // pred_check_branch
    %664 = sbr.rel (0) target = $region17
  $region16: #{net_forward.7} parent=0 // pred_region
    _
  $region17: #{net_forward.7} parent=0 // pred_fallthru
    _
  // Predicated region
  $region18: #{net_forward.7} parent=0 // pred_check
    _
  $region19: #{net_forward.7} parent=0 // pred_check_branch
    %666 = sbr.rel (0) target = $region21
  $region20: #{net_forward.7} parent=0 // pred_region
    _
  $region21: #{net_forward.7} parent=0 // pred_fallthru
    _

// kernel: net_forward.8
$region0: #{net_forward.8}
  #allocation0 [shape = 'u32[]', space=smem, size = 0x4, offset = 0x4, fixed_abs, tag = 'smem constant byte address 0x4 - core index']
  #allocation1 [shape = 'u32[144,128]{1,0:T(1,128)}', space=vmem, size = 0x12000, scoped, tag = 'internal scratch']
  %s0 = inlined_call_operand.vmem [shape: bf16[50,288], index: 0, kind: input, shape index: {}]
  %s1 = inlined_call_operand.vmem [shape: bf16[288,64], index: 1, kind: input, shape index: {}]
  %s2 = inlined_call_operand.vmem [shape: f32[1,64], index: 2, kind: input, shape index: {}]
  %s3 = inlined_call_operand.vmem [shape: bf16[50,64], index: 3, kind: output, shape index: {}]
  %s4 = sld [smem:[#allocation0]]
  $region22: #{net_forward.8} parent=0
    _
  %s6 = ssub.s32 1, %s4
  %s7 = scalar_select 0, %s6, %s4
  // Predicated region
  $region2: #{net_forward.8} parent=0 // pred_check
    _
  $region3: #{net_forward.8} parent=0 // pred_check_branch
    %9 = sbr.rel (0) target = $region5
  $region4: #{net_forward.8} parent=0 // pred_region
    _
  $region5: #{net_forward.8} parent=0 // pred_fallthru
    _
  // Predicated region
  $region6: #{net_forward.8} parent=0 // pred_check
    _
  $region7: #{net_forward.8} parent=0 // pred_check_branch
    %11 = sbr.rel (0) target = $region9
  $region8: #{net_forward.8} parent=0 // pred_region
    _
  $region9: #{net_forward.8} parent=0 // pred_fallthru
    _
  // Predicated region
  $region10: #{net_forward.8} parent=0 // pred_check
    _
  $region11: #{net_forward.8} parent=0 // pred_check_branch
    %13 = sbr.rel (0) target = $region13
  $region12: #{net_forward.8} parent=0 // pred_region
    _
  $region13: #{net_forward.8} parent=0 // pred_fallthru
    _
  %v15 = vld [vmem:[%s0] sm:$0xff]
  %v16 = vld [vmem:[%s0 + $0x8] sm:$0xf]
  %v17 = vld [vmem:[%s0 + $0xc] sm:$0xff]
  %v18 = vld [vmem:[%s0 + $0x14] sm:$0xf]
  %v19 = vld [vmem:[%s0 + $0x18] sm:$0xff]
  %v20 = vld [vmem:[%s0 + $0x20] sm:$0xf]
  %v21 = vld [vmem:[%s0 + $0x24] sm:$0xff]
  %v22 = vld [vmem:[%s0 + $0x2c] sm:$0xf]
  %v23 = vld [vmem:[%s0 + $0x30] sm:$0xff]
  %v24 = vld [vmem:[%s0 + $0x38] sm:$0xf]
  %v25 = vld [vmem:[%s0 + $0x3c] sm:$0xff]
  %v26 = vld [vmem:[%s0 + $0x44] sm:$0xf]
  %v27 = vld [vmem:[%s0 + $0x48] sm:$0xff]
  %v28 = vld [vmem:[%s0 + $0x50] sm:$0xf]
  %v29 = vld [vmem:[%s1] sm:$0xf]
  %v30 = vld [vmem:[%s1 + $0x4] sm:$0xf]
  %v31 = vld [vmem:[%s1 + $0x8] sm:$0xf]
  %v32 = vld [vmem:[%s1 + $0xc] sm:$0xf]
  %v33 = vld [vmem:[%s1 + $0x10] sm:$0xf]
  %v34 = vld [vmem:[%s1 + $0x14] sm:$0xf]
  %v35 = vld [vmem:[%s1 + $0x18] sm:$0xf]
  %v36 = vld [vmem:[%s1 + $0x1c] sm:$0xf]
  %v37 = vld [vmem:[%s1 + $0x20] sm:$0xf]
  %v38 = vld [vmem:[%s1 + $0x24] sm:$0xf]
  %v39 = vld [vmem:[%s1 + $0x28] sm:$0xf]
  %v40 = vld [vmem:[%s1 + $0x2c] sm:$0xf]
  %v41 = vld [vmem:[%s1 + $0x30] sm:$0xf]
  %v42 = vld [vmem:[%s1 + $0x34] sm:$0xf]
  %v43 = vld [vmem:[%s1 + $0x38] sm:$0xf]
  %v44 = vld [vmem:[%s1 + $0x3c] sm:$0xf]
  %v45 = vld [vmem:[%s1 + $0x40] sm:$0xf]
  %v46 = vld [vmem:[%s1 + $0x44] sm:$0xf]
  %v47 = vld [vmem:[%s1 + $0x48] sm:$0xf]
  %v48 = vld [vmem:[%s1 + $0x4c] sm:$0xf]
  %v49 = vld [vmem:[%s1 + $0x50] sm:$0xf]
  %v50 = vld [vmem:[%s1 + $0x54] sm:$0xf]
  %v51 = vld [vmem:[%s1 + $0x58] sm:$0xf]
  %v52 = vld [vmem:[%s1 + $0x5c] sm:$0xf]
  %v53 = vld [vmem:[%s1 + $0x60] sm:$0xf]
  %v54 = vld [vmem:[%s1 + $0x64] sm:$0xf]
  %v55 = vld [vmem:[%s1 + $0x68] sm:$0xf]
  %v56 = vld [vmem:[%s1 + $0x6c] sm:$0xf]
  %v57 = vld [vmem:[%s1 + $0x70] sm:$0xf]
  %v58 = vld [vmem:[%s1 + $0x74] sm:$0xf]
  %v59 = vld [vmem:[%s1 + $0x78] sm:$0xf]
  %v60 = vld [vmem:[%s1 + $0x7c] sm:$0xf]
  %v61 = vld [vmem:[%s1 + $0x80] sm:$0xf]
  %v62 = vld [vmem:[%s1 + $0x84] sm:$0xf]
  %v63 = vld [vmem:[%s1 + $0x88] sm:$0xf]
  %v64 = vld [vmem:[%s1 + $0x8c] sm:$0xf]
  %v65 = vld [vmem:[%s2] sm:$0x1]
  %v67 = vlaneseq
  %v68 = vshrl.u32 %v67, 7
  %v69 = vsub.s32 0, %v68
  %v70 = vrot.slane %v65, %v69
  %v86 = vunpack.c.l.b16 %v15
  %v87 = vunpack.c.h.b16 %v15
  %v88 = vunpack.c.l.b16 %v16
  %v89 = vunpack.c.l.b16 %v17
  %v90 = vunpack.c.h.b16 %v17
  %v91 = vunpack.c.l.b16 %v18
  %v92 = vunpack.c.l.b16 %v19
  %v93 = vunpack.c.h.b16 %v19
  %v94 = vunpack.c.l.b16 %v20
  %v95 = vunpack.c.l.b16 %v21
  %v96 = vunpack.c.h.b16 %v21
  %v97 = vunpack.c.l.b16 %v22
  %v98 = vunpack.c.l.b16 %v23
  %v99 = vunpack.c.h.b16 %v23
  %v100 = vunpack.c.l.b16 %v24
  %v101 = vunpack.c.l.b16 %v25
  %v102 = vunpack.c.h.b16 %v25
  %v103 = vunpack.c.l.b16 %v26
  %v104 = vunpack.c.l.b16 %v27
  %v105 = vunpack.c.h.b16 %v27
  %v106 = vunpack.c.l.b16 %v28
  %v107 = vpack.c.b16 %v89, %v86
  %v108 = vpack.c.b16 %v90, %v87
  %v109 = vpack.c.b16 %v91, %v88
  %v110 = vpack.c.b16 %v95, %v92
  %v111 = vpack.c.b16 %v96, %v93
  %v112 = vpack.c.b16 %v97, %v94
  %v113 = vpack.c.b16 %v101, %v98
  %v114 = vpack.c.b16 %v102, %v99
  %v115 = vpack.c.b16 %v103, %v100
  %v116 = vpack.c.b16 %v104, %v104
  %v117 = vpack.c.b16 %v105, %v105
  %v118 = vpack.c.b16 %v106, %v106
  %v163 = vunpack.c.l.b16 %v29
  %v164 = vunpack.c.l.b16 %v30
  %v165 = vunpack.c.l.b16 %v31
  %v166 = vunpack.c.l.b16 %v32
  %v167 = vunpack.c.l.b16 %v33
  %v168 = vunpack.c.l.b16 %v34
  %v169 = vunpack.c.l.b16 %v35
  %v170 = vunpack.c.l.b16 %v36
  %v171 = vunpack.c.l.b16 %v37
  %v172 = vunpack.c.l.b16 %v38
  %v173 = vunpack.c.l.b16 %v39
  %v174 = vunpack.c.l.b16 %v40
  %v175 = vunpack.c.l.b16 %v41
  %v176 = vunpack.c.l.b16 %v42
  %v177 = vunpack.c.l.b16 %v43
  %v178 = vunpack.c.l.b16 %v44
  %v179 = vunpack.c.l.b16 %v45
  %v180 = vunpack.c.l.b16 %v46
  %v181 = vunpack.c.l.b16 %v47
  %v182 = vunpack.c.l.b16 %v48
  %v183 = vunpack.c.l.b16 %v49
  %v184 = vunpack.c.l.b16 %v50
  %v185 = vunpack.c.l.b16 %v51
  %v186 = vunpack.c.l.b16 %v52
  %v187 = vunpack.c.l.b16 %v53
  %v188 = vunpack.c.l.b16 %v54
  %v189 = vunpack.c.l.b16 %v55
  %v190 = vunpack.c.l.b16 %v56
  %v191 = vunpack.c.l.b16 %v57
  %v192 = vunpack.c.l.b16 %v58
  %v193 = vunpack.c.l.b16 %v59
  %v194 = vunpack.c.l.b16 %v60
  %v195 = vunpack.c.l.b16 %v61
  %v196 = vunpack.c.l.b16 %v62
  %v197 = vunpack.c.l.b16 %v63
  %v198 = vunpack.c.l.b16 %v64
  %v199 = vpack.c.b16 %v164, %v163
  %v200 = vpack.c.b16 %v166, %v165
  %v201 = vpack.c.b16 %v168, %v167
  %v202 = vpack.c.b16 %v170, %v169
  %v203 = vpack.c.b16 %v172, %v171
  %v204 = vpack.c.b16 %v174, %v173
  %v205 = vpack.c.b16 %v176, %v175
  %v206 = vpack.c.b16 %v178, %v177
  %v207 = vpack.c.b16 %v180, %v179
  %v208 = vpack.c.b16 %v182, %v181
  %v209 = vpack.c.b16 %v184, %v183
  %v210 = vpack.c.b16 %v186, %v185
  %v211 = vpack.c.b16 %v188, %v187
  %v212 = vpack.c.b16 %v190, %v189
  %v213 = vpack.c.b16 %v192, %v191
  %v214 = vpack.c.b16 %v194, %v193
  %v215 = vpack.c.b16 %v196, %v195
  %v216 = vpack.c.b16 %v198, %v197
  %vm235 = vcmask 261120
  %v237 = vsel %vm235, %v109, 0
  %v240 = vsel %vm235, %v112, 0
  %v243 = vsel %vm235, %v115, 0
  %v246 = vsel %vm235, %v118, 0
  %248 = vmatprep.subr.bf16.mxu0 0
  %249 = vmatpush1.bf16.msra.mxu0 %v199
  %250 = vmatprep.subr.bf16.mxu0 0
  %251 = vmatpush1.bf16.msra.mxu0 %v200
  %252 = vmatprep.subr.bf16.mxu0 0
  %253 = vmatpush1.bf16.msra.mxu0 %v201
  %254 = vmatprep.subr.bf16.mxu0 0
  %255 = vmatpush1.bf16.msra.mxu0 %v202
  %256 = vmatprep.subr.bf16.mxu0 0
  %257 = vmatpush1.bf16.msra.mxu0 %v203
  %258 = vmatprep.subr.bf16.mxu0 0
  %259 = vmatpush1.bf16.msra.mxu0 %v204
  %260 = vmatprep.subr.bf16.mxu0 0
  %261 = vmatpush1.bf16.msra.mxu0 %v205
  %262 = vmatprep.subr.bf16.mxu0 0
  %263 = vmatpush1.bf16.msra.mxu0 %v206
  %264 = vmatprep.subr.bf16.mxu0 0
  %265 = vmatpush1.bf16.msra.mxu0 %v207
  %266 = vmatprep.subr.bf16.mxu0 0
  %267 = vmatpush1.bf16.msra.mxu0 %v208
  %268 = vmatprep.subr.bf16.mxu0 0
  %269 = vmatpush1.bf16.msra.mxu0 %v209
  %270 = vmatprep.subr.bf16.mxu0 0
  %271 = vmatpush1.bf16.msra.mxu0 %v210
  %272 = vmatprep.subr.bf16.mxu0 0
  %273 = vmatpush1.bf16.msra.mxu0 %v211
  %274 = vmatprep.subr.bf16.mxu0 0
  %275 = vmatpush1.bf16.msra.mxu0 %v212
  %276 = vmatprep.subr.bf16.mxu0 0
  %277 = vmatpush1.bf16.msra.mxu0 %v213
  %278 = vmatprep.subr.bf16.mxu0 0
  %279 = vmatpush1.bf16.msra.mxu0 %v214
  %280 = vmatprep.mubr.bf16.mxu0 %v108
  %281 = vmatmul.mubr.bf16.gmra.mrb[0].mxu0 %v107
  %v282 = vpop.f32.mrb[0].mxu0
  %v283 = vadd.f32 %v70, %v282
  %v284 = vpop.f32.mrb[0].mxu0
  %v285 = vpop.f32.mrb[0].mxu0
  %v286 = vadd.f32 %v70, %v285
  %v287 = vpop.f32.mrb[0].mxu0
  %288 = vmatprep.mubr.bf16.mxu0 %v111
  %289 = vmatmul.mubr.bf16.gmra.mrb[0].mxu0 %v110
  %v290 = vpop.f32.mrb[0].mxu0
  %v291 = vadd.f32 %v70, %v290
  %v292 = vpop.f32.mrb[0].mxu0
  %v293 = vpop.f32.mrb[0].mxu0
  %v294 = vadd.f32 %v70, %v293
  %v295 = vpop.f32.mrb[0].mxu0
  %296 = vmatprep.mubr.bf16.mxu0 %v114
  %297 = vmatmul.mubr.bf16.gmra.mrb[0].mxu0 %v113
  %v298 = vpop.f32.mrb[0].mxu0
  %v299 = vadd.f32 %v70, %v298
  %v300 = vpop.f32.mrb[0].mxu0
  %v301 = vpop.f32.mrb[0].mxu0
  %v302 = vadd.f32 %v70, %v301
  %v303 = vpop.f32.mrb[0].mxu0
  %304 = vmatprep.mubr.bf16.mxu0 %v117
  %305 = vmatmul.mubr.bf16.gmra.mrb[0].mxu0 %v116
  %v306 = vpop.f32.mrb[0].mxu0
  %v307 = vadd.f32 %v70, %v306
  %v308 = vpop.f32.mrb[0].mxu0
  %v309 = vpop.f32.mrb[0].mxu0
  %v310 = vpop.f32.mrb[0].mxu0
  %311 = vdwg.mxu0
  %312 = vmatprep.subr.bf16.mxu0 0
  %313 = vmatpush1.bf16.msra.mxu0 %v215
  %314 = vmatprep.subr.bf16.mxu0 0
  %315 = vmatpush1.bf16.msra.mxu0 %v216
  %316 = vmatprep.subr.bf16.mxu0 0
  %317 = vmatpush1.bf16.msra.mxu0 0
  %318 = vmatprep.subr.bf16.mxu0 0
  %319 = vmatpush1.bf16.msra.mxu0 0
  %320 = vmatprep.subr.bf16.mxu0 0
  %321 = vmatpush1.bf16.msra.mxu0 0
  %322 = vmatprep.subr.bf16.mxu0 0
  %323 = vmatpush1.bf16.msra.mxu0 0
  %324 = vmatprep.subr.bf16.mxu0 0
  %325 = vmatpush1.bf16.msra.mxu0 0
  %326 = vmatprep.subr.bf16.mxu0 0
  %327 = vmatpush1.bf16.msra.mxu0 0
  %328 = vmatprep.subr.bf16.mxu0 0
  %329 = vmatpush1.bf16.msra.mxu0 0
  %330 = vmatprep.subr.bf16.mxu0 0
  %331 = vmatpush1.bf16.msra.mxu0 0
  %332 = vmatprep.subr.bf16.mxu0 0
  %333 = vmatpush1.bf16.msra.mxu0 0
  %334 = vmatprep.subr.bf16.mxu0 0
  %335 = vmatpush1.bf16.msra.mxu0 0
  %336 = vmatprep.subr.bf16.mxu0 0
  %337 = vmatpush1.bf16.msra.mxu0 0
  %338 = vmatprep.subr.bf16.mxu0 0
  %339 = vmatpush1.bf16.msra.mxu0 0
  %340 = vmatprep.subr.bf16.mxu0 0
  %341 = vmatpush1.bf16.msra.mxu0 0
  %342 = vmatprep.subr.bf16.mxu0 0
  %343 = vmatpush1.bf16.msra.mxu0 0
  %344 = vmatprep.mubr.bf16.mxu0 0
  %345 = vmatmul.mubr.bf16.gmra.mrb[0].mxu0 %v237
  %v346 = vpop.f32.mrb[0].mxu0
  %v347 = vadd.f32 %v283, %v346
  %v348 = vpop.f32.mrb[0].mxu0
  %v349 = vpop.f32.mrb[0].mxu0
  %v350 = vadd.f32 %v286, %v349
  %v351 = vpop.f32.mrb[0].mxu0
  %352 = vmatprep.mubr.bf16.mxu0 0
  %353 = vmatmul.mubr.bf16.gmra.mrb[0].mxu0 %v240
  %v354 = vpop.f32.mrb[0].mxu0
  %v355 = vadd.f32 %v291, %v354
  %v356 = vpop.f32.mrb[0].mxu0
  %v357 = vpop.f32.mrb[0].mxu0
  %v358 = vadd.f32 %v294, %v357
  %v359 = vpop.f32.mrb[0].mxu0
  %360 = vmatprep.mubr.bf16.mxu0 0
  %361 = vmatmul.mubr.bf16.gmra.mrb[0].mxu0 %v243
  %v362 = vpop.f32.mrb[0].mxu0
  %v363 = vadd.f32 %v299, %v362
  %v364 = vpop.f32.mrb[0].mxu0
  %v365 = vpop.f32.mrb[0].mxu0
  %v366 = vadd.f32 %v302, %v365
  %v367 = vpop.f32.mrb[0].mxu0
  %368 = vmatprep.mubr.bf16.mxu0 0
  %369 = vmatmul.mubr.bf16.gmra.mrb[0].mxu0 %v246
  %v370 = vpop.f32.mrb[0].mxu0
  %v371 = vadd.f32 %v307, %v370
  %v372 = vpop.f32.mrb[0].mxu0
  %v373 = vpop.f32.mrb[0].mxu0
  %v374 = vpop.f32.mrb[0].mxu0
  %375 = vdwg.mxu0
  %v376 = vmax.f32 %v347, 0.0
  %v377 = vmax.f32 %v350, 0.0
  %v378 = vmax.f32 %v355, 0.0
  %v379 = vmax.f32 %v358, 0.0
  %v380 = vmax.f32 %v363, 0.0
  %v381 = vmax.f32 %v366, 0.0
  %v382 = vmax.f32 %v371, 0.0
  %v383 = vpack.c.bf16 %v377, %v376
  %v384 = vpack.c.bf16 %v379, %v378
  %v385 = vpack.c.bf16 %v381, %v380
  %v386 = vpack.c.bf16 %v382, %v382
  %v391 = vunpack.c.l.b16 %v383
  %v392 = vunpack.c.h.b16 %v383
  %v393 = vunpack.c.l.b16 %v384
  %v394 = vunpack.c.h.b16 %v384
  %v395 = vunpack.c.l.b16 %v385
  %v396 = vunpack.c.h.b16 %v385
  %v397 = vunpack.c.l.b16 %v386
  %v398 = vpack.c.b16 %v391, %v391
  %v399 = vpack.c.b16 %v392, %v392
  %v400 = vpack.c.b16 %v393, %v393
  %v401 = vpack.c.b16 %v394, %v394
  %v402 = vpack.c.b16 %v395, %v395
  %v403 = vpack.c.b16 %v396, %v396
  %v404 = vpack.c.b16 %v397, %v397
  %vm412 = vcmask 519168
  %413 = vst.msk [vmem:[%s3] sm:$0xf] %vm412, %v398
  %414 = vst.msk [vmem:[%s3 + $0x4] sm:$0xf] %vm412, %v399
  %415 = vst.msk [vmem:[%s3 + $0x8] sm:$0xf] %vm412, %v400
  %416 = vst.msk [vmem:[%s3 + $0xc] sm:$0xf] %vm412, %v401
  %417 = vst.msk [vmem:[%s3 + $0x10] sm:$0xf] %vm412, %v402
  %418 = vst.msk [vmem:[%s3 + $0x14] sm:$0xf] %vm412, %v403
  %419 = vst.msk [vmem:[%s3 + $0x18] sm:$0xf] %vm412, %v404
  // Predicated region
  $region14: #{net_forward.8} parent=0 // pred_check
    _
  $region15: #{net_forward.8} parent=0 // pred_check_branch
    %421 = sbr.rel (0) target = $region17
  $region16: #{net_forward.8} parent=0 // pred_region
    _
  $region17: #{net_forward.8} parent=0 // pred_fallthru
    _
  // Predicated region
  $region18: #{net_forward.8} parent=0 // pred_check
    _
  $region19: #{net_forward.8} parent=0 // pred_check_branch
    %423 = sbr.rel (0) target = $region21
  $region20: #{net_forward.8} parent=0 // pred_region
    _
  $region21: #{net_forward.8} parent=0 // pred_fallthru
    _

// kernel: net_forward.9
$region0: #{net_forward.9}
  #allocation0 [shape = 'u32[]', space=smem, size = 0x4, offset = 0x4, fixed_abs, tag = 'smem constant byte address 0x4 - core index']
  #allocation1 [shape = 'u32[144,128]{1,0:T(1,128)}', space=vmem, size = 0x12000, scoped, tag = 'internal scratch']
  #allocation2 [shape = 'f32[1,1]{1,0:T(1,128)S(1)}', space=vmem, size = 0x200, scoped, tag = 'scoped memory for net_forward.9']
  %s0 = inlined_call_operand.vmem [shape: bf16[5,5,2,64], index: 0, kind: input, shape index: {}]
  %s1 = inlined_call_operand.vmem [shape: bf16[3,3,64,128], index: 1, kind: input, shape index: {}]
  %s2 = inlined_call_operand.vmem [shape: f32[1,128], index: 2, kind: input, shape index: {}]
  %s3 = inlined_call_operand.vmem [shape: bf16[3,3,128,256], index: 3, kind: input, shape index: {}]
  %s4 = inlined_call_operand.vmem [shape: f32[1,256], index: 4, kind: input, shape index: {}]
  %s5 = inlined_call_operand.vmem [shape: f32[256,100], index: 5, kind: input, shape index: {}]
  %s6 = inlined_call_operand.vmem [shape: f32[1,100], index: 6, kind: input, shape index: {}]
  %s7 = inlined_call_operand.vmem [shape: f32[100,1], index: 7, kind: input, shape index: {}]
  %s8 = inlined_call_operand.<no memory space> [shape: f32[1,1], index: 8, kind: input, shape index: {}]
  %s9 = inlined_call_operand.vmem [shape: f32[256,100], index: 9, kind: input, shape index: {}]
  %s10 = inlined_call_operand.vmem [shape: f32[1,100], index: 10, kind: input, shape index: {}]
  %s11 = inlined_call_operand.vmem [shape: f32[100,2], index: 11, kind: input, shape index: {}]
  %s12 = inlined_call_operand.vmem [shape: f32[1,2], index: 12, kind: input, shape index: {}]
  %s13 = inlined_call_operand.vmem [shape: f32[100,2], index: 13, kind: input, shape index: {}]
  %s14 = inlined_call_operand.vmem [shape: f32[1,2], index: 14, kind: input, shape index: {}]
  %s15 = inlined_call_operand.vmem [shape: f32[2,1], index: 15, kind: output, shape index: {0}]
  %s16 = inlined_call_operand.hbm [shape: f32[2,2], index: 16, kind: output, shape index: {1}]
  %s17 = inlined_call_operand.hbm [shape: f32[2,2], index: 17, kind: output, shape index: {2}]
  %18 = xla_tuple %s15, %s16, %s17
  %s19 = sld [smem:[#allocation0]]
  $region86: #{net_forward.9} parent=0
    _
  %s21 = ssub.s32 1, %s19
  %s22 = scalar_select 0, %s21, %s19
  %v23 = vstv %s8
  %24 = vst [vmem:[#allocation2] sm:$0x1] %v23
  $region1: #{net_forward.9} parent=0
    #allocation3 [shape = 'u8[1024]{0}', space=vmem, size = 0x400, scoped, tag = 'output window, operand 1, single buffered']
    #allocation4 [shape = 's32[1]{0}', space=sflag, size = 0x4, scoped, tag = 'scoped memory for net_forward.9']
    #allocation5 [shape = 'u8[1024]{0}', space=vmem, size = 0x400, scoped, tag = 'output window, operand 2, single buffered']
    #allocation6 [shape = 's32[1]{0}', space=sflag, size = 0x4, scoped, tag = 'scoped memory for net_forward.9']
    %25 = vsyncpa [#allocation4], 0
    %26 = vsyncpa [#allocation6], 0
    // Predicated region
    $region2: #{net_forward.9} parent=1 // pred_check
      _
    $region3: #{net_forward.9} parent=1 // pred_check_branch
      %28 = sbr.rel (0) target = $region5
    $region4: #{net_forward.9} parent=1 // pred_region
      _
    $region5: #{net_forward.9} parent=1 // pred_fallthru
      _
    // Predicated region
    $region6: #{net_forward.9} parent=1 // pred_check
      _
    $region7: #{net_forward.9} parent=1 // pred_check_branch
      %30 = sbr.rel (0) target = $region9
    $region8: #{net_forward.9} parent=1 // pred_region
      _
    $region9: #{net_forward.9} parent=1 // pred_fallthru
      _
    // Predicated region
    $region10: #{net_forward.9} parent=1 // pred_check
      _
    $region11: #{net_forward.9} parent=1 // pred_check_branch
      %32 = sbr.rel (0) target = $region13
    $region12: #{net_forward.9} parent=1 // pred_region
      _
    $region13: #{net_forward.9} parent=1 // pred_fallthru
      _
    // Predicated region
    $region14: #{net_forward.9} parent=1 // pred_check
      _
    $region15: #{net_forward.9} parent=1 // pred_check_branch
      %34 = sbr.rel (0) target = $region17
    $region16: #{net_forward.9} parent=1 // pred_region
      _
    $region17: #{net_forward.9} parent=1 // pred_fallthru
      _
    // Predicated region
    $region18: #{net_forward.9} parent=1 // pred_check
      _
    $region19: #{net_forward.9} parent=1 // pred_check_branch
      %36 = sbr.rel (0) target = $region21
    $region20: #{net_forward.9} parent=1 // pred_region
      _
    $region21: #{net_forward.9} parent=1 // pred_fallthru
      _
    // Predicated region
    $region22: #{net_forward.9} parent=1 // pred_check
      _
    $region23: #{net_forward.9} parent=1 // pred_check_branch
      %38 = sbr.rel (0) target = $region25
    $region24: #{net_forward.9} parent=1 // pred_region
      _
    $region25: #{net_forward.9} parent=1 // pred_fallthru
      _
    // Predicated region
    $region26: #{net_forward.9} parent=1 // pred_check
      _
    $region27: #{net_forward.9} parent=1 // pred_check_branch
      %40 = sbr.rel (0) target = $region29
    $region28: #{net_forward.9} parent=1 // pred_region
      _
    $region29: #{net_forward.9} parent=1 // pred_fallthru
      _
    // Predicated region
    $region30: #{net_forward.9} parent=1 // pred_check
      _
    $region31: #{net_forward.9} parent=1 // pred_check_branch
      %42 = sbr.rel (0) target = $region33
    $region32: #{net_forward.9} parent=1 // pred_region
      _
    $region33: #{net_forward.9} parent=1 // pred_fallthru
      _
    // Predicated region
    $region34: #{net_forward.9} parent=1 // pred_check
      _
    $region35: #{net_forward.9} parent=1 // pred_check_branch
      %44 = sbr.rel (0) target = $region37
    $region36: #{net_forward.9} parent=1 // pred_region
      _
    $region37: #{net_forward.9} parent=1 // pred_fallthru
      _
    // Predicated region
    $region38: #{net_forward.9} parent=1 // pred_check
      _
    $region39: #{net_forward.9} parent=1 // pred_check_branch
      %46 = sbr.rel (0) target = $region41
    $region40: #{net_forward.9} parent=1 // pred_region
      _
    $region41: #{net_forward.9} parent=1 // pred_fallthru
      _
    // Predicated region
    $region42: #{net_forward.9} parent=1 // pred_check
      _
    $region43: #{net_forward.9} parent=1 // pred_check_branch
      %48 = sbr.rel (0) target = $region45
    $region44: #{net_forward.9} parent=1 // pred_region
      _
    $region45: #{net_forward.9} parent=1 // pred_fallthru
      _
    // Predicated region
    $region46: #{net_forward.9} parent=1 // pred_check
      _
    $region47: #{net_forward.9} parent=1 // pred_check_branch
      %50 = sbr.rel (0) target = $region49
    $region48: #{net_forward.9} parent=1 // pred_region
      _
    $region49: #{net_forward.9} parent=1 // pred_fallthru
      _
    // Predicated region
    $region50: #{net_forward.9} parent=1 // pred_check
      _
    $region51: #{net_forward.9} parent=1 // pred_check_branch
      %52 = sbr.rel (0) target = $region53
    $region52: #{net_forward.9} parent=1 // pred_region
      _
    $region53: #{net_forward.9} parent=1 // pred_fallthru
      _
    // Predicated region
    $region54: #{net_forward.9} parent=1 // pred_check
      _
    $region55: #{net_forward.9} parent=1 // pred_check_branch
      %54 = sbr.rel (0) target = $region57
    $region56: #{net_forward.9} parent=1 // pred_region
      _
    $region57: #{net_forward.9} parent=1 // pred_fallthru
      _
    // Predicated region
    $region58: #{net_forward.9} parent=1 // pred_check
      _
    $region59: #{net_forward.9} parent=1 // pred_check_branch
      %56 = sbr.rel (0) target = $region61
    $region60: #{net_forward.9} parent=1 // pred_region
      _
    $region61: #{net_forward.9} parent=1 // pred_fallthru
      _
    %v58 = vld [vmem:[%s0] sm:$0x1]
    %v59 = vld [vmem:[%s0 + $0x1] sm:$0x1]
    %v60 = vld [vmem:[%s0 + $0x2] sm:$0x1]
    %v61 = vld [vmem:[%s0 + $0x3] sm:$0x1]
    %v62 = vld [vmem:[%s0 + $0x4] sm:$0x1]
    %v63 = vld [vmem:[%s0 + $0x5] sm:$0x1]
    %v64 = vld [vmem:[%s0 + $0x6] sm:$0x1]
    %v65 = vld [vmem:[%s0 + $0x7] sm:$0x1]
    %v66 = vld [vmem:[%s0 + $0x8] sm:$0x1]
    %v67 = vld [vmem:[%s0 + $0x9] sm:$0x1]
    %v68 = vld [vmem:[%s0 + $0xa] sm:$0x1]
    %v69 = vld [vmem:[%s0 + $0xb] sm:$0x1]
    %v70 = vld [vmem:[%s0 + $0xc] sm:$0x1]
    %v71 = vld [vmem:[%s0 + $0xd] sm:$0x1]
    %v72 = vld [vmem:[%s0 + $0xe] sm:$0x1]
    %v73 = vld [vmem:[%s0 + $0xf] sm:$0x1]
    %v74 = vld [vmem:[%s0 + $0x10] sm:$0x1]
    %v75 = vld [vmem:[%s0 + $0x11] sm:$0x1]
    %v76 = vld [vmem:[%s0 + $0x12] sm:$0x1]
    %v77 = vld [vmem:[%s0 + $0x13] sm:$0x1]
    %v78 = vld [vmem:[%s0 + $0x14] sm:$0x1]
    %v79 = vld [vmem:[%s0 + $0x15] sm:$0x1]
    %v80 = vld [vmem:[%s0 + $0x16] sm:$0x1]
    %v81 = vld [vmem:[%s0 + $0x17] sm:$0x1]
    %v82 = vld [vmem:[%s0 + $0x18] sm:$0x1]
    %v83 = vld [vmem:[%s1] sm:$0xf]
    %v84 = vld [vmem:[%s1 + $0x4] sm:$0xf]
    %v85 = vld [vmem:[%s1 + $0x8] sm:$0xf]
    %v86 = vld [vmem:[%s1 + $0xc] sm:$0xf]
    %v87 = vld [vmem:[%s1 + $0x10] sm:$0xf]
    %v88 = vld [vmem:[%s1 + $0x14] sm:$0xf]
    %v89 = vld [vmem:[%s1 + $0x18] sm:$0xf]
    %v90 = vld [vmem:[%s1 + $0x1c] sm:$0xf]
    %v91 = vld [vmem:[%s1 + $0x20] sm:$0xf]
    %v92 = vld [vmem:[%s1 + $0x24] sm:$0xf]
    %v93 = vld [vmem:[%s1 + $0x28] sm:$0xf]
    %v94 = vld [vmem:[%s1 + $0x2c] sm:$0xf]
    %v95 = vld [vmem:[%s1 + $0x30] sm:$0xf]
    %v96 = vld [vmem:[%s1 + $0x34] sm:$0xf]
    %v97 = vld [vmem:[%s1 + $0x38] sm:$0xf]
    %v98 = vld [vmem:[%s1 + $0x3c] sm:$0xf]
    %v99 = vld [vmem:[%s1 + $0x40] sm:$0xf]
    %v100 = vld [vmem:[%s1 + $0x44] sm:$0xf]
    %v101 = vld [vmem:[%s1 + $0x48] sm:$0xf]
    %v102 = vld [vmem:[%s1 + $0x4c] sm:$0xf]
    %v103 = vld [vmem:[%s1 + $0x50] sm:$0xf]
    %v104 = vld [vmem:[%s1 + $0x54] sm:$0xf]
    %v105 = vld [vmem:[%s1 + $0x58] sm:$0xf]
    %v106 = vld [vmem:[%s1 + $0x5c] sm:$0xf]
    %v107 = vld [vmem:[%s1 + $0x60] sm:$0xf]
    %v108 = vld [vmem:[%s1 + $0x64] sm:$0xf]
    %v109 = vld [vmem:[%s1 + $0x68] sm:$0xf]
    %v110 = vld [vmem:[%s1 + $0x6c] sm:$0xf]
    %v111 = vld [vmem:[%s1 + $0x70] sm:$0xf]
    %v112 = vld [vmem:[%s1 + $0x74] sm:$0xf]
    %v113 = vld [vmem:[%s1 + $0x78] sm:$0xf]
    %v114 = vld [vmem:[%s1 + $0x7c] sm:$0xf]
    %v115 = vld [vmem:[%s1 + $0x80] sm:$0xf]
    %v116 = vld [vmem:[%s1 + $0x84] sm:$0xf]
    %v117 = vld [vmem:[%s1 + $0x88] sm:$0xf]
    %v118 = vld [vmem:[%s1 + $0x8c] sm:$0xf]
    %v119 = vld [vmem:[%s1 + $0x90] sm:$0xf]
    %v120 = vld [vmem:[%s1 + $0x94] sm:$0xf]
    %v121 = vld [vmem:[%s1 + $0x98] sm:$0xf]
    %v122 = vld [vmem:[%s1 + $0x9c] sm:$0xf]
    %v123 = vld [vmem:[%s1 + $0xa0] sm:$0xf]
    %v124 = vld [vmem:[%s1 + $0xa4] sm:$0xf]
    %v125 = vld [vmem:[%s1 + $0xa8] sm:$0xf]
    %v126 = vld [vmem:[%s1 + $0xac] sm:$0xf]
    %v127 = vld [vmem:[%s1 + $0xb0] sm:$0xf]
    %v128 = vld [vmem:[%s1 + $0xb4] sm:$0xf]
    %v129 = vld [vmem:[%s1 + $0xb8] sm:$0xf]
    %v130 = vld [vmem:[%s1 + $0xbc] sm:$0xf]
    %v131 = vld [vmem:[%s1 + $0xc0] sm:$0xf]
    %v132 = vld [vmem:[%s1 + $0xc4] sm:$0xf]
    %v133 = vld [vmem:[%s1 + $0xc8] sm:$0xf]
    %v134 = vld [vmem:[%s1 + $0xcc] sm:$0xf]
    %v135 = vld [vmem:[%s1 + $0xd0] sm:$0xf]
    %v136 = vld [vmem:[%s1 + $0xd4] sm:$0xf]
    %v137 = vld [vmem:[%s1 + $0xd8] sm:$0xf]
    %v138 = vld [vmem:[%s1 + $0xdc] sm:$0xf]
    %v139 = vld [vmem:[%s1 + $0xe0] sm:$0xf]
    %v140 = vld [vmem:[%s1 + $0xe4] sm:$0xf]
    %v141 = vld [vmem:[%s1 + $0xe8] sm:$0xf]
    %v142 = vld [vmem:[%s1 + $0xec] sm:$0xf]
    %v143 = vld [vmem:[%s1 + $0xf0] sm:$0xf]
    %v144 = vld [vmem:[%s1 + $0xf4] sm:$0xf]
    %v145 = vld [vmem:[%s1 + $0xf8] sm:$0xf]
    %v146 = vld [vmem:[%s1 + $0xfc] sm:$0xf]
    %v147 = vld [vmem:[%s1 + $0x100] sm:$0xf]
    %v148 = vld [vmem:[%s1 + $0x104] sm:$0xf]
    %v149 = vld [vmem:[%s1 + $0x108] sm:$0xf]
    %v150 = vld [vmem:[%s1 + $0x10c] sm:$0xf]
    %v151 = vld [vmem:[%s1 + $0x110] sm:$0xf]
    %v152 = vld [vmem:[%s1 + $0x114] sm:$0xf]
    %v153 = vld [vmem:[%s1 + $0x118] sm:$0xf]
    %v154 = vld [vmem:[%s1 + $0x11c] sm:$0xf]
    %v155 = vld [vmem:[%s3] sm:$0xff]
    %v156 = vld [vmem:[%s3 + $0x8] sm:$0xff]
    %v157 = vld [vmem:[%s3 + $0x10] sm:$0xff]
    %v158 = vld [vmem:[%s3 + $0x18] sm:$0xff]
    %v159 = vld [vmem:[%s3 + $0x20] sm:$0xff]
    %v160 = vld [vmem:[%s3 + $0x28] sm:$0xff]
    %v161 = vld [vmem:[%s3 + $0x30] sm:$0xff]
    %v162 = vld [vmem:[%s3 + $0x38] sm:$0xff]
    %v163 = vld [vmem:[%s3 + $0x40] sm:$0xff]
    %v164 = vld [vmem:[%s3 + $0x48] sm:$0xff]
    %v165 = vld [vmem:[%s3 + $0x50] sm:$0xff]
    %v166 = vld [vmem:[%s3 + $0x58] sm:$0xff]
    %v167 = vld [vmem:[%s3 + $0x60] sm:$0xff]
    %v168 = vld [vmem:[%s3 + $0x68] sm:$0xff]
    %v169 = vld [vmem:[%s3 + $0x70] sm:$0xff]
    %v170 = vld [vmem:[%s3 + $0x78] sm:$0xff]
    %v171 = vld [vmem:[%s3 + $0x80] sm:$0xff]
    %v172 = vld [vmem:[%s3 + $0x88] sm:$0xff]
    %v173 = vld [vmem:[%s3 + $0x90] sm:$0xff]
    %v174 = vld [vmem:[%s3 + $0x98] sm:$0xff]
    %v175 = vld [vmem:[%s3 + $0xa0] sm:$0xff]
    %v176 = vld [vmem:[%s3 + $0xa8] sm:$0xff]
    %v177 = vld [vmem:[%s3 + $0xb0] sm:$0xff]
    %v178 = vld [vmem:[%s3 + $0xb8] sm:$0xff]
    %v179 = vld [vmem:[%s3 + $0xc0] sm:$0xff]
    %v180 = vld [vmem:[%s3 + $0xc8] sm:$0xff]
    %v181 = vld [vmem:[%s3 + $0xd0] sm:$0xff]
    %v182 = vld [vmem:[%s3 + $0xd8] sm:$0xff]
    %v183 = vld [vmem:[%s3 + $0xe0] sm:$0xff]
    %v184 = vld [vmem:[%s3 + $0xe8] sm:$0xff]
    %v185 = vld [vmem:[%s3 + $0xf0] sm:$0xff]
    %v186 = vld [vmem:[%s3 + $0xf8] sm:$0xff]
    %v187 = vld [vmem:[%s3 + $0x100] sm:$0xff]
    %v188 = vld [vmem:[%s3 + $0x108] sm:$0xff]
    %v189 = vld [vmem:[%s3 + $0x110] sm:$0xff]
    %v190 = vld [vmem:[%s3 + $0x118] sm:$0xff]
    %v191 = vld [vmem:[%s3 + $0x120] sm:$0xff]
    %v192 = vld [vmem:[%s3 + $0x128] sm:$0xff]
    %v193 = vld [vmem:[%s3 + $0x130] sm:$0xff]
    %v194 = vld [vmem:[%s3 + $0x138] sm:$0xff]
    %v195 = vld [vmem:[%s3 + $0x140] sm:$0xff]
    %v196 = vld [vmem:[%s3 + $0x148] sm:$0xff]
    %v197 = vld [vmem:[%s3 + $0x150] sm:$0xff]
    %v198 = vld [vmem:[%s3 + $0x158] sm:$0xff]
    %v199 = vld [vmem:[%s3 + $0x160] sm:$0xff]
    %v200 = vld [vmem:[%s3 + $0x168] sm:$0xff]
    %v201 = vld [vmem:[%s3 + $0x170] sm:$0xff]
    %v202 = vld [vmem:[%s3 + $0x178] sm:$0xff]
    %v203 = vld [vmem:[%s3 + $0x180] sm:$0xff]
    %v204 = vld [vmem:[%s3 + $0x188] sm:$0xff]
    %v205 = vld [vmem:[%s3 + $0x190] sm:$0xff]
    %v206 = vld [vmem:[%s3 + $0x198] sm:$0xff]
    %v207 = vld [vmem:[%s3 + $0x1a0] sm:$0xff]
    %v208 = vld [vmem:[%s3 + $0x1a8] sm:$0xff]
    %v209 = vld [vmem:[%s3 + $0x1b0] sm:$0xff]
    %v210 = vld [vmem:[%s3 + $0x1b8] sm:$0xff]
    %v211 = vld [vmem:[%s3 + $0x1c0] sm:$0xff]
    %v212 = vld [vmem:[%s3 + $0x1c8] sm:$0xff]
    %v213 = vld [vmem:[%s3 + $0x1d0] sm:$0xff]
    %v214 = vld [vmem:[%s3 + $0x1d8] sm:$0xff]
    %v215 = vld [vmem:[%s3 + $0x1e0] sm:$0xff]
    %v216 = vld [vmem:[%s3 + $0x1e8] sm:$0xff]
    %v217 = vld [vmem:[%s3 + $0x1f0] sm:$0xff]
    %v218 = vld [vmem:[%s3 + $0x1f8] sm:$0xff]
    %v219 = vld [vmem:[%s3 + $0x200] sm:$0xff]
    %v220 = vld [vmem:[%s3 + $0x208] sm:$0xff]
    %v221 = vld [vmem:[%s3 + $0x210] sm:$0xff]
    %v222 = vld [vmem:[%s3 + $0x218] sm:$0xff]
    %v223 = vld [vmem:[%s3 + $0x220] sm:$0xff]
    %v224 = vld [vmem:[%s3 + $0x228] sm:$0xff]
    %v225 = vld [vmem:[%s3 + $0x230] sm:$0xff]
    %v226 = vld [vmem:[%s3 + $0x238] sm:$0xff]
    %v227 = vld [vmem:[%s3 + $0x240] sm:$0xff]
    %v228 = vld [vmem:[%s3 + $0x248] sm:$0xff]
    %v229 = vld [vmem:[%s3 + $0x250] sm:$0xff]
    %v230 = vld [vmem:[%s3 + $0x258] sm:$0xff]
    %v231 = vld [vmem:[%s3 + $0x260] sm:$0xff]
    %v232 = vld [vmem:[%s3 + $0x268] sm:$0xff]
    %v233 = vld [vmem:[%s3 + $0x270] sm:$0xff]
    %v234 = vld [vmem:[%s3 + $0x278] sm:$0xff]
    %v235 = vld [vmem:[%s3 + $0x280] sm:$0xff]
    %v236 = vld [vmem:[%s3 + $0x288] sm:$0xff]
    %v237 = vld [vmem:[%s3 + $0x290] sm:$0xff]
    %v238 = vld [vmem:[%s3 + $0x298] sm:$0xff]
    %v239 = vld [vmem:[%s3 + $0x2a0] sm:$0xff]
    %v240 = vld [vmem:[%s3 + $0x2a8] sm:$0xff]
    %v241 = vld [vmem:[%s3 + $0x2b0] sm:$0xff]
    %v242 = vld [vmem:[%s3 + $0x2b8] sm:$0xff]
    %v243 = vld [vmem:[%s3 + $0x2c0] sm:$0xff]
    %v244 = vld [vmem:[%s3 + $0x2c8] sm:$0xff]
    %v245 = vld [vmem:[%s3 + $0x2d0] sm:$0xff]
    %v246 = vld [vmem:[%s3 + $0x2d8] sm:$0xff]
    %v247 = vld [vmem:[%s3 + $0x2e0] sm:$0xff]
    %v248 = vld [vmem:[%s3 + $0x2e8] sm:$0xff]
    %v249 = vld [vmem:[%s3 + $0x2f0] sm:$0xff]
    %v250 = vld [vmem:[%s3 + $0x2f8] sm:$0xff]
    %v251 = vld [vmem:[%s3 + $0x300] sm:$0xff]
    %v252 = vld [vmem:[%s3 + $0x308] sm:$0xff]
    %v253 = vld [vmem:[%s3 + $0x310] sm:$0xff]
    %v254 = vld [vmem:[%s3 + $0x318] sm:$0xff]
    %v255 = vld [vmem:[%s3 + $0x320] sm:$0xff]
    %v256 = vld [vmem:[%s3 + $0x328] sm:$0xff]
    %v257 = vld [vmem:[%s3 + $0x330] sm:$0xff]
    %v258 = vld [vmem:[%s3 + $0x338] sm:$0xff]
    %v259 = vld [vmem:[%s3 + $0x340] sm:$0xff]
    %v260 = vld [vmem:[%s3 + $0x348] sm:$0xff]
    %v261 = vld [vmem:[%s3 + $0x350] sm:$0xff]
    %v262 = vld [vmem:[%s3 + $0x358] sm:$0xff]
    %v263 = vld [vmem:[%s3 + $0x360] sm:$0xff]
    %v264 = vld [vmem:[%s3 + $0x368] sm:$0xff]
    %v265 = vld [vmem:[%s3 + $0x370] sm:$0xff]
    %v266 = vld [vmem:[%s3 + $0x378] sm:$0xff]
    %v267 = vld [vmem:[%s3 + $0x380] sm:$0xff]
    %v268 = vld [vmem:[%s3 + $0x388] sm:$0xff]
    %v269 = vld [vmem:[%s3 + $0x390] sm:$0xff]
    %v270 = vld [vmem:[%s3 + $0x398] sm:$0xff]
    %v271 = vld [vmem:[%s3 + $0x3a0] sm:$0xff]
    %v272 = vld [vmem:[%s3 + $0x3a8] sm:$0xff]
    %v273 = vld [vmem:[%s3 + $0x3b0] sm:$0xff]
    %v274 = vld [vmem:[%s3 + $0x3b8] sm:$0xff]
    %v275 = vld [vmem:[%s3 + $0x3c0] sm:$0xff]
    %v276 = vld [vmem:[%s3 + $0x3c8] sm:$0xff]
    %v277 = vld [vmem:[%s3 + $0x3d0] sm:$0xff]
    %v278 = vld [vmem:[%s3 + $0x3d8] sm:$0xff]
    %v279 = vld [vmem:[%s3 + $0x3e0] sm:$0xff]
    %v280 = vld [vmem:[%s3 + $0x3e8] sm:$0xff]
    %v281 = vld [vmem:[%s3 + $0x3f0] sm:$0xff]
    %v282 = vld [vmem:[%s3 + $0x3f8] sm:$0xff]
    %v283 = vld [vmem:[%s3 + $0x400] sm:$0xff]
    %v284 = vld [vmem:[%s3 + $0x408] sm:$0xff]
    %v285 = vld [vmem:[%s3 + $0x410] sm:$0xff]
    %v286 = vld [vmem:[%s3 + $0x418] sm:$0xff]
    %v287 = vld [vmem:[%s3 + $0x420] sm:$0xff]
    %v288 = vld [vmem:[%s3 + $0x428] sm:$0xff]
    %v289 = vld [vmem:[%s3 + $0x430] sm:$0xff]
    %v290 = vld [vmem:[%s3 + $0x438] sm:$0xff]
    %v291 = vld [vmem:[%s3 + $0x440] sm:$0xff]
    %v292 = vld [vmem:[%s3 + $0x448] sm:$0xff]
    %v293 = vld [vmem:[%s3 + $0x450] sm:$0xff]
    %v294 = vld [vmem:[%s3 + $0x458] sm:$0xff]
    %v295 = vld [vmem:[%s3 + $0x460] sm:$0xff]
    %v296 = vld [vmem:[%s3 + $0x468] sm:$0xff]
    %v297 = vld [vmem:[%s3 + $0x470] sm:$0xff]
    %v298 = vld [vmem:[%s3 + $0x478] sm:$0xff]
    %v299 = vld [vmem:[%s2] sm:$0x1]
    %v300 = vld [vmem:[%s4] sm:$0x3]
    %v309 = vunpack.c.l.b16 %v91
    %v310 = vunpack.c.l.b16 %v92
    %v311 = vunpack.c.l.b16 %v93
    %v312 = vunpack.c.l.b16 %v94
    %v313 = vunpack.c.l.b16 %v95
    %v314 = vunpack.c.l.b16 %v96
    %v315 = vunpack.c.l.b16 %v97
    %v316 = vunpack.c.l.b16 %v98
    %v317 = vpack.c.b16 %v310, %v309
    %v318 = vpack.c.b16 %v312, %v311
    %v319 = vpack.c.b16 %v314, %v313
    %v320 = vpack.c.b16 %v316, %v315
    %vm325 = vcmask 523264
    %v327 = vsel %vm325, %v59, 0
    %329 = vmatprep.subr.bf16.mxu0 0
    %330 = vmatpush1.bf16.msra.mxu0 %v317
    %331 = vmatprep.subr.bf16.mxu0 0
    %332 = vmatpush1.bf16.msra.mxu0 %v318
    %333 = vmatprep.subr.bf16.mxu0 0
    %334 = vmatpush1.bf16.msra.mxu0 %v319
    %335 = vmatprep.subr.bf16.mxu0 0
    %336 = vmatpush1.bf16.msra.mxu0 %v320
    %337 = vmatprep.subr.bf16.mxu0 0
    %338 = vmatpush1.bf16.msra.mxu0 0
    %339 = vmatprep.subr.bf16.mxu0 0
    %340 = vmatpush1.bf16.msra.mxu0 0
    %341 = vmatprep.subr.bf16.mxu0 0
    %342 = vmatpush1.bf16.msra.mxu0 0
    %343 = vmatprep.subr.bf16.mxu0 0
    %344 = vmatpush1.bf16.msra.mxu0 0
    %345 = vmatprep.subr.bf16.mxu0 0
    %346 = vmatpush1.bf16.msra.mxu0 0
    %347 = vmatprep.subr.bf16.mxu0 0
    %348 = vmatpush1.bf16.msra.mxu0 0
    %349 = vmatprep.subr.bf16.mxu0 0
    %350 = vmatpush1.bf16.msra.mxu0 0
    %351 = vmatprep.subr.bf16.mxu0 0
    %352 = vmatpush1.bf16.msra.mxu0 0
    %353 = vmatprep.subr.bf16.mxu0 0
    %354 = vmatpush1.bf16.msra.mxu0 0
    %355 = vmatprep.subr.bf16.mxu0 0
    %356 = vmatpush1.bf16.msra.mxu0 0
    %357 = vmatprep.subr.bf16.mxu0 0
    %358 = vmatpush1.bf16.msra.mxu0 0
    %359 = vmatprep.subr.bf16.mxu0 0
    %360 = vmatpush1.bf16.msra.mxu0 0
    %361 = vmatprep.mubr.bf16.mxu0 0
    %362 = vmatmul.mubr.bf16.gmra.mrb[0].mxu0 %v327
    %v363 = vpop.f32.mrb[0].mxu0
    %v364 = vadd.f32 0.0, %v363
    %v365 = vpop.f32.mrb[0].mxu0
    %v366 = vpop.f32.mrb[0].mxu0
    %v367 = vpop.f32.mrb[0].mxu0
    %368 = vdwg.mxu0
    %v377 = vunpack.c.l.b16 %v83
    %v378 = vunpack.c.l.b16 %v84
    %v379 = vunpack.c.l.b16 %v85
    %v380 = vunpack.c.l.b16 %v86
    %v381 = vunpack.c.l.b16 %v87
    %v382 = vunpack.c.l.b16 %v88
    %v383 = vunpack.c.l.b16 %v89
    %v384 = vunpack.c.l.b16 %v90
    %v385 = vpack.c.b16 %v378, %v377
    %v386 = vpack.c.b16 %v380, %v379
    %v387 = vpack.c.b16 %v382, %v381
    %v388 = vpack.c.b16 %v384, %v383
    %v394 = vsel %vm325, %v58, 0
    %396 = vmatprep.subr.bf16.mxu0 0
    %397 = vmatpush1.bf16.msra.mxu0 %v385
    %398 = vmatprep.subr.bf16.mxu0 0
    %399 = vmatpush1.bf16.msra.mxu0 %v386
    %400 = vmatprep.subr.bf16.mxu0 0
    %401 = vmatpush1.bf16.msra.mxu0 %v387
    %402 = vmatprep.subr.bf16.mxu0 0
    %403 = vmatpush1.bf16.msra.mxu0 %v388
    %404 = vmatprep.subr.bf16.mxu0 0
    %405 = vmatpush1.bf16.msra.mxu0 0
    %406 = vmatprep.subr.bf16.mxu0 0
    %407 = vmatpush1.bf16.msra.mxu0 0
    %408 = vmatprep.subr.bf16.mxu0 0
    %409 = vmatpush1.bf16.msra.mxu0 0
    %410 = vmatprep.subr.bf16.mxu0 0
    %411 = vmatpush1.bf16.msra.mxu0 0
    %412 = vmatprep.subr.bf16.mxu0 0
    %413 = vmatpush1.bf16.msra.mxu0 0
    %414 = vmatprep.subr.bf16.mxu0 0
    %415 = vmatpush1.bf16.msra.mxu0 0
    %416 = vmatprep.subr.bf16.mxu0 0
    %417 = vmatpush1.bf16.msra.mxu0 0
    %418 = vmatprep.subr.bf16.mxu0 0
    %419 = vmatpush1.bf16.msra.mxu0 0
    %420 = vmatprep.subr.bf16.mxu0 0
    %421 = vmatpush1.bf16.msra.mxu0 0
    %422 = vmatprep.subr.bf16.mxu0 0
    %423 = vmatpush1.bf16.msra.mxu0 0
    %424 = vmatprep.subr.bf16.mxu0 0
    %425 = vmatpush1.bf16.msra.mxu0 0
    %426 = vmatprep.subr.bf16.mxu0 0
    %427 = vmatpush1.bf16.msra.mxu0 0
    %428 = vmatprep.mubr.bf16.mxu0 0
    %429 = vmatmul.mubr.bf16.gmra.mrb[0].mxu0 %v394
    %v430 = vpop.f32.mrb[0].mxu0
    %v431 = vadd.f32 %v364, %v430
    %v432 = vpop.f32.mrb[0].mxu0
    %v433 = vpop.f32.mrb[0].mxu0
    %v434 = vpop.f32.mrb[0].mxu0
    %435 = vdwg.mxu0
    %v444 = vunpack.c.l.b16 %v99
    %v445 = vunpack.c.l.b16 %v100
    %v446 = vunpack.c.l.b16 %v101
    %v447 = vunpack.c.l.b16 %v102
    %v448 = vunpack.c.l.b16 %v103
    %v449 = vunpack.c.l.b16 %v104
    %v450 = vunpack.c.l.b16 %v105
    %v451 = vunpack.c.l.b16 %v106
    %v452 = vpack.c.b16 %v445, %v444
    %v453 = vpack.c.b16 %v447, %v446
    %v454 = vpack.c.b16 %v449, %v448
    %v455 = vpack.c.b16 %v451, %v450
    %v461 = vsel %vm325, %v60, 0
    %463 = vmatprep.subr.bf16.mxu0 0
    %464 = vmatpush1.bf16.msra.mxu0 %v452
    %465 = vmatprep.subr.bf16.mxu0 0
    %466 = vmatpush1.bf16.msra.mxu0 %v453
    %467 = vmatprep.subr.bf16.mxu0 0
    %468 = vmatpush1.bf16.msra.mxu0 %v454
    %469 = vmatprep.subr.bf16.mxu0 0
    %470 = vmatpush1.bf16.msra.mxu0 %v455
    %471 = vmatprep.subr.bf16.mxu0 0
    %472 = vmatpush1.bf16.msra.mxu0 0
    %473 = vmatprep.subr.bf16.mxu0 0
    %474 = vmatpush1.bf16.msra.mxu0 0
    %475 = vmatprep.subr.bf16.mxu0 0
    %476 = vmatpush1.bf16.msra.mxu0 0
    %477 = vmatprep.subr.bf16.mxu0 0
    %478 = vmatpush1.bf16.msra.mxu0 0
    %479 = vmatprep.subr.bf16.mxu0 0
    %480 = vmatpush1.bf16.msra.mxu0 0
    %481 = vmatprep.subr.bf16.mxu0 0
    %482 = vmatpush1.bf16.msra.mxu0 0
    %483 = vmatprep.subr.bf16.mxu0 0
    %484 = vmatpush1.bf16.msra.mxu0 0
    %485 = vmatprep.subr.bf16.mxu0 0
    %486 = vmatpush1.bf16.msra.mxu0 0
    %487 = vmatprep.subr.bf16.mxu0 0
    %488 = vmatpush1.bf16.msra.mxu0 0
    %489 = vmatprep.subr.bf16.mxu0 0
    %490 = vmatpush1.bf16.msra.mxu0 0
    %491 = vmatprep.subr.bf16.mxu0 0
    %492 = vmatpush1.bf16.msra.mxu0 0
    %493 = vmatprep.subr.bf16.mxu0 0
    %494 = vmatpush1.bf16.msra.mxu0 0
    %495 = vmatprep.mubr.bf16.mxu0 0
    %496 = vmatmul.mubr.bf16.gmra.mrb[0].mxu0 %v461
    %v497 = vpop.f32.mrb[0].mxu0
    %v498 = vadd.f32 0.0, %v497
    %v499 = vpop.f32.mrb[0].mxu0
    %v500 = vpop.f32.mrb[0].mxu0
    %v501 = vpop.f32.mrb[0].mxu0
    %502 = vdwg.mxu0
    %v503 = vadd.f32 %v431, %v498
    %v512 = vunpack.c.l.b16 %v107
    %v513 = vunpack.c.l.b16 %v108
    %v514 = vunpack.c.l.b16 %v109
    %v515 = vunpack.c.l.b16 %v110
    %v516 = vunpack.c.l.b16 %v111
    %v517 = vunpack.c.l.b16 %v112
    %v518 = vunpack.c.l.b16 %v113
    %v519 = vunpack.c.l.b16 %v114
    %v520 = vpack.c.b16 %v513, %v512
    %v521 = vpack.c.b16 %v515, %v514
    %v522 = vpack.c.b16 %v517, %v516
    %v523 = vpack.c.b16 %v519, %v518
    %v529 = vsel %vm325, %v63, 0
    %531 = vmatprep.subr.bf16.mxu0 0
    %532 = vmatpush1.bf16.msra.mxu0 %v520
    %533 = vmatprep.subr.bf16.mxu0 0
    %534 = vmatpush1.bf16.msra.mxu0 %v521
    %535 = vmatprep.subr.bf16.mxu0 0
    %536 = vmatpush1.bf16.msra.mxu0 %v522
    %537 = vmatprep.subr.bf16.mxu0 0
    %538 = vmatpush1.bf16.msra.mxu0 %v523
    %539 = vmatprep.subr.bf16.mxu0 0
    %540 = vmatpush1.bf16.msra.mxu0 0
    %541 = vmatprep.subr.bf16.mxu0 0
    %542 = vmatpush1.bf16.msra.mxu0 0
    %543 = vmatprep.subr.bf16.mxu0 0
    %544 = vmatpush1.bf16.msra.mxu0 0
    %545 = vmatprep.subr.bf16.mxu0 0
    %546 = vmatpush1.bf16.msra.mxu0 0
    %547 = vmatprep.subr.bf16.mxu0 0
    %548 = vmatpush1.bf16.msra.mxu0 0
    %549 = vmatprep.subr.bf16.mxu0 0
    %550 = vmatpush1.bf16.msra.mxu0 0
    %551 = vmatprep.subr.bf16.mxu0 0
    %552 = vmatpush1.bf16.msra.mxu0 0
    %553 = vmatprep.subr.bf16.mxu0 0
    %554 = vmatpush1.bf16.msra.mxu0 0
    %555 = vmatprep.subr.bf16.mxu0 0
    %556 = vmatpush1.bf16.msra.mxu0 0
    %557 = vmatprep.subr.bf16.mxu0 0
    %558 = vmatpush1.bf16.msra.mxu0 0
    %559 = vmatprep.subr.bf16.mxu0 0
    %560 = vmatpush1.bf16.msra.mxu0 0
    %561 = vmatprep.subr.bf16.mxu0 0
    %562 = vmatpush1.bf16.msra.mxu0 0
    %563 = vmatprep.mubr.bf16.mxu0 0
    %564 = vmatmul.mubr.bf16.gmra.mrb[0].mxu0 %v529
    %v565 = vpop.f32.mrb[0].mxu0
    %v566 = vadd.f32 0.0, %v565
    %v567 = vpop.f32.mrb[0].mxu0
    %v568 = vpop.f32.mrb[0].mxu0
    %v569 = vpop.f32.mrb[0].mxu0
    %570 = vdwg.mxu0
    %v571 = vadd.f32 %v503, %v566
    %v580 = vunpack.c.l.b16 %v115
    %v581 = vunpack.c.l.b16 %v116
    %v582 = vunpack.c.l.b16 %v117
    %v583 = vunpack.c.l.b16 %v118
    %v584 = vunpack.c.l.b16 %v119
    %v585 = vunpack.c.l.b16 %v120
    %v586 = vunpack.c.l.b16 %v121
    %v587 = vunpack.c.l.b16 %v122
    %v588 = vpack.c.b16 %v581, %v580
    %v589 = vpack.c.b16 %v583, %v582
    %v590 = vpack.c.b16 %v585, %v584
    %v591 = vpack.c.b16 %v587, %v586
    %v597 = vsel %vm325, %v64, 0
    %599 = vmatprep.subr.bf16.mxu0 0
    %600 = vmatpush1.bf16.msra.mxu0 %v588
    %601 = vmatprep.subr.bf16.mxu0 0
    %602 = vmatpush1.bf16.msra.mxu0 %v589
    %603 = vmatprep.subr.bf16.mxu0 0
    %604 = vmatpush1.bf16.msra.mxu0 %v590
    %605 = vmatprep.subr.bf16.mxu0 0
    %606 = vmatpush1.bf16.msra.mxu0 %v591
    %607 = vmatprep.subr.bf16.mxu0 0
    %608 = vmatpush1.bf16.msra.mxu0 0
    %609 = vmatprep.subr.bf16.mxu0 0
    %610 = vmatpush1.bf16.msra.mxu0 0
    %611 = vmatprep.subr.bf16.mxu0 0
    %612 = vmatpush1.bf16.msra.mxu0 0
    %613 = vmatprep.subr.bf16.mxu0 0
    %614 = vmatpush1.bf16.msra.mxu0 0
    %615 = vmatprep.subr.bf16.mxu0 0
    %616 = vmatpush1.bf16.msra.mxu0 0
    %617 = vmatprep.subr.bf16.mxu0 0
    %618 = vmatpush1.bf16.msra.mxu0 0
    %619 = vmatprep.subr.bf16.mxu0 0
    %620 = vmatpush1.bf16.msra.mxu0 0
    %621 = vmatprep.subr.bf16.mxu0 0
    %622 = vmatpush1.bf16.msra.mxu0 0
    %623 = vmatprep.subr.bf16.mxu0 0
    %624 = vmatpush1.bf16.msra.mxu0 0
    %625 = vmatprep.subr.bf16.mxu0 0
    %626 = vmatpush1.bf16.msra.mxu0 0
    %627 = vmatprep.subr.bf16.mxu0 0
    %628 = vmatpush1.bf16.msra.mxu0 0
    %629 = vmatprep.subr.bf16.mxu0 0
    %630 = vmatpush1.bf16.msra.mxu0 0
    %631 = vmatprep.mubr.bf16.mxu0 0
    %632 = vmatmul.mubr.bf16.gmra.mrb[0].mxu0 %v597
    %v633 = vpop.f32.mrb[0].mxu0
    %v634 = vadd.f32 0.0, %v633
    %v635 = vpop.f32.mrb[0].mxu0
    %v636 = vpop.f32.mrb[0].mxu0
    %v637 = vpop.f32.mrb[0].mxu0
    %638 = vdwg.mxu0
    %v639 = vadd.f32 %v571, %v634
    %v648 = vunpack.c.l.b16 %v123
    %v649 = vunpack.c.l.b16 %v124
    %v650 = vunpack.c.l.b16 %v125
    %v651 = vunpack.c.l.b16 %v126
    %v652 = vunpack.c.l.b16 %v127
    %v653 = vunpack.c.l.b16 %v128
    %v654 = vunpack.c.l.b16 %v129
    %v655 = vunpack.c.l.b16 %v130
    %v656 = vpack.c.b16 %v649, %v648
    %v657 = vpack.c.b16 %v651, %v650
    %v658 = vpack.c.b16 %v653, %v652
    %v659 = vpack.c.b16 %v655, %v654
    %v665 = vsel %vm325, %v65, 0
    %667 = vmatprep.subr.bf16.mxu0 0
    %668 = vmatpush1.bf16.msra.mxu0 %v656
    %669 = vmatprep.subr.bf16.mxu0 0
    %670 = vmatpush1.bf16.msra.mxu0 %v657
    %671 = vmatprep.subr.bf16.mxu0 0
    %672 = vmatpush1.bf16.msra.mxu0 %v658
    %673 = vmatprep.subr.bf16.mxu0 0
    %674 = vmatpush1.bf16.msra.mxu0 %v659
    %675 = vmatprep.subr.bf16.mxu0 0
    %676 = vmatpush1.bf16.msra.mxu0 0
    %677 = vmatprep.subr.bf16.mxu0 0
    %678 = vmatpush1.bf16.msra.mxu0 0
    %679 = vmatprep.subr.bf16.mxu0 0
    %680 = vmatpush1.bf16.msra.mxu0 0
    %681 = vmatprep.subr.bf16.mxu0 0
    %682 = vmatpush1.bf16.msra.mxu0 0
    %683 = vmatprep.subr.bf16.mxu0 0
    %684 = vmatpush1.bf16.msra.mxu0 0
    %685 = vmatprep.subr.bf16.mxu0 0
    %686 = vmatpush1.bf16.msra.mxu0 0
    %687 = vmatprep.subr.bf16.mxu0 0
    %688 = vmatpush1.bf16.msra.mxu0 0
    %689 = vmatprep.subr.bf16.mxu0 0
    %690 = vmatpush1.bf16.msra.mxu0 0
    %691 = vmatprep.subr.bf16.mxu0 0
    %692 = vmatpush1.bf16.msra.mxu0 0
    %693 = vmatprep.subr.bf16.mxu0 0
    %694 = vmatpush1.bf16.msra.mxu0 0
    %695 = vmatprep.subr.bf16.mxu0 0
    %696 = vmatpush1.bf16.msra.mxu0 0
    %697 = vmatprep.subr.bf16.mxu0 0
    %698 = vmatpush1.bf16.msra.mxu0 0
    %699 = vmatprep.mubr.bf16.mxu0 0
    %700 = vmatmul.mubr.bf16.gmra.mrb[0].mxu0 %v665
    %v701 = vpop.f32.mrb[0].mxu0
    %v702 = vadd.f32 0.0, %v701
    %v703 = vpop.f32.mrb[0].mxu0
    %v704 = vpop.f32.mrb[0].mxu0
    %v705 = vpop.f32.mrb[0].mxu0
    %706 = vdwg.mxu0
    %v707 = vadd.f32 %v639, %v702
    %v716 = vunpack.c.l.b16 %v131
    %v717 = vunpack.c.l.b16 %v132
    %v718 = vunpack.c.l.b16 %v133
    %v719 = vunpack.c.l.b16 %v134
    %v720 = vunpack.c.l.b16 %v135
    %v721 = vunpack.c.l.b16 %v136
    %v722 = vunpack.c.l.b16 %v137
    %v723 = vunpack.c.l.b16 %v138
    %v724 = vpack.c.b16 %v717, %v716
    %v725 = vpack.c.b16 %v719, %v718
    %v726 = vpack.c.b16 %v721, %v720
    %v727 = vpack.c.b16 %v723, %v722
    %v733 = vsel %vm325, %v68, 0
    %735 = vmatprep.subr.bf16.mxu0 0
    %736 = vmatpush1.bf16.msra.mxu0 %v724
    %737 = vmatprep.subr.bf16.mxu0 0
    %738 = vmatpush1.bf16.msra.mxu0 %v725
    %739 = vmatprep.subr.bf16.mxu0 0
    %740 = vmatpush1.bf16.msra.mxu0 %v726
    %741 = vmatprep.subr.bf16.mxu0 0
    %742 = vmatpush1.bf16.msra.mxu0 %v727
    %743 = vmatprep.subr.bf16.mxu0 0
    %744 = vmatpush1.bf16.msra.mxu0 0
    %745 = vmatprep.subr.bf16.mxu0 0
    %746 = vmatpush1.bf16.msra.mxu0 0
    %747 = vmatprep.subr.bf16.mxu0 0
    %748 = vmatpush1.bf16.msra.mxu0 0
    %749 = vmatprep.subr.bf16.mxu0 0
    %750 = vmatpush1.bf16.msra.mxu0 0
    %751 = vmatprep.subr.bf16.mxu0 0
    %752 = vmatpush1.bf16.msra.mxu0 0
    %753 = vmatprep.subr.bf16.mxu0 0
    %754 = vmatpush1.bf16.msra.mxu0 0
    %755 = vmatprep.subr.bf16.mxu0 0
    %756 = vmatpush1.bf16.msra.mxu0 0
    %757 = vmatprep.subr.bf16.mxu0 0
    %758 = vmatpush1.bf16.msra.mxu0 0
    %759 = vmatprep.subr.bf16.mxu0 0
    %760 = vmatpush1.bf16.msra.mxu0 0
    %761 = vmatprep.subr.bf16.mxu0 0
    %762 = vmatpush1.bf16.msra.mxu0 0
    %763 = vmatprep.subr.bf16.mxu0 0
    %764 = vmatpush1.bf16.msra.mxu0 0
    %765 = vmatprep.subr.bf16.mxu0 0
    %766 = vmatpush1.bf16.msra.mxu0 0
    %767 = vmatprep.mubr.bf16.mxu0 0
    %768 = vmatmul.mubr.bf16.gmra.mrb[0].mxu0 %v733
    %v769 = vpop.f32.mrb[0].mxu0
    %v770 = vadd.f32 0.0, %v769
    %v771 = vpop.f32.mrb[0].mxu0
    %v772 = vpop.f32.mrb[0].mxu0
    %v773 = vpop.f32.mrb[0].mxu0
    %774 = vdwg.mxu0
    %v775 = vadd.f32 %v707, %v770
    %v784 = vunpack.c.l.b16 %v139
    %v785 = vunpack.c.l.b16 %v140
    %v786 = vunpack.c.l.b16 %v141
    %v787 = vunpack.c.l.b16 %v142
    %v788 = vunpack.c.l.b16 %v143
    %v789 = vunpack.c.l.b16 %v144
    %v790 = vunpack.c.l.b16 %v145
    %v791 = vunpack.c.l.b16 %v146
    %v792 = vpack.c.b16 %v785, %v784
    %v793 = vpack.c.b16 %v787, %v786
    %v794 = vpack.c.b16 %v789, %v788
    %v795 = vpack.c.b16 %v791, %v790
    %v801 = vsel %vm325, %v69, 0
    %803 = vmatprep.subr.bf16.mxu0 0
    %804 = vmatpush1.bf16.msra.mxu0 %v792
    %805 = vmatprep.subr.bf16.mxu0 0
    %806 = vmatpush1.bf16.msra.mxu0 %v793
    %807 = vmatprep.subr.bf16.mxu0 0
    %808 = vmatpush1.bf16.msra.mxu0 %v794
    %809 = vmatprep.subr.bf16.mxu0 0
    %810 = vmatpush1.bf16.msra.mxu0 %v795
    %811 = vmatprep.subr.bf16.mxu0 0
    %812 = vmatpush1.bf16.msra.mxu0 0
    %813 = vmatprep.subr.bf16.mxu0 0
    %814 = vmatpush1.bf16.msra.mxu0 0
    %815 = vmatprep.subr.bf16.mxu0 0
    %816 = vmatpush1.bf16.msra.mxu0 0
    %817 = vmatprep.subr.bf16.mxu0 0
    %818 = vmatpush1.bf16.msra.mxu0 0
    %819 = vmatprep.subr.bf16.mxu0 0
    %820 = vmatpush1.bf16.msra.mxu0 0
    %821 = vmatprep.subr.bf16.mxu0 0
    %822 = vmatpush1.bf16.msra.mxu0 0
    %823 = vmatprep.subr.bf16.mxu0 0
    %824 = vmatpush1.bf16.msra.mxu0 0
    %825 = vmatprep.subr.bf16.mxu0 0
    %826 = vmatpush1.bf16.msra.mxu0 0
    %827 = vmatprep.subr.bf16.mxu0 0
    %828 = vmatpush1.bf16.msra.mxu0 0
    %829 = vmatprep.subr.bf16.mxu0 0
    %830 = vmatpush1.bf16.msra.mxu0 0
    %831 = vmatprep.subr.bf16.mxu0 0
    %832 = vmatpush1.bf16.msra.mxu0 0
    %833 = vmatprep.subr.bf16.mxu0 0
    %834 = vmatpush1.bf16.msra.mxu0 0
    %835 = vmatprep.mubr.bf16.mxu0 0
    %836 = vmatmul.mubr.bf16.gmra.mrb[0].mxu0 %v801
    %v837 = vpop.f32.mrb[0].mxu0
    %v838 = vadd.f32 0.0, %v837
    %v839 = vpop.f32.mrb[0].mxu0
    %v840 = vpop.f32.mrb[0].mxu0
    %v841 = vpop.f32.mrb[0].mxu0
    %842 = vdwg.mxu0
    %v843 = vadd.f32 %v775, %v838
    %v852 = vunpack.c.l.b16 %v147
    %v853 = vunpack.c.l.b16 %v148
    %v854 = vunpack.c.l.b16 %v149
    %v855 = vunpack.c.l.b16 %v150
    %v856 = vunpack.c.l.b16 %v151
    %v857 = vunpack.c.l.b16 %v152
    %v858 = vunpack.c.l.b16 %v153
    %v859 = vunpack.c.l.b16 %v154
    %v860 = vpack.c.b16 %v853, %v852
    %v861 = vpack.c.b16 %v855, %v854
    %v862 = vpack.c.b16 %v857, %v856
    %v863 = vpack.c.b16 %v859, %v858
    %v869 = vsel %vm325, %v70, 0
    %871 = vmatprep.subr.bf16.mxu0 0
    %872 = vmatpush1.bf16.msra.mxu0 %v860
    %873 = vmatprep.subr.bf16.mxu0 0
    %874 = vmatpush1.bf16.msra.mxu0 %v861
    %875 = vmatprep.subr.bf16.mxu0 0
    %876 = vmatpush1.bf16.msra.mxu0 %v862
    %877 = vmatprep.subr.bf16.mxu0 0
    %878 = vmatpush1.bf16.msra.mxu0 %v863
    %879 = vmatprep.subr.bf16.mxu0 0
    %880 = vmatpush1.bf16.msra.mxu0 0
    %881 = vmatprep.subr.bf16.mxu0 0
    %882 = vmatpush1.bf16.msra.mxu0 0
    %883 = vmatprep.subr.bf16.mxu0 0
    %884 = vmatpush1.bf16.msra.mxu0 0
    %885 = vmatprep.subr.bf16.mxu0 0
    %886 = vmatpush1.bf16.msra.mxu0 0
    %887 = vmatprep.subr.bf16.mxu0 0
    %888 = vmatpush1.bf16.msra.mxu0 0
    %889 = vmatprep.subr.bf16.mxu0 0
    %890 = vmatpush1.bf16.msra.mxu0 0
    %891 = vmatprep.subr.bf16.mxu0 0
    %892 = vmatpush1.bf16.msra.mxu0 0
    %893 = vmatprep.subr.bf16.mxu0 0
    %894 = vmatpush1.bf16.msra.mxu0 0
    %895 = vmatprep.subr.bf16.mxu0 0
    %896 = vmatpush1.bf16.msra.mxu0 0
    %897 = vmatprep.subr.bf16.mxu0 0
    %898 = vmatpush1.bf16.msra.mxu0 0
    %899 = vmatprep.subr.bf16.mxu0 0
    %900 = vmatpush1.bf16.msra.mxu0 0
    %901 = vmatprep.subr.bf16.mxu0 0
    %902 = vmatpush1.bf16.msra.mxu0 0
    %903 = vmatprep.mubr.bf16.mxu0 0
    %904 = vmatmul.mubr.bf16.gmra.mrb[0].mxu0 %v869
    %v905 = vpop.f32.mrb[0].mxu0
    %v906 = vadd.f32 0.0, %v905
    %v907 = vpop.f32.mrb[0].mxu0
    %v908 = vpop.f32.mrb[0].mxu0
    %v909 = vpop.f32.mrb[0].mxu0
    %910 = vdwg.mxu0
    %v911 = vadd.f32 %v843, %v906
    %v913 = vlaneseq
    %v914 = vshrl.u32 %v913, 7
    %v915 = vsub.s32 0, %v914
    %v916 = vrot.slane %v299, %v915
    %v918 = vadd.f32 %v911, %v916
    %v919 = vmax.f32 %v918, 0.0
    %v920 = vpack.c.bf16 %v919, %v919
    %921 = vmatprep.subr.bf16.mxu0 0
    %922 = vmatpush1.bf16.msra.mxu0 %v317
    %923 = vmatprep.subr.bf16.mxu0 0
    %924 = vmatpush1.bf16.msra.mxu0 %v318
    %925 = vmatprep.subr.bf16.mxu0 0
    %926 = vmatpush1.bf16.msra.mxu0 %v319
    %927 = vmatprep.subr.bf16.mxu0 0
    %928 = vmatpush1.bf16.msra.mxu0 %v320
    %929 = vmatprep.subr.bf16.mxu0 0
    %930 = vmatpush1.bf16.msra.mxu0 0
    %931 = vmatprep.subr.bf16.mxu0 0
    %932 = vmatpush1.bf16.msra.mxu0 0
    %933 = vmatprep.subr.bf16.mxu0 0
    %934 = vmatpush1.bf16.msra.mxu0 0
    %935 = vmatprep.subr.bf16.mxu0 0
    %936 = vmatpush1.bf16.msra.mxu0 0
    %937 = vmatprep.subr.bf16.mxu0 0
    %938 = vmatpush1.bf16.msra.mxu0 0
    %939 = vmatprep.subr.bf16.mxu0 0
    %940 = vmatpush1.bf16.msra.mxu0 0
    %941 = vmatprep.subr.bf16.mxu0 0
    %942 = vmatpush1.bf16.msra.mxu0 0
    %943 = vmatprep.subr.bf16.mxu0 0
    %944 = vmatpush1.bf16.msra.mxu0 0
    %945 = vmatprep.subr.bf16.mxu0 0
    %946 = vmatpush1.bf16.msra.mxu0 0
    %947 = vmatprep.subr.bf16.mxu0 0
    %948 = vmatpush1.bf16.msra.mxu0 0
    %949 = vmatprep.subr.bf16.mxu0 0
    %950 = vmatpush1.bf16.msra.mxu0 0
    %951 = vmatprep.subr.bf16.mxu0 0
    %952 = vmatpush1.bf16.msra.mxu0 0
    %953 = vmatprep.mubr.bf16.mxu0 0
    %954 = vmatmul.mubr.bf16.gmra.mrb[0].mxu0 %v461
    %v955 = vpop.f32.mrb[0].mxu0
    %v956 = vadd.f32 0.0, %v955
    %v957 = vpop.f32.mrb[0].mxu0
    %v958 = vpop.f32.mrb[0].mxu0
    %v959 = vpop.f32.mrb[0].mxu0
    %960 = vdwg.mxu0
    %961 = vmatprep.subr.bf16.mxu0 0
    %962 = vmatpush1.bf16.msra.mxu0 %v385
    %963 = vmatprep.subr.bf16.mxu0 0
    %964 = vmatpush1.bf16.msra.mxu0 %v386
    %965 = vmatprep.subr.bf16.mxu0 0
    %966 = vmatpush1.bf16.msra.mxu0 %v387
    %967 = vmatprep.subr.bf16.mxu0 0
    %968 = vmatpush1.bf16.msra.mxu0 %v388
    %969 = vmatprep.subr.bf16.mxu0 0
    %970 = vmatpush1.bf16.msra.mxu0 0
    %971 = vmatprep.subr.bf16.mxu0 0
    %972 = vmatpush1.bf16.msra.mxu0 0
    %973 = vmatprep.subr.bf16.mxu0 0
    %974 = vmatpush1.bf16.msra.mxu0 0
    %975 = vmatprep.subr.bf16.mxu0 0
    %976 = vmatpush1.bf16.msra.mxu0 0
    %977 = vmatprep.subr.bf16.mxu0 0
    %978 = vmatpush1.bf16.msra.mxu0 0
    %979 = vmatprep.subr.bf16.mxu0 0
    %980 = vmatpush1.bf16.msra.mxu0 0
    %981 = vmatprep.subr.bf16.mxu0 0
    %982 = vmatpush1.bf16.msra.mxu0 0
    %983 = vmatprep.subr.bf16.mxu0 0
    %984 = vmatpush1.bf16.msra.mxu0 0
    %985 = vmatprep.subr.bf16.mxu0 0
    %986 = vmatpush1.bf16.msra.mxu0 0
    %987 = vmatprep.subr.bf16.mxu0 0
    %988 = vmatpush1.bf16.msra.mxu0 0
    %989 = vmatprep.subr.bf16.mxu0 0
    %990 = vmatpush1.bf16.msra.mxu0 0
    %991 = vmatprep.subr.bf16.mxu0 0
    %992 = vmatpush1.bf16.msra.mxu0 0
    %993 = vmatprep.mubr.bf16.mxu0 0
    %994 = vmatmul.mubr.bf16.gmra.mrb[0].mxu0 %v327
    %v995 = vpop.f32.mrb[0].mxu0
    %v996 = vadd.f32 %v956, %v995
    %v997 = vpop.f32.mrb[0].mxu0
    %v998 = vpop.f32.mrb[0].mxu0
    %v999 = vpop.f32.mrb[0].mxu0
    %1000 = vdwg.mxu0
    %v1002 = vsel %vm325, %v61, 0
    %1004 = vmatprep.subr.bf16.mxu0 0
    %1005 = vmatpush1.bf16.msra.mxu0 %v452
    %1006 = vmatprep.subr.bf16.mxu0 0
    %1007 = vmatpush1.bf16.msra.mxu0 %v453
    %1008 = vmatprep.subr.bf16.mxu0 0
    %1009 = vmatpush1.bf16.msra.mxu0 %v454
    %1010 = vmatprep.subr.bf16.mxu0 0
    %1011 = vmatpush1.bf16.msra.mxu0 %v455
    %1012 = vmatprep.subr.bf16.mxu0 0
    %1013 = vmatpush1.bf16.msra.mxu0 0
    %1014 = vmatprep.subr.bf16.mxu0 0
    %1015 = vmatpush1.bf16.msra.mxu0 0
    %1016 = vmatprep.subr.bf16.mxu0 0
    %1017 = vmatpush1.bf16.msra.mxu0 0
    %1018 = vmatprep.subr.bf16.mxu0 0
    %1019 = vmatpush1.bf16.msra.mxu0 0
    %1020 = vmatprep.subr.bf16.mxu0 0
    %1021 = vmatpush1.bf16.msra.mxu0 0
    %1022 = vmatprep.subr.bf16.mxu0 0
    %1023 = vmatpush1.bf16.msra.mxu0 0
    %1024 = vmatprep.subr.bf16.mxu0 0
    %1025 = vmatpush1.bf16.msra.mxu0 0
    %1026 = vmatprep.subr.bf16.mxu0 0
    %1027 = vmatpush1.bf16.msra.mxu0 0
    %1028 = vmatprep.subr.bf16.mxu0 0
    %1029 = vmatpush1.bf16.msra.mxu0 0
    %1030 = vmatprep.subr.bf16.mxu0 0
    %1031 = vmatpush1.bf16.msra.mxu0 0
    %1032 = vmatprep.subr.bf16.mxu0 0
    %1033 = vmatpush1.bf16.msra.mxu0 0
    %1034 = vmatprep.subr.bf16.mxu0 0
    %1035 = vmatpush1.bf16.msra.mxu0 0
    %1036 = vmatprep.mubr.bf16.mxu0 0
    %1037 = vmatmul.mubr.bf16.gmra.mrb[0].mxu0 %v1002
    %v1038 = vpop.f32.mrb[0].mxu0
    %v1039 = vadd.f32 0.0, %v1038
    %v1040 = vpop.f32.mrb[0].mxu0
    %v1041 = vpop.f32.mrb[0].mxu0
    %v1042 = vpop.f32.mrb[0].mxu0
    %1043 = vdwg.mxu0
    %v1044 = vadd.f32 %v996, %v1039
    %1045 = vmatprep.subr.bf16.mxu0 0
    %1046 = vmatpush1.bf16.msra.mxu0 %v520
    %1047 = vmatprep.subr.bf16.mxu0 0
    %1048 = vmatpush1.bf16.msra.mxu0 %v521
    %1049 = vmatprep.subr.bf16.mxu0 0
    %1050 = vmatpush1.bf16.msra.mxu0 %v522
    %1051 = vmatprep.subr.bf16.mxu0 0
    %1052 = vmatpush1.bf16.msra.mxu0 %v523
    %1053 = vmatprep.subr.bf16.mxu0 0
    %1054 = vmatpush1.bf16.msra.mxu0 0
    %1055 = vmatprep.subr.bf16.mxu0 0
    %1056 = vmatpush1.bf16.msra.mxu0 0
    %1057 = vmatprep.subr.bf16.mxu0 0
    %1058 = vmatpush1.bf16.msra.mxu0 0
    %1059 = vmatprep.subr.bf16.mxu0 0
    %1060 = vmatpush1.bf16.msra.mxu0 0
    %1061 = vmatprep.subr.bf16.mxu0 0
    %1062 = vmatpush1.bf16.msra.mxu0 0
    %1063 = vmatprep.subr.bf16.mxu0 0
    %1064 = vmatpush1.bf16.msra.mxu0 0
    %1065 = vmatprep.subr.bf16.mxu0 0
    %1066 = vmatpush1.bf16.msra.mxu0 0
    %1067 = vmatprep.subr.bf16.mxu0 0
    %1068 = vmatpush1.bf16.msra.mxu0 0
    %1069 = vmatprep.subr.bf16.mxu0 0
    %1070 = vmatpush1.bf16.msra.mxu0 0
    %1071 = vmatprep.subr.bf16.mxu0 0
    %1072 = vmatpush1.bf16.msra.mxu0 0
    %1073 = vmatprep.subr.bf16.mxu0 0
    %1074 = vmatpush1.bf16.msra.mxu0 0
    %1075 = vmatprep.subr.bf16.mxu0 0
    %1076 = vmatpush1.bf16.msra.mxu0 0
    %1077 = vmatprep.mubr.bf16.mxu0 0
    %1078 = vmatmul.mubr.bf16.gmra.mrb[0].mxu0 %v597
    %v1079 = vpop.f32.mrb[0].mxu0
    %v1080 = vadd.f32 0.0, %v1079
    %v1081 = vpop.f32.mrb[0].mxu0
    %v1082 = vpop.f32.mrb[0].mxu0
    %v1083 = vpop.f32.mrb[0].mxu0
    %1084 = vdwg.mxu0
    %v1085 = vadd.f32 %v1044, %v1080
    %1086 = vmatprep.subr.bf16.mxu0 0
    %1087 = vmatpush1.bf16.msra.mxu0 %v588
    %1088 = vmatprep.subr.bf16.mxu0 0
    %1089 = vmatpush1.bf16.msra.mxu0 %v589
    %1090 = vmatprep.subr.bf16.mxu0 0
    %1091 = vmatpush1.bf16.msra.mxu0 %v590
    %1092 = vmatprep.subr.bf16.mxu0 0
    %1093 = vmatpush1.bf16.msra.mxu0 %v591
    %1094 = vmatprep.subr.bf16.mxu0 0
    %1095 = vmatpush1.bf16.msra.mxu0 0
    %1096 = vmatprep.subr.bf16.mxu0 0
    %1097 = vmatpush1.bf16.msra.mxu0 0
    %1098 = vmatprep.subr.bf16.mxu0 0
    %1099 = vmatpush1.bf16.msra.mxu0 0
    %1100 = vmatprep.subr.bf16.mxu0 0
    %1101 = vmatpush1.bf16.msra.mxu0 0
    %1102 = vmatprep.subr.bf16.mxu0 0
    %1103 = vmatpush1.bf16.msra.mxu0 0
    %1104 = vmatprep.subr.bf16.mxu0 0
    %1105 = vmatpush1.bf16.msra.mxu0 0
    %1106 = vmatprep.subr.bf16.mxu0 0
    %1107 = vmatpush1.bf16.msra.mxu0 0
    %1108 = vmatprep.subr.bf16.mxu0 0
    %1109 = vmatpush1.bf16.msra.mxu0 0
    %1110 = vmatprep.subr.bf16.mxu0 0
    %1111 = vmatpush1.bf16.msra.mxu0 0
    %1112 = vmatprep.subr.bf16.mxu0 0
    %1113 = vmatpush1.bf16.msra.mxu0 0
    %1114 = vmatprep.subr.bf16.mxu0 0
    %1115 = vmatpush1.bf16.msra.mxu0 0
    %1116 = vmatprep.subr.bf16.mxu0 0
    %1117 = vmatpush1.bf16.msra.mxu0 0
    %1118 = vmatprep.mubr.bf16.mxu0 0
    %1119 = vmatmul.mubr.bf16.gmra.mrb[0].mxu0 %v665
    %v1120 = vpop.f32.mrb[0].mxu0
    %v1121 = vadd.f32 0.0, %v1120
    %v1122 = vpop.f32.mrb[0].mxu0
    %v1123 = vpop.f32.mrb[0].mxu0
    %v1124 = vpop.f32.mrb[0].mxu0
    %1125 = vdwg.mxu0
    %v1126 = vadd.f32 %v1085, %v1121
    %v1128 = vsel %vm325, %v66, 0
    %1130 = vmatprep.subr.bf16.mxu0 0
    %1131 = vmatpush1.bf16.msra.mxu0 %v656
    %1132 = vmatprep.subr.bf16.mxu0 0
    %1133 = vmatpush1.bf16.msra.mxu0 %v657
    %1134 = vmatprep.subr.bf16.mxu0 0
    %1135 = vmatpush1.bf16.msra.mxu0 %v658
    %1136 = vmatprep.subr.bf16.mxu0 0
    %1137 = vmatpush1.bf16.msra.mxu0 %v659
    %1138 = vmatprep.subr.bf16.mxu0 0
    %1139 = vmatpush1.bf16.msra.mxu0 0
    %1140 = vmatprep.subr.bf16.mxu0 0
    %1141 = vmatpush1.bf16.msra.mxu0 0
    %1142 = vmatprep.subr.bf16.mxu0 0
    %1143 = vmatpush1.bf16.msra.mxu0 0
    %1144 = vmatprep.subr.bf16.mxu0 0
    %1145 = vmatpush1.bf16.msra.mxu0 0
    %1146 = vmatprep.subr.bf16.mxu0 0
    %1147 = vmatpush1.bf16.msra.mxu0 0
    %1148 = vmatprep.subr.bf16.mxu0 0
    %1149 = vmatpush1.bf16.msra.mxu0 0
    %1150 = vmatprep.subr.bf16.mxu0 0
    %1151 = vmatpush1.bf16.msra.mxu0 0
    %1152 = vmatprep.subr.bf16.mxu0 0
    %1153 = vmatpush1.bf16.msra.mxu0 0
    %1154 = vmatprep.subr.bf16.mxu0 0
    %1155 = vmatpush1.bf16.msra.mxu0 0
    %1156 = vmatprep.subr.bf16.mxu0 0
    %1157 = vmatpush1.bf16.msra.mxu0 0
    %1158 = vmatprep.subr.bf16.mxu0 0
    %1159 = vmatpush1.bf16.msra.mxu0 0
    %1160 = vmatprep.subr.bf16.mxu0 0
    %1161 = vmatpush1.bf16.msra.mxu0 0
    %1162 = vmatprep.mubr.bf16.mxu0 0
    %1163 = vmatmul.mubr.bf16.gmra.mrb[0].mxu0 %v1128
    %v1164 = vpop.f32.mrb[0].mxu0
    %v1165 = vadd.f32 0.0, %v1164
    %v1166 = vpop.f32.mrb[0].mxu0
    %v1167 = vpop.f32.mrb[0].mxu0
    %v1168 = vpop.f32.mrb[0].mxu0
    %1169 = vdwg.mxu0
    %v1170 = vadd.f32 %v1126, %v1165
    %1171 = vmatprep.subr.bf16.mxu0 0
    %1172 = vmatpush1.bf16.msra.mxu0 %v724
    %1173 = vmatprep.subr.bf16.mxu0 0
    %1174 = vmatpush1.bf16.msra.mxu0 %v725
    %1175 = vmatprep.subr.bf16.mxu0 0
    %1176 = vmatpush1.bf16.msra.mxu0 %v726
    %1177 = vmatprep.subr.bf16.mxu0 0
    %1178 = vmatpush1.bf16.msra.mxu0 %v727
    %1179 = vmatprep.subr.bf16.mxu0 0
    %1180 = vmatpush1.bf16.msra.mxu0 0
    %1181 = vmatprep.subr.bf16.mxu0 0
    %1182 = vmatpush1.bf16.msra.mxu0 0
    %1183 = vmatprep.subr.bf16.mxu0 0
    %1184 = vmatpush1.bf16.msra.mxu0 0
    %1185 = vmatprep.subr.bf16.mxu0 0
    %1186 = vmatpush1.bf16.msra.mxu0 0
    %1187 = vmatprep.subr.bf16.mxu0 0
    %1188 = vmatpush1.bf16.msra.mxu0 0
    %1189 = vmatprep.subr.bf16.mxu0 0
    %1190 = vmatpush1.bf16.msra.mxu0 0
    %1191 = vmatprep.subr.bf16.mxu0 0
    %1192 = vmatpush1.bf16.msra.mxu0 0
    %1193 = vmatprep.subr.bf16.mxu0 0
    %1194 = vmatpush1.bf16.msra.mxu0 0
    %1195 = vmatprep.subr.bf16.mxu0 0
    %1196 = vmatpush1.bf16.msra.mxu0 0
    %1197 = vmatprep.subr.bf16.mxu0 0
    %1198 = vmatpush1.bf16.msra.mxu0 0
    %1199 = vmatprep.subr.bf16.mxu0 0
    %1200 = vmatpush1.bf16.msra.mxu0 0
    %1201 = vmatprep.subr.bf16.mxu0 0
    %1202 = vmatpush1.bf16.msra.mxu0 0
    %1203 = vmatprep.mubr.bf16.mxu0 0
    %1204 = vmatmul.mubr.bf16.gmra.mrb[0].mxu0 %v801
    %v1205 = vpop.f32.mrb[0].mxu0
    %v1206 = vadd.f32 0.0, %v1205
    %v1207 = vpop.f32.mrb[0].mxu0
    %v1208 = vpop.f32.mrb[0].mxu0
    %v1209 = vpop.f32.mrb[0].mxu0
    %1210 = vdwg.mxu0
    %v1211 = vadd.f32 %v1170, %v1206
    %1212 = vmatprep.subr.bf16.mxu0 0
    %1213 = vmatpush1.bf16.msra.mxu0 %v792
    %1214 = vmatprep.subr.bf16.mxu0 0
    %1215 = vmatpush1.bf16.msra.mxu0 %v793
    %1216 = vmatprep.subr.bf16.mxu0 0
    %1217 = vmatpush1.bf16.msra.mxu0 %v794
    %1218 = vmatprep.subr.bf16.mxu0 0
    %1219 = vmatpush1.bf16.msra.mxu0 %v795
    %1220 = vmatprep.subr.bf16.mxu0 0
    %1221 = vmatpush1.bf16.msra.mxu0 0
    %1222 = vmatprep.subr.bf16.mxu0 0
    %1223 = vmatpush1.bf16.msra.mxu0 0
    %1224 = vmatprep.subr.bf16.mxu0 0
    %1225 = vmatpush1.bf16.msra.mxu0 0
    %1226 = vmatprep.subr.bf16.mxu0 0
    %1227 = vmatpush1.bf16.msra.mxu0 0
    %1228 = vmatprep.subr.bf16.mxu0 0
    %1229 = vmatpush1.bf16.msra.mxu0 0
    %1230 = vmatprep.subr.bf16.mxu0 0
    %1231 = vmatpush1.bf16.msra.mxu0 0
    %1232 = vmatprep.subr.bf16.mxu0 0
    %1233 = vmatpush1.bf16.msra.mxu0 0
    %1234 = vmatprep.subr.bf16.mxu0 0
    %1235 = vmatpush1.bf16.msra.mxu0 0
    %1236 = vmatprep.subr.bf16.mxu0 0
    %1237 = vmatpush1.bf16.msra.mxu0 0
    %1238 = vmatprep.subr.bf16.mxu0 0
    %1239 = vmatpush1.bf16.msra.mxu0 0
    %1240 = vmatprep.subr.bf16.mxu0 0
    %1241 = vmatpush1.bf16.msra.mxu0 0
    %1242 = vmatprep.subr.bf16.mxu0 0
    %1243 = vmatpush1.bf16.msra.mxu0 0
    %1244 = vmatprep.mubr.bf16.mxu0 0
    %1245 = vmatmul.mubr.bf16.gmra.mrb[0].mxu0 %v869
    %v1246 = vpop.f32.mrb[0].mxu0
    %v1247 = vadd.f32 0.0, %v1246
    %v1248 = vpop.f32.mrb[0].mxu0
    %v1249 = vpop.f32.mrb[0].mxu0
    %v1250 = vpop.f32.mrb[0].mxu0
    %1251 = vdwg.mxu0
    %v1252 = vadd.f32 %v1211, %v1247
    %v1254 = vsel %vm325, %v71, 0
    %1256 = vmatprep.subr.bf16.mxu0 0
    %1257 = vmatpush1.bf16.msra.mxu0 %v860
    %1258 = vmatprep.subr.bf16.mxu0 0
    %1259 = vmatpush1.bf16.msra.mxu0 %v861
    %1260 = vmatprep.subr.bf16.mxu0 0
    %1261 = vmatpush1.bf16.msra.mxu0 %v862
    %1262 = vmatprep.subr.bf16.mxu0 0
    %1263 = vmatpush1.bf16.msra.mxu0 %v863
    %1264 = vmatprep.subr.bf16.mxu0 0
    %1265 = vmatpush1.bf16.msra.mxu0 0
    %1266 = vmatprep.subr.bf16.mxu0 0
    %1267 = vmatpush1.bf16.msra.mxu0 0
    %1268 = vmatprep.subr.bf16.mxu0 0
    %1269 = vmatpush1.bf16.msra.mxu0 0
    %1270 = vmatprep.subr.bf16.mxu0 0
    %1271 = vmatpush1.bf16.msra.mxu0 0
    %1272 = vmatprep.subr.bf16.mxu0 0
    %1273 = vmatpush1.bf16.msra.mxu0 0
    %1274 = vmatprep.subr.bf16.mxu0 0
    %1275 = vmatpush1.bf16.msra.mxu0 0
    %1276 = vmatprep.subr.bf16.mxu0 0
    %1277 = vmatpush1.bf16.msra.mxu0 0
    %1278 = vmatprep.subr.bf16.mxu0 0
    %1279 = vmatpush1.bf16.msra.mxu0 0
    %1280 = vmatprep.subr.bf16.mxu0 0
    %1281 = vmatpush1.bf16.msra.mxu0 0
    %1282 = vmatprep.subr.bf16.mxu0 0
    %1283 = vmatpush1.bf16.msra.mxu0 0
    %1284 = vmatprep.subr.bf16.mxu0 0
    %1285 = vmatpush1.bf16.msra.mxu0 0
    %1286 = vmatprep.subr.bf16.mxu0 0
    %1287 = vmatpush1.bf16.msra.mxu0 0
    %1288 = vmatprep.mubr.bf16.mxu0 0
    %1289 = vmatmul.mubr.bf16.gmra.mrb[0].mxu0 %v1254
    %v1290 = vpop.f32.mrb[0].mxu0
    %v1291 = vadd.f32 0.0, %v1290
    %v1292 = vpop.f32.mrb[0].mxu0
    %v1293 = vpop.f32.mrb[0].mxu0
    %v1294 = vpop.f32.mrb[0].mxu0
    %1295 = vdwg.mxu0
    %v1296 = vadd.f32 %v1252, %v1291
    %v1297 = vadd.f32 %v1296, %v916
    %v1298 = vmax.f32 %v1297, 0.0
    %v1299 = vpack.c.bf16 %v1298, %v1298
    %v1316 = vunpack.c.l.b16 %v171
    %v1317 = vunpack.c.h.b16 %v171
    %v1318 = vunpack.c.l.b16 %v172
    %v1319 = vunpack.c.h.b16 %v172
    %v1320 = vunpack.c.l.b16 %v173
    %v1321 = vunpack.c.h.b16 %v173
    %v1322 = vunpack.c.l.b16 %v174
    %v1323 = vunpack.c.h.b16 %v174
    %v1324 = vunpack.c.l.b16 %v175
    %v1325 = vunpack.c.h.b16 %v175
    %v1326 = vunpack.c.l.b16 %v176
    %v1327 = vunpack.c.h.b16 %v176
    %v1328 = vunpack.c.l.b16 %v177
    %v1329 = vunpack.c.h.b16 %v177
    %v1330 = vunpack.c.l.b16 %v178
    %v1331 = vunpack.c.h.b16 %v178
    %v1332 = vunpack.c.l.b16 %v179
    %v1333 = vunpack.c.h.b16 %v179
    %v1334 = vunpack.c.l.b16 %v180
    %v1335 = vunpack.c.h.b16 %v180
    %v1336 = vunpack.c.l.b16 %v181
    %v1337 = vunpack.c.h.b16 %v181
    %v1338 = vunpack.c.l.b16 %v182
    %v1339 = vunpack.c.h.b16 %v182
    %v1340 = vunpack.c.l.b16 %v183
    %v1341 = vunpack.c.h.b16 %v183
    %v1342 = vunpack.c.l.b16 %v184
    %v1343 = vunpack.c.h.b16 %v184
    %v1344 = vunpack.c.l.b16 %v185
    %v1345 = vunpack.c.h.b16 %v185
    %v1346 = vunpack.c.l.b16 %v186
    %v1347 = vunpack.c.h.b16 %v186
    %v1348 = vpack.c.b16 %v1318, %v1316
    %v1349 = vpack.c.b16 %v1319, %v1317
    %v1350 = vpack.c.b16 %v1322, %v1320
    %v1351 = vpack.c.b16 %v1323, %v1321
    %v1352 = vpack.c.b16 %v1326, %v1324
    %v1353 = vpack.c.b16 %v1327, %v1325
    %v1354 = vpack.c.b16 %v1330, %v1328
    %v1355 = vpack.c.b16 %v1331, %v1329
    %v1356 = vpack.c.b16 %v1334, %v1332
    %v1357 = vpack.c.b16 %v1335, %v1333
    %v1358 = vpack.c.b16 %v1338, %v1336
    %v1359 = vpack.c.b16 %v1339, %v1337
    %v1360 = vpack.c.b16 %v1342, %v1340
    %v1361 = vpack.c.b16 %v1343, %v1341
    %v1362 = vpack.c.b16 %v1346, %v1344
    %v1363 = vpack.c.b16 %v1347, %v1345
    %1380 = vmatprep.subr.bf16.mxu0 %v1349
    %1381 = vmatpush1.bf16.msra.mxu0 %v1348
    %1382 = vmatprep.subr.bf16.mxu0 %v1351
    %1383 = vmatpush1.bf16.msra.mxu0 %v1350
    %1384 = vmatprep.subr.bf16.mxu0 %v1353
    %1385 = vmatpush1.bf16.msra.mxu0 %v1352
    %1386 = vmatprep.subr.bf16.mxu0 %v1355
    %1387 = vmatpush1.bf16.msra.mxu0 %v1354
    %1388 = vmatprep.subr.bf16.mxu0 %v1357
    %1389 = vmatpush1.bf16.msra.mxu0 %v1356
    %1390 = vmatprep.subr.bf16.mxu0 %v1359
    %1391 = vmatpush1.bf16.msra.mxu0 %v1358
    %1392 = vmatprep.subr.bf16.mxu0 %v1361
    %1393 = vmatpush1.bf16.msra.mxu0 %v1360
    %1394 = vmatprep.subr.bf16.mxu0 %v1363
    %1395 = vmatpush1.bf16.msra.mxu0 %v1362
    %1396 = vmatprep.subr.bf16.mxu0 0
    %1397 = vmatpush1.bf16.msra.mxu0 0
    %1398 = vmatprep.subr.bf16.mxu0 0
    %1399 = vmatpush1.bf16.msra.mxu0 0
    %1400 = vmatprep.subr.bf16.mxu0 0
    %1401 = vmatpush1.bf16.msra.mxu0 0
    %1402 = vmatprep.subr.bf16.mxu0 0
    %1403 = vmatpush1.bf16.msra.mxu0 0
    %1404 = vmatprep.subr.bf16.mxu0 0
    %1405 = vmatpush1.bf16.msra.mxu0 0
    %1406 = vmatprep.subr.bf16.mxu0 0
    %1407 = vmatpush1.bf16.msra.mxu0 0
    %1408 = vmatprep.subr.bf16.mxu0 0
    %1409 = vmatpush1.bf16.msra.mxu0 0
    %1410 = vmatprep.subr.bf16.mxu0 0
    %1411 = vmatpush1.bf16.msra.mxu0 0
    %1412 = vmatprep.mubr.bf16.mxu0 0
    %1413 = vmatmul.mubr.bf16.gmra.mrb[0].mxu0 %v1299
    %v1414 = vpop.f32.mrb[0].mxu0
    %v1415 = vadd.f32 0.0, %v1414
    %v1416 = vpop.f32.mrb[0].mxu0
    %v1417 = vadd.f32 0.0, %v1416
    %v1418 = vpop.f32.mrb[0].mxu0
    %v1419 = vpop.f32.mrb[0].mxu0
    %1420 = vdwg.mxu0
    %v1437 = vunpack.c.l.b16 %v155
    %v1438 = vunpack.c.h.b16 %v155
    %v1439 = vunpack.c.l.b16 %v156
    %v1440 = vunpack.c.h.b16 %v156
    %v1441 = vunpack.c.l.b16 %v157
    %v1442 = vunpack.c.h.b16 %v157
    %v1443 = vunpack.c.l.b16 %v158
    %v1444 = vunpack.c.h.b16 %v158
    %v1445 = vunpack.c.l.b16 %v159
    %v1446 = vunpack.c.h.b16 %v159
    %v1447 = vunpack.c.l.b16 %v160
    %v1448 = vunpack.c.h.b16 %v160
    %v1449 = vunpack.c.l.b16 %v161
    %v1450 = vunpack.c.h.b16 %v161
    %v1451 = vunpack.c.l.b16 %v162
    %v1452 = vunpack.c.h.b16 %v162
    %v1453 = vunpack.c.l.b16 %v163
    %v1454 = vunpack.c.h.b16 %v163
    %v1455 = vunpack.c.l.b16 %v164
    %v1456 = vunpack.c.h.b16 %v164
    %v1457 = vunpack.c.l.b16 %v165
    %v1458 = vunpack.c.h.b16 %v165
    %v1459 = vunpack.c.l.b16 %v166
    %v1460 = vunpack.c.h.b16 %v166
    %v1461 = vunpack.c.l.b16 %v167
    %v1462 = vunpack.c.h.b16 %v167
    %v1463 = vunpack.c.l.b16 %v168
    %v1464 = vunpack.c.h.b16 %v168
    %v1465 = vunpack.c.l.b16 %v169
    %v1466 = vunpack.c.h.b16 %v169
    %v1467 = vunpack.c.l.b16 %v170
    %v1468 = vunpack.c.h.b16 %v170
    %v1469 = vpack.c.b16 %v1439, %v1437
    %v1470 = vpack.c.b16 %v1440, %v1438
    %v1471 = vpack.c.b16 %v1443, %v1441
    %v1472 = vpack.c.b16 %v1444, %v1442
    %v1473 = vpack.c.b16 %v1447, %v1445
    %v1474 = vpack.c.b16 %v1448, %v1446
    %v1475 = vpack.c.b16 %v1451, %v1449
    %v1476 = vpack.c.b16 %v1452, %v1450
    %v1477 = vpack.c.b16 %v1455, %v1453
    %v1478 = vpack.c.b16 %v1456, %v1454
    %v1479 = vpack.c.b16 %v1459, %v1457
    %v1480 = vpack.c.b16 %v1460, %v1458
    %v1481 = vpack.c.b16 %v1463, %v1461
    %v1482 = vpack.c.b16 %v1464, %v1462
    %v1483 = vpack.c.b16 %v1467, %v1465
    %v1484 = vpack.c.b16 %v1468, %v1466
    %1501 = vmatprep.subr.bf16.mxu0 %v1470
    %1502 = vmatpush1.bf16.msra.mxu0 %v1469
    %1503 = vmatprep.subr.bf16.mxu0 %v1472
    %1504 = vmatpush1.bf16.msra.mxu0 %v1471
    %1505 = vmatprep.subr.bf16.mxu0 %v1474
    %1506 = vmatpush1.bf16.msra.mxu0 %v1473
    %1507 = vmatprep.subr.bf16.mxu0 %v1476
    %1508 = vmatpush1.bf16.msra.mxu0 %v1475
    %1509 = vmatprep.subr.bf16.mxu0 %v1478
    %1510 = vmatpush1.bf16.msra.mxu0 %v1477
    %1511 = vmatprep.subr.bf16.mxu0 %v1480
    %1512 = vmatpush1.bf16.msra.mxu0 %v1479
    %1513 = vmatprep.subr.bf16.mxu0 %v1482
    %1514 = vmatpush1.bf16.msra.mxu0 %v1481
    %1515 = vmatprep.subr.bf16.mxu0 %v1484
    %1516 = vmatpush1.bf16.msra.mxu0 %v1483
    %1517 = vmatprep.subr.bf16.mxu0 0
    %1518 = vmatpush1.bf16.msra.mxu0 0
    %1519 = vmatprep.subr.bf16.mxu0 0
    %1520 = vmatpush1.bf16.msra.mxu0 0
    %1521 = vmatprep.subr.bf16.mxu0 0
    %1522 = vmatpush1.bf16.msra.mxu0 0
    %1523 = vmatprep.subr.bf16.mxu0 0
    %1524 = vmatpush1.bf16.msra.mxu0 0
    %1525 = vmatprep.subr.bf16.mxu0 0
    %1526 = vmatpush1.bf16.msra.mxu0 0
    %1527 = vmatprep.subr.bf16.mxu0 0
    %1528 = vmatpush1.bf16.msra.mxu0 0
    %1529 = vmatprep.subr.bf16.mxu0 0
    %1530 = vmatpush1.bf16.msra.mxu0 0
    %1531 = vmatprep.subr.bf16.mxu0 0
    %1532 = vmatpush1.bf16.msra.mxu0 0
    %1533 = vmatprep.mubr.bf16.mxu0 0
    %1534 = vmatmul.mubr.bf16.gmra.mrb[0].mxu0 %v920
    %v1535 = vpop.f32.mrb[0].mxu0
    %v1536 = vadd.f32 %v1415, %v1535
    %v1537 = vpop.f32.mrb[0].mxu0
    %v1538 = vadd.f32 %v1417, %v1537
    %v1539 = vpop.f32.mrb[0].mxu0
    %v1540 = vpop.f32.mrb[0].mxu0
    %1541 = vdwg.mxu0
    %1542 = vmatprep.subr.bf16.mxu0 0
    %1543 = vmatpush1.bf16.msra.mxu0 %v317
    %1544 = vmatprep.subr.bf16.mxu0 0
    %1545 = vmatpush1.bf16.msra.mxu0 %v318
    %1546 = vmatprep.subr.bf16.mxu0 0
    %1547 = vmatpush1.bf16.msra.mxu0 %v319
    %1548 = vmatprep.subr.bf16.mxu0 0
    %1549 = vmatpush1.bf16.msra.mxu0 %v320
    %1550 = vmatprep.subr.bf16.mxu0 0
    %1551 = vmatpush1.bf16.msra.mxu0 0
    %1552 = vmatprep.subr.bf16.mxu0 0
    %1553 = vmatpush1.bf16.msra.mxu0 0
    %1554 = vmatprep.subr.bf16.mxu0 0
    %1555 = vmatpush1.bf16.msra.mxu0 0
    %1556 = vmatprep.subr.bf16.mxu0 0
    %1557 = vmatpush1.bf16.msra.mxu0 0
    %1558 = vmatprep.subr.bf16.mxu0 0
    %1559 = vmatpush1.bf16.msra.mxu0 0
    %1560 = vmatprep.subr.bf16.mxu0 0
    %1561 = vmatpush1.bf16.msra.mxu0 0
    %1562 = vmatprep.subr.bf16.mxu0 0
    %1563 = vmatpush1.bf16.msra.mxu0 0
    %1564 = vmatprep.subr.bf16.mxu0 0
    %1565 = vmatpush1.bf16.msra.mxu0 0
    %1566 = vmatprep.subr.bf16.mxu0 0
    %1567 = vmatpush1.bf16.msra.mxu0 0
    %1568 = vmatprep.subr.bf16.mxu0 0
    %1569 = vmatpush1.bf16.msra.mxu0 0
    %1570 = vmatprep.subr.bf16.mxu0 0
    %1571 = vmatpush1.bf16.msra.mxu0 0
    %1572 = vmatprep.subr.bf16.mxu0 0
    %1573 = vmatpush1.bf16.msra.mxu0 0
    %1574 = vmatprep.mubr.bf16.mxu0 0
    %1575 = vmatmul.mubr.bf16.gmra.mrb[0].mxu0 %v1002
    %v1576 = vpop.f32.mrb[0].mxu0
    %v1577 = vadd.f32 0.0, %v1576
    %v1578 = vpop.f32.mrb[0].mxu0
    %v1579 = vpop.f32.mrb[0].mxu0
    %v1580 = vpop.f32.mrb[0].mxu0
    %1581 = vdwg.mxu0
    %1582 = vmatprep.subr.bf16.mxu0 0
    %1583 = vmatpush1.bf16.msra.mxu0 %v385
    %1584 = vmatprep.subr.bf16.mxu0 0
    %1585 = vmatpush1.bf16.msra.mxu0 %v386
    %1586 = vmatprep.subr.bf16.mxu0 0
    %1587 = vmatpush1.bf16.msra.mxu0 %v387
    %1588 = vmatprep.subr.bf16.mxu0 0
    %1589 = vmatpush1.bf16.msra.mxu0 %v388
    %1590 = vmatprep.subr.bf16.mxu0 0
    %1591 = vmatpush1.bf16.msra.mxu0 0
    %1592 = vmatprep.subr.bf16.mxu0 0
    %1593 = vmatpush1.bf16.msra.mxu0 0
    %1594 = vmatprep.subr.bf16.mxu0 0
    %1595 = vmatpush1.bf16.msra.mxu0 0
    %1596 = vmatprep.subr.bf16.mxu0 0
    %1597 = vmatpush1.bf16.msra.mxu0 0
    %1598 = vmatprep.subr.bf16.mxu0 0
    %1599 = vmatpush1.bf16.msra.mxu0 0
    %1600 = vmatprep.subr.bf16.mxu0 0
    %1601 = vmatpush1.bf16.msra.mxu0 0
    %1602 = vmatprep.subr.bf16.mxu0 0
    %1603 = vmatpush1.bf16.msra.mxu0 0
    %1604 = vmatprep.subr.bf16.mxu0 0
    %1605 = vmatpush1.bf16.msra.mxu0 0
    %1606 = vmatprep.subr.bf16.mxu0 0
    %1607 = vmatpush1.bf16.msra.mxu0 0
    %1608 = vmatprep.subr.bf16.mxu0 0
    %1609 = vmatpush1.bf16.msra.mxu0 0
    %1610 = vmatprep.subr.bf16.mxu0 0
    %1611 = vmatpush1.bf16.msra.mxu0 0
    %1612 = vmatprep.subr.bf16.mxu0 0
    %1613 = vmatpush1.bf16.msra.mxu0 0
    %1614 = vmatprep.mubr.bf16.mxu0 0
    %1615 = vmatmul.mubr.bf16.gmra.mrb[0].mxu0 %v461
    %v1616 = vpop.f32.mrb[0].mxu0
    %v1617 = vadd.f32 %v1577, %v1616
    %v1618 = vpop.f32.mrb[0].mxu0
    %v1619 = vpop.f32.mrb[0].mxu0
    %v1620 = vpop.f32.mrb[0].mxu0
    %1621 = vdwg.mxu0
    %v1623 = vsel %vm325, %v62, 0
    %1625 = vmatprep.subr.bf16.mxu0 0
    %1626 = vmatpush1.bf16.msra.mxu0 %v452
    %1627 = vmatprep.subr.bf16.mxu0 0
    %1628 = vmatpush1.bf16.msra.mxu0 %v453
    %1629 = vmatprep.subr.bf16.mxu0 0
    %1630 = vmatpush1.bf16.msra.mxu0 %v454
    %1631 = vmatprep.subr.bf16.mxu0 0
    %1632 = vmatpush1.bf16.msra.mxu0 %v455
    %1633 = vmatprep.subr.bf16.mxu0 0
    %1634 = vmatpush1.bf16.msra.mxu0 0
    %1635 = vmatprep.subr.bf16.mxu0 0
    %1636 = vmatpush1.bf16.msra.mxu0 0
    %1637 = vmatprep.subr.bf16.mxu0 0
    %1638 = vmatpush1.bf16.msra.mxu0 0
    %1639 = vmatprep.subr.bf16.mxu0 0
    %1640 = vmatpush1.bf16.msra.mxu0 0
    %1641 = vmatprep.subr.bf16.mxu0 0
    %1642 = vmatpush1.bf16.msra.mxu0 0
    %1643 = vmatprep.subr.bf16.mxu0 0
    %1644 = vmatpush1.bf16.msra.mxu0 0
    %1645 = vmatprep.subr.bf16.mxu0 0
    %1646 = vmatpush1.bf16.msra.mxu0 0
    %1647 = vmatprep.subr.bf16.mxu0 0
    %1648 = vmatpush1.bf16.msra.mxu0 0
    %1649 = vmatprep.subr.bf16.mxu0 0
    %1650 = vmatpush1.bf16.msra.mxu0 0
    %1651 = vmatprep.subr.bf16.mxu0 0
    %1652 = vmatpush1.bf16.msra.mxu0 0
    %1653 = vmatprep.subr.bf16.mxu0 0
    %1654 = vmatpush1.bf16.msra.mxu0 0
    %1655 = vmatprep.subr.bf16.mxu0 0
    %1656 = vmatpush1.bf16.msra.mxu0 0
    %1657 = vmatprep.mubr.bf16.mxu0 0
    %1658 = vmatmul.mubr.bf16.gmra.mrb[0].mxu0 %v1623
    %v1659 = vpop.f32.mrb[0].mxu0
    %v1660 = vadd.f32 0.0, %v1659
    %v1661 = vpop.f32.mrb[0].mxu0
    %v1662 = vpop.f32.mrb[0].mxu0
    %v1663 = vpop.f32.mrb[0].mxu0
    %1664 = vdwg.mxu0
    %v1665 = vadd.f32 %v1617, %v1660
    %1666 = vmatprep.subr.bf16.mxu0 0
    %1667 = vmatpush1.bf16.msra.mxu0 %v520
    %1668 = vmatprep.subr.bf16.mxu0 0
    %1669 = vmatpush1.bf16.msra.mxu0 %v521
    %1670 = vmatprep.subr.bf16.mxu0 0
    %1671 = vmatpush1.bf16.msra.mxu0 %v522
    %1672 = vmatprep.subr.bf16.mxu0 0
    %1673 = vmatpush1.bf16.msra.mxu0 %v523
    %1674 = vmatprep.subr.bf16.mxu0 0
    %1675 = vmatpush1.bf16.msra.mxu0 0
    %1676 = vmatprep.subr.bf16.mxu0 0
    %1677 = vmatpush1.bf16.msra.mxu0 0
    %1678 = vmatprep.subr.bf16.mxu0 0
    %1679 = vmatpush1.bf16.msra.mxu0 0
    %1680 = vmatprep.subr.bf16.mxu0 0
    %1681 = vmatpush1.bf16.msra.mxu0 0
    %1682 = vmatprep.subr.bf16.mxu0 0
    %1683 = vmatpush1.bf16.msra.mxu0 0
    %1684 = vmatprep.subr.bf16.mxu0 0
    %1685 = vmatpush1.bf16.msra.mxu0 0
    %1686 = vmatprep.subr.bf16.mxu0 0
    %1687 = vmatpush1.bf16.msra.mxu0 0
    %1688 = vmatprep.subr.bf16.mxu0 0
    %1689 = vmatpush1.bf16.msra.mxu0 0
    %1690 = vmatprep.subr.bf16.mxu0 0
    %1691 = vmatpush1.bf16.msra.mxu0 0
    %1692 = vmatprep.subr.bf16.mxu0 0
    %1693 = vmatpush1.bf16.msra.mxu0 0
    %1694 = vmatprep.subr.bf16.mxu0 0
    %1695 = vmatpush1.bf16.msra.mxu0 0
    %1696 = vmatprep.subr.bf16.mxu0 0
    %1697 = vmatpush1.bf16.msra.mxu0 0
    %1698 = vmatprep.mubr.bf16.mxu0 0
    %1699 = vmatmul.mubr.bf16.gmra.mrb[0].mxu0 %v665
    %v1700 = vpop.f32.mrb[0].mxu0
    %v1701 = vadd.f32 0.0, %v1700
    %v1702 = vpop.f32.mrb[0].mxu0
    %v1703 = vpop.f32.mrb[0].mxu0
    %v1704 = vpop.f32.mrb[0].mxu0
    %1705 = vdwg.mxu0
    %v1706 = vadd.f32 %v1665, %v1701
    %1707 = vmatprep.subr.bf16.mxu0 0
    %1708 = vmatpush1.bf16.msra.mxu0 %v588
    %1709 = vmatprep.subr.bf16.mxu0 0
    %1710 = vmatpush1.bf16.msra.mxu0 %v589
    %1711 = vmatprep.subr.bf16.mxu0 0
    %1712 = vmatpush1.bf16.msra.mxu0 %v590
    %1713 = vmatprep.subr.bf16.mxu0 0
    %1714 = vmatpush1.bf16.msra.mxu0 %v591
    %1715 = vmatprep.subr.bf16.mxu0 0
    %1716 = vmatpush1.bf16.msra.mxu0 0
    %1717 = vmatprep.subr.bf16.mxu0 0
    %1718 = vmatpush1.bf16.msra.mxu0 0
    %1719 = vmatprep.subr.bf16.mxu0 0
    %1720 = vmatpush1.bf16.msra.mxu0 0
    %1721 = vmatprep.subr.bf16.mxu0 0
    %1722 = vmatpush1.bf16.msra.mxu0 0
    %1723 = vmatprep.subr.bf16.mxu0 0
    %1724 = vmatpush1.bf16.msra.mxu0 0
    %1725 = vmatprep.subr.bf16.mxu0 0
    %1726 = vmatpush1.bf16.msra.mxu0 0
    %1727 = vmatprep.subr.bf16.mxu0 0
    %1728 = vmatpush1.bf16.msra.mxu0 0
    %1729 = vmatprep.subr.bf16.mxu0 0
    %1730 = vmatpush1.bf16.msra.mxu0 0
    %1731 = vmatprep.subr.bf16.mxu0 0
    %1732 = vmatpush1.bf16.msra.mxu0 0
    %1733 = vmatprep.subr.bf16.mxu0 0
    %1734 = vmatpush1.bf16.msra.mxu0 0
    %1735 = vmatprep.subr.bf16.mxu0 0
    %1736 = vmatpush1.bf16.msra.mxu0 0
    %1737 = vmatprep.subr.bf16.mxu0 0
    %1738 = vmatpush1.bf16.msra.mxu0 0
    %1739 = vmatprep.mubr.bf16.mxu0 0
    %1740 = vmatmul.mubr.bf16.gmra.mrb[0].mxu0 %v1128
    %v1741 = vpop.f32.mrb[0].mxu0
    %v1742 = vadd.f32 0.0, %v1741
    %v1743 = vpop.f32.mrb[0].mxu0
    %v1744 = vpop.f32.mrb[0].mxu0
    %v1745 = vpop.f32.mrb[0].mxu0
    %1746 = vdwg.mxu0
    %v1747 = vadd.f32 %v1706, %v1742
    %v1749 = vsel %vm325, %v67, 0
    %1751 = vmatprep.subr.bf16.mxu0 0
    %1752 = vmatpush1.bf16.msra.mxu0 %v656
    %1753 = vmatprep.subr.bf16.mxu0 0
    %1754 = vmatpush1.bf16.msra.mxu0 %v657
    %1755 = vmatprep.subr.bf16.mxu0 0
    %1756 = vmatpush1.bf16.msra.mxu0 %v658
    %1757 = vmatprep.subr.bf16.mxu0 0
    %1758 = vmatpush1.bf16.msra.mxu0 %v659
    %1759 = vmatprep.subr.bf16.mxu0 0
    %1760 = vmatpush1.bf16.msra.mxu0 0
    %1761 = vmatprep.subr.bf16.mxu0 0
    %1762 = vmatpush1.bf16.msra.mxu0 0
    %1763 = vmatprep.subr.bf16.mxu0 0
    %1764 = vmatpush1.bf16.msra.mxu0 0
    %1765 = vmatprep.subr.bf16.mxu0 0
    %1766 = vmatpush1.bf16.msra.mxu0 0
    %1767 = vmatprep.subr.bf16.mxu0 0
    %1768 = vmatpush1.bf16.msra.mxu0 0
    %1769 = vmatprep.subr.bf16.mxu0 0
    %1770 = vmatpush1.bf16.msra.mxu0 0
    %1771 = vmatprep.subr.bf16.mxu0 0
    %1772 = vmatpush1.bf16.msra.mxu0 0
    %1773 = vmatprep.subr.bf16.mxu0 0
    %1774 = vmatpush1.bf16.msra.mxu0 0
    %1775 = vmatprep.subr.bf16.mxu0 0
    %1776 = vmatpush1.bf16.msra.mxu0 0
    %1777 = vmatprep.subr.bf16.mxu0 0
    %1778 = vmatpush1.bf16.msra.mxu0 0
    %1779 = vmatprep.subr.bf16.mxu0 0
    %1780 = vmatpush1.bf16.msra.mxu0 0
    %1781 = vmatprep.subr.bf16.mxu0 0
    %1782 = vmatpush1.bf16.msra.mxu0 0
    %1783 = vmatprep.mubr.bf16.mxu0 0
    %1784 = vmatmul.mubr.bf16.gmra.mrb[0].mxu0 %v1749
    %v1785 = vpop.f32.mrb[0].mxu0
    %v1786 = vadd.f32 0.0, %v1785
    %v1787 = vpop.f32.mrb[0].mxu0
    %v1788 = vpop.f32.mrb[0].mxu0
    %v1789 = vpop.f32.mrb[0].mxu0
    %1790 = vdwg.mxu0
    %v1791 = vadd.f32 %v1747, %v1786
    %1792 = vmatprep.subr.bf16.mxu0 0
    %1793 = vmatpush1.bf16.msra.mxu0 %v724
    %1794 = vmatprep.subr.bf16.mxu0 0
    %1795 = vmatpush1.bf16.msra.mxu0 %v725
    %1796 = vmatprep.subr.bf16.mxu0 0
    %1797 = vmatpush1.bf16.msra.mxu0 %v726
    %1798 = vmatprep.subr.bf16.mxu0 0
    %1799 = vmatpush1.bf16.msra.mxu0 %v727
    %1800 = vmatprep.subr.bf16.mxu0 0
    %1801 = vmatpush1.bf16.msra.mxu0 0
    %1802 = vmatprep.subr.bf16.mxu0 0
    %1803 = vmatpush1.bf16.msra.mxu0 0
    %1804 = vmatprep.subr.bf16.mxu0 0
    %1805 = vmatpush1.bf16.msra.mxu0 0
    %1806 = vmatprep.subr.bf16.mxu0 0
    %1807 = vmatpush1.bf16.msra.mxu0 0
    %1808 = vmatprep.subr.bf16.mxu0 0
    %1809 = vmatpush1.bf16.msra.mxu0 0
    %1810 = vmatprep.subr.bf16.mxu0 0
    %1811 = vmatpush1.bf16.msra.mxu0 0
    %1812 = vmatprep.subr.bf16.mxu0 0
    %1813 = vmatpush1.bf16.msra.mxu0 0
    %1814 = vmatprep.subr.bf16.mxu0 0
    %1815 = vmatpush1.bf16.msra.mxu0 0
    %1816 = vmatprep.subr.bf16.mxu0 0
    %1817 = vmatpush1.bf16.msra.mxu0 0
    %1818 = vmatprep.subr.bf16.mxu0 0
    %1819 = vmatpush1.bf16.msra.mxu0 0
    %1820 = vmatprep.subr.bf16.mxu0 0
    %1821 = vmatpush1.bf16.msra.mxu0 0
    %1822 = vmatprep.subr.bf16.mxu0 0
    %1823 = vmatpush1.bf16.msra.mxu0 0
    %1824 = vmatprep.mubr.bf16.mxu0 0
    %1825 = vmatmul.mubr.bf16.gmra.mrb[0].mxu0 %v869
    %v1826 = vpop.f32.mrb[0].mxu0
    %v1827 = vadd.f32 0.0, %v1826
    %v1828 = vpop.f32.mrb[0].mxu0
    %v1829 = vpop.f32.mrb[0].mxu0
    %v1830 = vpop.f32.mrb[0].mxu0
    %1831 = vdwg.mxu0
    %v1832 = vadd.f32 %v1791, %v1827
    %1833 = vmatprep.subr.bf16.mxu0 0
    %1834 = vmatpush1.bf16.msra.mxu0 %v792
    %1835 = vmatprep.subr.bf16.mxu0 0
    %1836 = vmatpush1.bf16.msra.mxu0 %v793
    %1837 = vmatprep.subr.bf16.mxu0 0
    %1838 = vmatpush1.bf16.msra.mxu0 %v794
    %1839 = vmatprep.subr.bf16.mxu0 0
    %1840 = vmatpush1.bf16.msra.mxu0 %v795
    %1841 = vmatprep.subr.bf16.mxu0 0
    %1842 = vmatpush1.bf16.msra.mxu0 0
    %1843 = vmatprep.subr.bf16.mxu0 0
    %1844 = vmatpush1.bf16.msra.mxu0 0
    %1845 = vmatprep.subr.bf16.mxu0 0
    %1846 = vmatpush1.bf16.msra.mxu0 0
    %1847 = vmatprep.subr.bf16.mxu0 0
    %1848 = vmatpush1.bf16.msra.mxu0 0
    %1849 = vmatprep.subr.bf16.mxu0 0
    %1850 = vmatpush1.bf16.msra.mxu0 0
    %1851 = vmatprep.subr.bf16.mxu0 0
    %1852 = vmatpush1.bf16.msra.mxu0 0
    %1853 = vmatprep.subr.bf16.mxu0 0
    %1854 = vmatpush1.bf16.msra.mxu0 0
    %1855 = vmatprep.subr.bf16.mxu0 0
    %1856 = vmatpush1.bf16.msra.mxu0 0
    %1857 = vmatprep.subr.bf16.mxu0 0
    %1858 = vmatpush1.bf16.msra.mxu0 0
    %1859 = vmatprep.subr.bf16.mxu0 0
    %1860 = vmatpush1.bf16.msra.mxu0 0
    %1861 = vmatprep.subr.bf16.mxu0 0
    %1862 = vmatpush1.bf16.msra.mxu0 0
    %1863 = vmatprep.subr.bf16.mxu0 0
    %1864 = vmatpush1.bf16.msra.mxu0 0
    %1865 = vmatprep.mubr.bf16.mxu0 0
    %1866 = vmatmul.mubr.bf16.gmra.mrb[0].mxu0 %v1254
    %v1867 = vpop.f32.mrb[0].mxu0
    %v1868 = vadd.f32 0.0, %v1867
    %v1869 = vpop.f32.mrb[0].mxu0
    %v1870 = vpop.f32.mrb[0].mxu0
    %v1871 = vpop.f32.mrb[0].mxu0
    %1872 = vdwg.mxu0
    %v1873 = vadd.f32 %v1832, %v1868
    %v1875 = vsel %vm325, %v72, 0
    %1877 = vmatprep.subr.bf16.mxu0 0
    %1878 = vmatpush1.bf16.msra.mxu0 %v860
    %1879 = vmatprep.subr.bf16.mxu0 0
    %1880 = vmatpush1.bf16.msra.mxu0 %v861
    %1881 = vmatprep.subr.bf16.mxu0 0
    %1882 = vmatpush1.bf16.msra.mxu0 %v862
    %1883 = vmatprep.subr.bf16.mxu0 0
    %1884 = vmatpush1.bf16.msra.mxu0 %v863
    %1885 = vmatprep.subr.bf16.mxu0 0
    %1886 = vmatpush1.bf16.msra.mxu0 0
    %1887 = vmatprep.subr.bf16.mxu0 0
    %1888 = vmatpush1.bf16.msra.mxu0 0
    %1889 = vmatprep.subr.bf16.mxu0 0
    %1890 = vmatpush1.bf16.msra.mxu0 0
    %1891 = vmatprep.subr.bf16.mxu0 0
    %1892 = vmatpush1.bf16.msra.mxu0 0
    %1893 = vmatprep.subr.bf16.mxu0 0
    %1894 = vmatpush1.bf16.msra.mxu0 0
    %1895 = vmatprep.subr.bf16.mxu0 0
    %1896 = vmatpush1.bf16.msra.mxu0 0
    %1897 = vmatprep.subr.bf16.mxu0 0
    %1898 = vmatpush1.bf16.msra.mxu0 0
    %1899 = vmatprep.subr.bf16.mxu0 0
    %1900 = vmatpush1.bf16.msra.mxu0 0
    %1901 = vmatprep.subr.bf16.mxu0 0
    %1902 = vmatpush1.bf16.msra.mxu0 0
    %1903 = vmatprep.subr.bf16.mxu0 0
    %1904 = vmatpush1.bf16.msra.mxu0 0
    %1905 = vmatprep.subr.bf16.mxu0 0
    %1906 = vmatpush1.bf16.msra.mxu0 0
    %1907 = vmatprep.subr.bf16.mxu0 0
    %1908 = vmatpush1.bf16.msra.mxu0 0
    %1909 = vmatprep.mubr.bf16.mxu0 0
    %1910 = vmatmul.mubr.bf16.gmra.mrb[0].mxu0 %v1875
    %v1911 = vpop.f32.mrb[0].mxu0
    %v1912 = vadd.f32 0.0, %v1911
    %v1913 = vpop.f32.mrb[0].mxu0
    %v1914 = vpop.f32.mrb[0].mxu0
    %v1915 = vpop.f32.mrb[0].mxu0
    %1916 = vdwg.mxu0
    %v1917 = vadd.f32 %v1873, %v1912
    %v1918 = vadd.f32 %v1917, %v916
    %v1919 = vmax.f32 %v1918, 0.0
    %v1920 = vpack.c.bf16 %v1919, %v1919
    %v1937 = vunpack.c.l.b16 %v187
    %v1938 = vunpack.c.h.b16 %v187
    %v1939 = vunpack.c.l.b16 %v188
    %v1940 = vunpack.c.h.b16 %v188
    %v1941 = vunpack.c.l.b16 %v189
    %v1942 = vunpack.c.h.b16 %v189
    %v1943 = vunpack.c.l.b16 %v190
    %v1944 = vunpack.c.h.b16 %v190
    %v1945 = vunpack.c.l.b16 %v191
    %v1946 = vunpack.c.h.b16 %v191
    %v1947 = vunpack.c.l.b16 %v192
    %v1948 = vunpack.c.h.b16 %v192
    %v1949 = vunpack.c.l.b16 %v193
    %v1950 = vunpack.c.h.b16 %v193
    %v1951 = vunpack.c.l.b16 %v194
    %v1952 = vunpack.c.h.b16 %v194
    %v1953 = vunpack.c.l.b16 %v195
    %v1954 = vunpack.c.h.b16 %v195
    %v1955 = vunpack.c.l.b16 %v196
    %v1956 = vunpack.c.h.b16 %v196
    %v1957 = vunpack.c.l.b16 %v197
    %v1958 = vunpack.c.h.b16 %v197
    %v1959 = vunpack.c.l.b16 %v198
    %v1960 = vunpack.c.h.b16 %v198
    %v1961 = vunpack.c.l.b16 %v199
    %v1962 = vunpack.c.h.b16 %v199
    %v1963 = vunpack.c.l.b16 %v200
    %v1964 = vunpack.c.h.b16 %v200
    %v1965 = vunpack.c.l.b16 %v201
    %v1966 = vunpack.c.h.b16 %v201
    %v1967 = vunpack.c.l.b16 %v202
    %v1968 = vunpack.c.h.b16 %v202
    %v1969 = vpack.c.b16 %v1939, %v1937
    %v1970 = vpack.c.b16 %v1940, %v1938
    %v1971 = vpack.c.b16 %v1943, %v1941
    %v1972 = vpack.c.b16 %v1944, %v1942
    %v1973 = vpack.c.b16 %v1947, %v1945
    %v1974 = vpack.c.b16 %v1948, %v1946
    %v1975 = vpack.c.b16 %v1951, %v1949
    %v1976 = vpack.c.b16 %v1952, %v1950
    %v1977 = vpack.c.b16 %v1955, %v1953
    %v1978 = vpack.c.b16 %v1956, %v1954
    %v1979 = vpack.c.b16 %v1959, %v1957
    %v1980 = vpack.c.b16 %v1960, %v1958
    %v1981 = vpack.c.b16 %v1963, %v1961
    %v1982 = vpack.c.b16 %v1964, %v1962
    %v1983 = vpack.c.b16 %v1967, %v1965
    %v1984 = vpack.c.b16 %v1968, %v1966
    %2001 = vmatprep.subr.bf16.mxu0 %v1970
    %2002 = vmatpush1.bf16.msra.mxu0 %v1969
    %2003 = vmatprep.subr.bf16.mxu0 %v1972
    %2004 = vmatpush1.bf16.msra.mxu0 %v1971
    %2005 = vmatprep.subr.bf16.mxu0 %v1974
    %2006 = vmatpush1.bf16.msra.mxu0 %v1973
    %2007 = vmatprep.subr.bf16.mxu0 %v1976
    %2008 = vmatpush1.bf16.msra.mxu0 %v1975
    %2009 = vmatprep.subr.bf16.mxu0 %v1978
    %2010 = vmatpush1.bf16.msra.mxu0 %v1977
    %2011 = vmatprep.subr.bf16.mxu0 %v1980
    %2012 = vmatpush1.bf16.msra.mxu0 %v1979
    %2013 = vmatprep.subr.bf16.mxu0 %v1982
    %2014 = vmatpush1.bf16.msra.mxu0 %v1981
    %2015 = vmatprep.subr.bf16.mxu0 %v1984
    %2016 = vmatpush1.bf16.msra.mxu0 %v1983
    %2017 = vmatprep.subr.bf16.mxu0 0
    %2018 = vmatpush1.bf16.msra.mxu0 0
    %2019 = vmatprep.subr.bf16.mxu0 0
    %2020 = vmatpush1.bf16.msra.mxu0 0
    %2021 = vmatprep.subr.bf16.mxu0 0
    %2022 = vmatpush1.bf16.msra.mxu0 0
    %2023 = vmatprep.subr.bf16.mxu0 0
    %2024 = vmatpush1.bf16.msra.mxu0 0
    %2025 = vmatprep.subr.bf16.mxu0 0
    %2026 = vmatpush1.bf16.msra.mxu0 0
    %2027 = vmatprep.subr.bf16.mxu0 0
    %2028 = vmatpush1.bf16.msra.mxu0 0
    %2029 = vmatprep.subr.bf16.mxu0 0
    %2030 = vmatpush1.bf16.msra.mxu0 0
    %2031 = vmatprep.subr.bf16.mxu0 0
    %2032 = vmatpush1.bf16.msra.mxu0 0
    %2033 = vmatprep.mubr.bf16.mxu0 0
    %2034 = vmatmul.mubr.bf16.gmra.mrb[0].mxu0 %v1920
    %v2035 = vpop.f32.mrb[0].mxu0
    %v2036 = vadd.f32 0.0, %v2035
    %v2037 = vpop.f32.mrb[0].mxu0
    %v2038 = vadd.f32 0.0, %v2037
    %v2039 = vpop.f32.mrb[0].mxu0
    %v2040 = vpop.f32.mrb[0].mxu0
    %2041 = vdwg.mxu0
    %v2042 = vadd.f32 %v1536, %v2036
    %v2043 = vadd.f32 %v1538, %v2038
    %2044 = vmatprep.subr.bf16.mxu0 0
    %2045 = vmatpush1.bf16.msra.mxu0 %v317
    %2046 = vmatprep.subr.bf16.mxu0 0
    %2047 = vmatpush1.bf16.msra.mxu0 %v318
    %2048 = vmatprep.subr.bf16.mxu0 0
    %2049 = vmatpush1.bf16.msra.mxu0 %v319
    %2050 = vmatprep.subr.bf16.mxu0 0
    %2051 = vmatpush1.bf16.msra.mxu0 %v320
    %2052 = vmatprep.subr.bf16.mxu0 0
    %2053 = vmatpush1.bf16.msra.mxu0 0
    %2054 = vmatprep.subr.bf16.mxu0 0
    %2055 = vmatpush1.bf16.msra.mxu0 0
    %2056 = vmatprep.subr.bf16.mxu0 0
    %2057 = vmatpush1.bf16.msra.mxu0 0
    %2058 = vmatprep.subr.bf16.mxu0 0
    %2059 = vmatpush1.bf16.msra.mxu0 0
    %2060 = vmatprep.subr.bf16.mxu0 0
    %2061 = vmatpush1.bf16.msra.mxu0 0
    %2062 = vmatprep.subr.bf16.mxu0 0
    %2063 = vmatpush1.bf16.msra.mxu0 0
    %2064 = vmatprep.subr.bf16.mxu0 0
    %2065 = vmatpush1.bf16.msra.mxu0 0
    %2066 = vmatprep.subr.bf16.mxu0 0
    %2067 = vmatpush1.bf16.msra.mxu0 0
    %2068 = vmatprep.subr.bf16.mxu0 0
    %2069 = vmatpush1.bf16.msra.mxu0 0
    %2070 = vmatprep.subr.bf16.mxu0 0
    %2071 = vmatpush1.bf16.msra.mxu0 0
    %2072 = vmatprep.subr.bf16.mxu0 0
    %2073 = vmatpush1.bf16.msra.mxu0 0
    %2074 = vmatprep.subr.bf16.mxu0 0
    %2075 = vmatpush1.bf16.msra.mxu0 0
    %2076 = vmatprep.mubr.bf16.mxu0 0
    %2077 = vmatmul.mubr.bf16.gmra.mrb[0].mxu0 %v597
    %v2078 = vpop.f32.mrb[0].mxu0
    %v2079 = vadd.f32 0.0, %v2078
    %v2080 = vpop.f32.mrb[0].mxu0
    %v2081 = vpop.f32.mrb[0].mxu0
    %v2082 = vpop.f32.mrb[0].mxu0
    %2083 = vdwg.mxu0
    %2084 = vmatprep.subr.bf16.mxu0 0
    %2085 = vmatpush1.bf16.msra.mxu0 %v385
    %2086 = vmatprep.subr.bf16.mxu0 0
    %2087 = vmatpush1.bf16.msra.mxu0 %v386
    %2088 = vmatprep.subr.bf16.mxu0 0
    %2089 = vmatpush1.bf16.msra.mxu0 %v387
    %2090 = vmatprep.subr.bf16.mxu0 0
    %2091 = vmatpush1.bf16.msra.mxu0 %v388
    %2092 = vmatprep.subr.bf16.mxu0 0
    %2093 = vmatpush1.bf16.msra.mxu0 0
    %2094 = vmatprep.subr.bf16.mxu0 0
    %2095 = vmatpush1.bf16.msra.mxu0 0
    %2096 = vmatprep.subr.bf16.mxu0 0
    %2097 = vmatpush1.bf16.msra.mxu0 0
    %2098 = vmatprep.subr.bf16.mxu0 0
    %2099 = vmatpush1.bf16.msra.mxu0 0
    %2100 = vmatprep.subr.bf16.mxu0 0
    %2101 = vmatpush1.bf16.msra.mxu0 0
    %2102 = vmatprep.subr.bf16.mxu0 0
    %2103 = vmatpush1.bf16.msra.mxu0 0
    %2104 = vmatprep.subr.bf16.mxu0 0
    %2105 = vmatpush1.bf16.msra.mxu0 0
    %2106 = vmatprep.subr.bf16.mxu0 0
    %2107 = vmatpush1.bf16.msra.mxu0 0
    %2108 = vmatprep.subr.bf16.mxu0 0
    %2109 = vmatpush1.bf16.msra.mxu0 0
    %2110 = vmatprep.subr.bf16.mxu0 0
    %2111 = vmatpush1.bf16.msra.mxu0 0
    %2112 = vmatprep.subr.bf16.mxu0 0
    %2113 = vmatpush1.bf16.msra.mxu0 0
    %2114 = vmatprep.subr.bf16.mxu0 0
    %2115 = vmatpush1.bf16.msra.mxu0 0
    %2116 = vmatprep.mubr.bf16.mxu0 0
    %2117 = vmatmul.mubr.bf16.gmra.mrb[0].mxu0 %v529
    %v2118 = vpop.f32.mrb[0].mxu0
    %v2119 = vadd.f32 %v2079, %v2118
    %v2120 = vpop.f32.mrb[0].mxu0
    %v2121 = vpop.f32.mrb[0].mxu0
    %v2122 = vpop.f32.mrb[0].mxu0
    %2123 = vdwg.mxu0
    %2124 = vmatprep.subr.bf16.mxu0 0
    %2125 = vmatpush1.bf16.msra.mxu0 %v452
    %2126 = vmatprep.subr.bf16.mxu0 0
    %2127 = vmatpush1.bf16.msra.mxu0 %v453
    %2128 = vmatprep.subr.bf16.mxu0 0
    %2129 = vmatpush1.bf16.msra.mxu0 %v454
    %2130 = vmatprep.subr.bf16.mxu0 0
    %2131 = vmatpush1.bf16.msra.mxu0 %v455
    %2132 = vmatprep.subr.bf16.mxu0 0
    %2133 = vmatpush1.bf16.msra.mxu0 0
    %2134 = vmatprep.subr.bf16.mxu0 0
    %2135 = vmatpush1.bf16.msra.mxu0 0
    %2136 = vmatprep.subr.bf16.mxu0 0
    %2137 = vmatpush1.bf16.msra.mxu0 0
    %2138 = vmatprep.subr.bf16.mxu0 0
    %2139 = vmatpush1.bf16.msra.mxu0 0
    %2140 = vmatprep.subr.bf16.mxu0 0
    %2141 = vmatpush1.bf16.msra.mxu0 0
    %2142 = vmatprep.subr.bf16.mxu0 0
    %2143 = vmatpush1.bf16.msra.mxu0 0
    %2144 = vmatprep.subr.bf16.mxu0 0
    %2145 = vmatpush1.bf16.msra.mxu0 0
    %2146 = vmatprep.subr.bf16.mxu0 0
    %2147 = vmatpush1.bf16.msra.mxu0 0
    %2148 = vmatprep.subr.bf16.mxu0 0
    %2149 = vmatpush1.bf16.msra.mxu0 0
    %2150 = vmatprep.subr.bf16.mxu0 0
    %2151 = vmatpush1.bf16.msra.mxu0 0
    %2152 = vmatprep.subr.bf16.mxu0 0
    %2153 = vmatpush1.bf16.msra.mxu0 0
    %2154 = vmatprep.subr.bf16.mxu0 0
    %2155 = vmatpush1.bf16.msra.mxu0 0
    %2156 = vmatprep.mubr.bf16.mxu0 0
    %2157 = vmatmul.mubr.bf16.gmra.mrb[0].mxu0 %v665
    %v2158 = vpop.f32.mrb[0].mxu0
    %v2159 = vadd.f32 0.0, %v2158
    %v2160 = vpop.f32.mrb[0].mxu0
    %v2161 = vpop.f32.mrb[0].mxu0
    %v2162 = vpop.f32.mrb[0].mxu0
    %2163 = vdwg.mxu0
    %v2164 = vadd.f32 %v2119, %v2159
    %2165 = vmatprep.subr.bf16.mxu0 0
    %2166 = vmatpush1.bf16.msra.mxu0 %v520
    %2167 = vmatprep.subr.bf16.mxu0 0
    %2168 = vmatpush1.bf16.msra.mxu0 %v521
    %2169 = vmatprep.subr.bf16.mxu0 0
    %2170 = vmatpush1.bf16.msra.mxu0 %v522
    %2171 = vmatprep.subr.bf16.mxu0 0
    %2172 = vmatpush1.bf16.msra.mxu0 %v523
    %2173 = vmatprep.subr.bf16.mxu0 0
    %2174 = vmatpush1.bf16.msra.mxu0 0
    %2175 = vmatprep.subr.bf16.mxu0 0
    %2176 = vmatpush1.bf16.msra.mxu0 0
    %2177 = vmatprep.subr.bf16.mxu0 0
    %2178 = vmatpush1.bf16.msra.mxu0 0
    %2179 = vmatprep.subr.bf16.mxu0 0
    %2180 = vmatpush1.bf16.msra.mxu0 0
    %2181 = vmatprep.subr.bf16.mxu0 0
    %2182 = vmatpush1.bf16.msra.mxu0 0
    %2183 = vmatprep.subr.bf16.mxu0 0
    %2184 = vmatpush1.bf16.msra.mxu0 0
    %2185 = vmatprep.subr.bf16.mxu0 0
    %2186 = vmatpush1.bf16.msra.mxu0 0
    %2187 = vmatprep.subr.bf16.mxu0 0
    %2188 = vmatpush1.bf16.msra.mxu0 0
    %2189 = vmatprep.subr.bf16.mxu0 0
    %2190 = vmatpush1.bf16.msra.mxu0 0
    %2191 = vmatprep.subr.bf16.mxu0 0
    %2192 = vmatpush1.bf16.msra.mxu0 0
    %2193 = vmatprep.subr.bf16.mxu0 0
    %2194 = vmatpush1.bf16.msra.mxu0 0
    %2195 = vmatprep.subr.bf16.mxu0 0
    %2196 = vmatpush1.bf16.msra.mxu0 0
    %2197 = vmatprep.mubr.bf16.mxu0 0
    %2198 = vmatmul.mubr.bf16.gmra.mrb[0].mxu0 %v733
    %v2199 = vpop.f32.mrb[0].mxu0
    %v2200 = vadd.f32 0.0, %v2199
    %v2201 = vpop.f32.mrb[0].mxu0
    %v2202 = vpop.f32.mrb[0].mxu0
    %v2203 = vpop.f32.mrb[0].mxu0
    %2204 = vdwg.mxu0
    %v2205 = vadd.f32 %v2164, %v2200
    %2206 = vmatprep.subr.bf16.mxu0 0
    %2207 = vmatpush1.bf16.msra.mxu0 %v588
    %2208 = vmatprep.subr.bf16.mxu0 0
    %2209 = vmatpush1.bf16.msra.mxu0 %v589
    %2210 = vmatprep.subr.bf16.mxu0 0
    %2211 = vmatpush1.bf16.msra.mxu0 %v590
    %2212 = vmatprep.subr.bf16.mxu0 0
    %2213 = vmatpush1.bf16.msra.mxu0 %v591
    %2214 = vmatprep.subr.bf16.mxu0 0
    %2215 = vmatpush1.bf16.msra.mxu0 0
    %2216 = vmatprep.subr.bf16.mxu0 0
    %2217 = vmatpush1.bf16.msra.mxu0 0
    %2218 = vmatprep.subr.bf16.mxu0 0
    %2219 = vmatpush1.bf16.msra.mxu0 0
    %2220 = vmatprep.subr.bf16.mxu0 0
    %2221 = vmatpush1.bf16.msra.mxu0 0
    %2222 = vmatprep.subr.bf16.mxu0 0
    %2223 = vmatpush1.bf16.msra.mxu0 0
    %2224 = vmatprep.subr.bf16.mxu0 0
    %2225 = vmatpush1.bf16.msra.mxu0 0
    %2226 = vmatprep.subr.bf16.mxu0 0
    %2227 = vmatpush1.bf16.msra.mxu0 0
    %2228 = vmatprep.subr.bf16.mxu0 0
    %2229 = vmatpush1.bf16.msra.mxu0 0
    %2230 = vmatprep.subr.bf16.mxu0 0
    %2231 = vmatpush1.bf16.msra.mxu0 0
    %2232 = vmatprep.subr.bf16.mxu0 0
    %2233 = vmatpush1.bf16.msra.mxu0 0
    %2234 = vmatprep.subr.bf16.mxu0 0
    %2235 = vmatpush1.bf16.msra.mxu0 0
    %2236 = vmatprep.subr.bf16.mxu0 0
    %2237 = vmatpush1.bf16.msra.mxu0 0
    %2238 = vmatprep.mubr.bf16.mxu0 0
    %2239 = vmatmul.mubr.bf16.gmra.mrb[0].mxu0 %v801
    %v2240 = vpop.f32.mrb[0].mxu0
    %v2241 = vadd.f32 0.0, %v2240
    %v2242 = vpop.f32.mrb[0].mxu0
    %v2243 = vpop.f32.mrb[0].mxu0
    %v2244 = vpop.f32.mrb[0].mxu0
    %2245 = vdwg.mxu0
    %v2246 = vadd.f32 %v2205, %v2241
    %2247 = vmatprep.subr.bf16.mxu0 0
    %2248 = vmatpush1.bf16.msra.mxu0 %v656
    %2249 = vmatprep.subr.bf16.mxu0 0
    %2250 = vmatpush1.bf16.msra.mxu0 %v657
    %2251 = vmatprep.subr.bf16.mxu0 0
    %2252 = vmatpush1.bf16.msra.mxu0 %v658
    %2253 = vmatprep.subr.bf16.mxu0 0
    %2254 = vmatpush1.bf16.msra.mxu0 %v659
    %2255 = vmatprep.subr.bf16.mxu0 0
    %2256 = vmatpush1.bf16.msra.mxu0 0
    %2257 = vmatprep.subr.bf16.mxu0 0
    %2258 = vmatpush1.bf16.msra.mxu0 0
    %2259 = vmatprep.subr.bf16.mxu0 0
    %2260 = vmatpush1.bf16.msra.mxu0 0
    %2261 = vmatprep.subr.bf16.mxu0 0
    %2262 = vmatpush1.bf16.msra.mxu0 0
    %2263 = vmatprep.subr.bf16.mxu0 0
    %2264 = vmatpush1.bf16.msra.mxu0 0
    %2265 = vmatprep.subr.bf16.mxu0 0
    %2266 = vmatpush1.bf16.msra.mxu0 0
    %2267 = vmatprep.subr.bf16.mxu0 0
    %2268 = vmatpush1.bf16.msra.mxu0 0
    %2269 = vmatprep.subr.bf16.mxu0 0
    %2270 = vmatpush1.bf16.msra.mxu0 0
    %2271 = vmatprep.subr.bf16.mxu0 0
    %2272 = vmatpush1.bf16.msra.mxu0 0
    %2273 = vmatprep.subr.bf16.mxu0 0
    %2274 = vmatpush1.bf16.msra.mxu0 0
    %2275 = vmatprep.subr.bf16.mxu0 0
    %2276 = vmatpush1.bf16.msra.mxu0 0
    %2277 = vmatprep.subr.bf16.mxu0 0
    %2278 = vmatpush1.bf16.msra.mxu0 0
    %2279 = vmatprep.mubr.bf16.mxu0 0
    %2280 = vmatmul.mubr.bf16.gmra.mrb[0].mxu0 %v869
    %v2281 = vpop.f32.mrb[0].mxu0
    %v2282 = vadd.f32 0.0, %v2281
    %v2283 = vpop.f32.mrb[0].mxu0
    %v2284 = vpop.f32.mrb[0].mxu0
    %v2285 = vpop.f32.mrb[0].mxu0
    %2286 = vdwg.mxu0
    %v2287 = vadd.f32 %v2246, %v2282
    %v2289 = vsel %vm325, %v73, 0
    %2291 = vmatprep.subr.bf16.mxu0 0
    %2292 = vmatpush1.bf16.msra.mxu0 %v724
    %2293 = vmatprep.subr.bf16.mxu0 0
    %2294 = vmatpush1.bf16.msra.mxu0 %v725
    %2295 = vmatprep.subr.bf16.mxu0 0
    %2296 = vmatpush1.bf16.msra.mxu0 %v726
    %2297 = vmatprep.subr.bf16.mxu0 0
    %2298 = vmatpush1.bf16.msra.mxu0 %v727
    %2299 = vmatprep.subr.bf16.mxu0 0
    %2300 = vmatpush1.bf16.msra.mxu0 0
    %2301 = vmatprep.subr.bf16.mxu0 0
    %2302 = vmatpush1.bf16.msra.mxu0 0
    %2303 = vmatprep.subr.bf16.mxu0 0
    %2304 = vmatpush1.bf16.msra.mxu0 0
    %2305 = vmatprep.subr.bf16.mxu0 0
    %2306 = vmatpush1.bf16.msra.mxu0 0
    %2307 = vmatprep.subr.bf16.mxu0 0
    %2308 = vmatpush1.bf16.msra.mxu0 0
    %2309 = vmatprep.subr.bf16.mxu0 0
    %2310 = vmatpush1.bf16.msra.mxu0 0
    %2311 = vmatprep.subr.bf16.mxu0 0
    %2312 = vmatpush1.bf16.msra.mxu0 0
    %2313 = vmatprep.subr.bf16.mxu0 0
    %2314 = vmatpush1.bf16.msra.mxu0 0
    %2315 = vmatprep.subr.bf16.mxu0 0
    %2316 = vmatpush1.bf16.msra.mxu0 0
    %2317 = vmatprep.subr.bf16.mxu0 0
    %2318 = vmatpush1.bf16.msra.mxu0 0
    %2319 = vmatprep.subr.bf16.mxu0 0
    %2320 = vmatpush1.bf16.msra.mxu0 0
    %2321 = vmatprep.subr.bf16.mxu0 0
    %2322 = vmatpush1.bf16.msra.mxu0 0
    %2323 = vmatprep.mubr.bf16.mxu0 0
    %2324 = vmatmul.mubr.bf16.gmra.mrb[0].mxu0 %v2289
    %v2325 = vpop.f32.mrb[0].mxu0
    %v2326 = vadd.f32 0.0, %v2325
    %v2327 = vpop.f32.mrb[0].mxu0
    %v2328 = vpop.f32.mrb[0].mxu0
    %v2329 = vpop.f32.mrb[0].mxu0
    %2330 = vdwg.mxu0
    %v2331 = vadd.f32 %v2287, %v2326
    %v2333 = vsel %vm325, %v74, 0
    %2335 = vmatprep.subr.bf16.mxu0 0
    %2336 = vmatpush1.bf16.msra.mxu0 %v792
    %2337 = vmatprep.subr.bf16.mxu0 0
    %2338 = vmatpush1.bf16.msra.mxu0 %v793
    %2339 = vmatprep.subr.bf16.mxu0 0
    %2340 = vmatpush1.bf16.msra.mxu0 %v794
    %2341 = vmatprep.subr.bf16.mxu0 0
    %2342 = vmatpush1.bf16.msra.mxu0 %v795
    %2343 = vmatprep.subr.bf16.mxu0 0
    %2344 = vmatpush1.bf16.msra.mxu0 0
    %2345 = vmatprep.subr.bf16.mxu0 0
    %2346 = vmatpush1.bf16.msra.mxu0 0
    %2347 = vmatprep.subr.bf16.mxu0 0
    %2348 = vmatpush1.bf16.msra.mxu0 0
    %2349 = vmatprep.subr.bf16.mxu0 0
    %2350 = vmatpush1.bf16.msra.mxu0 0
    %2351 = vmatprep.subr.bf16.mxu0 0
    %2352 = vmatpush1.bf16.msra.mxu0 0
    %2353 = vmatprep.subr.bf16.mxu0 0
    %2354 = vmatpush1.bf16.msra.mxu0 0
    %2355 = vmatprep.subr.bf16.mxu0 0
    %2356 = vmatpush1.bf16.msra.mxu0 0
    %2357 = vmatprep.subr.bf16.mxu0 0
    %2358 = vmatpush1.bf16.msra.mxu0 0
    %2359 = vmatprep.subr.bf16.mxu0 0
    %2360 = vmatpush1.bf16.msra.mxu0 0
    %2361 = vmatprep.subr.bf16.mxu0 0
    %2362 = vmatpush1.bf16.msra.mxu0 0
    %2363 = vmatprep.subr.bf16.mxu0 0
    %2364 = vmatpush1.bf16.msra.mxu0 0
    %2365 = vmatprep.subr.bf16.mxu0 0
    %2366 = vmatpush1.bf16.msra.mxu0 0
    %2367 = vmatprep.mubr.bf16.mxu0 0
    %2368 = vmatmul.mubr.bf16.gmra.mrb[0].mxu0 %v2333
    %v2369 = vpop.f32.mrb[0].mxu0
    %v2370 = vadd.f32 0.0, %v2369
    %v2371 = vpop.f32.mrb[0].mxu0
    %v2372 = vpop.f32.mrb[0].mxu0
    %v2373 = vpop.f32.mrb[0].mxu0
    %2374 = vdwg.mxu0
    %v2375 = vadd.f32 %v2331, %v2370
    %v2377 = vsel %vm325, %v75, 0
    %2379 = vmatprep.subr.bf16.mxu0 0
    %2380 = vmatpush1.bf16.msra.mxu0 %v860
    %2381 = vmatprep.subr.bf16.mxu0 0
    %2382 = vmatpush1.bf16.msra.mxu0 %v861
    %2383 = vmatprep.subr.bf16.mxu0 0
    %2384 = vmatpush1.bf16.msra.mxu0 %v862
    %2385 = vmatprep.subr.bf16.mxu0 0
    %2386 = vmatpush1.bf16.msra.mxu0 %v863
    %2387 = vmatprep.subr.bf16.mxu0 0
    %2388 = vmatpush1.bf16.msra.mxu0 0
    %2389 = vmatprep.subr.bf16.mxu0 0
    %2390 = vmatpush1.bf16.msra.mxu0 0
    %2391 = vmatprep.subr.bf16.mxu0 0
    %2392 = vmatpush1.bf16.msra.mxu0 0
    %2393 = vmatprep.subr.bf16.mxu0 0
    %2394 = vmatpush1.bf16.msra.mxu0 0
    %2395 = vmatprep.subr.bf16.mxu0 0
    %2396 = vmatpush1.bf16.msra.mxu0 0
    %2397 = vmatprep.subr.bf16.mxu0 0
    %2398 = vmatpush1.bf16.msra.mxu0 0
    %2399 = vmatprep.subr.bf16.mxu0 0
    %2400 = vmatpush1.bf16.msra.mxu0 0
    %2401 = vmatprep.subr.bf16.mxu0 0
    %2402 = vmatpush1.bf16.msra.mxu0 0
    %2403 = vmatprep.subr.bf16.mxu0 0
    %2404 = vmatpush1.bf16.msra.mxu0 0
    %2405 = vmatprep.subr.bf16.mxu0 0
    %2406 = vmatpush1.bf16.msra.mxu0 0
    %2407 = vmatprep.subr.bf16.mxu0 0
    %2408 = vmatpush1.bf16.msra.mxu0 0
    %2409 = vmatprep.subr.bf16.mxu0 0
    %2410 = vmatpush1.bf16.msra.mxu0 0
    %2411 = vmatprep.mubr.bf16.mxu0 0
    %2412 = vmatmul.mubr.bf16.gmra.mrb[0].mxu0 %v2377
    %v2413 = vpop.f32.mrb[0].mxu0
    %v2414 = vadd.f32 0.0, %v2413
    %v2415 = vpop.f32.mrb[0].mxu0
    %v2416 = vpop.f32.mrb[0].mxu0
    %v2417 = vpop.f32.mrb[0].mxu0
    %2418 = vdwg.mxu0
    %v2419 = vadd.f32 %v2375, %v2414
    %v2420 = vadd.f32 %v2419, %v916
    %v2421 = vmax.f32 %v2420, 0.0
    %v2422 = vpack.c.bf16 %v2421, %v2421
    %v2439 = vunpack.c.l.b16 %v203
    %v2440 = vunpack.c.h.b16 %v203
    %v2441 = vunpack.c.l.b16 %v204
    %v2442 = vunpack.c.h.b16 %v204
    %v2443 = vunpack.c.l.b16 %v205
    %v2444 = vunpack.c.h.b16 %v205
    %v2445 = vunpack.c.l.b16 %v206
    %v2446 = vunpack.c.h.b16 %v206
    %v2447 = vunpack.c.l.b16 %v207
    %v2448 = vunpack.c.h.b16 %v207
    %v2449 = vunpack.c.l.b16 %v208
    %v2450 = vunpack.c.h.b16 %v208
    %v2451 = vunpack.c.l.b16 %v209
    %v2452 = vunpack.c.h.b16 %v209
    %v2453 = vunpack.c.l.b16 %v210
    %v2454 = vunpack.c.h.b16 %v210
    %v2455 = vunpack.c.l.b16 %v211
    %v2456 = vunpack.c.h.b16 %v211
    %v2457 = vunpack.c.l.b16 %v212
    %v2458 = vunpack.c.h.b16 %v212
    %v2459 = vunpack.c.l.b16 %v213
    %v2460 = vunpack.c.h.b16 %v213
    %v2461 = vunpack.c.l.b16 %v214
    %v2462 = vunpack.c.h.b16 %v214
    %v2463 = vunpack.c.l.b16 %v215
    %v2464 = vunpack.c.h.b16 %v215
    %v2465 = vunpack.c.l.b16 %v216
    %v2466 = vunpack.c.h.b16 %v216
    %v2467 = vunpack.c.l.b16 %v217
    %v2468 = vunpack.c.h.b16 %v217
    %v2469 = vunpack.c.l.b16 %v218
    %v2470 = vunpack.c.h.b16 %v218
    %v2471 = vpack.c.b16 %v2441, %v2439
    %v2472 = vpack.c.b16 %v2442, %v2440
    %v2473 = vpack.c.b16 %v2445, %v2443
    %v2474 = vpack.c.b16 %v2446, %v2444
    %v2475 = vpack.c.b16 %v2449, %v2447
    %v2476 = vpack.c.b16 %v2450, %v2448
    %v2477 = vpack.c.b16 %v2453, %v2451
    %v2478 = vpack.c.b16 %v2454, %v2452
    %v2479 = vpack.c.b16 %v2457, %v2455
    %v2480 = vpack.c.b16 %v2458, %v2456
    %v2481 = vpack.c.b16 %v2461, %v2459
    %v2482 = vpack.c.b16 %v2462, %v2460
    %v2483 = vpack.c.b16 %v2465, %v2463
    %v2484 = vpack.c.b16 %v2466, %v2464
    %v2485 = vpack.c.b16 %v2469, %v2467
    %v2486 = vpack.c.b16 %v2470, %v2468
    %2503 = vmatprep.subr.bf16.mxu0 %v2472
    %2504 = vmatpush1.bf16.msra.mxu0 %v2471
    %2505 = vmatprep.subr.bf16.mxu0 %v2474
    %2506 = vmatpush1.bf16.msra.mxu0 %v2473
    %2507 = vmatprep.subr.bf16.mxu0 %v2476
    %2508 = vmatpush1.bf16.msra.mxu0 %v2475
    %2509 = vmatprep.subr.bf16.mxu0 %v2478
    %2510 = vmatpush1.bf16.msra.mxu0 %v2477
    %2511 = vmatprep.subr.bf16.mxu0 %v2480
    %2512 = vmatpush1.bf16.msra.mxu0 %v2479
    %2513 = vmatprep.subr.bf16.mxu0 %v2482
    %2514 = vmatpush1.bf16.msra.mxu0 %v2481
    %2515 = vmatprep.subr.bf16.mxu0 %v2484
    %2516 = vmatpush1.bf16.msra.mxu0 %v2483
    %2517 = vmatprep.subr.bf16.mxu0 %v2486
    %2518 = vmatpush1.bf16.msra.mxu0 %v2485
    %2519 = vmatprep.subr.bf16.mxu0 0
    %2520 = vmatpush1.bf16.msra.mxu0 0
    %2521 = vmatprep.subr.bf16.mxu0 0
    %2522 = vmatpush1.bf16.msra.mxu0 0
    %2523 = vmatprep.subr.bf16.mxu0 0
    %2524 = vmatpush1.bf16.msra.mxu0 0
    %2525 = vmatprep.subr.bf16.mxu0 0
    %2526 = vmatpush1.bf16.msra.mxu0 0
    %2527 = vmatprep.subr.bf16.mxu0 0
    %2528 = vmatpush1.bf16.msra.mxu0 0
    %2529 = vmatprep.subr.bf16.mxu0 0
    %2530 = vmatpush1.bf16.msra.mxu0 0
    %2531 = vmatprep.subr.bf16.mxu0 0
    %2532 = vmatpush1.bf16.msra.mxu0 0
    %2533 = vmatprep.subr.bf16.mxu0 0
    %2534 = vmatpush1.bf16.msra.mxu0 0
    %2535 = vmatprep.mubr.bf16.mxu0 0
    %2536 = vmatmul.mubr.bf16.gmra.mrb[0].mxu0 %v2422
    %v2537 = vpop.f32.mrb[0].mxu0
    %v2538 = vadd.f32 0.0, %v2537
    %v2539 = vpop.f32.mrb[0].mxu0
    %v2540 = vadd.f32 0.0, %v2539
    %v2541 = vpop.f32.mrb[0].mxu0
    %v2542 = vpop.f32.mrb[0].mxu0
    %2543 = vdwg.mxu0
    %v2544 = vadd.f32 %v2042, %v2538
    %v2545 = vadd.f32 %v2043, %v2540
    %2546 = vmatprep.subr.bf16.mxu0 0
    %2547 = vmatpush1.bf16.msra.mxu0 %v317
    %2548 = vmatprep.subr.bf16.mxu0 0
    %2549 = vmatpush1.bf16.msra.mxu0 %v318
    %2550 = vmatprep.subr.bf16.mxu0 0
    %2551 = vmatpush1.bf16.msra.mxu0 %v319
    %2552 = vmatprep.subr.bf16.mxu0 0
    %2553 = vmatpush1.bf16.msra.mxu0 %v320
    %2554 = vmatprep.subr.bf16.mxu0 0
    %2555 = vmatpush1.bf16.msra.mxu0 0
    %2556 = vmatprep.subr.bf16.mxu0 0
    %2557 = vmatpush1.bf16.msra.mxu0 0
    %2558 = vmatprep.subr.bf16.mxu0 0
    %2559 = vmatpush1.bf16.msra.mxu0 0
    %2560 = vmatprep.subr.bf16.mxu0 0
    %2561 = vmatpush1.bf16.msra.mxu0 0
    %2562 = vmatprep.subr.bf16.mxu0 0
    %2563 = vmatpush1.bf16.msra.mxu0 0
    %2564 = vmatprep.subr.bf16.mxu0 0
    %2565 = vmatpush1.bf16.msra.mxu0 0
    %2566 = vmatprep.subr.bf16.mxu0 0
    %2567 = vmatpush1.bf16.msra.mxu0 0
    %2568 = vmatprep.subr.bf16.mxu0 0
    %2569 = vmatpush1.bf16.msra.mxu0 0
    %2570 = vmatprep.subr.bf16.mxu0 0
    %2571 = vmatpush1.bf16.msra.mxu0 0
    %2572 = vmatprep.subr.bf16.mxu0 0
    %2573 = vmatpush1.bf16.msra.mxu0 0
    %2574 = vmatprep.subr.bf16.mxu0 0
    %2575 = vmatpush1.bf16.msra.mxu0 0
    %2576 = vmatprep.subr.bf16.mxu0 0
    %2577 = vmatpush1.bf16.msra.mxu0 0
    %2578 = vmatprep.mubr.bf16.mxu0 0
    %2579 = vmatmul.mubr.bf16.gmra.mrb[0].mxu0 %v665
    %v2580 = vpop.f32.mrb[0].mxu0
    %v2581 = vadd.f32 0.0, %v2580
    %v2582 = vpop.f32.mrb[0].mxu0
    %v2583 = vpop.f32.mrb[0].mxu0
    %v2584 = vpop.f32.mrb[0].mxu0
    %2585 = vdwg.mxu0
    %2586 = vmatprep.subr.bf16.mxu0 0
    %2587 = vmatpush1.bf16.msra.mxu0 %v385
    %2588 = vmatprep.subr.bf16.mxu0 0
    %2589 = vmatpush1.bf16.msra.mxu0 %v386
    %2590 = vmatprep.subr.bf16.mxu0 0
    %2591 = vmatpush1.bf16.msra.mxu0 %v387
    %2592 = vmatprep.subr.bf16.mxu0 0
    %2593 = vmatpush1.bf16.msra.mxu0 %v388
    %2594 = vmatprep.subr.bf16.mxu0 0
    %2595 = vmatpush1.bf16.msra.mxu0 0
    %2596 = vmatprep.subr.bf16.mxu0 0
    %2597 = vmatpush1.bf16.msra.mxu0 0
    %2598 = vmatprep.subr.bf16.mxu0 0
    %2599 = vmatpush1.bf16.msra.mxu0 0
    %2600 = vmatprep.subr.bf16.mxu0 0
    %2601 = vmatpush1.bf16.msra.mxu0 0
    %2602 = vmatprep.subr.bf16.mxu0 0
    %2603 = vmatpush1.bf16.msra.mxu0 0
    %2604 = vmatprep.subr.bf16.mxu0 0
    %2605 = vmatpush1.bf16.msra.mxu0 0
    %2606 = vmatprep.subr.bf16.mxu0 0
    %2607 = vmatpush1.bf16.msra.mxu0 0
    %2608 = vmatprep.subr.bf16.mxu0 0
    %2609 = vmatpush1.bf16.msra.mxu0 0
    %2610 = vmatprep.subr.bf16.mxu0 0
    %2611 = vmatpush1.bf16.msra.mxu0 0
    %2612 = vmatprep.subr.bf16.mxu0 0
    %2613 = vmatpush1.bf16.msra.mxu0 0
    %2614 = vmatprep.subr.bf16.mxu0 0
    %2615 = vmatpush1.bf16.msra.mxu0 0
    %2616 = vmatprep.subr.bf16.mxu0 0
    %2617 = vmatpush1.bf16.msra.mxu0 0
    %2618 = vmatprep.mubr.bf16.mxu0 0
    %2619 = vmatmul.mubr.bf16.gmra.mrb[0].mxu0 %v597
    %v2620 = vpop.f32.mrb[0].mxu0
    %v2621 = vadd.f32 %v2581, %v2620
    %v2622 = vpop.f32.mrb[0].mxu0
    %v2623 = vpop.f32.mrb[0].mxu0
    %v2624 = vpop.f32.mrb[0].mxu0
    %2625 = vdwg.mxu0
    %2626 = vmatprep.subr.bf16.mxu0 0
    %2627 = vmatpush1.bf16.msra.mxu0 %v452
    %2628 = vmatprep.subr.bf16.mxu0 0
    %2629 = vmatpush1.bf16.msra.mxu0 %v453
    %2630 = vmatprep.subr.bf16.mxu0 0
    %2631 = vmatpush1.bf16.msra.mxu0 %v454
    %2632 = vmatprep.subr.bf16.mxu0 0
    %2633 = vmatpush1.bf16.msra.mxu0 %v455
    %2634 = vmatprep.subr.bf16.mxu0 0
    %2635 = vmatpush1.bf16.msra.mxu0 0
    %2636 = vmatprep.subr.bf16.mxu0 0
    %2637 = vmatpush1.bf16.msra.mxu0 0
    %2638 = vmatprep.subr.bf16.mxu0 0
    %2639 = vmatpush1.bf16.msra.mxu0 0
    %2640 = vmatprep.subr.bf16.mxu0 0
    %2641 = vmatpush1.bf16.msra.mxu0 0
    %2642 = vmatprep.subr.bf16.mxu0 0
    %2643 = vmatpush1.bf16.msra.mxu0 0
    %2644 = vmatprep.subr.bf16.mxu0 0
    %2645 = vmatpush1.bf16.msra.mxu0 0
    %2646 = vmatprep.subr.bf16.mxu0 0
    %2647 = vmatpush1.bf16.msra.mxu0 0
    %2648 = vmatprep.subr.bf16.mxu0 0
    %2649 = vmatpush1.bf16.msra.mxu0 0
    %2650 = vmatprep.subr.bf16.mxu0 0
    %2651 = vmatpush1.bf16.msra.mxu0 0
    %2652 = vmatprep.subr.bf16.mxu0 0
    %2653 = vmatpush1.bf16.msra.mxu0 0
    %2654 = vmatprep.subr.bf16.mxu0 0
    %2655 = vmatpush1.bf16.msra.mxu0 0
    %2656 = vmatprep.subr.bf16.mxu0 0
    %2657 = vmatpush1.bf16.msra.mxu0 0
    %2658 = vmatprep.mubr.bf16.mxu0 0
    %2659 = vmatmul.mubr.bf16.gmra.mrb[0].mxu0 %v1128
    %v2660 = vpop.f32.mrb[0].mxu0
    %v2661 = vadd.f32 0.0, %v2660
    %v2662 = vpop.f32.mrb[0].mxu0
    %v2663 = vpop.f32.mrb[0].mxu0
    %v2664 = vpop.f32.mrb[0].mxu0
    %2665 = vdwg.mxu0
    %v2666 = vadd.f32 %v2621, %v2661
    %2667 = vmatprep.subr.bf16.mxu0 0
    %2668 = vmatpush1.bf16.msra.mxu0 %v520
    %2669 = vmatprep.subr.bf16.mxu0 0
    %2670 = vmatpush1.bf16.msra.mxu0 %v521
    %2671 = vmatprep.subr.bf16.mxu0 0
    %2672 = vmatpush1.bf16.msra.mxu0 %v522
    %2673 = vmatprep.subr.bf16.mxu0 0
    %2674 = vmatpush1.bf16.msra.mxu0 %v523
    %2675 = vmatprep.subr.bf16.mxu0 0
    %2676 = vmatpush1.bf16.msra.mxu0 0
    %2677 = vmatprep.subr.bf16.mxu0 0
    %2678 = vmatpush1.bf16.msra.mxu0 0
    %2679 = vmatprep.subr.bf16.mxu0 0
    %2680 = vmatpush1.bf16.msra.mxu0 0
    %2681 = vmatprep.subr.bf16.mxu0 0
    %2682 = vmatpush1.bf16.msra.mxu0 0
    %2683 = vmatprep.subr.bf16.mxu0 0
    %2684 = vmatpush1.bf16.msra.mxu0 0
    %2685 = vmatprep.subr.bf16.mxu0 0
    %2686 = vmatpush1.bf16.msra.mxu0 0
    %2687 = vmatprep.subr.bf16.mxu0 0
    %2688 = vmatpush1.bf16.msra.mxu0 0
    %2689 = vmatprep.subr.bf16.mxu0 0
    %2690 = vmatpush1.bf16.msra.mxu0 0
    %2691 = vmatprep.subr.bf16.mxu0 0
    %2692 = vmatpush1.bf16.msra.mxu0 0
    %2693 = vmatprep.subr.bf16.mxu0 0
    %2694 = vmatpush1.bf16.msra.mxu0 0
    %2695 = vmatprep.subr.bf16.mxu0 0
    %2696 = vmatpush1.bf16.msra.mxu0 0
    %2697 = vmatprep.subr.bf16.mxu0 0
    %2698 = vmatpush1.bf16.msra.mxu0 0
    %2699 = vmatprep.mubr.bf16.mxu0 0
    %2700 = vmatmul.mubr.bf16.gmra.mrb[0].mxu0 %v801
    %v2701 = vpop.f32.mrb[0].mxu0
    %v2702 = vadd.f32 0.0, %v2701
    %v2703 = vpop.f32.mrb[0].mxu0
    %v2704 = vpop.f32.mrb[0].mxu0
    %v2705 = vpop.f32.mrb[0].mxu0
    %2706 = vdwg.mxu0
    %v2707 = vadd.f32 %v2666, %v2702
    %2708 = vmatprep.subr.bf16.mxu0 0
    %2709 = vmatpush1.bf16.msra.mxu0 %v588
    %2710 = vmatprep.subr.bf16.mxu0 0
    %2711 = vmatpush1.bf16.msra.mxu0 %v589
    %2712 = vmatprep.subr.bf16.mxu0 0
    %2713 = vmatpush1.bf16.msra.mxu0 %v590
    %2714 = vmatprep.subr.bf16.mxu0 0
    %2715 = vmatpush1.bf16.msra.mxu0 %v591
    %2716 = vmatprep.subr.bf16.mxu0 0
    %2717 = vmatpush1.bf16.msra.mxu0 0
    %2718 = vmatprep.subr.bf16.mxu0 0
    %2719 = vmatpush1.bf16.msra.mxu0 0
    %2720 = vmatprep.subr.bf16.mxu0 0
    %2721 = vmatpush1.bf16.msra.mxu0 0
    %2722 = vmatprep.subr.bf16.mxu0 0
    %2723 = vmatpush1.bf16.msra.mxu0 0
    %2724 = vmatprep.subr.bf16.mxu0 0
    %2725 = vmatpush1.bf16.msra.mxu0 0
    %2726 = vmatprep.subr.bf16.mxu0 0
    %2727 = vmatpush1.bf16.msra.mxu0 0
    %2728 = vmatprep.subr.bf16.mxu0 0
    %2729 = vmatpush1.bf16.msra.mxu0 0
    %2730 = vmatprep.subr.bf16.mxu0 0
    %2731 = vmatpush1.bf16.msra.mxu0 0
    %2732 = vmatprep.subr.bf16.mxu0 0
    %2733 = vmatpush1.bf16.msra.mxu0 0
    %2734 = vmatprep.subr.bf16.mxu0 0
    %2735 = vmatpush1.bf16.msra.mxu0 0
    %2736 = vmatprep.subr.bf16.mxu0 0
    %2737 = vmatpush1.bf16.msra.mxu0 0
    %2738 = vmatprep.subr.bf16.mxu0 0
    %2739 = vmatpush1.bf16.msra.mxu0 0
    %2740 = vmatprep.mubr.bf16.mxu0 0
    %2741 = vmatmul.mubr.bf16.gmra.mrb[0].mxu0 %v869
    %v2742 = vpop.f32.mrb[0].mxu0
    %v2743 = vadd.f32 0.0, %v2742
    %v2744 = vpop.f32.mrb[0].mxu0
    %v2745 = vpop.f32.mrb[0].mxu0
    %v2746 = vpop.f32.mrb[0].mxu0
    %2747 = vdwg.mxu0
    %v2748 = vadd.f32 %v2707, %v2743
    %2749 = vmatprep.subr.bf16.mxu0 0
    %2750 = vmatpush1.bf16.msra.mxu0 %v656
    %2751 = vmatprep.subr.bf16.mxu0 0
    %2752 = vmatpush1.bf16.msra.mxu0 %v657
    %2753 = vmatprep.subr.bf16.mxu0 0
    %2754 = vmatpush1.bf16.msra.mxu0 %v658
    %2755 = vmatprep.subr.bf16.mxu0 0
    %2756 = vmatpush1.bf16.msra.mxu0 %v659
    %2757 = vmatprep.subr.bf16.mxu0 0
    %2758 = vmatpush1.bf16.msra.mxu0 0
    %2759 = vmatprep.subr.bf16.mxu0 0
    %2760 = vmatpush1.bf16.msra.mxu0 0
    %2761 = vmatprep.subr.bf16.mxu0 0
    %2762 = vmatpush1.bf16.msra.mxu0 0
    %2763 = vmatprep.subr.bf16.mxu0 0
    %2764 = vmatpush1.bf16.msra.mxu0 0
    %2765 = vmatprep.subr.bf16.mxu0 0
    %2766 = vmatpush1.bf16.msra.mxu0 0
    %2767 = vmatprep.subr.bf16.mxu0 0
    %2768 = vmatpush1.bf16.msra.mxu0 0
    %2769 = vmatprep.subr.bf16.mxu0 0
    %2770 = vmatpush1.bf16.msra.mxu0 0
    %2771 = vmatprep.subr.bf16.mxu0 0
    %2772 = vmatpush1.bf16.msra.mxu0 0
    %2773 = vmatprep.subr.bf16.mxu0 0
    %2774 = vmatpush1.bf16.msra.mxu0 0
    %2775 = vmatprep.subr.bf16.mxu0 0
    %2776 = vmatpush1.bf16.msra.mxu0 0
    %2777 = vmatprep.subr.bf16.mxu0 0
    %2778 = vmatpush1.bf16.msra.mxu0 0
    %2779 = vmatprep.subr.bf16.mxu0 0
    %2780 = vmatpush1.bf16.msra.mxu0 0
    %2781 = vmatprep.mubr.bf16.mxu0 0
    %2782 = vmatmul.mubr.bf16.gmra.mrb[0].mxu0 %v1254
    %v2783 = vpop.f32.mrb[0].mxu0
    %v2784 = vadd.f32 0.0, %v2783
    %v2785 = vpop.f32.mrb[0].mxu0
    %v2786 = vpop.f32.mrb[0].mxu0
    %v2787 = vpop.f32.mrb[0].mxu0
    %2788 = vdwg.mxu0
    %v2789 = vadd.f32 %v2748, %v2784
    %2790 = vmatprep.subr.bf16.mxu0 0
    %2791 = vmatpush1.bf16.msra.mxu0 %v724
    %2792 = vmatprep.subr.bf16.mxu0 0
    %2793 = vmatpush1.bf16.msra.mxu0 %v725
    %2794 = vmatprep.subr.bf16.mxu0 0
    %2795 = vmatpush1.bf16.msra.mxu0 %v726
    %2796 = vmatprep.subr.bf16.mxu0 0
    %2797 = vmatpush1.bf16.msra.mxu0 %v727
    %2798 = vmatprep.subr.bf16.mxu0 0
    %2799 = vmatpush1.bf16.msra.mxu0 0
    %2800 = vmatprep.subr.bf16.mxu0 0
    %2801 = vmatpush1.bf16.msra.mxu0 0
    %2802 = vmatprep.subr.bf16.mxu0 0
    %2803 = vmatpush1.bf16.msra.mxu0 0
    %2804 = vmatprep.subr.bf16.mxu0 0
    %2805 = vmatpush1.bf16.msra.mxu0 0
    %2806 = vmatprep.subr.bf16.mxu0 0
    %2807 = vmatpush1.bf16.msra.mxu0 0
    %2808 = vmatprep.subr.bf16.mxu0 0
    %2809 = vmatpush1.bf16.msra.mxu0 0
    %2810 = vmatprep.subr.bf16.mxu0 0
    %2811 = vmatpush1.bf16.msra.mxu0 0
    %2812 = vmatprep.subr.bf16.mxu0 0
    %2813 = vmatpush1.bf16.msra.mxu0 0
    %2814 = vmatprep.subr.bf16.mxu0 0
    %2815 = vmatpush1.bf16.msra.mxu0 0
    %2816 = vmatprep.subr.bf16.mxu0 0
    %2817 = vmatpush1.bf16.msra.mxu0 0
    %2818 = vmatprep.subr.bf16.mxu0 0
    %2819 = vmatpush1.bf16.msra.mxu0 0
    %2820 = vmatprep.subr.bf16.mxu0 0
    %2821 = vmatpush1.bf16.msra.mxu0 0
    %2822 = vmatprep.mubr.bf16.mxu0 0
    %2823 = vmatmul.mubr.bf16.gmra.mrb[0].mxu0 %v2333
    %v2824 = vpop.f32.mrb[0].mxu0
    %v2825 = vadd.f32 0.0, %v2824
    %v2826 = vpop.f32.mrb[0].mxu0
    %v2827 = vpop.f32.mrb[0].mxu0
    %v2828 = vpop.f32.mrb[0].mxu0
    %2829 = vdwg.mxu0
    %v2830 = vadd.f32 %v2789, %v2825
    %2831 = vmatprep.subr.bf16.mxu0 0
    %2832 = vmatpush1.bf16.msra.mxu0 %v792
    %2833 = vmatprep.subr.bf16.mxu0 0
    %2834 = vmatpush1.bf16.msra.mxu0 %v793
    %2835 = vmatprep.subr.bf16.mxu0 0
    %2836 = vmatpush1.bf16.msra.mxu0 %v794
    %2837 = vmatprep.subr.bf16.mxu0 0
    %2838 = vmatpush1.bf16.msra.mxu0 %v795
    %2839 = vmatprep.subr.bf16.mxu0 0
    %2840 = vmatpush1.bf16.msra.mxu0 0
    %2841 = vmatprep.subr.bf16.mxu0 0
    %2842 = vmatpush1.bf16.msra.mxu0 0
    %2843 = vmatprep.subr.bf16.mxu0 0
    %2844 = vmatpush1.bf16.msra.mxu0 0
    %2845 = vmatprep.subr.bf16.mxu0 0
    %2846 = vmatpush1.bf16.msra.mxu0 0
    %2847 = vmatprep.subr.bf16.mxu0 0
    %2848 = vmatpush1.bf16.msra.mxu0 0
    %2849 = vmatprep.subr.bf16.mxu0 0
    %2850 = vmatpush1.bf16.msra.mxu0 0
    %2851 = vmatprep.subr.bf16.mxu0 0
    %2852 = vmatpush1.bf16.msra.mxu0 0
    %2853 = vmatprep.subr.bf16.mxu0 0
    %2854 = vmatpush1.bf16.msra.mxu0 0
    %2855 = vmatprep.subr.bf16.mxu0 0
    %2856 = vmatpush1.bf16.msra.mxu0 0
    %2857 = vmatprep.subr.bf16.mxu0 0
    %2858 = vmatpush1.bf16.msra.mxu0 0
    %2859 = vmatprep.subr.bf16.mxu0 0
    %2860 = vmatpush1.bf16.msra.mxu0 0
    %2861 = vmatprep.subr.bf16.mxu0 0
    %2862 = vmatpush1.bf16.msra.mxu0 0
    %2863 = vmatprep.mubr.bf16.mxu0 0
    %2864 = vmatmul.mubr.bf16.gmra.mrb[0].mxu0 %v2377
    %v2865 = vpop.f32.mrb[0].mxu0
    %v2866 = vadd.f32 0.0, %v2865
    %v2867 = vpop.f32.mrb[0].mxu0
    %v2868 = vpop.f32.mrb[0].mxu0
    %v2869 = vpop.f32.mrb[0].mxu0
    %2870 = vdwg.mxu0
    %v2871 = vadd.f32 %v2830, %v2866
    %v2873 = vsel %vm325, %v76, 0
    %2875 = vmatprep.subr.bf16.mxu0 0
    %2876 = vmatpush1.bf16.msra.mxu0 %v860
    %2877 = vmatprep.subr.bf16.mxu0 0
    %2878 = vmatpush1.bf16.msra.mxu0 %v861
    %2879 = vmatprep.subr.bf16.mxu0 0
    %2880 = vmatpush1.bf16.msra.mxu0 %v862
    %2881 = vmatprep.subr.bf16.mxu0 0
    %2882 = vmatpush1.bf16.msra.mxu0 %v863
    %2883 = vmatprep.subr.bf16.mxu0 0
    %2884 = vmatpush1.bf16.msra.mxu0 0
    %2885 = vmatprep.subr.bf16.mxu0 0
    %2886 = vmatpush1.bf16.msra.mxu0 0
    %2887 = vmatprep.subr.bf16.mxu0 0
    %2888 = vmatpush1.bf16.msra.mxu0 0
    %2889 = vmatprep.subr.bf16.mxu0 0
    %2890 = vmatpush1.bf16.msra.mxu0 0
    %2891 = vmatprep.subr.bf16.mxu0 0
    %2892 = vmatpush1.bf16.msra.mxu0 0
    %2893 = vmatprep.subr.bf16.mxu0 0
    %2894 = vmatpush1.bf16.msra.mxu0 0
    %2895 = vmatprep.subr.bf16.mxu0 0
    %2896 = vmatpush1.bf16.msra.mxu0 0
    %2897 = vmatprep.subr.bf16.mxu0 0
    %2898 = vmatpush1.bf16.msra.mxu0 0
    %2899 = vmatprep.subr.bf16.mxu0 0
    %2900 = vmatpush1.bf16.msra.mxu0 0
    %2901 = vmatprep.subr.bf16.mxu0 0
    %2902 = vmatpush1.bf16.msra.mxu0 0
    %2903 = vmatprep.subr.bf16.mxu0 0
    %2904 = vmatpush1.bf16.msra.mxu0 0
    %2905 = vmatprep.subr.bf16.mxu0 0
    %2906 = vmatpush1.bf16.msra.mxu0 0
    %2907 = vmatprep.mubr.bf16.mxu0 0
    %2908 = vmatmul.mubr.bf16.gmra.mrb[0].mxu0 %v2873
    %v2909 = vpop.f32.mrb[0].mxu0
    %v2910 = vadd.f32 0.0, %v2909
    %v2911 = vpop.f32.mrb[0].mxu0
    %v2912 = vpop.f32.mrb[0].mxu0
    %v2913 = vpop.f32.mrb[0].mxu0
    %2914 = vdwg.mxu0
    %v2915 = vadd.f32 %v2871, %v2910
    %v2916 = vadd.f32 %v2915, %v916
    %v2917 = vmax.f32 %v2916, 0.0
    %v2918 = vpack.c.bf16 %v2917, %v2917
    %v2935 = vunpack.c.l.b16 %v219
    %v2936 = vunpack.c.h.b16 %v219
    %v2937 = vunpack.c.l.b16 %v220
    %v2938 = vunpack.c.h.b16 %v220
    %v2939 = vunpack.c.l.b16 %v221
    %v2940 = vunpack.c.h.b16 %v221
    %v2941 = vunpack.c.l.b16 %v222
    %v2942 = vunpack.c.h.b16 %v222
    %v2943 = vunpack.c.l.b16 %v223
    %v2944 = vunpack.c.h.b16 %v223
    %v2945 = vunpack.c.l.b16 %v224
    %v2946 = vunpack.c.h.b16 %v224
    %v2947 = vunpack.c.l.b16 %v225
    %v2948 = vunpack.c.h.b16 %v225
    %v2949 = vunpack.c.l.b16 %v226
    %v2950 = vunpack.c.h.b16 %v226
    %v2951 = vunpack.c.l.b16 %v227
    %v2952 = vunpack.c.h.b16 %v227
    %v2953 = vunpack.c.l.b16 %v228
    %v2954 = vunpack.c.h.b16 %v228
    %v2955 = vunpack.c.l.b16 %v229
    %v2956 = vunpack.c.h.b16 %v229
    %v2957 = vunpack.c.l.b16 %v230
    %v2958 = vunpack.c.h.b16 %v230
    %v2959 = vunpack.c.l.b16 %v231
    %v2960 = vunpack.c.h.b16 %v231
    %v2961 = vunpack.c.l.b16 %v232
    %v2962 = vunpack.c.h.b16 %v232
    %v2963 = vunpack.c.l.b16 %v233
    %v2964 = vunpack.c.h.b16 %v233
    %v2965 = vunpack.c.l.b16 %v234
    %v2966 = vunpack.c.h.b16 %v234
    %v2967 = vpack.c.b16 %v2937, %v2935
    %v2968 = vpack.c.b16 %v2938, %v2936
    %v2969 = vpack.c.b16 %v2941, %v2939
    %v2970 = vpack.c.b16 %v2942, %v2940
    %v2971 = vpack.c.b16 %v2945, %v2943
    %v2972 = vpack.c.b16 %v2946, %v2944
    %v2973 = vpack.c.b16 %v2949, %v2947
    %v2974 = vpack.c.b16 %v2950, %v2948
    %v2975 = vpack.c.b16 %v2953, %v2951
    %v2976 = vpack.c.b16 %v2954, %v2952
    %v2977 = vpack.c.b16 %v2957, %v2955
    %v2978 = vpack.c.b16 %v2958, %v2956
    %v2979 = vpack.c.b16 %v2961, %v2959
    %v2980 = vpack.c.b16 %v2962, %v2960
    %v2981 = vpack.c.b16 %v2965, %v2963
    %v2982 = vpack.c.b16 %v2966, %v2964
    %2999 = vmatprep.subr.bf16.mxu0 %v2968
    %3000 = vmatpush1.bf16.msra.mxu0 %v2967
    %3001 = vmatprep.subr.bf16.mxu0 %v2970
    %3002 = vmatpush1.bf16.msra.mxu0 %v2969
    %3003 = vmatprep.subr.bf16.mxu0 %v2972
    %3004 = vmatpush1.bf16.msra.mxu0 %v2971
    %3005 = vmatprep.subr.bf16.mxu0 %v2974
    %3006 = vmatpush1.bf16.msra.mxu0 %v2973
    %3007 = vmatprep.subr.bf16.mxu0 %v2976
    %3008 = vmatpush1.bf16.msra.mxu0 %v2975
    %3009 = vmatprep.subr.bf16.mxu0 %v2978
    %3010 = vmatpush1.bf16.msra.mxu0 %v2977
    %3011 = vmatprep.subr.bf16.mxu0 %v2980
    %3012 = vmatpush1.bf16.msra.mxu0 %v2979
    %3013 = vmatprep.subr.bf16.mxu0 %v2982
    %3014 = vmatpush1.bf16.msra.mxu0 %v2981
    %3015 = vmatprep.subr.bf16.mxu0 0
    %3016 = vmatpush1.bf16.msra.mxu0 0
    %3017 = vmatprep.subr.bf16.mxu0 0
    %3018 = vmatpush1.bf16.msra.mxu0 0
    %3019 = vmatprep.subr.bf16.mxu0 0
    %3020 = vmatpush1.bf16.msra.mxu0 0
    %3021 = vmatprep.subr.bf16.mxu0 0
    %3022 = vmatpush1.bf16.msra.mxu0 0
    %3023 = vmatprep.subr.bf16.mxu0 0
    %3024 = vmatpush1.bf16.msra.mxu0 0
    %3025 = vmatprep.subr.bf16.mxu0 0
    %3026 = vmatpush1.bf16.msra.mxu0 0
    %3027 = vmatprep.subr.bf16.mxu0 0
    %3028 = vmatpush1.bf16.msra.mxu0 0
    %3029 = vmatprep.subr.bf16.mxu0 0
    %3030 = vmatpush1.bf16.msra.mxu0 0
    %3031 = vmatprep.mubr.bf16.mxu0 0
    %3032 = vmatmul.mubr.bf16.gmra.mrb[0].mxu0 %v2918
    %v3033 = vpop.f32.mrb[0].mxu0
    %v3034 = vadd.f32 0.0, %v3033
    %v3035 = vpop.f32.mrb[0].mxu0
    %v3036 = vadd.f32 0.0, %v3035
    %v3037 = vpop.f32.mrb[0].mxu0
    %v3038 = vpop.f32.mrb[0].mxu0
    %3039 = vdwg.mxu0
    %v3040 = vadd.f32 %v2544, %v3034
    %v3041 = vadd.f32 %v2545, %v3036
    %3042 = vmatprep.subr.bf16.mxu0 0
    %3043 = vmatpush1.bf16.msra.mxu0 %v317
    %3044 = vmatprep.subr.bf16.mxu0 0
    %3045 = vmatpush1.bf16.msra.mxu0 %v318
    %3046 = vmatprep.subr.bf16.mxu0 0
    %3047 = vmatpush1.bf16.msra.mxu0 %v319
    %3048 = vmatprep.subr.bf16.mxu0 0
    %3049 = vmatpush1.bf16.msra.mxu0 %v320
    %3050 = vmatprep.subr.bf16.mxu0 0
    %3051 = vmatpush1.bf16.msra.mxu0 0
    %3052 = vmatprep.subr.bf16.mxu0 0
    %3053 = vmatpush1.bf16.msra.mxu0 0
    %3054 = vmatprep.subr.bf16.mxu0 0
    %3055 = vmatpush1.bf16.msra.mxu0 0
    %3056 = vmatprep.subr.bf16.mxu0 0
    %3057 = vmatpush1.bf16.msra.mxu0 0
    %3058 = vmatprep.subr.bf16.mxu0 0
    %3059 = vmatpush1.bf16.msra.mxu0 0
    %3060 = vmatprep.subr.bf16.mxu0 0
    %3061 = vmatpush1.bf16.msra.mxu0 0
    %3062 = vmatprep.subr.bf16.mxu0 0
    %3063 = vmatpush1.bf16.msra.mxu0 0
    %3064 = vmatprep.subr.bf16.mxu0 0
    %3065 = vmatpush1.bf16.msra.mxu0 0
    %3066 = vmatprep.subr.bf16.mxu0 0
    %3067 = vmatpush1.bf16.msra.mxu0 0
    %3068 = vmatprep.subr.bf16.mxu0 0
    %3069 = vmatpush1.bf16.msra.mxu0 0
    %3070 = vmatprep.subr.bf16.mxu0 0
    %3071 = vmatpush1.bf16.msra.mxu0 0
    %3072 = vmatprep.subr.bf16.mxu0 0
    %3073 = vmatpush1.bf16.msra.mxu0 0
    %3074 = vmatprep.mubr.bf16.mxu0 0
    %3075 = vmatmul.mubr.bf16.gmra.mrb[0].mxu0 %v1128
    %v3076 = vpop.f32.mrb[0].mxu0
    %v3077 = vadd.f32 0.0, %v3076
    %v3078 = vpop.f32.mrb[0].mxu0
    %v3079 = vpop.f32.mrb[0].mxu0
    %v3080 = vpop.f32.mrb[0].mxu0
    %3081 = vdwg.mxu0
    %3082 = vmatprep.subr.bf16.mxu0 0
    %3083 = vmatpush1.bf16.msra.mxu0 %v385
    %3084 = vmatprep.subr.bf16.mxu0 0
    %3085 = vmatpush1.bf16.msra.mxu0 %v386
    %3086 = vmatprep.subr.bf16.mxu0 0
    %3087 = vmatpush1.bf16.msra.mxu0 %v387
    %3088 = vmatprep.subr.bf16.mxu0 0
    %3089 = vmatpush1.bf16.msra.mxu0 %v388
    %3090 = vmatprep.subr.bf16.mxu0 0
    %3091 = vmatpush1.bf16.msra.mxu0 0
    %3092 = vmatprep.subr.bf16.mxu0 0
    %3093 = vmatpush1.bf16.msra.mxu0 0
    %3094 = vmatprep.subr.bf16.mxu0 0
    %3095 = vmatpush1.bf16.msra.mxu0 0
    %3096 = vmatprep.subr.bf16.mxu0 0
    %3097 = vmatpush1.bf16.msra.mxu0 0
    %3098 = vmatprep.subr.bf16.mxu0 0
    %3099 = vmatpush1.bf16.msra.mxu0 0
    %3100 = vmatprep.subr.bf16.mxu0 0
    %3101 = vmatpush1.bf16.msra.mxu0 0
    %3102 = vmatprep.subr.bf16.mxu0 0
    %3103 = vmatpush1.bf16.msra.mxu0 0
    %3104 = vmatprep.subr.bf16.mxu0 0
    %3105 = vmatpush1.bf16.msra.mxu0 0
    %3106 = vmatprep.subr.bf16.mxu0 0
    %3107 = vmatpush1.bf16.msra.mxu0 0
    %3108 = vmatprep.subr.bf16.mxu0 0
    %3109 = vmatpush1.bf16.msra.mxu0 0
    %3110 = vmatprep.subr.bf16.mxu0 0
    %3111 = vmatpush1.bf16.msra.mxu0 0
    %3112 = vmatprep.subr.bf16.mxu0 0
    %3113 = vmatpush1.bf16.msra.mxu0 0
    %3114 = vmatprep.mubr.bf16.mxu0 0
    %3115 = vmatmul.mubr.bf16.gmra.mrb[0].mxu0 %v665
    %v3116 = vpop.f32.mrb[0].mxu0
    %v3117 = vadd.f32 %v3077, %v3116
    %v3118 = vpop.f32.mrb[0].mxu0
    %v3119 = vpop.f32.mrb[0].mxu0
    %v3120 = vpop.f32.mrb[0].mxu0
    %3121 = vdwg.mxu0
    %3122 = vmatprep.subr.bf16.mxu0 0
    %3123 = vmatpush1.bf16.msra.mxu0 %v452
    %3124 = vmatprep.subr.bf16.mxu0 0
    %3125 = vmatpush1.bf16.msra.mxu0 %v453
    %3126 = vmatprep.subr.bf16.mxu0 0
    %3127 = vmatpush1.bf16.msra.mxu0 %v454
    %3128 = vmatprep.subr.bf16.mxu0 0
    %3129 = vmatpush1.bf16.msra.mxu0 %v455
    %3130 = vmatprep.subr.bf16.mxu0 0
    %3131 = vmatpush1.bf16.msra.mxu0 0
    %3132 = vmatprep.subr.bf16.mxu0 0
    %3133 = vmatpush1.bf16.msra.mxu0 0
    %3134 = vmatprep.subr.bf16.mxu0 0
    %3135 = vmatpush1.bf16.msra.mxu0 0
    %3136 = vmatprep.subr.bf16.mxu0 0
    %3137 = vmatpush1.bf16.msra.mxu0 0
    %3138 = vmatprep.subr.bf16.mxu0 0
    %3139 = vmatpush1.bf16.msra.mxu0 0
    %3140 = vmatprep.subr.bf16.mxu0 0
    %3141 = vmatpush1.bf16.msra.mxu0 0
    %3142 = vmatprep.subr.bf16.mxu0 0
    %3143 = vmatpush1.bf16.msra.mxu0 0
    %3144 = vmatprep.subr.bf16.mxu0 0
    %3145 = vmatpush1.bf16.msra.mxu0 0
    %3146 = vmatprep.subr.bf16.mxu0 0
    %3147 = vmatpush1.bf16.msra.mxu0 0
    %3148 = vmatprep.subr.bf16.mxu0 0
    %3149 = vmatpush1.bf16.msra.mxu0 0
    %3150 = vmatprep.subr.bf16.mxu0 0
    %3151 = vmatpush1.bf16.msra.mxu0 0
    %3152 = vmatprep.subr.bf16.mxu0 0
    %3153 = vmatpush1.bf16.msra.mxu0 0
    %3154 = vmatprep.mubr.bf16.mxu0 0
    %3155 = vmatmul.mubr.bf16.gmra.mrb[0].mxu0 %v1749
    %v3156 = vpop.f32.mrb[0].mxu0
    %v3157 = vadd.f32 0.0, %v3156
    %v3158 = vpop.f32.mrb[0].mxu0
    %v3159 = vpop.f32.mrb[0].mxu0
    %v3160 = vpop.f32.mrb[0].mxu0
    %3161 = vdwg.mxu0
    %v3162 = vadd.f32 %v3117, %v3157
    %3163 = vmatprep.subr.bf16.mxu0 0
    %3164 = vmatpush1.bf16.msra.mxu0 %v520
    %3165 = vmatprep.subr.bf16.mxu0 0
    %3166 = vmatpush1.bf16.msra.mxu0 %v521
    %3167 = vmatprep.subr.bf16.mxu0 0
    %3168 = vmatpush1.bf16.msra.mxu0 %v522
    %3169 = vmatprep.subr.bf16.mxu0 0
    %3170 = vmatpush1.bf16.msra.mxu0 %v523
    %3171 = vmatprep.subr.bf16.mxu0 0
    %3172 = vmatpush1.bf16.msra.mxu0 0
    %3173 = vmatprep.subr.bf16.mxu0 0
    %3174 = vmatpush1.bf16.msra.mxu0 0
    %3175 = vmatprep.subr.bf16.mxu0 0
    %3176 = vmatpush1.bf16.msra.mxu0 0
    %3177 = vmatprep.subr.bf16.mxu0 0
    %3178 = vmatpush1.bf16.msra.mxu0 0
    %3179 = vmatprep.subr.bf16.mxu0 0
    %3180 = vmatpush1.bf16.msra.mxu0 0
    %3181 = vmatprep.subr.bf16.mxu0 0
    %3182 = vmatpush1.bf16.msra.mxu0 0
    %3183 = vmatprep.subr.bf16.mxu0 0
    %3184 = vmatpush1.bf16.msra.mxu0 0
    %3185 = vmatprep.subr.bf16.mxu0 0
    %3186 = vmatpush1.bf16.msra.mxu0 0
    %3187 = vmatprep.subr.bf16.mxu0 0
    %3188 = vmatpush1.bf16.msra.mxu0 0
    %3189 = vmatprep.subr.bf16.mxu0 0
    %3190 = vmatpush1.bf16.msra.mxu0 0
    %3191 = vmatprep.subr.bf16.mxu0 0
    %3192 = vmatpush1.bf16.msra.mxu0 0
    %3193 = vmatprep.subr.bf16.mxu0 0
    %3194 = vmatpush1.bf16.msra.mxu0 0
    %3195 = vmatprep.mubr.bf16.mxu0 0
    %3196 = vmatmul.mubr.bf16.gmra.mrb[0].mxu0 %v869
    %v3197 = vpop.f32.mrb[0].mxu0
    %v3198 = vadd.f32 0.0, %v3197
    %v3199 = vpop.f32.mrb[0].mxu0
    %v3200 = vpop.f32.mrb[0].mxu0
    %v3201 = vpop.f32.mrb[0].mxu0
    %3202 = vdwg.mxu0
    %v3203 = vadd.f32 %v3162, %v3198
    %3204 = vmatprep.subr.bf16.mxu0 0
    %3205 = vmatpush1.bf16.msra.mxu0 %v588
    %3206 = vmatprep.subr.bf16.mxu0 0
    %3207 = vmatpush1.bf16.msra.mxu0 %v589
    %3208 = vmatprep.subr.bf16.mxu0 0
    %3209 = vmatpush1.bf16.msra.mxu0 %v590
    %3210 = vmatprep.subr.bf16.mxu0 0
    %3211 = vmatpush1.bf16.msra.mxu0 %v591
    %3212 = vmatprep.subr.bf16.mxu0 0
    %3213 = vmatpush1.bf16.msra.mxu0 0
    %3214 = vmatprep.subr.bf16.mxu0 0
    %3215 = vmatpush1.bf16.msra.mxu0 0
    %3216 = vmatprep.subr.bf16.mxu0 0
    %3217 = vmatpush1.bf16.msra.mxu0 0
    %3218 = vmatprep.subr.bf16.mxu0 0
    %3219 = vmatpush1.bf16.msra.mxu0 0
    %3220 = vmatprep.subr.bf16.mxu0 0
    %3221 = vmatpush1.bf16.msra.mxu0 0
    %3222 = vmatprep.subr.bf16.mxu0 0
    %3223 = vmatpush1.bf16.msra.mxu0 0
    %3224 = vmatprep.subr.bf16.mxu0 0
    %3225 = vmatpush1.bf16.msra.mxu0 0
    %3226 = vmatprep.subr.bf16.mxu0 0
    %3227 = vmatpush1.bf16.msra.mxu0 0
    %3228 = vmatprep.subr.bf16.mxu0 0
    %3229 = vmatpush1.bf16.msra.mxu0 0
    %3230 = vmatprep.subr.bf16.mxu0 0
    %3231 = vmatpush1.bf16.msra.mxu0 0
    %3232 = vmatprep.subr.bf16.mxu0 0
    %3233 = vmatpush1.bf16.msra.mxu0 0
    %3234 = vmatprep.subr.bf16.mxu0 0
    %3235 = vmatpush1.bf16.msra.mxu0 0
    %3236 = vmatprep.mubr.bf16.mxu0 0
    %3237 = vmatmul.mubr.bf16.gmra.mrb[0].mxu0 %v1254
    %v3238 = vpop.f32.mrb[0].mxu0
    %v3239 = vadd.f32 0.0, %v3238
    %v3240 = vpop.f32.mrb[0].mxu0
    %v3241 = vpop.f32.mrb[0].mxu0
    %v3242 = vpop.f32.mrb[0].mxu0
    %3243 = vdwg.mxu0
    %v3244 = vadd.f32 %v3203, %v3239
    %3245 = vmatprep.subr.bf16.mxu0 0
    %3246 = vmatpush1.bf16.msra.mxu0 %v656
    %3247 = vmatprep.subr.bf16.mxu0 0
    %3248 = vmatpush1.bf16.msra.mxu0 %v657
    %3249 = vmatprep.subr.bf16.mxu0 0
    %3250 = vmatpush1.bf16.msra.mxu0 %v658
    %3251 = vmatprep.subr.bf16.mxu0 0
    %3252 = vmatpush1.bf16.msra.mxu0 %v659
    %3253 = vmatprep.subr.bf16.mxu0 0
    %3254 = vmatpush1.bf16.msra.mxu0 0
    %3255 = vmatprep.subr.bf16.mxu0 0
    %3256 = vmatpush1.bf16.msra.mxu0 0
    %3257 = vmatprep.subr.bf16.mxu0 0
    %3258 = vmatpush1.bf16.msra.mxu0 0
    %3259 = vmatprep.subr.bf16.mxu0 0
    %3260 = vmatpush1.bf16.msra.mxu0 0
    %3261 = vmatprep.subr.bf16.mxu0 0
    %3262 = vmatpush1.bf16.msra.mxu0 0
    %3263 = vmatprep.subr.bf16.mxu0 0
    %3264 = vmatpush1.bf16.msra.mxu0 0
    %3265 = vmatprep.subr.bf16.mxu0 0
    %3266 = vmatpush1.bf16.msra.mxu0 0
    %3267 = vmatprep.subr.bf16.mxu0 0
    %3268 = vmatpush1.bf16.msra.mxu0 0
    %3269 = vmatprep.subr.bf16.mxu0 0
    %3270 = vmatpush1.bf16.msra.mxu0 0
    %3271 = vmatprep.subr.bf16.mxu0 0
    %3272 = vmatpush1.bf16.msra.mxu0 0
    %3273 = vmatprep.subr.bf16.mxu0 0
    %3274 = vmatpush1.bf16.msra.mxu0 0
    %3275 = vmatprep.subr.bf16.mxu0 0
    %3276 = vmatpush1.bf16.msra.mxu0 0
    %3277 = vmatprep.mubr.bf16.mxu0 0
    %3278 = vmatmul.mubr.bf16.gmra.mrb[0].mxu0 %v1875
    %v3279 = vpop.f32.mrb[0].mxu0
    %v3280 = vadd.f32 0.0, %v3279
    %v3281 = vpop.f32.mrb[0].mxu0
    %v3282 = vpop.f32.mrb[0].mxu0
    %v3283 = vpop.f32.mrb[0].mxu0
    %3284 = vdwg.mxu0
    %v3285 = vadd.f32 %v3244, %v3280
    %3286 = vmatprep.subr.bf16.mxu0 0
    %3287 = vmatpush1.bf16.msra.mxu0 %v724
    %3288 = vmatprep.subr.bf16.mxu0 0
    %3289 = vmatpush1.bf16.msra.mxu0 %v725
    %3290 = vmatprep.subr.bf16.mxu0 0
    %3291 = vmatpush1.bf16.msra.mxu0 %v726
    %3292 = vmatprep.subr.bf16.mxu0 0
    %3293 = vmatpush1.bf16.msra.mxu0 %v727
    %3294 = vmatprep.subr.bf16.mxu0 0
    %3295 = vmatpush1.bf16.msra.mxu0 0
    %3296 = vmatprep.subr.bf16.mxu0 0
    %3297 = vmatpush1.bf16.msra.mxu0 0
    %3298 = vmatprep.subr.bf16.mxu0 0
    %3299 = vmatpush1.bf16.msra.mxu0 0
    %3300 = vmatprep.subr.bf16.mxu0 0
    %3301 = vmatpush1.bf16.msra.mxu0 0
    %3302 = vmatprep.subr.bf16.mxu0 0
    %3303 = vmatpush1.bf16.msra.mxu0 0
    %3304 = vmatprep.subr.bf16.mxu0 0
    %3305 = vmatpush1.bf16.msra.mxu0 0
    %3306 = vmatprep.subr.bf16.mxu0 0
    %3307 = vmatpush1.bf16.msra.mxu0 0
    %3308 = vmatprep.subr.bf16.mxu0 0
    %3309 = vmatpush1.bf16.msra.mxu0 0
    %3310 = vmatprep.subr.bf16.mxu0 0
    %3311 = vmatpush1.bf16.msra.mxu0 0
    %3312 = vmatprep.subr.bf16.mxu0 0
    %3313 = vmatpush1.bf16.msra.mxu0 0
    %3314 = vmatprep.subr.bf16.mxu0 0
    %3315 = vmatpush1.bf16.msra.mxu0 0
    %3316 = vmatprep.subr.bf16.mxu0 0
    %3317 = vmatpush1.bf16.msra.mxu0 0
    %3318 = vmatprep.mubr.bf16.mxu0 0
    %3319 = vmatmul.mubr.bf16.gmra.mrb[0].mxu0 %v2377
    %v3320 = vpop.f32.mrb[0].mxu0
    %v3321 = vadd.f32 0.0, %v3320
    %v3322 = vpop.f32.mrb[0].mxu0
    %v3323 = vpop.f32.mrb[0].mxu0
    %v3324 = vpop.f32.mrb[0].mxu0
    %3325 = vdwg.mxu0
    %v3326 = vadd.f32 %v3285, %v3321
    %3327 = vmatprep.subr.bf16.mxu0 0
    %3328 = vmatpush1.bf16.msra.mxu0 %v792
    %3329 = vmatprep.subr.bf16.mxu0 0
    %3330 = vmatpush1.bf16.msra.mxu0 %v793
    %3331 = vmatprep.subr.bf16.mxu0 0
    %3332 = vmatpush1.bf16.msra.mxu0 %v794
    %3333 = vmatprep.subr.bf16.mxu0 0
    %3334 = vmatpush1.bf16.msra.mxu0 %v795
    %3335 = vmatprep.subr.bf16.mxu0 0
    %3336 = vmatpush1.bf16.msra.mxu0 0
    %3337 = vmatprep.subr.bf16.mxu0 0
    %3338 = vmatpush1.bf16.msra.mxu0 0
    %3339 = vmatprep.subr.bf16.mxu0 0
    %3340 = vmatpush1.bf16.msra.mxu0 0
    %3341 = vmatprep.subr.bf16.mxu0 0
    %3342 = vmatpush1.bf16.msra.mxu0 0
    %3343 = vmatprep.subr.bf16.mxu0 0
    %3344 = vmatpush1.bf16.msra.mxu0 0
    %3345 = vmatprep.subr.bf16.mxu0 0
    %3346 = vmatpush1.bf16.msra.mxu0 0
    %3347 = vmatprep.subr.bf16.mxu0 0
    %3348 = vmatpush1.bf16.msra.mxu0 0
    %3349 = vmatprep.subr.bf16.mxu0 0
    %3350 = vmatpush1.bf16.msra.mxu0 0
    %3351 = vmatprep.subr.bf16.mxu0 0
    %3352 = vmatpush1.bf16.msra.mxu0 0
    %3353 = vmatprep.subr.bf16.mxu0 0
    %3354 = vmatpush1.bf16.msra.mxu0 0
    %3355 = vmatprep.subr.bf16.mxu0 0
    %3356 = vmatpush1.bf16.msra.mxu0 0
    %3357 = vmatprep.subr.bf16.mxu0 0
    %3358 = vmatpush1.bf16.msra.mxu0 0
    %3359 = vmatprep.mubr.bf16.mxu0 0
    %3360 = vmatmul.mubr.bf16.gmra.mrb[0].mxu0 %v2873
    %v3361 = vpop.f32.mrb[0].mxu0
    %v3362 = vadd.f32 0.0, %v3361
    %v3363 = vpop.f32.mrb[0].mxu0
    %v3364 = vpop.f32.mrb[0].mxu0
    %v3365 = vpop.f32.mrb[0].mxu0
    %3366 = vdwg.mxu0
    %v3367 = vadd.f32 %v3326, %v3362
    %v3369 = vsel %vm325, %v77, 0
    %3371 = vmatprep.subr.bf16.mxu0 0
    %3372 = vmatpush1.bf16.msra.mxu0 %v860
    %3373 = vmatprep.subr.bf16.mxu0 0
    %3374 = vmatpush1.bf16.msra.mxu0 %v861
    %3375 = vmatprep.subr.bf16.mxu0 0
    %3376 = vmatpush1.bf16.msra.mxu0 %v862
    %3377 = vmatprep.subr.bf16.mxu0 0
    %3378 = vmatpush1.bf16.msra.mxu0 %v863
    %3379 = vmatprep.subr.bf16.mxu0 0
    %3380 = vmatpush1.bf16.msra.mxu0 0
    %3381 = vmatprep.subr.bf16.mxu0 0
    %3382 = vmatpush1.bf16.msra.mxu0 0
    %3383 = vmatprep.subr.bf16.mxu0 0
    %3384 = vmatpush1.bf16.msra.mxu0 0
    %3385 = vmatprep.subr.bf16.mxu0 0
    %3386 = vmatpush1.bf16.msra.mxu0 0
    %3387 = vmatprep.subr.bf16.mxu0 0
    %3388 = vmatpush1.bf16.msra.mxu0 0
    %3389 = vmatprep.subr.bf16.mxu0 0
    %3390 = vmatpush1.bf16.msra.mxu0 0
    %3391 = vmatprep.subr.bf16.mxu0 0
    %3392 = vmatpush1.bf16.msra.mxu0 0
    %3393 = vmatprep.subr.bf16.mxu0 0
    %3394 = vmatpush1.bf16.msra.mxu0 0
    %3395 = vmatprep.subr.bf16.mxu0 0
    %3396 = vmatpush1.bf16.msra.mxu0 0
    %3397 = vmatprep.subr.bf16.mxu0 0
    %3398 = vmatpush1.bf16.msra.mxu0 0
    %3399 = vmatprep.subr.bf16.mxu0 0
    %3400 = vmatpush1.bf16.msra.mxu0 0
    %3401 = vmatprep.subr.bf16.mxu0 0
    %3402 = vmatpush1.bf16.msra.mxu0 0
    %3403 = vmatprep.mubr.bf16.mxu0 0
    %3404 = vmatmul.mubr.bf16.gmra.mrb[0].mxu0 %v3369
    %v3405 = vpop.f32.mrb[0].mxu0
    %v3406 = vadd.f32 0.0, %v3405
    %v3407 = vpop.f32.mrb[0].mxu0
    %v3408 = vpop.f32.mrb[0].mxu0
    %v3409 = vpop.f32.mrb[0].mxu0
    %3410 = vdwg.mxu0
    %v3411 = vadd.f32 %v3367, %v3406
    %v3412 = vadd.f32 %v3411, %v916
    %v3413 = vmax.f32 %v3412, 0.0
    %v3414 = vpack.c.bf16 %v3413, %v3413
    %v3431 = vunpack.c.l.b16 %v235
    %v3432 = vunpack.c.h.b16 %v235
    %v3433 = vunpack.c.l.b16 %v236
    %v3434 = vunpack.c.h.b16 %v236
    %v3435 = vunpack.c.l.b16 %v237
    %v3436 = vunpack.c.h.b16 %v237
    %v3437 = vunpack.c.l.b16 %v238
    %v3438 = vunpack.c.h.b16 %v238
    %v3439 = vunpack.c.l.b16 %v239
    %v3440 = vunpack.c.h.b16 %v239
    %v3441 = vunpack.c.l.b16 %v240
    %v3442 = vunpack.c.h.b16 %v240
    %v3443 = vunpack.c.l.b16 %v241
    %v3444 = vunpack.c.h.b16 %v241
    %v3445 = vunpack.c.l.b16 %v242
    %v3446 = vunpack.c.h.b16 %v242
    %v3447 = vunpack.c.l.b16 %v243
    %v3448 = vunpack.c.h.b16 %v243
    %v3449 = vunpack.c.l.b16 %v244
    %v3450 = vunpack.c.h.b16 %v244
    %v3451 = vunpack.c.l.b16 %v245
    %v3452 = vunpack.c.h.b16 %v245
    %v3453 = vunpack.c.l.b16 %v246
    %v3454 = vunpack.c.h.b16 %v246
    %v3455 = vunpack.c.l.b16 %v247
    %v3456 = vunpack.c.h.b16 %v247
    %v3457 = vunpack.c.l.b16 %v248
    %v3458 = vunpack.c.h.b16 %v248
    %v3459 = vunpack.c.l.b16 %v249
    %v3460 = vunpack.c.h.b16 %v249
    %v3461 = vunpack.c.l.b16 %v250
    %v3462 = vunpack.c.h.b16 %v250
    %v3463 = vpack.c.b16 %v3433, %v3431
    %v3464 = vpack.c.b16 %v3434, %v3432
    %v3465 = vpack.c.b16 %v3437, %v3435
    %v3466 = vpack.c.b16 %v3438, %v3436
    %v3467 = vpack.c.b16 %v3441, %v3439
    %v3468 = vpack.c.b16 %v3442, %v3440
    %v3469 = vpack.c.b16 %v3445, %v3443
    %v3470 = vpack.c.b16 %v3446, %v3444
    %v3471 = vpack.c.b16 %v3449, %v3447
    %v3472 = vpack.c.b16 %v3450, %v3448
    %v3473 = vpack.c.b16 %v3453, %v3451
    %v3474 = vpack.c.b16 %v3454, %v3452
    %v3475 = vpack.c.b16 %v3457, %v3455
    %v3476 = vpack.c.b16 %v3458, %v3456
    %v3477 = vpack.c.b16 %v3461, %v3459
    %v3478 = vpack.c.b16 %v3462, %v3460
    %3495 = vmatprep.subr.bf16.mxu0 %v3464
    %3496 = vmatpush1.bf16.msra.mxu0 %v3463
    %3497 = vmatprep.subr.bf16.mxu0 %v3466
    %3498 = vmatpush1.bf16.msra.mxu0 %v3465
    %3499 = vmatprep.subr.bf16.mxu0 %v3468
    %3500 = vmatpush1.bf16.msra.mxu0 %v3467
    %3501 = vmatprep.subr.bf16.mxu0 %v3470
    %3502 = vmatpush1.bf16.msra.mxu0 %v3469
    %3503 = vmatprep.subr.bf16.mxu0 %v3472
    %3504 = vmatpush1.bf16.msra.mxu0 %v3471
    %3505 = vmatprep.subr.bf16.mxu0 %v3474
    %3506 = vmatpush1.bf16.msra.mxu0 %v3473
    %3507 = vmatprep.subr.bf16.mxu0 %v3476
    %3508 = vmatpush1.bf16.msra.mxu0 %v3475
    %3509 = vmatprep.subr.bf16.mxu0 %v3478
    %3510 = vmatpush1.bf16.msra.mxu0 %v3477
    %3511 = vmatprep.subr.bf16.mxu0 0
    %3512 = vmatpush1.bf16.msra.mxu0 0
    %3513 = vmatprep.subr.bf16.mxu0 0
    %3514 = vmatpush1.bf16.msra.mxu0 0
    %3515 = vmatprep.subr.bf16.mxu0 0
    %3516 = vmatpush1.bf16.msra.mxu0 0
    %3517 = vmatprep.subr.bf16.mxu0 0
    %3518 = vmatpush1.bf16.msra.mxu0 0
    %3519 = vmatprep.subr.bf16.mxu0 0
    %3520 = vmatpush1.bf16.msra.mxu0 0
    %3521 = vmatprep.subr.bf16.mxu0 0
    %3522 = vmatpush1.bf16.msra.mxu0 0
    %3523 = vmatprep.subr.bf16.mxu0 0
    %3524 = vmatpush1.bf16.msra.mxu0 0
    %3525 = vmatprep.subr.bf16.mxu0 0
    %3526 = vmatpush1.bf16.msra.mxu0 0
    %3527 = vmatprep.mubr.bf16.mxu0 0
    %3528 = vmatmul.mubr.bf16.gmra.mrb[0].mxu0 %v3414
    %v3529 = vpop.f32.mrb[0].mxu0
    %v3530 = vadd.f32 0.0, %v3529
    %v3531 = vpop.f32.mrb[0].mxu0
    %v3532 = vadd.f32 0.0, %v3531
    %v3533 = vpop.f32.mrb[0].mxu0
    %v3534 = vpop.f32.mrb[0].mxu0
    %3535 = vdwg.mxu0
    %v3536 = vadd.f32 %v3040, %v3530
    %v3537 = vadd.f32 %v3041, %v3532
    %3538 = vmatprep.subr.bf16.mxu0 0
    %3539 = vmatpush1.bf16.msra.mxu0 %v317
    %3540 = vmatprep.subr.bf16.mxu0 0
    %3541 = vmatpush1.bf16.msra.mxu0 %v318
    %3542 = vmatprep.subr.bf16.mxu0 0
    %3543 = vmatpush1.bf16.msra.mxu0 %v319
    %3544 = vmatprep.subr.bf16.mxu0 0
    %3545 = vmatpush1.bf16.msra.mxu0 %v320
    %3546 = vmatprep.subr.bf16.mxu0 0
    %3547 = vmatpush1.bf16.msra.mxu0 0
    %3548 = vmatprep.subr.bf16.mxu0 0
    %3549 = vmatpush1.bf16.msra.mxu0 0
    %3550 = vmatprep.subr.bf16.mxu0 0
    %3551 = vmatpush1.bf16.msra.mxu0 0
    %3552 = vmatprep.subr.bf16.mxu0 0
    %3553 = vmatpush1.bf16.msra.mxu0 0
    %3554 = vmatprep.subr.bf16.mxu0 0
    %3555 = vmatpush1.bf16.msra.mxu0 0
    %3556 = vmatprep.subr.bf16.mxu0 0
    %3557 = vmatpush1.bf16.msra.mxu0 0
    %3558 = vmatprep.subr.bf16.mxu0 0
    %3559 = vmatpush1.bf16.msra.mxu0 0
    %3560 = vmatprep.subr.bf16.mxu0 0
    %3561 = vmatpush1.bf16.msra.mxu0 0
    %3562 = vmatprep.subr.bf16.mxu0 0
    %3563 = vmatpush1.bf16.msra.mxu0 0
    %3564 = vmatprep.subr.bf16.mxu0 0
    %3565 = vmatpush1.bf16.msra.mxu0 0
    %3566 = vmatprep.subr.bf16.mxu0 0
    %3567 = vmatpush1.bf16.msra.mxu0 0
    %3568 = vmatprep.subr.bf16.mxu0 0
    %3569 = vmatpush1.bf16.msra.mxu0 0
    %3570 = vmatprep.mubr.bf16.mxu0 0
    %3571 = vmatmul.mubr.bf16.gmra.mrb[0].mxu0 %v801
    %v3572 = vpop.f32.mrb[0].mxu0
    %v3573 = vadd.f32 0.0, %v3572
    %v3574 = vpop.f32.mrb[0].mxu0
    %v3575 = vpop.f32.mrb[0].mxu0
    %v3576 = vpop.f32.mrb[0].mxu0
    %3577 = vdwg.mxu0
    %3578 = vmatprep.subr.bf16.mxu0 0
    %3579 = vmatpush1.bf16.msra.mxu0 %v385
    %3580 = vmatprep.subr.bf16.mxu0 0
    %3581 = vmatpush1.bf16.msra.mxu0 %v386
    %3582 = vmatprep.subr.bf16.mxu0 0
    %3583 = vmatpush1.bf16.msra.mxu0 %v387
    %3584 = vmatprep.subr.bf16.mxu0 0
    %3585 = vmatpush1.bf16.msra.mxu0 %v388
    %3586 = vmatprep.subr.bf16.mxu0 0
    %3587 = vmatpush1.bf16.msra.mxu0 0
    %3588 = vmatprep.subr.bf16.mxu0 0
    %3589 = vmatpush1.bf16.msra.mxu0 0
    %3590 = vmatprep.subr.bf16.mxu0 0
    %3591 = vmatpush1.bf16.msra.mxu0 0
    %3592 = vmatprep.subr.bf16.mxu0 0
    %3593 = vmatpush1.bf16.msra.mxu0 0
    %3594 = vmatprep.subr.bf16.mxu0 0
    %3595 = vmatpush1.bf16.msra.mxu0 0
    %3596 = vmatprep.subr.bf16.mxu0 0
    %3597 = vmatpush1.bf16.msra.mxu0 0
    %3598 = vmatprep.subr.bf16.mxu0 0
    %3599 = vmatpush1.bf16.msra.mxu0 0
    %3600 = vmatprep.subr.bf16.mxu0 0
    %3601 = vmatpush1.bf16.msra.mxu0 0
    %3602 = vmatprep.subr.bf16.mxu0 0
    %3603 = vmatpush1.bf16.msra.mxu0 0
    %3604 = vmatprep.subr.bf16.mxu0 0
    %3605 = vmatpush1.bf16.msra.mxu0 0
    %3606 = vmatprep.subr.bf16.mxu0 0
    %3607 = vmatpush1.bf16.msra.mxu0 0
    %3608 = vmatprep.subr.bf16.mxu0 0
    %3609 = vmatpush1.bf16.msra.mxu0 0
    %3610 = vmatprep.mubr.bf16.mxu0 0
    %3611 = vmatmul.mubr.bf16.gmra.mrb[0].mxu0 %v733
    %v3612 = vpop.f32.mrb[0].mxu0
    %v3613 = vadd.f32 %v3573, %v3612
    %v3614 = vpop.f32.mrb[0].mxu0
    %v3615 = vpop.f32.mrb[0].mxu0
    %v3616 = vpop.f32.mrb[0].mxu0
    %3617 = vdwg.mxu0
    %3618 = vmatprep.subr.bf16.mxu0 0
    %3619 = vmatpush1.bf16.msra.mxu0 %v452
    %3620 = vmatprep.subr.bf16.mxu0 0
    %3621 = vmatpush1.bf16.msra.mxu0 %v453
    %3622 = vmatprep.subr.bf16.mxu0 0
    %3623 = vmatpush1.bf16.msra.mxu0 %v454
    %3624 = vmatprep.subr.bf16.mxu0 0
    %3625 = vmatpush1.bf16.msra.mxu0 %v455
    %3626 = vmatprep.subr.bf16.mxu0 0
    %3627 = vmatpush1.bf16.msra.mxu0 0
    %3628 = vmatprep.subr.bf16.mxu0 0
    %3629 = vmatpush1.bf16.msra.mxu0 0
    %3630 = vmatprep.subr.bf16.mxu0 0
    %3631 = vmatpush1.bf16.msra.mxu0 0
    %3632 = vmatprep.subr.bf16.mxu0 0
    %3633 = vmatpush1.bf16.msra.mxu0 0
    %3634 = vmatprep.subr.bf16.mxu0 0
    %3635 = vmatpush1.bf16.msra.mxu0 0
    %3636 = vmatprep.subr.bf16.mxu0 0
    %3637 = vmatpush1.bf16.msra.mxu0 0
    %3638 = vmatprep.subr.bf16.mxu0 0
    %3639 = vmatpush1.bf16.msra.mxu0 0
    %3640 = vmatprep.subr.bf16.mxu0 0
    %3641 = vmatpush1.bf16.msra.mxu0 0
    %3642 = vmatprep.subr.bf16.mxu0 0
    %3643 = vmatpush1.bf16.msra.mxu0 0
    %3644 = vmatprep.subr.bf16.mxu0 0
    %3645 = vmatpush1.bf16.msra.mxu0 0
    %3646 = vmatprep.subr.bf16.mxu0 0
    %3647 = vmatpush1.bf16.msra.mxu0 0
    %3648 = vmatprep.subr.bf16.mxu0 0
    %3649 = vmatpush1.bf16.msra.mxu0 0
    %3650 = vmatprep.mubr.bf16.mxu0 0
    %3651 = vmatmul.mubr.bf16.gmra.mrb[0].mxu0 %v869
    %v3652 = vpop.f32.mrb[0].mxu0
    %v3653 = vadd.f32 0.0, %v3652
    %v3654 = vpop.f32.mrb[0].mxu0
    %v3655 = vpop.f32.mrb[0].mxu0
    %v3656 = vpop.f32.mrb[0].mxu0
    %3657 = vdwg.mxu0
    %v3658 = vadd.f32 %v3613, %v3653
    %3659 = vmatprep.subr.bf16.mxu0 0
    %3660 = vmatpush1.bf16.msra.mxu0 %v520
    %3661 = vmatprep.subr.bf16.mxu0 0
    %3662 = vmatpush1.bf16.msra.mxu0 %v521
    %3663 = vmatprep.subr.bf16.mxu0 0
    %3664 = vmatpush1.bf16.msra.mxu0 %v522
    %3665 = vmatprep.subr.bf16.mxu0 0
    %3666 = vmatpush1.bf16.msra.mxu0 %v523
    %3667 = vmatprep.subr.bf16.mxu0 0
    %3668 = vmatpush1.bf16.msra.mxu0 0
    %3669 = vmatprep.subr.bf16.mxu0 0
    %3670 = vmatpush1.bf16.msra.mxu0 0
    %3671 = vmatprep.subr.bf16.mxu0 0
    %3672 = vmatpush1.bf16.msra.mxu0 0
    %3673 = vmatprep.subr.bf16.mxu0 0
    %3674 = vmatpush1.bf16.msra.mxu0 0
    %3675 = vmatprep.subr.bf16.mxu0 0
    %3676 = vmatpush1.bf16.msra.mxu0 0
    %3677 = vmatprep.subr.bf16.mxu0 0
    %3678 = vmatpush1.bf16.msra.mxu0 0
    %3679 = vmatprep.subr.bf16.mxu0 0
    %3680 = vmatpush1.bf16.msra.mxu0 0
    %3681 = vmatprep.subr.bf16.mxu0 0
    %3682 = vmatpush1.bf16.msra.mxu0 0
    %3683 = vmatprep.subr.bf16.mxu0 0
    %3684 = vmatpush1.bf16.msra.mxu0 0
    %3685 = vmatprep.subr.bf16.mxu0 0
    %3686 = vmatpush1.bf16.msra.mxu0 0
    %3687 = vmatprep.subr.bf16.mxu0 0
    %3688 = vmatpush1.bf16.msra.mxu0 0
    %3689 = vmatprep.subr.bf16.mxu0 0
    %3690 = vmatpush1.bf16.msra.mxu0 0
    %3691 = vmatprep.mubr.bf16.mxu0 0
    %3692 = vmatmul.mubr.bf16.gmra.mrb[0].mxu0 %v2289
    %v3693 = vpop.f32.mrb[0].mxu0
    %v3694 = vadd.f32 0.0, %v3693
    %v3695 = vpop.f32.mrb[0].mxu0
    %v3696 = vpop.f32.mrb[0].mxu0
    %v3697 = vpop.f32.mrb[0].mxu0
    %3698 = vdwg.mxu0
    %v3699 = vadd.f32 %v3658, %v3694
    %3700 = vmatprep.subr.bf16.mxu0 0
    %3701 = vmatpush1.bf16.msra.mxu0 %v588
    %3702 = vmatprep.subr.bf16.mxu0 0
    %3703 = vmatpush1.bf16.msra.mxu0 %v589
    %3704 = vmatprep.subr.bf16.mxu0 0
    %3705 = vmatpush1.bf16.msra.mxu0 %v590
    %3706 = vmatprep.subr.bf16.mxu0 0
    %3707 = vmatpush1.bf16.msra.mxu0 %v591
    %3708 = vmatprep.subr.bf16.mxu0 0
    %3709 = vmatpush1.bf16.msra.mxu0 0
    %3710 = vmatprep.subr.bf16.mxu0 0
    %3711 = vmatpush1.bf16.msra.mxu0 0
    %3712 = vmatprep.subr.bf16.mxu0 0
    %3713 = vmatpush1.bf16.msra.mxu0 0
    %3714 = vmatprep.subr.bf16.mxu0 0
    %3715 = vmatpush1.bf16.msra.mxu0 0
    %3716 = vmatprep.subr.bf16.mxu0 0
    %3717 = vmatpush1.bf16.msra.mxu0 0
    %3718 = vmatprep.subr.bf16.mxu0 0
    %3719 = vmatpush1.bf16.msra.mxu0 0
    %3720 = vmatprep.subr.bf16.mxu0 0
    %3721 = vmatpush1.bf16.msra.mxu0 0
    %3722 = vmatprep.subr.bf16.mxu0 0
    %3723 = vmatpush1.bf16.msra.mxu0 0
    %3724 = vmatprep.subr.bf16.mxu0 0
    %3725 = vmatpush1.bf16.msra.mxu0 0
    %3726 = vmatprep.subr.bf16.mxu0 0
    %3727 = vmatpush1.bf16.msra.mxu0 0
    %3728 = vmatprep.subr.bf16.mxu0 0
    %3729 = vmatpush1.bf16.msra.mxu0 0
    %3730 = vmatprep.subr.bf16.mxu0 0
    %3731 = vmatpush1.bf16.msra.mxu0 0
    %3732 = vmatprep.mubr.bf16.mxu0 0
    %3733 = vmatmul.mubr.bf16.gmra.mrb[0].mxu0 %v2333
    %v3734 = vpop.f32.mrb[0].mxu0
    %v3735 = vadd.f32 0.0, %v3734
    %v3736 = vpop.f32.mrb[0].mxu0
    %v3737 = vpop.f32.mrb[0].mxu0
    %v3738 = vpop.f32.mrb[0].mxu0
    %3739 = vdwg.mxu0
    %v3740 = vadd.f32 %v3699, %v3735
    %3741 = vmatprep.subr.bf16.mxu0 0
    %3742 = vmatpush1.bf16.msra.mxu0 %v656
    %3743 = vmatprep.subr.bf16.mxu0 0
    %3744 = vmatpush1.bf16.msra.mxu0 %v657
    %3745 = vmatprep.subr.bf16.mxu0 0
    %3746 = vmatpush1.bf16.msra.mxu0 %v658
    %3747 = vmatprep.subr.bf16.mxu0 0
    %3748 = vmatpush1.bf16.msra.mxu0 %v659
    %3749 = vmatprep.subr.bf16.mxu0 0
    %3750 = vmatpush1.bf16.msra.mxu0 0
    %3751 = vmatprep.subr.bf16.mxu0 0
    %3752 = vmatpush1.bf16.msra.mxu0 0
    %3753 = vmatprep.subr.bf16.mxu0 0
    %3754 = vmatpush1.bf16.msra.mxu0 0
    %3755 = vmatprep.subr.bf16.mxu0 0
    %3756 = vmatpush1.bf16.msra.mxu0 0
    %3757 = vmatprep.subr.bf16.mxu0 0
    %3758 = vmatpush1.bf16.msra.mxu0 0
    %3759 = vmatprep.subr.bf16.mxu0 0
    %3760 = vmatpush1.bf16.msra.mxu0 0
    %3761 = vmatprep.subr.bf16.mxu0 0
    %3762 = vmatpush1.bf16.msra.mxu0 0
    %3763 = vmatprep.subr.bf16.mxu0 0
    %3764 = vmatpush1.bf16.msra.mxu0 0
    %3765 = vmatprep.subr.bf16.mxu0 0
    %3766 = vmatpush1.bf16.msra.mxu0 0
    %3767 = vmatprep.subr.bf16.mxu0 0
    %3768 = vmatpush1.bf16.msra.mxu0 0
    %3769 = vmatprep.subr.bf16.mxu0 0
    %3770 = vmatpush1.bf16.msra.mxu0 0
    %3771 = vmatprep.subr.bf16.mxu0 0
    %3772 = vmatpush1.bf16.msra.mxu0 0
    %3773 = vmatprep.mubr.bf16.mxu0 0
    %3774 = vmatmul.mubr.bf16.gmra.mrb[0].mxu0 %v2377
    %v3775 = vpop.f32.mrb[0].mxu0
    %v3776 = vadd.f32 0.0, %v3775
    %v3777 = vpop.f32.mrb[0].mxu0
    %v3778 = vpop.f32.mrb[0].mxu0
    %v3779 = vpop.f32.mrb[0].mxu0
    %3780 = vdwg.mxu0
    %v3781 = vadd.f32 %v3740, %v3776
    %v3783 = vsel %vm325, %v78, 0
    %3785 = vmatprep.subr.bf16.mxu0 0
    %3786 = vmatpush1.bf16.msra.mxu0 %v724
    %3787 = vmatprep.subr.bf16.mxu0 0
    %3788 = vmatpush1.bf16.msra.mxu0 %v725
    %3789 = vmatprep.subr.bf16.mxu0 0
    %3790 = vmatpush1.bf16.msra.mxu0 %v726
    %3791 = vmatprep.subr.bf16.mxu0 0
    %3792 = vmatpush1.bf16.msra.mxu0 %v727
    %3793 = vmatprep.subr.bf16.mxu0 0
    %3794 = vmatpush1.bf16.msra.mxu0 0
    %3795 = vmatprep.subr.bf16.mxu0 0
    %3796 = vmatpush1.bf16.msra.mxu0 0
    %3797 = vmatprep.subr.bf16.mxu0 0
    %3798 = vmatpush1.bf16.msra.mxu0 0
    %3799 = vmatprep.subr.bf16.mxu0 0
    %3800 = vmatpush1.bf16.msra.mxu0 0
    %3801 = vmatprep.subr.bf16.mxu0 0
    %3802 = vmatpush1.bf16.msra.mxu0 0
    %3803 = vmatprep.subr.bf16.mxu0 0
    %3804 = vmatpush1.bf16.msra.mxu0 0
    %3805 = vmatprep.subr.bf16.mxu0 0
    %3806 = vmatpush1.bf16.msra.mxu0 0
    %3807 = vmatprep.subr.bf16.mxu0 0
    %3808 = vmatpush1.bf16.msra.mxu0 0
    %3809 = vmatprep.subr.bf16.mxu0 0
    %3810 = vmatpush1.bf16.msra.mxu0 0
    %3811 = vmatprep.subr.bf16.mxu0 0
    %3812 = vmatpush1.bf16.msra.mxu0 0
    %3813 = vmatprep.subr.bf16.mxu0 0
    %3814 = vmatpush1.bf16.msra.mxu0 0
    %3815 = vmatprep.subr.bf16.mxu0 0
    %3816 = vmatpush1.bf16.msra.mxu0 0
    %3817 = vmatprep.mubr.bf16.mxu0 0
    %3818 = vmatmul.mubr.bf16.gmra.mrb[0].mxu0 %v3783
    %v3819 = vpop.f32.mrb[0].mxu0
    %v3820 = vadd.f32 0.0, %v3819
    %v3821 = vpop.f32.mrb[0].mxu0
    %v3822 = vpop.f32.mrb[0].mxu0
    %v3823 = vpop.f32.mrb[0].mxu0
    %3824 = vdwg.mxu0
    %v3825 = vadd.f32 %v3781, %v3820
    %v3827 = vsel %vm325, %v79, 0
    %3829 = vmatprep.subr.bf16.mxu0 0
    %3830 = vmatpush1.bf16.msra.mxu0 %v792
    %3831 = vmatprep.subr.bf16.mxu0 0
    %3832 = vmatpush1.bf16.msra.mxu0 %v793
    %3833 = vmatprep.subr.bf16.mxu0 0
    %3834 = vmatpush1.bf16.msra.mxu0 %v794
    %3835 = vmatprep.subr.bf16.mxu0 0
    %3836 = vmatpush1.bf16.msra.mxu0 %v795
    %3837 = vmatprep.subr.bf16.mxu0 0
    %3838 = vmatpush1.bf16.msra.mxu0 0
    %3839 = vmatprep.subr.bf16.mxu0 0
    %3840 = vmatpush1.bf16.msra.mxu0 0
    %3841 = vmatprep.subr.bf16.mxu0 0
    %3842 = vmatpush1.bf16.msra.mxu0 0
    %3843 = vmatprep.subr.bf16.mxu0 0
    %3844 = vmatpush1.bf16.msra.mxu0 0
    %3845 = vmatprep.subr.bf16.mxu0 0
    %3846 = vmatpush1.bf16.msra.mxu0 0
    %3847 = vmatprep.subr.bf16.mxu0 0
    %3848 = vmatpush1.bf16.msra.mxu0 0
    %3849 = vmatprep.subr.bf16.mxu0 0
    %3850 = vmatpush1.bf16.msra.mxu0 0
    %3851 = vmatprep.subr.bf16.mxu0 0
    %3852 = vmatpush1.bf16.msra.mxu0 0
    %3853 = vmatprep.subr.bf16.mxu0 0
    %3854 = vmatpush1.bf16.msra.mxu0 0
    %3855 = vmatprep.subr.bf16.mxu0 0
    %3856 = vmatpush1.bf16.msra.mxu0 0
    %3857 = vmatprep.subr.bf16.mxu0 0
    %3858 = vmatpush1.bf16.msra.mxu0 0
    %3859 = vmatprep.subr.bf16.mxu0 0
    %3860 = vmatpush1.bf16.msra.mxu0 0
    %3861 = vmatprep.mubr.bf16.mxu0 0
    %3862 = vmatmul.mubr.bf16.gmra.mrb[0].mxu0 %v3827
    %v3863 = vpop.f32.mrb[0].mxu0
    %v3864 = vadd.f32 0.0, %v3863
    %v3865 = vpop.f32.mrb[0].mxu0
    %v3866 = vpop.f32.mrb[0].mxu0
    %v3867 = vpop.f32.mrb[0].mxu0
    %3868 = vdwg.mxu0
    %v3869 = vadd.f32 %v3825, %v3864
    %v3871 = vsel %vm325, %v80, 0
    %3873 = vmatprep.subr.bf16.mxu0 0
    %3874 = vmatpush1.bf16.msra.mxu0 %v860
    %3875 = vmatprep.subr.bf16.mxu0 0
    %3876 = vmatpush1.bf16.msra.mxu0 %v861
    %3877 = vmatprep.subr.bf16.mxu0 0
    %3878 = vmatpush1.bf16.msra.mxu0 %v862
    %3879 = vmatprep.subr.bf16.mxu0 0
    %3880 = vmatpush1.bf16.msra.mxu0 %v863
    %3881 = vmatprep.subr.bf16.mxu0 0
    %3882 = vmatpush1.bf16.msra.mxu0 0
    %3883 = vmatprep.subr.bf16.mxu0 0
    %3884 = vmatpush1.bf16.msra.mxu0 0
    %3885 = vmatprep.subr.bf16.mxu0 0
    %3886 = vmatpush1.bf16.msra.mxu0 0
    %3887 = vmatprep.subr.bf16.mxu0 0
    %3888 = vmatpush1.bf16.msra.mxu0 0
    %3889 = vmatprep.subr.bf16.mxu0 0
    %3890 = vmatpush1.bf16.msra.mxu0 0
    %3891 = vmatprep.subr.bf16.mxu0 0
    %3892 = vmatpush1.bf16.msra.mxu0 0
    %3893 = vmatprep.subr.bf16.mxu0 0
    %3894 = vmatpush1.bf16.msra.mxu0 0
    %3895 = vmatprep.subr.bf16.mxu0 0
    %3896 = vmatpush1.bf16.msra.mxu0 0
    %3897 = vmatprep.subr.bf16.mxu0 0
    %3898 = vmatpush1.bf16.msra.mxu0 0
    %3899 = vmatprep.subr.bf16.mxu0 0
    %3900 = vmatpush1.bf16.msra.mxu0 0
    %3901 = vmatprep.subr.bf16.mxu0 0
    %3902 = vmatpush1.bf16.msra.mxu0 0
    %3903 = vmatprep.subr.bf16.mxu0 0
    %3904 = vmatpush1.bf16.msra.mxu0 0
    %3905 = vmatprep.mubr.bf16.mxu0 0
    %3906 = vmatmul.mubr.bf16.gmra.mrb[0].mxu0 %v3871
    %v3907 = vpop.f32.mrb[0].mxu0
    %v3908 = vadd.f32 0.0, %v3907
    %v3909 = vpop.f32.mrb[0].mxu0
    %v3910 = vpop.f32.mrb[0].mxu0
    %v3911 = vpop.f32.mrb[0].mxu0
    %3912 = vdwg.mxu0
    %v3913 = vadd.f32 %v3869, %v3908
    %v3914 = vadd.f32 %v3913, %v916
    %v3915 = vmax.f32 %v3914, 0.0
    %v3916 = vpack.c.bf16 %v3915, %v3915
    %v3933 = vunpack.c.l.b16 %v251
    %v3934 = vunpack.c.h.b16 %v251
    %v3935 = vunpack.c.l.b16 %v252
    %v3936 = vunpack.c.h.b16 %v252
    %v3937 = vunpack.c.l.b16 %v253
    %v3938 = vunpack.c.h.b16 %v253
    %v3939 = vunpack.c.l.b16 %v254
    %v3940 = vunpack.c.h.b16 %v254
    %v3941 = vunpack.c.l.b16 %v255
    %v3942 = vunpack.c.h.b16 %v255
    %v3943 = vunpack.c.l.b16 %v256
    %v3944 = vunpack.c.h.b16 %v256
    %v3945 = vunpack.c.l.b16 %v257
    %v3946 = vunpack.c.h.b16 %v257
    %v3947 = vunpack.c.l.b16 %v258
    %v3948 = vunpack.c.h.b16 %v258
    %v3949 = vunpack.c.l.b16 %v259
    %v3950 = vunpack.c.h.b16 %v259
    %v3951 = vunpack.c.l.b16 %v260
    %v3952 = vunpack.c.h.b16 %v260
    %v3953 = vunpack.c.l.b16 %v261
    %v3954 = vunpack.c.h.b16 %v261
    %v3955 = vunpack.c.l.b16 %v262
    %v3956 = vunpack.c.h.b16 %v262
    %v3957 = vunpack.c.l.b16 %v263
    %v3958 = vunpack.c.h.b16 %v263
    %v3959 = vunpack.c.l.b16 %v264
    %v3960 = vunpack.c.h.b16 %v264
    %v3961 = vunpack.c.l.b16 %v265
    %v3962 = vunpack.c.h.b16 %v265
    %v3963 = vunpack.c.l.b16 %v266
    %v3964 = vunpack.c.h.b16 %v266
    %v3965 = vpack.c.b16 %v3935, %v3933
    %v3966 = vpack.c.b16 %v3936, %v3934
    %v3967 = vpack.c.b16 %v3939, %v3937
    %v3968 = vpack.c.b16 %v3940, %v3938
    %v3969 = vpack.c.b16 %v3943, %v3941
    %v3970 = vpack.c.b16 %v3944, %v3942
    %v3971 = vpack.c.b16 %v3947, %v3945
    %v3972 = vpack.c.b16 %v3948, %v3946
    %v3973 = vpack.c.b16 %v3951, %v3949
    %v3974 = vpack.c.b16 %v3952, %v3950
    %v3975 = vpack.c.b16 %v3955, %v3953
    %v3976 = vpack.c.b16 %v3956, %v3954
    %v3977 = vpack.c.b16 %v3959, %v3957
    %v3978 = vpack.c.b16 %v3960, %v3958
    %v3979 = vpack.c.b16 %v3963, %v3961
    %v3980 = vpack.c.b16 %v3964, %v3962
    %3997 = vmatprep.subr.bf16.mxu0 %v3966
    %3998 = vmatpush1.bf16.msra.mxu0 %v3965
    %3999 = vmatprep.subr.bf16.mxu0 %v3968
    %4000 = vmatpush1.bf16.msra.mxu0 %v3967
    %4001 = vmatprep.subr.bf16.mxu0 %v3970
    %4002 = vmatpush1.bf16.msra.mxu0 %v3969
    %4003 = vmatprep.subr.bf16.mxu0 %v3972
    %4004 = vmatpush1.bf16.msra.mxu0 %v3971
    %4005 = vmatprep.subr.bf16.mxu0 %v3974
    %4006 = vmatpush1.bf16.msra.mxu0 %v3973
    %4007 = vmatprep.subr.bf16.mxu0 %v3976
    %4008 = vmatpush1.bf16.msra.mxu0 %v3975
    %4009 = vmatprep.subr.bf16.mxu0 %v3978
    %4010 = vmatpush1.bf16.msra.mxu0 %v3977
    %4011 = vmatprep.subr.bf16.mxu0 %v3980
    %4012 = vmatpush1.bf16.msra.mxu0 %v3979
    %4013 = vmatprep.subr.bf16.mxu0 0
    %4014 = vmatpush1.bf16.msra.mxu0 0
    %4015 = vmatprep.subr.bf16.mxu0 0
    %4016 = vmatpush1.bf16.msra.mxu0 0
    %4017 = vmatprep.subr.bf16.mxu0 0
    %4018 = vmatpush1.bf16.msra.mxu0 0
    %4019 = vmatprep.subr.bf16.mxu0 0
    %4020 = vmatpush1.bf16.msra.mxu0 0
    %4021 = vmatprep.subr.bf16.mxu0 0
    %4022 = vmatpush1.bf16.msra.mxu0 0
    %4023 = vmatprep.subr.bf16.mxu0 0
    %4024 = vmatpush1.bf16.msra.mxu0 0
    %4025 = vmatprep.subr.bf16.mxu0 0
    %4026 = vmatpush1.bf16.msra.mxu0 0
    %4027 = vmatprep.subr.bf16.mxu0 0
    %4028 = vmatpush1.bf16.msra.mxu0 0
    %4029 = vmatprep.mubr.bf16.mxu0 0
    %4030 = vmatmul.mubr.bf16.gmra.mrb[0].mxu0 %v3916
    %v4031 = vpop.f32.mrb[0].mxu0
    %v4032 = vadd.f32 0.0, %v4031
    %v4033 = vpop.f32.mrb[0].mxu0
    %v4034 = vadd.f32 0.0, %v4033
    %v4035 = vpop.f32.mrb[0].mxu0
    %v4036 = vpop.f32.mrb[0].mxu0
    %4037 = vdwg.mxu0
    %v4038 = vadd.f32 %v3536, %v4032
    %v4039 = vadd.f32 %v3537, %v4034
    %4040 = vmatprep.subr.bf16.mxu0 0
    %4041 = vmatpush1.bf16.msra.mxu0 %v317
    %4042 = vmatprep.subr.bf16.mxu0 0
    %4043 = vmatpush1.bf16.msra.mxu0 %v318
    %4044 = vmatprep.subr.bf16.mxu0 0
    %4045 = vmatpush1.bf16.msra.mxu0 %v319
    %4046 = vmatprep.subr.bf16.mxu0 0
    %4047 = vmatpush1.bf16.msra.mxu0 %v320
    %4048 = vmatprep.subr.bf16.mxu0 0
    %4049 = vmatpush1.bf16.msra.mxu0 0
    %4050 = vmatprep.subr.bf16.mxu0 0
    %4051 = vmatpush1.bf16.msra.mxu0 0
    %4052 = vmatprep.subr.bf16.mxu0 0
    %4053 = vmatpush1.bf16.msra.mxu0 0
    %4054 = vmatprep.subr.bf16.mxu0 0
    %4055 = vmatpush1.bf16.msra.mxu0 0
    %4056 = vmatprep.subr.bf16.mxu0 0
    %4057 = vmatpush1.bf16.msra.mxu0 0
    %4058 = vmatprep.subr.bf16.mxu0 0
    %4059 = vmatpush1.bf16.msra.mxu0 0
    %4060 = vmatprep.subr.bf16.mxu0 0
    %4061 = vmatpush1.bf16.msra.mxu0 0
    %4062 = vmatprep.subr.bf16.mxu0 0
    %4063 = vmatpush1.bf16.msra.mxu0 0
    %4064 = vmatprep.subr.bf16.mxu0 0
    %4065 = vmatpush1.bf16.msra.mxu0 0
    %4066 = vmatprep.subr.bf16.mxu0 0
    %4067 = vmatpush1.bf16.msra.mxu0 0
    %4068 = vmatprep.subr.bf16.mxu0 0
    %4069 = vmatpush1.bf16.msra.mxu0 0
    %4070 = vmatprep.subr.bf16.mxu0 0
    %4071 = vmatpush1.bf16.msra.mxu0 0
    %4072 = vmatprep.mubr.bf16.mxu0 0
    %4073 = vmatmul.mubr.bf16.gmra.mrb[0].mxu0 %v869
    %v4074 = vpop.f32.mrb[0].mxu0
    %v4075 = vadd.f32 0.0, %v4074
    %v4076 = vpop.f32.mrb[0].mxu0
    %v4077 = vpop.f32.mrb[0].mxu0
    %v4078 = vpop.f32.mrb[0].mxu0
    %4079 = vdwg.mxu0
    %4080 = vmatprep.subr.bf16.mxu0 0
    %4081 = vmatpush1.bf16.msra.mxu0 %v385
    %4082 = vmatprep.subr.bf16.mxu0 0
    %4083 = vmatpush1.bf16.msra.mxu0 %v386
    %4084 = vmatprep.subr.bf16.mxu0 0
    %4085 = vmatpush1.bf16.msra.mxu0 %v387
    %4086 = vmatprep.subr.bf16.mxu0 0
    %4087 = vmatpush1.bf16.msra.mxu0 %v388
    %4088 = vmatprep.subr.bf16.mxu0 0
    %4089 = vmatpush1.bf16.msra.mxu0 0
    %4090 = vmatprep.subr.bf16.mxu0 0
    %4091 = vmatpush1.bf16.msra.mxu0 0
    %4092 = vmatprep.subr.bf16.mxu0 0
    %4093 = vmatpush1.bf16.msra.mxu0 0
    %4094 = vmatprep.subr.bf16.mxu0 0
    %4095 = vmatpush1.bf16.msra.mxu0 0
    %4096 = vmatprep.subr.bf16.mxu0 0
    %4097 = vmatpush1.bf16.msra.mxu0 0
    %4098 = vmatprep.subr.bf16.mxu0 0
    %4099 = vmatpush1.bf16.msra.mxu0 0
    %4100 = vmatprep.subr.bf16.mxu0 0
    %4101 = vmatpush1.bf16.msra.mxu0 0
    %4102 = vmatprep.subr.bf16.mxu0 0
    %4103 = vmatpush1.bf16.msra.mxu0 0
    %4104 = vmatprep.subr.bf16.mxu0 0
    %4105 = vmatpush1.bf16.msra.mxu0 0
    %4106 = vmatprep.subr.bf16.mxu0 0
    %4107 = vmatpush1.bf16.msra.mxu0 0
    %4108 = vmatprep.subr.bf16.mxu0 0
    %4109 = vmatpush1.bf16.msra.mxu0 0
    %4110 = vmatprep.subr.bf16.mxu0 0
    %4111 = vmatpush1.bf16.msra.mxu0 0
    %4112 = vmatprep.mubr.bf16.mxu0 0
    %4113 = vmatmul.mubr.bf16.gmra.mrb[0].mxu0 %v801
    %v4114 = vpop.f32.mrb[0].mxu0
    %v4115 = vadd.f32 %v4075, %v4114
    %v4116 = vpop.f32.mrb[0].mxu0
    %v4117 = vpop.f32.mrb[0].mxu0
    %v4118 = vpop.f32.mrb[0].mxu0
    %4119 = vdwg.mxu0
    %4120 = vmatprep.subr.bf16.mxu0 0
    %4121 = vmatpush1.bf16.msra.mxu0 %v452
    %4122 = vmatprep.subr.bf16.mxu0 0
    %4123 = vmatpush1.bf16.msra.mxu0 %v453
    %4124 = vmatprep.subr.bf16.mxu0 0
    %4125 = vmatpush1.bf16.msra.mxu0 %v454
    %4126 = vmatprep.subr.bf16.mxu0 0
    %4127 = vmatpush1.bf16.msra.mxu0 %v455
    %4128 = vmatprep.subr.bf16.mxu0 0
    %4129 = vmatpush1.bf16.msra.mxu0 0
    %4130 = vmatprep.subr.bf16.mxu0 0
    %4131 = vmatpush1.bf16.msra.mxu0 0
    %4132 = vmatprep.subr.bf16.mxu0 0
    %4133 = vmatpush1.bf16.msra.mxu0 0
    %4134 = vmatprep.subr.bf16.mxu0 0
    %4135 = vmatpush1.bf16.msra.mxu0 0
    %4136 = vmatprep.subr.bf16.mxu0 0
    %4137 = vmatpush1.bf16.msra.mxu0 0
    %4138 = vmatprep.subr.bf16.mxu0 0
    %4139 = vmatpush1.bf16.msra.mxu0 0
    %4140 = vmatprep.subr.bf16.mxu0 0
    %4141 = vmatpush1.bf16.msra.mxu0 0
    %4142 = vmatprep.subr.bf16.mxu0 0
    %4143 = vmatpush1.bf16.msra.mxu0 0
    %4144 = vmatprep.subr.bf16.mxu0 0
    %4145 = vmatpush1.bf16.msra.mxu0 0
    %4146 = vmatprep.subr.bf16.mxu0 0
    %4147 = vmatpush1.bf16.msra.mxu0 0
    %4148 = vmatprep.subr.bf16.mxu0 0
    %4149 = vmatpush1.bf16.msra.mxu0 0
    %4150 = vmatprep.subr.bf16.mxu0 0
    %4151 = vmatpush1.bf16.msra.mxu0 0
    %4152 = vmatprep.mubr.bf16.mxu0 0
    %4153 = vmatmul.mubr.bf16.gmra.mrb[0].mxu0 %v1254
    %v4154 = vpop.f32.mrb[0].mxu0
    %v4155 = vadd.f32 0.0, %v4154
    %v4156 = vpop.f32.mrb[0].mxu0
    %v4157 = vpop.f32.mrb[0].mxu0
    %v4158 = vpop.f32.mrb[0].mxu0
    %4159 = vdwg.mxu0
    %v4160 = vadd.f32 %v4115, %v4155
    %4161 = vmatprep.subr.bf16.mxu0 0
    %4162 = vmatpush1.bf16.msra.mxu0 %v520
    %4163 = vmatprep.subr.bf16.mxu0 0
    %4164 = vmatpush1.bf16.msra.mxu0 %v521
    %4165 = vmatprep.subr.bf16.mxu0 0
    %4166 = vmatpush1.bf16.msra.mxu0 %v522
    %4167 = vmatprep.subr.bf16.mxu0 0
    %4168 = vmatpush1.bf16.msra.mxu0 %v523
    %4169 = vmatprep.subr.bf16.mxu0 0
    %4170 = vmatpush1.bf16.msra.mxu0 0
    %4171 = vmatprep.subr.bf16.mxu0 0
    %4172 = vmatpush1.bf16.msra.mxu0 0
    %4173 = vmatprep.subr.bf16.mxu0 0
    %4174 = vmatpush1.bf16.msra.mxu0 0
    %4175 = vmatprep.subr.bf16.mxu0 0
    %4176 = vmatpush1.bf16.msra.mxu0 0
    %4177 = vmatprep.subr.bf16.mxu0 0
    %4178 = vmatpush1.bf16.msra.mxu0 0
    %4179 = vmatprep.subr.bf16.mxu0 0
    %4180 = vmatpush1.bf16.msra.mxu0 0
    %4181 = vmatprep.subr.bf16.mxu0 0
    %4182 = vmatpush1.bf16.msra.mxu0 0
    %4183 = vmatprep.subr.bf16.mxu0 0
    %4184 = vmatpush1.bf16.msra.mxu0 0
    %4185 = vmatprep.subr.bf16.mxu0 0
    %4186 = vmatpush1.bf16.msra.mxu0 0
    %4187 = vmatprep.subr.bf16.mxu0 0
    %4188 = vmatpush1.bf16.msra.mxu0 0
    %4189 = vmatprep.subr.bf16.mxu0 0
    %4190 = vmatpush1.bf16.msra.mxu0 0
    %4191 = vmatprep.subr.bf16.mxu0 0
    %4192 = vmatpush1.bf16.msra.mxu0 0
    %4193 = vmatprep.mubr.bf16.mxu0 0
    %4194 = vmatmul.mubr.bf16.gmra.mrb[0].mxu0 %v2333
    %v4195 = vpop.f32.mrb[0].mxu0
    %v4196 = vadd.f32 0.0, %v4195
    %v4197 = vpop.f32.mrb[0].mxu0
    %v4198 = vpop.f32.mrb[0].mxu0
    %v4199 = vpop.f32.mrb[0].mxu0
    %4200 = vdwg.mxu0
    %v4201 = vadd.f32 %v4160, %v4196
    %4202 = vmatprep.subr.bf16.mxu0 0
    %4203 = vmatpush1.bf16.msra.mxu0 %v588
    %4204 = vmatprep.subr.bf16.mxu0 0
    %4205 = vmatpush1.bf16.msra.mxu0 %v589
    %4206 = vmatprep.subr.bf16.mxu0 0
    %4207 = vmatpush1.bf16.msra.mxu0 %v590
    %4208 = vmatprep.subr.bf16.mxu0 0
    %4209 = vmatpush1.bf16.msra.mxu0 %v591
    %4210 = vmatprep.subr.bf16.mxu0 0
    %4211 = vmatpush1.bf16.msra.mxu0 0
    %4212 = vmatprep.subr.bf16.mxu0 0
    %4213 = vmatpush1.bf16.msra.mxu0 0
    %4214 = vmatprep.subr.bf16.mxu0 0
    %4215 = vmatpush1.bf16.msra.mxu0 0
    %4216 = vmatprep.subr.bf16.mxu0 0
    %4217 = vmatpush1.bf16.msra.mxu0 0
    %4218 = vmatprep.subr.bf16.mxu0 0
    %4219 = vmatpush1.bf16.msra.mxu0 0
    %4220 = vmatprep.subr.bf16.mxu0 0
    %4221 = vmatpush1.bf16.msra.mxu0 0
    %4222 = vmatprep.subr.bf16.mxu0 0
    %4223 = vmatpush1.bf16.msra.mxu0 0
    %4224 = vmatprep.subr.bf16.mxu0 0
    %4225 = vmatpush1.bf16.msra.mxu0 0
    %4226 = vmatprep.subr.bf16.mxu0 0
    %4227 = vmatpush1.bf16.msra.mxu0 0
    %4228 = vmatprep.subr.bf16.mxu0 0
    %4229 = vmatpush1.bf16.msra.mxu0 0
    %4230 = vmatprep.subr.bf16.mxu0 0
    %4231 = vmatpush1.bf16.msra.mxu0 0
    %4232 = vmatprep.subr.bf16.mxu0 0
    %4233 = vmatpush1.bf16.msra.mxu0 0
    %4234 = vmatprep.mubr.bf16.mxu0 0
    %4235 = vmatmul.mubr.bf16.gmra.mrb[0].mxu0 %v2377
    %v4236 = vpop.f32.mrb[0].mxu0
    %v4237 = vadd.f32 0.0, %v4236
    %v4238 = vpop.f32.mrb[0].mxu0
    %v4239 = vpop.f32.mrb[0].mxu0
    %v4240 = vpop.f32.mrb[0].mxu0
    %4241 = vdwg.mxu0
    %v4242 = vadd.f32 %v4201, %v4237
    %4243 = vmatprep.subr.bf16.mxu0 0
    %4244 = vmatpush1.bf16.msra.mxu0 %v656
    %4245 = vmatprep.subr.bf16.mxu0 0
    %4246 = vmatpush1.bf16.msra.mxu0 %v657
    %4247 = vmatprep.subr.bf16.mxu0 0
    %4248 = vmatpush1.bf16.msra.mxu0 %v658
    %4249 = vmatprep.subr.bf16.mxu0 0
    %4250 = vmatpush1.bf16.msra.mxu0 %v659
    %4251 = vmatprep.subr.bf16.mxu0 0
    %4252 = vmatpush1.bf16.msra.mxu0 0
    %4253 = vmatprep.subr.bf16.mxu0 0
    %4254 = vmatpush1.bf16.msra.mxu0 0
    %4255 = vmatprep.subr.bf16.mxu0 0
    %4256 = vmatpush1.bf16.msra.mxu0 0
    %4257 = vmatprep.subr.bf16.mxu0 0
    %4258 = vmatpush1.bf16.msra.mxu0 0
    %4259 = vmatprep.subr.bf16.mxu0 0
    %4260 = vmatpush1.bf16.msra.mxu0 0
    %4261 = vmatprep.subr.bf16.mxu0 0
    %4262 = vmatpush1.bf16.msra.mxu0 0
    %4263 = vmatprep.subr.bf16.mxu0 0
    %4264 = vmatpush1.bf16.msra.mxu0 0
    %4265 = vmatprep.subr.bf16.mxu0 0
    %4266 = vmatpush1.bf16.msra.mxu0 0
    %4267 = vmatprep.subr.bf16.mxu0 0
    %4268 = vmatpush1.bf16.msra.mxu0 0
    %4269 = vmatprep.subr.bf16.mxu0 0
    %4270 = vmatpush1.bf16.msra.mxu0 0
    %4271 = vmatprep.subr.bf16.mxu0 0
    %4272 = vmatpush1.bf16.msra.mxu0 0
    %4273 = vmatprep.subr.bf16.mxu0 0
    %4274 = vmatpush1.bf16.msra.mxu0 0
    %4275 = vmatprep.mubr.bf16.mxu0 0
    %4276 = vmatmul.mubr.bf16.gmra.mrb[0].mxu0 %v2873
    %v4277 = vpop.f32.mrb[0].mxu0
    %v4278 = vadd.f32 0.0, %v4277
    %v4279 = vpop.f32.mrb[0].mxu0
    %v4280 = vpop.f32.mrb[0].mxu0
    %v4281 = vpop.f32.mrb[0].mxu0
    %4282 = vdwg.mxu0
    %v4283 = vadd.f32 %v4242, %v4278
    %4284 = vmatprep.subr.bf16.mxu0 0
    %4285 = vmatpush1.bf16.msra.mxu0 %v724
    %4286 = vmatprep.subr.bf16.mxu0 0
    %4287 = vmatpush1.bf16.msra.mxu0 %v725
    %4288 = vmatprep.subr.bf16.mxu0 0
    %4289 = vmatpush1.bf16.msra.mxu0 %v726
    %4290 = vmatprep.subr.bf16.mxu0 0
    %4291 = vmatpush1.bf16.msra.mxu0 %v727
    %4292 = vmatprep.subr.bf16.mxu0 0
    %4293 = vmatpush1.bf16.msra.mxu0 0
    %4294 = vmatprep.subr.bf16.mxu0 0
    %4295 = vmatpush1.bf16.msra.mxu0 0
    %4296 = vmatprep.subr.bf16.mxu0 0
    %4297 = vmatpush1.bf16.msra.mxu0 0
    %4298 = vmatprep.subr.bf16.mxu0 0
    %4299 = vmatpush1.bf16.msra.mxu0 0
    %4300 = vmatprep.subr.bf16.mxu0 0
    %4301 = vmatpush1.bf16.msra.mxu0 0
    %4302 = vmatprep.subr.bf16.mxu0 0
    %4303 = vmatpush1.bf16.msra.mxu0 0
    %4304 = vmatprep.subr.bf16.mxu0 0
    %4305 = vmatpush1.bf16.msra.mxu0 0
    %4306 = vmatprep.subr.bf16.mxu0 0
    %4307 = vmatpush1.bf16.msra.mxu0 0
    %4308 = vmatprep.subr.bf16.mxu0 0
    %4309 = vmatpush1.bf16.msra.mxu0 0
    %4310 = vmatprep.subr.bf16.mxu0 0
    %4311 = vmatpush1.bf16.msra.mxu0 0
    %4312 = vmatprep.subr.bf16.mxu0 0
    %4313 = vmatpush1.bf16.msra.mxu0 0
    %4314 = vmatprep.subr.bf16.mxu0 0
    %4315 = vmatpush1.bf16.msra.mxu0 0
    %4316 = vmatprep.mubr.bf16.mxu0 0
    %4317 = vmatmul.mubr.bf16.gmra.mrb[0].mxu0 %v3827
    %v4318 = vpop.f32.mrb[0].mxu0
    %v4319 = vadd.f32 0.0, %v4318
    %v4320 = vpop.f32.mrb[0].mxu0
    %v4321 = vpop.f32.mrb[0].mxu0
    %v4322 = vpop.f32.mrb[0].mxu0
    %4323 = vdwg.mxu0
    %v4324 = vadd.f32 %v4283, %v4319
    %4325 = vmatprep.subr.bf16.mxu0 0
    %4326 = vmatpush1.bf16.msra.mxu0 %v792
    %4327 = vmatprep.subr.bf16.mxu0 0
    %4328 = vmatpush1.bf16.msra.mxu0 %v793
    %4329 = vmatprep.subr.bf16.mxu0 0
    %4330 = vmatpush1.bf16.msra.mxu0 %v794
    %4331 = vmatprep.subr.bf16.mxu0 0
    %4332 = vmatpush1.bf16.msra.mxu0 %v795
    %4333 = vmatprep.subr.bf16.mxu0 0
    %4334 = vmatpush1.bf16.msra.mxu0 0
    %4335 = vmatprep.subr.bf16.mxu0 0
    %4336 = vmatpush1.bf16.msra.mxu0 0
    %4337 = vmatprep.subr.bf16.mxu0 0
    %4338 = vmatpush1.bf16.msra.mxu0 0
    %4339 = vmatprep.subr.bf16.mxu0 0
    %4340 = vmatpush1.bf16.msra.mxu0 0
    %4341 = vmatprep.subr.bf16.mxu0 0
    %4342 = vmatpush1.bf16.msra.mxu0 0
    %4343 = vmatprep.subr.bf16.mxu0 0
    %4344 = vmatpush1.bf16.msra.mxu0 0
    %4345 = vmatprep.subr.bf16.mxu0 0
    %4346 = vmatpush1.bf16.msra.mxu0 0
    %4347 = vmatprep.subr.bf16.mxu0 0
    %4348 = vmatpush1.bf16.msra.mxu0 0
    %4349 = vmatprep.subr.bf16.mxu0 0
    %4350 = vmatpush1.bf16.msra.mxu0 0
    %4351 = vmatprep.subr.bf16.mxu0 0
    %4352 = vmatpush1.bf16.msra.mxu0 0
    %4353 = vmatprep.subr.bf16.mxu0 0
    %4354 = vmatpush1.bf16.msra.mxu0 0
    %4355 = vmatprep.subr.bf16.mxu0 0
    %4356 = vmatpush1.bf16.msra.mxu0 0
    %4357 = vmatprep.mubr.bf16.mxu0 0
    %4358 = vmatmul.mubr.bf16.gmra.mrb[0].mxu0 %v3871
    %v4359 = vpop.f32.mrb[0].mxu0
    %v4360 = vadd.f32 0.0, %v4359
    %v4361 = vpop.f32.mrb[0].mxu0
    %v4362 = vpop.f32.mrb[0].mxu0
    %v4363 = vpop.f32.mrb[0].mxu0
    %4364 = vdwg.mxu0
    %v4365 = vadd.f32 %v4324, %v4360
    %v4367 = vsel %vm325, %v81, 0
    %4369 = vmatprep.subr.bf16.mxu0 0
    %4370 = vmatpush1.bf16.msra.mxu0 %v860
    %4371 = vmatprep.subr.bf16.mxu0 0
    %4372 = vmatpush1.bf16.msra.mxu0 %v861
    %4373 = vmatprep.subr.bf16.mxu0 0
    %4374 = vmatpush1.bf16.msra.mxu0 %v862
    %4375 = vmatprep.subr.bf16.mxu0 0
    %4376 = vmatpush1.bf16.msra.mxu0 %v863
    %4377 = vmatprep.subr.bf16.mxu0 0
    %4378 = vmatpush1.bf16.msra.mxu0 0
    %4379 = vmatprep.subr.bf16.mxu0 0
    %4380 = vmatpush1.bf16.msra.mxu0 0
    %4381 = vmatprep.subr.bf16.mxu0 0
    %4382 = vmatpush1.bf16.msra.mxu0 0
    %4383 = vmatprep.subr.bf16.mxu0 0
    %4384 = vmatpush1.bf16.msra.mxu0 0
    %4385 = vmatprep.subr.bf16.mxu0 0
    %4386 = vmatpush1.bf16.msra.mxu0 0
    %4387 = vmatprep.subr.bf16.mxu0 0
    %4388 = vmatpush1.bf16.msra.mxu0 0
    %4389 = vmatprep.subr.bf16.mxu0 0
    %4390 = vmatpush1.bf16.msra.mxu0 0
    %4391 = vmatprep.subr.bf16.mxu0 0
    %4392 = vmatpush1.bf16.msra.mxu0 0
    %4393 = vmatprep.subr.bf16.mxu0 0
    %4394 = vmatpush1.bf16.msra.mxu0 0
    %4395 = vmatprep.subr.bf16.mxu0 0
    %4396 = vmatpush1.bf16.msra.mxu0 0
    %4397 = vmatprep.subr.bf16.mxu0 0
    %4398 = vmatpush1.bf16.msra.mxu0 0
    %4399 = vmatprep.subr.bf16.mxu0 0
    %4400 = vmatpush1.bf16.msra.mxu0 0
    %4401 = vmatprep.mubr.bf16.mxu0 0
    %4402 = vmatmul.mubr.bf16.gmra.mrb[0].mxu0 %v4367
    %v4403 = vpop.f32.mrb[0].mxu0
    %v4404 = vadd.f32 0.0, %v4403
    %v4405 = vpop.f32.mrb[0].mxu0
    %v4406 = vpop.f32.mrb[0].mxu0
    %v4407 = vpop.f32.mrb[0].mxu0
    %4408 = vdwg.mxu0
    %v4409 = vadd.f32 %v4365, %v4404
    %v4410 = vadd.f32 %v4409, %v916
    %v4411 = vmax.f32 %v4410, 0.0
    %v4412 = vpack.c.bf16 %v4411, %v4411
    %v4429 = vunpack.c.l.b16 %v267
    %v4430 = vunpack.c.h.b16 %v267
    %v4431 = vunpack.c.l.b16 %v268
    %v4432 = vunpack.c.h.b16 %v268
    %v4433 = vunpack.c.l.b16 %v269
    %v4434 = vunpack.c.h.b16 %v269
    %v4435 = vunpack.c.l.b16 %v270
    %v4436 = vunpack.c.h.b16 %v270
    %v4437 = vunpack.c.l.b16 %v271
    %v4438 = vunpack.c.h.b16 %v271
    %v4439 = vunpack.c.l.b16 %v272
    %v4440 = vunpack.c.h.b16 %v272
    %v4441 = vunpack.c.l.b16 %v273
    %v4442 = vunpack.c.h.b16 %v273
    %v4443 = vunpack.c.l.b16 %v274
    %v4444 = vunpack.c.h.b16 %v274
    %v4445 = vunpack.c.l.b16 %v275
    %v4446 = vunpack.c.h.b16 %v275
    %v4447 = vunpack.c.l.b16 %v276
    %v4448 = vunpack.c.h.b16 %v276
    %v4449 = vunpack.c.l.b16 %v277
    %v4450 = vunpack.c.h.b16 %v277
    %v4451 = vunpack.c.l.b16 %v278
    %v4452 = vunpack.c.h.b16 %v278
    %v4453 = vunpack.c.l.b16 %v279
    %v4454 = vunpack.c.h.b16 %v279
    %v4455 = vunpack.c.l.b16 %v280
    %v4456 = vunpack.c.h.b16 %v280
    %v4457 = vunpack.c.l.b16 %v281
    %v4458 = vunpack.c.h.b16 %v281
    %v4459 = vunpack.c.l.b16 %v282
    %v4460 = vunpack.c.h.b16 %v282
    %v4461 = vpack.c.b16 %v4431, %v4429
    %v4462 = vpack.c.b16 %v4432, %v4430
    %v4463 = vpack.c.b16 %v4435, %v4433
    %v4464 = vpack.c.b16 %v4436, %v4434
    %v4465 = vpack.c.b16 %v4439, %v4437
    %v4466 = vpack.c.b16 %v4440, %v4438
    %v4467 = vpack.c.b16 %v4443, %v4441
    %v4468 = vpack.c.b16 %v4444, %v4442
    %v4469 = vpack.c.b16 %v4447, %v4445
    %v4470 = vpack.c.b16 %v4448, %v4446
    %v4471 = vpack.c.b16 %v4451, %v4449
    %v4472 = vpack.c.b16 %v4452, %v4450
    %v4473 = vpack.c.b16 %v4455, %v4453
    %v4474 = vpack.c.b16 %v4456, %v4454
    %v4475 = vpack.c.b16 %v4459, %v4457
    %v4476 = vpack.c.b16 %v4460, %v4458
    %4493 = vmatprep.subr.bf16.mxu0 %v4462
    %4494 = vmatpush1.bf16.msra.mxu0 %v4461
    %4495 = vmatprep.subr.bf16.mxu0 %v4464
    %4496 = vmatpush1.bf16.msra.mxu0 %v4463
    %4497 = vmatprep.subr.bf16.mxu0 %v4466
    %4498 = vmatpush1.bf16.msra.mxu0 %v4465
    %4499 = vmatprep.subr.bf16.mxu0 %v4468
    %4500 = vmatpush1.bf16.msra.mxu0 %v4467
    %4501 = vmatprep.subr.bf16.mxu0 %v4470
    %4502 = vmatpush1.bf16.msra.mxu0 %v4469
    %4503 = vmatprep.subr.bf16.mxu0 %v4472
    %4504 = vmatpush1.bf16.msra.mxu0 %v4471
    %4505 = vmatprep.subr.bf16.mxu0 %v4474
    %4506 = vmatpush1.bf16.msra.mxu0 %v4473
    %4507 = vmatprep.subr.bf16.mxu0 %v4476
    %4508 = vmatpush1.bf16.msra.mxu0 %v4475
    %4509 = vmatprep.subr.bf16.mxu0 0
    %4510 = vmatpush1.bf16.msra.mxu0 0
    %4511 = vmatprep.subr.bf16.mxu0 0
    %4512 = vmatpush1.bf16.msra.mxu0 0
    %4513 = vmatprep.subr.bf16.mxu0 0
    %4514 = vmatpush1.bf16.msra.mxu0 0
    %4515 = vmatprep.subr.bf16.mxu0 0
    %4516 = vmatpush1.bf16.msra.mxu0 0
    %4517 = vmatprep.subr.bf16.mxu0 0
    %4518 = vmatpush1.bf16.msra.mxu0 0
    %4519 = vmatprep.subr.bf16.mxu0 0
    %4520 = vmatpush1.bf16.msra.mxu0 0
    %4521 = vmatprep.subr.bf16.mxu0 0
    %4522 = vmatpush1.bf16.msra.mxu0 0
    %4523 = vmatprep.subr.bf16.mxu0 0
    %4524 = vmatpush1.bf16.msra.mxu0 0
    %4525 = vmatprep.mubr.bf16.mxu0 0
    %4526 = vmatmul.mubr.bf16.gmra.mrb[0].mxu0 %v4412
    %v4527 = vpop.f32.mrb[0].mxu0
    %v4528 = vadd.f32 0.0, %v4527
    %v4529 = vpop.f32.mrb[0].mxu0
    %v4530 = vadd.f32 0.0, %v4529
    %v4531 = vpop.f32.mrb[0].mxu0
    %v4532 = vpop.f32.mrb[0].mxu0
    %4533 = vdwg.mxu0
    %v4534 = vadd.f32 %v4038, %v4528
    %v4535 = vadd.f32 %v4039, %v4530
    %4536 = vmatprep.subr.bf16.mxu0 0
    %4537 = vmatpush1.bf16.msra.mxu0 %v317
    %4538 = vmatprep.subr.bf16.mxu0 0
    %4539 = vmatpush1.bf16.msra.mxu0 %v318
    %4540 = vmatprep.subr.bf16.mxu0 0
    %4541 = vmatpush1.bf16.msra.mxu0 %v319
    %4542 = vmatprep.subr.bf16.mxu0 0
    %4543 = vmatpush1.bf16.msra.mxu0 %v320
    %4544 = vmatprep.subr.bf16.mxu0 0
    %4545 = vmatpush1.bf16.msra.mxu0 0
    %4546 = vmatprep.subr.bf16.mxu0 0
    %4547 = vmatpush1.bf16.msra.mxu0 0
    %4548 = vmatprep.subr.bf16.mxu0 0
    %4549 = vmatpush1.bf16.msra.mxu0 0
    %4550 = vmatprep.subr.bf16.mxu0 0
    %4551 = vmatpush1.bf16.msra.mxu0 0
    %4552 = vmatprep.subr.bf16.mxu0 0
    %4553 = vmatpush1.bf16.msra.mxu0 0
    %4554 = vmatprep.subr.bf16.mxu0 0
    %4555 = vmatpush1.bf16.msra.mxu0 0
    %4556 = vmatprep.subr.bf16.mxu0 0
    %4557 = vmatpush1.bf16.msra.mxu0 0
    %4558 = vmatprep.subr.bf16.mxu0 0
    %4559 = vmatpush1.bf16.msra.mxu0 0
    %4560 = vmatprep.subr.bf16.mxu0 0
    %4561 = vmatpush1.bf16.msra.mxu0 0
    %4562 = vmatprep.subr.bf16.mxu0 0
    %4563 = vmatpush1.bf16.msra.mxu0 0
    %4564 = vmatprep.subr.bf16.mxu0 0
    %4565 = vmatpush1.bf16.msra.mxu0 0
    %4566 = vmatprep.subr.bf16.mxu0 0
    %4567 = vmatpush1.bf16.msra.mxu0 0
    %4568 = vmatprep.mubr.bf16.mxu0 0
    %4569 = vmatmul.mubr.bf16.gmra.mrb[0].mxu0 %v1254
    %v4570 = vpop.f32.mrb[0].mxu0
    %v4571 = vadd.f32 0.0, %v4570
    %v4572 = vpop.f32.mrb[0].mxu0
    %v4573 = vpop.f32.mrb[0].mxu0
    %v4574 = vpop.f32.mrb[0].mxu0
    %4575 = vdwg.mxu0
    %4576 = vmatprep.subr.bf16.mxu0 0
    %4577 = vmatpush1.bf16.msra.mxu0 %v385
    %4578 = vmatprep.subr.bf16.mxu0 0
    %4579 = vmatpush1.bf16.msra.mxu0 %v386
    %4580 = vmatprep.subr.bf16.mxu0 0
    %4581 = vmatpush1.bf16.msra.mxu0 %v387
    %4582 = vmatprep.subr.bf16.mxu0 0
    %4583 = vmatpush1.bf16.msra.mxu0 %v388
    %4584 = vmatprep.subr.bf16.mxu0 0
    %4585 = vmatpush1.bf16.msra.mxu0 0
    %4586 = vmatprep.subr.bf16.mxu0 0
    %4587 = vmatpush1.bf16.msra.mxu0 0
    %4588 = vmatprep.subr.bf16.mxu0 0
    %4589 = vmatpush1.bf16.msra.mxu0 0
    %4590 = vmatprep.subr.bf16.mxu0 0
    %4591 = vmatpush1.bf16.msra.mxu0 0
    %4592 = vmatprep.subr.bf16.mxu0 0
    %4593 = vmatpush1.bf16.msra.mxu0 0
    %4594 = vmatprep.subr.bf16.mxu0 0
    %4595 = vmatpush1.bf16.msra.mxu0 0
    %4596 = vmatprep.subr.bf16.mxu0 0
    %4597 = vmatpush1.bf16.msra.mxu0 0
    %4598 = vmatprep.subr.bf16.mxu0 0
    %4599 = vmatpush1.bf16.msra.mxu0 0
    %4600 = vmatprep.subr.bf16.mxu0 0
    %4601 = vmatpush1.bf16.msra.mxu0 0
    %4602 = vmatprep.subr.bf16.mxu0 0
    %4603 = vmatpush1.bf16.msra.mxu0 0
    %4604 = vmatprep.subr.bf16.mxu0 0
    %4605 = vmatpush1.bf16.msra.mxu0 0
    %4606 = vmatprep.subr.bf16.mxu0 0
    %4607 = vmatpush1.bf16.msra.mxu0 0
    %4608 = vmatprep.mubr.bf16.mxu0 0
    %4609 = vmatmul.mubr.bf16.gmra.mrb[0].mxu0 %v869
    %v4610 = vpop.f32.mrb[0].mxu0
    %v4611 = vadd.f32 %v4571, %v4610
    %v4612 = vpop.f32.mrb[0].mxu0
    %v4613 = vpop.f32.mrb[0].mxu0
    %v4614 = vpop.f32.mrb[0].mxu0
    %4615 = vdwg.mxu0
    %4616 = vmatprep.subr.bf16.mxu0 0
    %4617 = vmatpush1.bf16.msra.mxu0 %v452
    %4618 = vmatprep.subr.bf16.mxu0 0
    %4619 = vmatpush1.bf16.msra.mxu0 %v453
    %4620 = vmatprep.subr.bf16.mxu0 0
    %4621 = vmatpush1.bf16.msra.mxu0 %v454
    %4622 = vmatprep.subr.bf16.mxu0 0
    %4623 = vmatpush1.bf16.msra.mxu0 %v455
    %4624 = vmatprep.subr.bf16.mxu0 0
    %4625 = vmatpush1.bf16.msra.mxu0 0
    %4626 = vmatprep.subr.bf16.mxu0 0
    %4627 = vmatpush1.bf16.msra.mxu0 0
    %4628 = vmatprep.subr.bf16.mxu0 0
    %4629 = vmatpush1.bf16.msra.mxu0 0
    %4630 = vmatprep.subr.bf16.mxu0 0
    %4631 = vmatpush1.bf16.msra.mxu0 0
    %4632 = vmatprep.subr.bf16.mxu0 0
    %4633 = vmatpush1.bf16.msra.mxu0 0
    %4634 = vmatprep.subr.bf16.mxu0 0
    %4635 = vmatpush1.bf16.msra.mxu0 0
    %4636 = vmatprep.subr.bf16.mxu0 0
    %4637 = vmatpush1.bf16.msra.mxu0 0
    %4638 = vmatprep.subr.bf16.mxu0 0
    %4639 = vmatpush1.bf16.msra.mxu0 0
    %4640 = vmatprep.subr.bf16.mxu0 0
    %4641 = vmatpush1.bf16.msra.mxu0 0
    %4642 = vmatprep.subr.bf16.mxu0 0
    %4643 = vmatpush1.bf16.msra.mxu0 0
    %4644 = vmatprep.subr.bf16.mxu0 0
    %4645 = vmatpush1.bf16.msra.mxu0 0
    %4646 = vmatprep.subr.bf16.mxu0 0
    %4647 = vmatpush1.bf16.msra.mxu0 0
    %4648 = vmatprep.mubr.bf16.mxu0 0
    %4649 = vmatmul.mubr.bf16.gmra.mrb[0].mxu0 %v1875
    %v4650 = vpop.f32.mrb[0].mxu0
    %v4651 = vadd.f32 0.0, %v4650
    %v4652 = vpop.f32.mrb[0].mxu0
    %v4653 = vpop.f32.mrb[0].mxu0
    %v4654 = vpop.f32.mrb[0].mxu0
    %4655 = vdwg.mxu0
    %v4656 = vadd.f32 %v4611, %v4651
    %4657 = vmatprep.subr.bf16.mxu0 0
    %4658 = vmatpush1.bf16.msra.mxu0 %v520
    %4659 = vmatprep.subr.bf16.mxu0 0
    %4660 = vmatpush1.bf16.msra.mxu0 %v521
    %4661 = vmatprep.subr.bf16.mxu0 0
    %4662 = vmatpush1.bf16.msra.mxu0 %v522
    %4663 = vmatprep.subr.bf16.mxu0 0
    %4664 = vmatpush1.bf16.msra.mxu0 %v523
    %4665 = vmatprep.subr.bf16.mxu0 0
    %4666 = vmatpush1.bf16.msra.mxu0 0
    %4667 = vmatprep.subr.bf16.mxu0 0
    %4668 = vmatpush1.bf16.msra.mxu0 0
    %4669 = vmatprep.subr.bf16.mxu0 0
    %4670 = vmatpush1.bf16.msra.mxu0 0
    %4671 = vmatprep.subr.bf16.mxu0 0
    %4672 = vmatpush1.bf16.msra.mxu0 0
    %4673 = vmatprep.subr.bf16.mxu0 0
    %4674 = vmatpush1.bf16.msra.mxu0 0
    %4675 = vmatprep.subr.bf16.mxu0 0
    %4676 = vmatpush1.bf16.msra.mxu0 0
    %4677 = vmatprep.subr.bf16.mxu0 0
    %4678 = vmatpush1.bf16.msra.mxu0 0
    %4679 = vmatprep.subr.bf16.mxu0 0
    %4680 = vmatpush1.bf16.msra.mxu0 0
    %4681 = vmatprep.subr.bf16.mxu0 0
    %4682 = vmatpush1.bf16.msra.mxu0 0
    %4683 = vmatprep.subr.bf16.mxu0 0
    %4684 = vmatpush1.bf16.msra.mxu0 0
    %4685 = vmatprep.subr.bf16.mxu0 0
    %4686 = vmatpush1.bf16.msra.mxu0 0
    %4687 = vmatprep.subr.bf16.mxu0 0
    %4688 = vmatpush1.bf16.msra.mxu0 0
    %4689 = vmatprep.mubr.bf16.mxu0 0
    %4690 = vmatmul.mubr.bf16.gmra.mrb[0].mxu0 %v2377
    %v4691 = vpop.f32.mrb[0].mxu0
    %v4692 = vadd.f32 0.0, %v4691
    %v4693 = vpop.f32.mrb[0].mxu0
    %v4694 = vpop.f32.mrb[0].mxu0
    %v4695 = vpop.f32.mrb[0].mxu0
    %4696 = vdwg.mxu0
    %v4697 = vadd.f32 %v4656, %v4692
    %4698 = vmatprep.subr.bf16.mxu0 0
    %4699 = vmatpush1.bf16.msra.mxu0 %v588
    %4700 = vmatprep.subr.bf16.mxu0 0
    %4701 = vmatpush1.bf16.msra.mxu0 %v589
    %4702 = vmatprep.subr.bf16.mxu0 0
    %4703 = vmatpush1.bf16.msra.mxu0 %v590
    %4704 = vmatprep.subr.bf16.mxu0 0
    %4705 = vmatpush1.bf16.msra.mxu0 %v591
    %4706 = vmatprep.subr.bf16.mxu0 0
    %4707 = vmatpush1.bf16.msra.mxu0 0
    %4708 = vmatprep.subr.bf16.mxu0 0
    %4709 = vmatpush1.bf16.msra.mxu0 0
    %4710 = vmatprep.subr.bf16.mxu0 0
    %4711 = vmatpush1.bf16.msra.mxu0 0
    %4712 = vmatprep.subr.bf16.mxu0 0
    %4713 = vmatpush1.bf16.msra.mxu0 0
    %4714 = vmatprep.subr.bf16.mxu0 0
    %4715 = vmatpush1.bf16.msra.mxu0 0
    %4716 = vmatprep.subr.bf16.mxu0 0
    %4717 = vmatpush1.bf16.msra.mxu0 0
    %4718 = vmatprep.subr.bf16.mxu0 0
    %4719 = vmatpush1.bf16.msra.mxu0 0
    %4720 = vmatprep.subr.bf16.mxu0 0
    %4721 = vmatpush1.bf16.msra.mxu0 0
    %4722 = vmatprep.subr.bf16.mxu0 0
    %4723 = vmatpush1.bf16.msra.mxu0 0
    %4724 = vmatprep.subr.bf16.mxu0 0
    %4725 = vmatpush1.bf16.msra.mxu0 0
    %4726 = vmatprep.subr.bf16.mxu0 0
    %4727 = vmatpush1.bf16.msra.mxu0 0
    %4728 = vmatprep.subr.bf16.mxu0 0
    %4729 = vmatpush1.bf16.msra.mxu0 0
    %4730 = vmatprep.mubr.bf16.mxu0 0
    %4731 = vmatmul.mubr.bf16.gmra.mrb[0].mxu0 %v2873
    %v4732 = vpop.f32.mrb[0].mxu0
    %v4733 = vadd.f32 0.0, %v4732
    %v4734 = vpop.f32.mrb[0].mxu0
    %v4735 = vpop.f32.mrb[0].mxu0
    %v4736 = vpop.f32.mrb[0].mxu0
    %4737 = vdwg.mxu0
    %v4738 = vadd.f32 %v4697, %v4733
    %4739 = vmatprep.subr.bf16.mxu0 0
    %4740 = vmatpush1.bf16.msra.mxu0 %v656
    %4741 = vmatprep.subr.bf16.mxu0 0
    %4742 = vmatpush1.bf16.msra.mxu0 %v657
    %4743 = vmatprep.subr.bf16.mxu0 0
    %4744 = vmatpush1.bf16.msra.mxu0 %v658
    %4745 = vmatprep.subr.bf16.mxu0 0
    %4746 = vmatpush1.bf16.msra.mxu0 %v659
    %4747 = vmatprep.subr.bf16.mxu0 0
    %4748 = vmatpush1.bf16.msra.mxu0 0
    %4749 = vmatprep.subr.bf16.mxu0 0
    %4750 = vmatpush1.bf16.msra.mxu0 0
    %4751 = vmatprep.subr.bf16.mxu0 0
    %4752 = vmatpush1.bf16.msra.mxu0 0
    %4753 = vmatprep.subr.bf16.mxu0 0
    %4754 = vmatpush1.bf16.msra.mxu0 0
    %4755 = vmatprep.subr.bf16.mxu0 0
    %4756 = vmatpush1.bf16.msra.mxu0 0
    %4757 = vmatprep.subr.bf16.mxu0 0
    %4758 = vmatpush1.bf16.msra.mxu0 0
    %4759 = vmatprep.subr.bf16.mxu0 0
    %4760 = vmatpush1.bf16.msra.mxu0 0
    %4761 = vmatprep.subr.bf16.mxu0 0
    %4762 = vmatpush1.bf16.msra.mxu0 0
    %4763 = vmatprep.subr.bf16.mxu0 0
    %4764 = vmatpush1.bf16.msra.mxu0 0
    %4765 = vmatprep.subr.bf16.mxu0 0
    %4766 = vmatpush1.bf16.msra.mxu0 0
    %4767 = vmatprep.subr.bf16.mxu0 0
    %4768 = vmatpush1.bf16.msra.mxu0 0
    %4769 = vmatprep.subr.bf16.mxu0 0
    %4770 = vmatpush1.bf16.msra.mxu0 0
    %4771 = vmatprep.mubr.bf16.mxu0 0
    %4772 = vmatmul.mubr.bf16.gmra.mrb[0].mxu0 %v3369
    %v4773 = vpop.f32.mrb[0].mxu0
    %v4774 = vadd.f32 0.0, %v4773
    %v4775 = vpop.f32.mrb[0].mxu0
    %v4776 = vpop.f32.mrb[0].mxu0
    %v4777 = vpop.f32.mrb[0].mxu0
    %4778 = vdwg.mxu0
    %v4779 = vadd.f32 %v4738, %v4774
    %4780 = vmatprep.subr.bf16.mxu0 0
    %4781 = vmatpush1.bf16.msra.mxu0 %v724
    %4782 = vmatprep.subr.bf16.mxu0 0
    %4783 = vmatpush1.bf16.msra.mxu0 %v725
    %4784 = vmatprep.subr.bf16.mxu0 0
    %4785 = vmatpush1.bf16.msra.mxu0 %v726
    %4786 = vmatprep.subr.bf16.mxu0 0
    %4787 = vmatpush1.bf16.msra.mxu0 %v727
    %4788 = vmatprep.subr.bf16.mxu0 0
    %4789 = vmatpush1.bf16.msra.mxu0 0
    %4790 = vmatprep.subr.bf16.mxu0 0
    %4791 = vmatpush1.bf16.msra.mxu0 0
    %4792 = vmatprep.subr.bf16.mxu0 0
    %4793 = vmatpush1.bf16.msra.mxu0 0
    %4794 = vmatprep.subr.bf16.mxu0 0
    %4795 = vmatpush1.bf16.msra.mxu0 0
    %4796 = vmatprep.subr.bf16.mxu0 0
    %4797 = vmatpush1.bf16.msra.mxu0 0
    %4798 = vmatprep.subr.bf16.mxu0 0
    %4799 = vmatpush1.bf16.msra.mxu0 0
    %4800 = vmatprep.subr.bf16.mxu0 0
    %4801 = vmatpush1.bf16.msra.mxu0 0
    %4802 = vmatprep.subr.bf16.mxu0 0
    %4803 = vmatpush1.bf16.msra.mxu0 0
    %4804 = vmatprep.subr.bf16.mxu0 0
    %4805 = vmatpush1.bf16.msra.mxu0 0
    %4806 = vmatprep.subr.bf16.mxu0 0
    %4807 = vmatpush1.bf16.msra.mxu0 0
    %4808 = vmatprep.subr.bf16.mxu0 0
    %4809 = vmatpush1.bf16.msra.mxu0 0
    %4810 = vmatprep.subr.bf16.mxu0 0
    %4811 = vmatpush1.bf16.msra.mxu0 0
    %4812 = vmatprep.mubr.bf16.mxu0 0
    %4813 = vmatmul.mubr.bf16.gmra.mrb[0].mxu0 %v3871
    %v4814 = vpop.f32.mrb[0].mxu0
    %v4815 = vadd.f32 0.0, %v4814
    %v4816 = vpop.f32.mrb[0].mxu0
    %v4817 = vpop.f32.mrb[0].mxu0
    %v4818 = vpop.f32.mrb[0].mxu0
    %4819 = vdwg.mxu0
    %v4820 = vadd.f32 %v4779, %v4815
    %4821 = vmatprep.subr.bf16.mxu0 0
    %4822 = vmatpush1.bf16.msra.mxu0 %v792
    %4823 = vmatprep.subr.bf16.mxu0 0
    %4824 = vmatpush1.bf16.msra.mxu0 %v793
    %4825 = vmatprep.subr.bf16.mxu0 0
    %4826 = vmatpush1.bf16.msra.mxu0 %v794
    %4827 = vmatprep.subr.bf16.mxu0 0
    %4828 = vmatpush1.bf16.msra.mxu0 %v795
    %4829 = vmatprep.subr.bf16.mxu0 0
    %4830 = vmatpush1.bf16.msra.mxu0 0
    %4831 = vmatprep.subr.bf16.mxu0 0
    %4832 = vmatpush1.bf16.msra.mxu0 0
    %4833 = vmatprep.subr.bf16.mxu0 0
    %4834 = vmatpush1.bf16.msra.mxu0 0
    %4835 = vmatprep.subr.bf16.mxu0 0
    %4836 = vmatpush1.bf16.msra.mxu0 0
    %4837 = vmatprep.subr.bf16.mxu0 0
    %4838 = vmatpush1.bf16.msra.mxu0 0
    %4839 = vmatprep.subr.bf16.mxu0 0
    %4840 = vmatpush1.bf16.msra.mxu0 0
    %4841 = vmatprep.subr.bf16.mxu0 0
    %4842 = vmatpush1.bf16.msra.mxu0 0
    %4843 = vmatprep.subr.bf16.mxu0 0
    %4844 = vmatpush1.bf16.msra.mxu0 0
    %4845 = vmatprep.subr.bf16.mxu0 0
    %4846 = vmatpush1.bf16.msra.mxu0 0
    %4847 = vmatprep.subr.bf16.mxu0 0
    %4848 = vmatpush1.bf16.msra.mxu0 0
    %4849 = vmatprep.subr.bf16.mxu0 0
    %4850 = vmatpush1.bf16.msra.mxu0 0
    %4851 = vmatprep.subr.bf16.mxu0 0
    %4852 = vmatpush1.bf16.msra.mxu0 0
    %4853 = vmatprep.mubr.bf16.mxu0 0
    %4854 = vmatmul.mubr.bf16.gmra.mrb[0].mxu0 %v4367
    %v4855 = vpop.f32.mrb[0].mxu0
    %v4856 = vadd.f32 0.0, %v4855
    %v4857 = vpop.f32.mrb[0].mxu0
    %v4858 = vpop.f32.mrb[0].mxu0
    %v4859 = vpop.f32.mrb[0].mxu0
    %4860 = vdwg.mxu0
    %v4861 = vadd.f32 %v4820, %v4856
    %v4863 = vsel %vm325, %v82, 0
    %4865 = vmatprep.subr.bf16.mxu0 0
    %4866 = vmatpush1.bf16.msra.mxu0 %v860
    %4867 = vmatprep.subr.bf16.mxu0 0
    %4868 = vmatpush1.bf16.msra.mxu0 %v861
    %4869 = vmatprep.subr.bf16.mxu0 0
    %4870 = vmatpush1.bf16.msra.mxu0 %v862
    %4871 = vmatprep.subr.bf16.mxu0 0
    %4872 = vmatpush1.bf16.msra.mxu0 %v863
    %4873 = vmatprep.subr.bf16.mxu0 0
    %4874 = vmatpush1.bf16.msra.mxu0 0
    %4875 = vmatprep.subr.bf16.mxu0 0
    %4876 = vmatpush1.bf16.msra.mxu0 0
    %4877 = vmatprep.subr.bf16.mxu0 0
    %4878 = vmatpush1.bf16.msra.mxu0 0
    %4879 = vmatprep.subr.bf16.mxu0 0
    %4880 = vmatpush1.bf16.msra.mxu0 0
    %4881 = vmatprep.subr.bf16.mxu0 0
    %4882 = vmatpush1.bf16.msra.mxu0 0
    %4883 = vmatprep.subr.bf16.mxu0 0
    %4884 = vmatpush1.bf16.msra.mxu0 0
    %4885 = vmatprep.subr.bf16.mxu0 0
    %4886 = vmatpush1.bf16.msra.mxu0 0
    %4887 = vmatprep.subr.bf16.mxu0 0
    %4888 = vmatpush1.bf16.msra.mxu0 0
    %4889 = vmatprep.subr.bf16.mxu0 0
    %4890 = vmatpush1.bf16.msra.mxu0 0
    %4891 = vmatprep.subr.bf16.mxu0 0
    %4892 = vmatpush1.bf16.msra.mxu0 0
    %4893 = vmatprep.subr.bf16.mxu0 0
    %4894 = vmatpush1.bf16.msra.mxu0 0
    %4895 = vmatprep.subr.bf16.mxu0 0
    %4896 = vmatpush1.bf16.msra.mxu0 0
    %4897 = vmatprep.mubr.bf16.mxu0 0
    %4898 = vmatmul.mubr.bf16.gmra.mrb[0].mxu0 %v4863
    %v4899 = vpop.f32.mrb[0].mxu0
    %v4900 = vadd.f32 0.0, %v4899
    %v4901 = vpop.f32.mrb[0].mxu0
    %v4902 = vpop.f32.mrb[0].mxu0
    %v4903 = vpop.f32.mrb[0].mxu0
    %4904 = vdwg.mxu0
    %v4905 = vadd.f32 %v4861, %v4900
    %v4906 = vadd.f32 %v4905, %v916
    %v4907 = vmax.f32 %v4906, 0.0
    %v4908 = vpack.c.bf16 %v4907, %v4907
    %v4925 = vunpack.c.l.b16 %v283
    %v4926 = vunpack.c.h.b16 %v283
    %v4927 = vunpack.c.l.b16 %v284
    %v4928 = vunpack.c.h.b16 %v284
    %v4929 = vunpack.c.l.b16 %v285
    %v4930 = vunpack.c.h.b16 %v285
    %v4931 = vunpack.c.l.b16 %v286
    %v4932 = vunpack.c.h.b16 %v286
    %v4933 = vunpack.c.l.b16 %v287
    %v4934 = vunpack.c.h.b16 %v287
    %v4935 = vunpack.c.l.b16 %v288
    %v4936 = vunpack.c.h.b16 %v288
    %v4937 = vunpack.c.l.b16 %v289
    %v4938 = vunpack.c.h.b16 %v289
    %v4939 = vunpack.c.l.b16 %v290
    %v4940 = vunpack.c.h.b16 %v290
    %v4941 = vunpack.c.l.b16 %v291
    %v4942 = vunpack.c.h.b16 %v291
    %v4943 = vunpack.c.l.b16 %v292
    %v4944 = vunpack.c.h.b16 %v292
    %v4945 = vunpack.c.l.b16 %v293
    %v4946 = vunpack.c.h.b16 %v293
    %v4947 = vunpack.c.l.b16 %v294
    %v4948 = vunpack.c.h.b16 %v294
    %v4949 = vunpack.c.l.b16 %v295
    %v4950 = vunpack.c.h.b16 %v295
    %v4951 = vunpack.c.l.b16 %v296
    %v4952 = vunpack.c.h.b16 %v296
    %v4953 = vunpack.c.l.b16 %v297
    %v4954 = vunpack.c.h.b16 %v297
    %v4955 = vunpack.c.l.b16 %v298
    %v4956 = vunpack.c.h.b16 %v298
    %v4957 = vpack.c.b16 %v4927, %v4925
    %v4958 = vpack.c.b16 %v4928, %v4926
    %v4959 = vpack.c.b16 %v4931, %v4929
    %v4960 = vpack.c.b16 %v4932, %v4930
    %v4961 = vpack.c.b16 %v4935, %v4933
    %v4962 = vpack.c.b16 %v4936, %v4934
    %v4963 = vpack.c.b16 %v4939, %v4937
    %v4964 = vpack.c.b16 %v4940, %v4938
    %v4965 = vpack.c.b16 %v4943, %v4941
    %v4966 = vpack.c.b16 %v4944, %v4942
    %v4967 = vpack.c.b16 %v4947, %v4945
    %v4968 = vpack.c.b16 %v4948, %v4946
    %v4969 = vpack.c.b16 %v4951, %v4949
    %v4970 = vpack.c.b16 %v4952, %v4950
    %v4971 = vpack.c.b16 %v4955, %v4953
    %v4972 = vpack.c.b16 %v4956, %v4954
    %4989 = vmatprep.subr.bf16.mxu0 %v4958
    %4990 = vmatpush1.bf16.msra.mxu0 %v4957
    %4991 = vmatprep.subr.bf16.mxu0 %v4960
    %4992 = vmatpush1.bf16.msra.mxu0 %v4959
    %4993 = vmatprep.subr.bf16.mxu0 %v4962
    %4994 = vmatpush1.bf16.msra.mxu0 %v4961
    %4995 = vmatprep.subr.bf16.mxu0 %v4964
    %4996 = vmatpush1.bf16.msra.mxu0 %v4963
    %4997 = vmatprep.subr.bf16.mxu0 %v4966
    %4998 = vmatpush1.bf16.msra.mxu0 %v4965
    %4999 = vmatprep.subr.bf16.mxu0 %v4968
    %5000 = vmatpush1.bf16.msra.mxu0 %v4967
    %5001 = vmatprep.subr.bf16.mxu0 %v4970
    %5002 = vmatpush1.bf16.msra.mxu0 %v4969
    %5003 = vmatprep.subr.bf16.mxu0 %v4972
    %5004 = vmatpush1.bf16.msra.mxu0 %v4971
    %5005 = vmatprep.subr.bf16.mxu0 0
    %5006 = vmatpush1.bf16.msra.mxu0 0
    %5007 = vmatprep.subr.bf16.mxu0 0
    %5008 = vmatpush1.bf16.msra.mxu0 0
    %5009 = vmatprep.subr.bf16.mxu0 0
    %5010 = vmatpush1.bf16.msra.mxu0 0
    %5011 = vmatprep.subr.bf16.mxu0 0
    %5012 = vmatpush1.bf16.msra.mxu0 0
    %5013 = vmatprep.subr.bf16.mxu0 0
    %5014 = vmatpush1.bf16.msra.mxu0 0
    %5015 = vmatprep.subr.bf16.mxu0 0
    %5016 = vmatpush1.bf16.msra.mxu0 0
    %5017 = vmatprep.subr.bf16.mxu0 0
    %5018 = vmatpush1.bf16.msra.mxu0 0
    %5019 = vmatprep.subr.bf16.mxu0 0
    %5020 = vmatpush1.bf16.msra.mxu0 0
    %5021 = vmatprep.mubr.bf16.mxu0 0
    %5022 = vmatmul.mubr.bf16.gmra.mrb[0].mxu0 %v4908
    %v5023 = vpop.f32.mrb[0].mxu0
    %v5024 = vadd.f32 0.0, %v5023
    %v5025 = vpop.f32.mrb[0].mxu0
    %v5026 = vadd.f32 0.0, %v5025
    %v5027 = vpop.f32.mrb[0].mxu0
    %v5028 = vpop.f32.mrb[0].mxu0
    %5029 = vdwg.mxu0
    %v5030 = vadd.f32 %v4534, %v5024
    %v5031 = vadd.f32 %v4535, %v5026
    %v5033 = vlaneseq
    %v5034 = vshrl.u32 %v5033, 7
    %v5035 = vsub.s32 0, %v5034
    %v5036 = vrot.slane %v300, %v5035
    %v5037 = vlaneseq
    %v5038 = vshrl.u32 %v5037, 7
    %v5039 = vsub.s32 1, %v5038
    %v5040 = vrot.slane %v300, %v5039
    %v5043 = vadd.f32 %v5030, %v5036
    %v5044 = vadd.f32 %v5031, %v5040
    %v5045 = vmax.f32 %v5043, 0.0
    %v5046 = vmax.f32 %v5044, 0.0
    %v5047 = vld [vmem:[%s5] sm:$0xff]
    %v5048 = vld [vmem:[%s5 + $0x8] sm:$0xff]
    %v5049 = vld [vmem:[%s5 + $0x10] sm:$0xff]
    %v5050 = vld [vmem:[%s5 + $0x18] sm:$0xff]
    %v5051 = vld [vmem:[%s5 + $0x20] sm:$0xff]
    %v5052 = vld [vmem:[%s5 + $0x28] sm:$0xff]
    %v5053 = vld [vmem:[%s5 + $0x30] sm:$0xff]
    %v5054 = vld [vmem:[%s5 + $0x38] sm:$0xff]
    %v5055 = vld [vmem:[%s5 + $0x40] sm:$0xff]
    %v5056 = vld [vmem:[%s5 + $0x48] sm:$0xff]
    %v5057 = vld [vmem:[%s5 + $0x50] sm:$0xff]
    %v5058 = vld [vmem:[%s5 + $0x58] sm:$0xff]
    %v5059 = vld [vmem:[%s5 + $0x60] sm:$0xff]
    %v5060 = vld [vmem:[%s5 + $0x68] sm:$0xff]
    %v5061 = vld [vmem:[%s5 + $0x70] sm:$0xff]
    %v5062 = vld [vmem:[%s5 + $0x78] sm:$0xff]
    %v5063 = vld [vmem:[%s5 + $0x80] sm:$0xff]
    %v5064 = vld [vmem:[%s5 + $0x88] sm:$0xff]
    %v5065 = vld [vmem:[%s5 + $0x90] sm:$0xff]
    %v5066 = vld [vmem:[%s5 + $0x98] sm:$0xff]
    %v5067 = vld [vmem:[%s5 + $0xa0] sm:$0xff]
    %v5068 = vld [vmem:[%s5 + $0xa8] sm:$0xff]
    %v5069 = vld [vmem:[%s5 + $0xb0] sm:$0xff]
    %v5070 = vld [vmem:[%s5 + $0xb8] sm:$0xff]
    %v5071 = vld [vmem:[%s5 + $0xc0] sm:$0xff]
    %v5072 = vld [vmem:[%s5 + $0xc8] sm:$0xff]
    %v5073 = vld [vmem:[%s5 + $0xd0] sm:$0xff]
    %v5074 = vld [vmem:[%s5 + $0xd8] sm:$0xff]
    %v5075 = vld [vmem:[%s5 + $0xe0] sm:$0xff]
    %v5076 = vld [vmem:[%s5 + $0xe8] sm:$0xff]
    %v5077 = vld [vmem:[%s5 + $0xf0] sm:$0xff]
    %v5078 = vld [vmem:[%s5 + $0xf8] sm:$0xff]
    %v5079 = vld [vmem:[%s6] sm:$0x1]
    %v5081 = vlaneseq
    %v5082 = vshrl.u32 %v5081, 7
    %v5083 = vsub.s32 0, %v5082
    %v5084 = vrot.slane %v5079, %v5083
    %5086 = vmatprep.subr.mxu0 0.0
    %5087 = vmatpush1.msra.mxu0 %v5047
    %5088 = vmatprep.subr.mxu0 0.0
    %5089 = vmatpush1.msra.mxu0 %v5048
    %5090 = vmatprep.subr.mxu0 0.0
    %5091 = vmatpush1.msra.mxu0 %v5049
    %5092 = vmatprep.subr.mxu0 0.0
    %5093 = vmatpush1.msra.mxu0 %v5050
    %5094 = vmatprep.subr.mxu0 0.0
    %5095 = vmatpush1.msra.mxu0 %v5051
    %5096 = vmatprep.subr.mxu0 0.0
    %5097 = vmatpush1.msra.mxu0 %v5052
    %5098 = vmatprep.subr.mxu0 0.0
    %5099 = vmatpush1.msra.mxu0 %v5053
    %5100 = vmatprep.subr.mxu0 0.0
    %5101 = vmatpush1.msra.mxu0 %v5054
    %5102 = vmatprep.subr.mxu0 0.0
    %5103 = vmatpush1.msra.mxu0 %v5055
    %5104 = vmatprep.subr.mxu0 0.0
    %5105 = vmatpush1.msra.mxu0 %v5056
    %5106 = vmatprep.subr.mxu0 0.0
    %5107 = vmatpush1.msra.mxu0 %v5057
    %5108 = vmatprep.subr.mxu0 0.0
    %5109 = vmatpush1.msra.mxu0 %v5058
    %5110 = vmatprep.subr.mxu0 0.0
    %5111 = vmatpush1.msra.mxu0 %v5059
    %5112 = vmatprep.subr.mxu0 0.0
    %5113 = vmatpush1.msra.mxu0 %v5060
    %5114 = vmatprep.subr.mxu0 0.0
    %5115 = vmatpush1.msra.mxu0 %v5061
    %5116 = vmatprep.subr.mxu0 0.0
    %5117 = vmatpush1.msra.mxu0 %v5062
    %5118 = vmatprep.subr.mxu0 0.0
    %5119 = vmatpush1.msra.mxu0 %v5063
    %5120 = vmatprep.subr.mxu0 0.0
    %5121 = vmatpush1.msra.mxu0 %v5064
    %5122 = vmatprep.subr.mxu0 0.0
    %5123 = vmatpush1.msra.mxu0 %v5065
    %5124 = vmatprep.subr.mxu0 0.0
    %5125 = vmatpush1.msra.mxu0 %v5066
    %5126 = vmatprep.subr.mxu0 0.0
    %5127 = vmatpush1.msra.mxu0 %v5067
    %5128 = vmatprep.subr.mxu0 0.0
    %5129 = vmatpush1.msra.mxu0 %v5068
    %5130 = vmatprep.subr.mxu0 0.0
    %5131 = vmatpush1.msra.mxu0 %v5069
    %5132 = vmatprep.subr.mxu0 0.0
    %5133 = vmatpush1.msra.mxu0 %v5070
    %5134 = vmatprep.subr.mxu0 0.0
    %5135 = vmatpush1.msra.mxu0 %v5071
    %5136 = vmatprep.subr.mxu0 0.0
    %5137 = vmatpush1.msra.mxu0 %v5072
    %5138 = vmatprep.subr.mxu0 0.0
    %5139 = vmatpush1.msra.mxu0 %v5073
    %5140 = vmatprep.subr.mxu0 0.0
    %5141 = vmatpush1.msra.mxu0 %v5074
    %5142 = vmatprep.subr.mxu0 0.0
    %5143 = vmatpush1.msra.mxu0 %v5075
    %5144 = vmatprep.subr.mxu0 0.0
    %5145 = vmatpush1.msra.mxu0 %v5076
    %5146 = vmatprep.subr.mxu0 0.0
    %5147 = vmatpush1.msra.mxu0 %v5077
    %5148 = vmatprep.subr.mxu0 0.0
    %5149 = vmatpush1.msra.mxu0 %v5078
    %5150 = vmatprep.mubr.f32.mxu0 %v5046
    %5151 = vmatmul.mubr.f32.gmra.mrb[0].mxu0 %v5045
    %v5152 = vpop.f32.mrb[0].mxu0
    %v5153 = vadd.f32 %v5084, %v5152
    %v5154 = vpop.f32.mrb[0].mxu0
    %5155 = vdwg.mxu0
    %v5156 = vmax.f32 %v5153, 0.0
    %v5157 = vld [vmem:[%s7] sm:$0xff]
    %v5158 = vld [vmem:[%s7 + $0x8] sm:$0xff]
    %v5159 = vld [vmem:[%s7 + $0x10] sm:$0xff]
    %v5160 = vld [vmem:[%s7 + $0x18] sm:$0xff]
    %v5161 = vld [vmem:[%s7 + $0x20] sm:$0xff]
    %v5162 = vld [vmem:[%s7 + $0x28] sm:$0xff]
    %v5163 = vld [vmem:[%s7 + $0x30] sm:$0xff]
    %v5164 = vld [vmem:[%s7 + $0x38] sm:$0xff]
    %v5165 = vld [vmem:[%s7 + $0x40] sm:$0xff]
    %v5166 = vld [vmem:[%s7 + $0x48] sm:$0xff]
    %v5167 = vld [vmem:[%s7 + $0x50] sm:$0xff]
    %v5168 = vld [vmem:[%s7 + $0x58] sm:$0xff]
    %v5169 = vld [vmem:[%s7 + $0x60] sm:$0xf]
    %v5170 = vld [vmem:[#allocation2] sm:$0x1]
    %v5172 = vlaneseq
    %v5173 = vshrl.u32 %v5172, 7
    %v5174 = vsub.s32 0, %v5173
    %v5175 = vrot.slane %v5170, %v5174
    %vm5177 = vcmask 818176
    %v5179 = vsel %vm5177, %v5156, 0
    %vm5181 = vcmask 1043456
    %v5183 = vsel %vm5181, %v5169, 0
    %5185 = vmatprep.subr.mxu0 0.0
    %5186 = vmatpush1.msra.mxu0 %v5157
    %5187 = vmatprep.subr.mxu0 0.0
    %5188 = vmatpush1.msra.mxu0 %v5158
    %5189 = vmatprep.subr.mxu0 0.0
    %5190 = vmatpush1.msra.mxu0 %v5159
    %5191 = vmatprep.subr.mxu0 0.0
    %5192 = vmatpush1.msra.mxu0 %v5160
    %5193 = vmatprep.subr.mxu0 0.0
    %5194 = vmatpush1.msra.mxu0 %v5161
    %5195 = vmatprep.subr.mxu0 0.0
    %5196 = vmatpush1.msra.mxu0 %v5162
    %5197 = vmatprep.subr.mxu0 0.0
    %5198 = vmatpush1.msra.mxu0 %v5163
    %5199 = vmatprep.subr.mxu0 0.0
    %5200 = vmatpush1.msra.mxu0 %v5164
    %5201 = vmatprep.subr.mxu0 0.0
    %5202 = vmatpush1.msra.mxu0 %v5165
    %5203 = vmatprep.subr.mxu0 0.0
    %5204 = vmatpush1.msra.mxu0 %v5166
    %5205 = vmatprep.subr.mxu0 0.0
    %5206 = vmatpush1.msra.mxu0 %v5167
    %5207 = vmatprep.subr.mxu0 0.0
    %5208 = vmatpush1.msra.mxu0 %v5168
    %5209 = vmatprep.subr.mxu0 0.0
    %5210 = vmatpush1.msra.mxu0 %v5183
    %5211 = vmatprep.subr.mxu0 0.0
    %5212 = vmatpush1.msra.mxu0 0.0
    %5213 = vmatprep.subr.mxu0 0.0
    %5214 = vmatpush1.msra.mxu0 0.0
    %5215 = vmatprep.subr.mxu0 0.0
    %5216 = vmatpush1.msra.mxu0 0.0
    %5217 = vmatprep.subr.mxu0 0.0
    %5218 = vmatpush1.msra.mxu0 0.0
    %5219 = vmatprep.subr.mxu0 0.0
    %5220 = vmatpush1.msra.mxu0 0.0
    %5221 = vmatprep.subr.mxu0 0.0
    %5222 = vmatpush1.msra.mxu0 0.0
    %5223 = vmatprep.subr.mxu0 0.0
    %5224 = vmatpush1.msra.mxu0 0.0
    %5225 = vmatprep.subr.mxu0 0.0
    %5226 = vmatpush1.msra.mxu0 0.0
    %5227 = vmatprep.subr.mxu0 0.0
    %5228 = vmatpush1.msra.mxu0 0.0
    %5229 = vmatprep.subr.mxu0 0.0
    %5230 = vmatpush1.msra.mxu0 0.0
    %5231 = vmatprep.subr.mxu0 0.0
    %5232 = vmatpush1.msra.mxu0 0.0
    %5233 = vmatprep.subr.mxu0 0.0
    %5234 = vmatpush1.msra.mxu0 0.0
    %5235 = vmatprep.subr.mxu0 0.0
    %5236 = vmatpush1.msra.mxu0 0.0
    %5237 = vmatprep.subr.mxu0 0.0
    %5238 = vmatpush1.msra.mxu0 0.0
    %5239 = vmatprep.subr.mxu0 0.0
    %5240 = vmatpush1.msra.mxu0 0.0
    %5241 = vmatprep.subr.mxu0 0.0
    %5242 = vmatpush1.msra.mxu0 0.0
    %5243 = vmatprep.subr.mxu0 0.0
    %5244 = vmatpush1.msra.mxu0 0.0
    %5245 = vmatprep.subr.mxu0 0.0
    %5246 = vmatpush1.msra.mxu0 0.0
    %5247 = vmatprep.subr.mxu0 0.0
    %5248 = vmatpush1.msra.mxu0 0.0
    %5249 = vmatprep.mubr.f32.mxu0 0.0
    %5250 = vmatmul.mubr.f32.gmra.mrb[0].mxu0 %v5179
    %v5251 = vpop.f32.mrb[0].mxu0
    %v5252 = vadd.f32 %v5175, %v5251
    %v5253 = vpop.f32.mrb[0].mxu0
    %5254 = vdwg.mxu0
    %vm5255 = vcmask 1024
    %5256 = vst.msk [vmem:[%s15] sm:$0x3] %vm5255, %v5252
    %v5257 = vld [vmem:[%s9] sm:$0xff]
    %v5258 = vld [vmem:[%s9 + $0x8] sm:$0xff]
    %v5259 = vld [vmem:[%s9 + $0x10] sm:$0xff]
    %v5260 = vld [vmem:[%s9 + $0x18] sm:$0xff]
    %v5261 = vld [vmem:[%s9 + $0x20] sm:$0xff]
    %v5262 = vld [vmem:[%s9 + $0x28] sm:$0xff]
    %v5263 = vld [vmem:[%s9 + $0x30] sm:$0xff]
    %v5264 = vld [vmem:[%s9 + $0x38] sm:$0xff]
    %v5265 = vld [vmem:[%s9 + $0x40] sm:$0xff]
    %v5266 = vld [vmem:[%s9 + $0x48] sm:$0xff]
    %v5267 = vld [vmem:[%s9 + $0x50] sm:$0xff]
    %v5268 = vld [vmem:[%s9 + $0x58] sm:$0xff]
    %v5269 = vld [vmem:[%s9 + $0x60] sm:$0xff]
    %v5270 = vld [vmem:[%s9 + $0x68] sm:$0xff]
    %v5271 = vld [vmem:[%s9 + $0x70] sm:$0xff]
    %v5272 = vld [vmem:[%s9 + $0x78] sm:$0xff]
    %v5273 = vld [vmem:[%s9 + $0x80] sm:$0xff]
    %v5274 = vld [vmem:[%s9 + $0x88] sm:$0xff]
    %v5275 = vld [vmem:[%s9 + $0x90] sm:$0xff]
    %v5276 = vld [vmem:[%s9 + $0x98] sm:$0xff]
    %v5277 = vld [vmem:[%s9 + $0xa0] sm:$0xff]
    %v5278 = vld [vmem:[%s9 + $0xa8] sm:$0xff]
    %v5279 = vld [vmem:[%s9 + $0xb0] sm:$0xff]
    %v5280 = vld [vmem:[%s9 + $0xb8] sm:$0xff]
    %v5281 = vld [vmem:[%s9 + $0xc0] sm:$0xff]
    %v5282 = vld [vmem:[%s9 + $0xc8] sm:$0xff]
    %v5283 = vld [vmem:[%s9 + $0xd0] sm:$0xff]
    %v5284 = vld [vmem:[%s9 + $0xd8] sm:$0xff]
    %v5285 = vld [vmem:[%s9 + $0xe0] sm:$0xff]
    %v5286 = vld [vmem:[%s9 + $0xe8] sm:$0xff]
    %v5287 = vld [vmem:[%s9 + $0xf0] sm:$0xff]
    %v5288 = vld [vmem:[%s9 + $0xf8] sm:$0xff]
    %v5289 = vld [vmem:[%s10] sm:$0x1]
    %v5291 = vlaneseq
    %v5292 = vshrl.u32 %v5291, 7
    %v5293 = vsub.s32 0, %v5292
    %v5294 = vrot.slane %v5289, %v5293
    %5296 = vmatprep.subr.mxu0 0.0
    %5297 = vmatpush1.msra.mxu0 %v5257
    %5298 = vmatprep.subr.mxu0 0.0
    %5299 = vmatpush1.msra.mxu0 %v5258
    %5300 = vmatprep.subr.mxu0 0.0
    %5301 = vmatpush1.msra.mxu0 %v5259
    %5302 = vmatprep.subr.mxu0 0.0
    %5303 = vmatpush1.msra.mxu0 %v5260
    %5304 = vmatprep.subr.mxu0 0.0
    %5305 = vmatpush1.msra.mxu0 %v5261
    %5306 = vmatprep.subr.mxu0 0.0
    %5307 = vmatpush1.msra.mxu0 %v5262
    %5308 = vmatprep.subr.mxu0 0.0
    %5309 = vmatpush1.msra.mxu0 %v5263
    %5310 = vmatprep.subr.mxu0 0.0
    %5311 = vmatpush1.msra.mxu0 %v5264
    %5312 = vmatprep.subr.mxu0 0.0
    %5313 = vmatpush1.msra.mxu0 %v5265
    %5314 = vmatprep.subr.mxu0 0.0
    %5315 = vmatpush1.msra.mxu0 %v5266
    %5316 = vmatprep.subr.mxu0 0.0
    %5317 = vmatpush1.msra.mxu0 %v5267
    %5318 = vmatprep.subr.mxu0 0.0
    %5319 = vmatpush1.msra.mxu0 %v5268
    %5320 = vmatprep.subr.mxu0 0.0
    %5321 = vmatpush1.msra.mxu0 %v5269
    %5322 = vmatprep.subr.mxu0 0.0
    %5323 = vmatpush1.msra.mxu0 %v5270
    %5324 = vmatprep.subr.mxu0 0.0
    %5325 = vmatpush1.msra.mxu0 %v5271
    %5326 = vmatprep.subr.mxu0 0.0
    %5327 = vmatpush1.msra.mxu0 %v5272
    %5328 = vmatprep.subr.mxu0 0.0
    %5329 = vmatpush1.msra.mxu0 %v5273
    %5330 = vmatprep.subr.mxu0 0.0
    %5331 = vmatpush1.msra.mxu0 %v5274
    %5332 = vmatprep.subr.mxu0 0.0
    %5333 = vmatpush1.msra.mxu0 %v5275
    %5334 = vmatprep.subr.mxu0 0.0
    %5335 = vmatpush1.msra.mxu0 %v5276
    %5336 = vmatprep.subr.mxu0 0.0
    %5337 = vmatpush1.msra.mxu0 %v5277
    %5338 = vmatprep.subr.mxu0 0.0
    %5339 = vmatpush1.msra.mxu0 %v5278
    %5340 = vmatprep.subr.mxu0 0.0
    %5341 = vmatpush1.msra.mxu0 %v5279
    %5342 = vmatprep.subr.mxu0 0.0
    %5343 = vmatpush1.msra.mxu0 %v5280
    %5344 = vmatprep.subr.mxu0 0.0
    %5345 = vmatpush1.msra.mxu0 %v5281
    %5346 = vmatprep.subr.mxu0 0.0
    %5347 = vmatpush1.msra.mxu0 %v5282
    %5348 = vmatprep.subr.mxu0 0.0
    %5349 = vmatpush1.msra.mxu0 %v5283
    %5350 = vmatprep.subr.mxu0 0.0
    %5351 = vmatpush1.msra.mxu0 %v5284
    %5352 = vmatprep.subr.mxu0 0.0
    %5353 = vmatpush1.msra.mxu0 %v5285
    %5354 = vmatprep.subr.mxu0 0.0
    %5355 = vmatpush1.msra.mxu0 %v5286
    %5356 = vmatprep.subr.mxu0 0.0
    %5357 = vmatpush1.msra.mxu0 %v5287
    %5358 = vmatprep.subr.mxu0 0.0
    %5359 = vmatpush1.msra.mxu0 %v5288
    %5360 = vmatprep.mubr.f32.mxu0 %v5046
    %5361 = vmatmul.mubr.f32.gmra.mrb[0].mxu0 %v5045
    %v5362 = vpop.f32.mrb[0].mxu0
    %v5363 = vadd.f32 %v5294, %v5362
    %v5364 = vpop.f32.mrb[0].mxu0
    %5365 = vdwg.mxu0
    %v5366 = vmax.f32 %v5363, 0.0
    %v5367 = vld [vmem:[%s11] sm:$0xff]
    %v5368 = vld [vmem:[%s11 + $0x8] sm:$0xff]
    %v5369 = vld [vmem:[%s11 + $0x10] sm:$0xff]
    %v5370 = vld [vmem:[%s11 + $0x18] sm:$0xff]
    %v5371 = vld [vmem:[%s11 + $0x20] sm:$0xff]
    %v5372 = vld [vmem:[%s11 + $0x28] sm:$0xff]
    %v5373 = vld [vmem:[%s11 + $0x30] sm:$0xff]
    %v5374 = vld [vmem:[%s11 + $0x38] sm:$0xff]
    %v5375 = vld [vmem:[%s11 + $0x40] sm:$0xff]
    %v5376 = vld [vmem:[%s11 + $0x48] sm:$0xff]
    %v5377 = vld [vmem:[%s11 + $0x50] sm:$0xff]
    %v5378 = vld [vmem:[%s11 + $0x58] sm:$0xff]
    %v5379 = vld [vmem:[%s11 + $0x60] sm:$0xf]
    %v5380 = vld [vmem:[%s12] sm:$0x1]
    %v5382 = vlaneseq
    %v5383 = vshrl.u32 %v5382, 7
    %v5384 = vsub.s32 0, %v5383
    %v5385 = vrot.slane %v5380, %v5384
    %v5388 = vsel %vm5177, %v5366, 0
    %v5391 = vsel %vm5181, %v5379, 0
    %5393 = vmatprep.subr.mxu0 0.0
    %5394 = vmatpush1.msra.mxu0 %v5367
    %5395 = vmatprep.subr.mxu0 0.0
    %5396 = vmatpush1.msra.mxu0 %v5368
    %5397 = vmatprep.subr.mxu0 0.0
    %5398 = vmatpush1.msra.mxu0 %v5369
    %5399 = vmatprep.subr.mxu0 0.0
    %5400 = vmatpush1.msra.mxu0 %v5370
    %5401 = vmatprep.subr.mxu0 0.0
    %5402 = vmatpush1.msra.mxu0 %v5371
    %5403 = vmatprep.subr.mxu0 0.0
    %5404 = vmatpush1.msra.mxu0 %v5372
    %5405 = vmatprep.subr.mxu0 0.0
    %5406 = vmatpush1.msra.mxu0 %v5373
    %5407 = vmatprep.subr.mxu0 0.0
    %5408 = vmatpush1.msra.mxu0 %v5374
    %5409 = vmatprep.subr.mxu0 0.0
    %5410 = vmatpush1.msra.mxu0 %v5375
    %5411 = vmatprep.subr.mxu0 0.0
    %5412 = vmatpush1.msra.mxu0 %v5376
    %5413 = vmatprep.subr.mxu0 0.0
    %5414 = vmatpush1.msra.mxu0 %v5377
    %5415 = vmatprep.subr.mxu0 0.0
    %5416 = vmatpush1.msra.mxu0 %v5378
    %5417 = vmatprep.subr.mxu0 0.0
    %5418 = vmatpush1.msra.mxu0 %v5391
    %5419 = vmatprep.subr.mxu0 0.0
    %5420 = vmatpush1.msra.mxu0 0.0
    %5421 = vmatprep.subr.mxu0 0.0
    %5422 = vmatpush1.msra.mxu0 0.0
    %5423 = vmatprep.subr.mxu0 0.0
    %5424 = vmatpush1.msra.mxu0 0.0
    %5425 = vmatprep.subr.mxu0 0.0
    %5426 = vmatpush1.msra.mxu0 0.0
    %5427 = vmatprep.subr.mxu0 0.0
    %5428 = vmatpush1.msra.mxu0 0.0
    %5429 = vmatprep.subr.mxu0 0.0
    %5430 = vmatpush1.msra.mxu0 0.0
    %5431 = vmatprep.subr.mxu0 0.0
    %5432 = vmatpush1.msra.mxu0 0.0
    %5433 = vmatprep.subr.mxu0 0.0
    %5434 = vmatpush1.msra.mxu0 0.0
    %5435 = vmatprep.subr.mxu0 0.0
    %5436 = vmatpush1.msra.mxu0 0.0
    %5437 = vmatprep.subr.mxu0 0.0
    %5438 = vmatpush1.msra.mxu0 0.0
    %5439 = vmatprep.subr.mxu0 0.0
    %5440 = vmatpush1.msra.mxu0 0.0
    %5441 = vmatprep.subr.mxu0 0.0
    %5442 = vmatpush1.msra.mxu0 0.0
    %5443 = vmatprep.subr.mxu0 0.0
    %5444 = vmatpush1.msra.mxu0 0.0
    %5445 = vmatprep.subr.mxu0 0.0
    %5446 = vmatpush1.msra.mxu0 0.0
    %5447 = vmatprep.subr.mxu0 0.0
    %5448 = vmatpush1.msra.mxu0 0.0
    %5449 = vmatprep.subr.mxu0 0.0
    %5450 = vmatpush1.msra.mxu0 0.0
    %5451 = vmatprep.subr.mxu0 0.0
    %5452 = vmatpush1.msra.mxu0 0.0
    %5453 = vmatprep.subr.mxu0 0.0
    %5454 = vmatpush1.msra.mxu0 0.0
    %5455 = vmatprep.subr.mxu0 0.0
    %5456 = vmatpush1.msra.mxu0 0.0
    %5457 = vmatprep.mubr.f32.mxu0 0.0
    %5458 = vmatmul.mubr.f32.gmra.mrb[0].mxu0 %v5388
    %v5459 = vpop.f32.mrb[0].mxu0
    %v5460 = vadd.f32 %v5385, %v5459
    %v5461 = vpop.f32.mrb[0].mxu0
    %5462 = vdwg.mxu0
    %v5463 = vld [vmem:[%s13] sm:$0xff]
    %v5464 = vld [vmem:[%s13 + $0x8] sm:$0xff]
    %v5465 = vld [vmem:[%s13 + $0x10] sm:$0xff]
    %v5466 = vld [vmem:[%s13 + $0x18] sm:$0xff]
    %v5467 = vld [vmem:[%s13 + $0x20] sm:$0xff]
    %v5468 = vld [vmem:[%s13 + $0x28] sm:$0xff]
    %v5469 = vld [vmem:[%s13 + $0x30] sm:$0xff]
    %v5470 = vld [vmem:[%s13 + $0x38] sm:$0xff]
    %v5471 = vld [vmem:[%s13 + $0x40] sm:$0xff]
    %v5472 = vld [vmem:[%s13 + $0x48] sm:$0xff]
    %v5473 = vld [vmem:[%s13 + $0x50] sm:$0xff]
    %v5474 = vld [vmem:[%s13 + $0x58] sm:$0xff]
    %v5475 = vld [vmem:[%s13 + $0x60] sm:$0xf]
    %v5476 = vld [vmem:[%s14] sm:$0x1]
    %v5478 = vlaneseq
    %v5479 = vshrl.u32 %v5478, 7
    %v5480 = vsub.s32 0, %v5479
    %v5481 = vrot.slane %v5476, %v5480
    %v5484 = vsel %vm5181, %v5475, 0
    %5486 = vmatprep.subr.mxu0 0.0
    %5487 = vmatpush1.msra.mxu0 %v5463
    %5488 = vmatprep.subr.mxu0 0.0
    %5489 = vmatpush1.msra.mxu0 %v5464
    %5490 = vmatprep.subr.mxu0 0.0
    %5491 = vmatpush1.msra.mxu0 %v5465
    %5492 = vmatprep.subr.mxu0 0.0
    %5493 = vmatpush1.msra.mxu0 %v5466
    %5494 = vmatprep.subr.mxu0 0.0
    %5495 = vmatpush1.msra.mxu0 %v5467
    %5496 = vmatprep.subr.mxu0 0.0
    %5497 = vmatpush1.msra.mxu0 %v5468
    %5498 = vmatprep.subr.mxu0 0.0
    %5499 = vmatpush1.msra.mxu0 %v5469
    %5500 = vmatprep.subr.mxu0 0.0
    %5501 = vmatpush1.msra.mxu0 %v5470
    %5502 = vmatprep.subr.mxu0 0.0
    %5503 = vmatpush1.msra.mxu0 %v5471
    %5504 = vmatprep.subr.mxu0 0.0
    %5505 = vmatpush1.msra.mxu0 %v5472
    %5506 = vmatprep.subr.mxu0 0.0
    %5507 = vmatpush1.msra.mxu0 %v5473
    %5508 = vmatprep.subr.mxu0 0.0
    %5509 = vmatpush1.msra.mxu0 %v5474
    %5510 = vmatprep.subr.mxu0 0.0
    %5511 = vmatpush1.msra.mxu0 %v5484
    %5512 = vmatprep.subr.mxu0 0.0
    %5513 = vmatpush1.msra.mxu0 0.0
    %5514 = vmatprep.subr.mxu0 0.0
    %5515 = vmatpush1.msra.mxu0 0.0
    %5516 = vmatprep.subr.mxu0 0.0
    %5517 = vmatpush1.msra.mxu0 0.0
    %5518 = vmatprep.subr.mxu0 0.0
    %5519 = vmatpush1.msra.mxu0 0.0
    %5520 = vmatprep.subr.mxu0 0.0
    %5521 = vmatpush1.msra.mxu0 0.0
    %5522 = vmatprep.subr.mxu0 0.0
    %5523 = vmatpush1.msra.mxu0 0.0
    %5524 = vmatprep.subr.mxu0 0.0
    %5525 = vmatpush1.msra.mxu0 0.0
    %5526 = vmatprep.subr.mxu0 0.0
    %5527 = vmatpush1.msra.mxu0 0.0
    %5528 = vmatprep.subr.mxu0 0.0
    %5529 = vmatpush1.msra.mxu0 0.0
    %5530 = vmatprep.subr.mxu0 0.0
    %5531 = vmatpush1.msra.mxu0 0.0
    %5532 = vmatprep.subr.mxu0 0.0
    %5533 = vmatpush1.msra.mxu0 0.0
    %5534 = vmatprep.subr.mxu0 0.0
    %5535 = vmatpush1.msra.mxu0 0.0
    %5536 = vmatprep.subr.mxu0 0.0
    %5537 = vmatpush1.msra.mxu0 0.0
    %5538 = vmatprep.subr.mxu0 0.0
    %5539 = vmatpush1.msra.mxu0 0.0
    %5540 = vmatprep.subr.mxu0 0.0
    %5541 = vmatpush1.msra.mxu0 0.0
    %5542 = vmatprep.subr.mxu0 0.0
    %5543 = vmatpush1.msra.mxu0 0.0
    %5544 = vmatprep.subr.mxu0 0.0
    %5545 = vmatpush1.msra.mxu0 0.0
    %5546 = vmatprep.subr.mxu0 0.0
    %5547 = vmatpush1.msra.mxu0 0.0
    %5548 = vmatprep.subr.mxu0 0.0
    %5549 = vmatpush1.msra.mxu0 0.0
    %5550 = vmatprep.mubr.f32.mxu0 0.0
    %5551 = vmatmul.mubr.f32.gmra.mrb[0].mxu0 %v5388
    %v5552 = vpop.f32.mrb[0].mxu0
    %v5553 = vadd.f32 %v5481, %v5552
    %v5554 = vpop.f32.mrb[0].mxu0
    %5555 = vdwg.mxu0
    %v5556 = vmax.f32 %v5460, 0.0
    %v5557 = vand.u32 2147483647, %v5460
    %v5558 = vsub.f32 0.0, %v5557
    %v5559 = vmul.f32 %v5558, 1.442695
    %v5560 = vpow.pop %v5559
    %v5561 = vadd.f32 %v5560, 1.0
    %v5562 = vlog2.pop %v5561
    %v5563 = vmul.f32 %v5562, 0.6931472
    %v5564 = vadd.f32 %v5556, %v5563
    %v5565 = vadd.f32 %v5564, 1.0
    %vm5566 = vcmask 9216
    %5567 = vst.msk [vmem:[#allocation3] sm:$0x3] %vm5566, %v5565
    %v5568 = vmax.f32 %v5553, 0.0
    %v5569 = vand.u32 2147483647, %v5553
    %v5570 = vsub.f32 0.0, %v5569
    %v5571 = vmul.f32 %v5570, 1.442695
    %v5572 = vpow.pop %v5571
    %v5573 = vadd.f32 %v5572, 1.0
    %v5574 = vlog2.pop %v5573
    %v5575 = vmul.f32 %v5574, 0.6931472
    %v5576 = vadd.f32 %v5568, %v5575
    %v5577 = vadd.f32 %v5576, 1.0
    %5578 = vst.msk [vmem:[#allocation5] sm:$0x3] %vm5566, %v5577
    // Predicated region
    $region62: #{net_forward.9} parent=1 // pred_check
      _
    $region63: #{net_forward.9} parent=1 // pred_check_branch
      %5580 = sbr.rel (0) target = $region65
    $region64: #{net_forward.9} parent=1 // pred_region
      _
    $region65: #{net_forward.9} parent=1 // pred_fallthru
      _
    // Predicated region
    $region66: #{net_forward.9} parent=1 // pred_check
      _
    $region67: #{net_forward.9} parent=1 // pred_check_branch
      %5582 = sbr.rel (0) target = $region69
    $region68: #{net_forward.9} parent=1 // pred_region
      %s5584 = ssub.s32 32, 32
      %5585 = vsyncadd [#allocation4], %s5584
      %s5587 = sshll.u32 [#allocation3], 4
      %s5588 = int_to_ptr.vmem [resolvable:$true] %s5587
      %5590 = dma.vmem_to_hbm [thread:$0]  %s5588, 32, %s16, [#allocation4]
    $region69: #{net_forward.9} parent=1 // pred_fallthru
      _
    // Predicated region
    $region70: #{net_forward.9} parent=1 // pred_check
      _
    $region71: #{net_forward.9} parent=1 // pred_check_branch
      %5592 = sbr.rel (0) target = $region73
    $region72: #{net_forward.9} parent=1 // pred_region
      %s5594 = ssub.s32 32, 32
      %5595 = vsyncadd [#allocation6], %s5594
      %s5597 = sshll.u32 [#allocation5], 4
      %s5598 = int_to_ptr.vmem [resolvable:$true] %s5597
      %5600 = dma.vmem_to_hbm [thread:$0]  %s5598, 32, %s17, [#allocation6]
    $region73: #{net_forward.9} parent=1 // pred_fallthru
      _
    // Predicated region
    $region74: #{net_forward.9} parent=1 // pred_check
      _
    $region75: #{net_forward.9} parent=1 // pred_check_branch
      %5602 = sbr.rel (0) target = $region77
    $region76: #{net_forward.9} parent=1 // pred_region
      _
    $region77: #{net_forward.9} parent=1 // pred_fallthru
      _
    // Predicated region
    $region78: #{net_forward.9} parent=1 // pred_check
      _
    $region79: #{net_forward.9} parent=1 // pred_check_branch
      %5604 = sbr.rel (0) target = $region81
    $region80: #{net_forward.9} parent=1 // pred_region
      %5605 = dma.done [#allocation4], 32
    $region81: #{net_forward.9} parent=1 // pred_fallthru
      _
    // Predicated region
    $region82: #{net_forward.9} parent=1 // pred_check
      _
    $region83: #{net_forward.9} parent=1 // pred_check_branch
      %5607 = sbr.rel (0) target = $region85
    $region84: #{net_forward.9} parent=1 // pred_region
      %5608 = dma.done [#allocation6], 32
    $region85: #{net_forward.9} parent=1 // pred_fallthru
      _
    %5609 = vsyncpa [#allocation4], 1
    %5610 = vsyncpa [#allocation6], 1

</llo_original>
